<compile_context>
chip_gen: v7x
topology: tpu7x:2x2x1
jax: 0.10.0
libtpu: 0.0.40
codegen_flags: <defaults>
</compile_context>

<pallas_src>
import functools

import jax
import jax.numpy as jnp
from jax.experimental import pallas as pl
from jax.experimental.pallas import tpu as pltpu

# ---- scaled-down CoCa ViT config (structure mirrors coca_ViT-B-32 vision tower) ----
IMG = 32            # image spatial size
PATCH = 8           # patch size -> 4x4 = 16 patches
CHANS = 3
WIDTH = 64          # transformer width (768 in the real model)
HEADS = 4
HEAD_DIM = WIDTH // HEADS
MLP = 4 * WIDTH
LAYERS = 2          # 12 in the real model
EMBED_DIM = 512     # matches COCAVisionOnly.embed_dim
NUM_OUTPUT = 10     # classifier head size (num_output != 0 branch)
NUM_OUT_PAD = 128   # classifier output padded to a lane-dense width; sliced back in JAX
N_PATCH = (IMG // PATCH) ** 2
SEQ = N_PATCH + 1   # + class token
SEQ_PAD = 24        # SEQ padded up to a sublane multiple (8); pad rows masked in attention
CPP = CHANS * PATCH * PATCH
ATTN_SCALE = HEAD_DIM ** -0.5
LN_EPS = 1e-5
MAX_BATCH_TILE = 8
VMEM_LIMIT = 32 * 1024 * 1024


def _batch_tile(batch):
    bt = min(batch, MAX_BATCH_TILE)
    while batch % bt:
        bt -= 1
    return bt


# ----------------------------- in-kernel helpers -----------------------------
def _ln(x, g, b):
    mu = jnp.mean(x, axis=-1, keepdims=True)
    xc = x - mu
    var = jnp.mean(xc * xc, axis=-1, keepdims=True)
    return xc * jax.lax.rsqrt(var + LN_EPS) * g + b


def _softmax_rows(s):
    # exact denominator (no approx reciprocal) per correctness review
    s = s - jnp.max(s, axis=-1, keepdims=True)
    e = jnp.exp(s)
    return e / jnp.sum(e, axis=-1, keepdims=True)


def _key_mask():
    # mask out the SEQ..SEQ_PAD-1 padding rows when they are used as attention keys
    return jax.lax.broadcasted_iota(jnp.int32, (1, SEQ_PAD), 1) < SEQ


# ----------------------------- Pallas kernels -----------------------------
def _embed_kernel(p_ref, w_ref, pos_ref, g_ref, b_ref, o_ref, *, bt):
    # Conv2d(k=stride=PATCH, bias=False) as one matmul over im2col'd patches,
    # batch folded into M.  Row 0 of each image's patch slab is zeros (class-token
    # slot, its embedding rides in pos_ref[0]); rows SEQ.. are sublane padding.
    emb = jnp.dot(p_ref[...].astype(jnp.bfloat16), w_ref[...],
                  preferred_element_type=jnp.float32)              # (bt*SEQ_PAD, D)
    for i in range(bt):
        rs = slice(i * SEQ_PAD, (i + 1) * SEQ_PAD)
        o_ref[rs, :] = _ln(emb[rs, :] + pos_ref[...], g_ref[...], b_ref[...])


def _block_kernel(x_ref, ln1g, ln1b, wqkv, bqkv, wo, bo, ln2g, ln2b,
                  wfc1, bfc1, wfc2, bfc2, o_ref, attn_sc, *, bt):
    # One pre-LN transformer block.  grid = (batch_tiles, LAYERS); the residual stream
    # is carried in the VMEM-resident output block across the (arbitrary) layer axis.
    layer = pl.program_id(1)

    @pl.when(layer == 0)
    def _():
        o_ref[...] = x_ref[...]                                    # seed the carry

    x = o_ref[...]                                                 # (bt*SEQ_PAD, D) f32
    h = _ln(x, ln1g[0], ln1b[0])

    # fused QKV projection: one [M, D] x [D, 3D] bf16 matmul, f32 accumulation
    qkv = jnp.dot(h.astype(jnp.bfloat16), wqkv[0],
                  preferred_element_type=jnp.float32) + bqkv[0]    # (M, 3D)
    q = qkv[:, 0:WIDTH] * ATTN_SCALE
    k = qkv[:, WIDTH:2 * WIDTH]
    v = qkv[:, 2 * WIDTH:3 * WIDTH]

    kmask = _key_mask()
    for b in range(bt):                                            # attention is per-image
        r0 = b * SEQ_PAD
        for hd in range(HEADS):
            c0 = hd * HEAD_DIM
            qh = q[r0:r0 + SEQ_PAD, c0:c0 + HEAD_DIM]
            kh = k[r0:r0 + SEQ_PAD, c0:c0 + HEAD_DIM]
            vh = v[r0:r0 + SEQ_PAD, c0:c0 + HEAD_DIM]
            s = jax.lax.dot_general(qh, kh, (((1,), (1,)), ((), ())),
                                    preferred_element_type=jnp.float32)   # (Sp, Sp)
            s = jnp.where(kmask, s, -1e30)
            p = _softmax_rows(s)
            attn_sc[r0:r0 + SEQ_PAD, c0:c0 + HEAD_DIM] = jnp.dot(
                p, vh, preferred_element_type=jnp.float32)

    # single full-width attention out-projection
    attn = jnp.dot(attn_sc[...].astype(jnp.bfloat16), wo[0],
                   preferred_element_type=jnp.float32) + bo[0]
    x = x + attn

    h2 = _ln(x, ln2g[0], ln2b[0])
    h2 = jnp.dot(h2.astype(jnp.bfloat16), wfc1[0],
                 preferred_element_type=jnp.float32) + bfc1[0]
    # TODO(synk): PyTorch nn.GELU defaults to the exact erf form; tanh approx used here.
    h2 = jax.nn.gelu(h2, approximate=True)
    h2 = jnp.dot(h2.astype(jnp.bfloat16), wfc2[0],
                 preferred_element_type=jnp.float32) + bfc2[0]
    o_ref[...] = x + h2


def _pool_head_kernel(x_ref, pq, wq, bq, wkv, bkv, wo, bo, lng, lnb,
                      pw, pb, cw, cb, feat_ref, logit_ref, pooled_sc, *, batch):
    # CoCa-style attentional pooling (single shared latent query) + ln_post + proj +
    # classifier, whole batch in ONE grid step (K/V at M=B*SEQ_PAD, head matmuls at M=B).
    x = x_ref[...]                                                 # (B*SEQ_PAD, D)
    kv = jnp.dot(x.astype(jnp.bfloat16), wkv[...],
                 preferred_element_type=jnp.float32) + bkv[...]    # fused K|V, (M, 2D)
    k = kv[:, 0:WIDTH]
    v = kv[:, WIDTH:2 * WIDTH]
    q = (jnp.dot(pq[...].astype(jnp.bfloat16), wq[...],
                 preferred_element_type=jnp.float32) + bq[...]) * ATTN_SCALE   # (1, D)

    kmask = _key_mask()
    for b in range(batch):
        r0 = b * SEQ_PAD
        for hd in range(HEADS):
            c0 = hd * HEAD_DIM
            kh = k[r0:r0 + SEQ_PAD, c0:c0 + HEAD_DIM]
            vh = v[r0:r0 + SEQ_PAD, c0:c0 + HEAD_DIM]
            s = jax.lax.dot_general(q[:, c0:c0 + HEAD_DIM], kh, (((1,), (1,)), ((), ())),
                                    preferred_element_type=jnp.float32)       # (1, Sp)
            s = jnp.where(kmask, s, -1e30)
            p = _softmax_rows(s)
            pooled_sc[b:b + 1, c0:c0 + HEAD_DIM] = jnp.dot(
                p, vh, preferred_element_type=jnp.float32)

    pooled = jnp.dot(pooled_sc[...].astype(jnp.bfloat16), wo[...],
                     preferred_element_type=jnp.float32) + bo[...]            # (B, D)
    pooled = _ln(pooled, lng[...], lnb[...])
    feats = jnp.dot(pooled.astype(jnp.bfloat16), pw[...],
                    preferred_element_type=jnp.float32) + pb[...]             # (B, EMBED)
    logits = jnp.dot(feats.astype(jnp.bfloat16), cw[...],
                     preferred_element_type=jnp.float32) + cb[...]            # (B, PAD)
    feat_ref[...] = feats
    logit_ref[...] = logits


# ----------------------------- pallas_call wrappers -----------------------------
def embed_image(pk, imgs):
    B, C, H, W = imgs.shape
    gh, gw = H // PATCH, W // PATCH
    bt = _batch_tile(B)
    nb = B // bt
    # im2col: NCHW -> [B, nPatches, C*P*P]  (== Conv2d(k=P, stride=P, bias=False))
    patches = (imgs.reshape(B, C, gh, PATCH, gw, PATCH)
                   .transpose(0, 2, 4, 1, 3, 5)
                   .reshape(B, gh * gw, CPP))
    # +1 leading zero row (class-token slot) and zero rows up to SEQ_PAD; flatten batch.
    patches = jnp.pad(patches, ((0, 0), (1, SEQ_PAD - SEQ), (0, 0))).reshape(B * SEQ_PAD, CPP)

    return pl.pallas_call(
        functools.partial(_embed_kernel, bt=bt),
        out_shape=jax.ShapeDtypeStruct((B * SEQ_PAD, WIDTH), jnp.float32),
        grid=(nb,),
        in_specs=[
            pl.BlockSpec((bt * SEQ_PAD, CPP), lambda b: (b, 0)),
            pl.BlockSpec((CPP, WIDTH), lambda b: (0, 0)),
            pl.BlockSpec((SEQ_PAD, WIDTH), lambda b: (0, 0)),
            pl.BlockSpec((1, WIDTH), lambda b: (0, 0)),
            pl.BlockSpec((1, WIDTH), lambda b: (0, 0)),
        ],
        out_specs=pl.BlockSpec((bt * SEQ_PAD, WIDTH), lambda b: (b, 0)),
        compiler_params=pltpu.CompilerParams(
            dimension_semantics=("parallel",),
            vmem_limit_bytes=VMEM_LIMIT),
    )(patches, pk["patch_w"], pk["pos_cls_pad"], pk["ln_pre_g"], pk["ln_pre_b"])


def transformer_blocks(x, pk):
    rows = x.shape[0]
    B = rows // SEQ_PAD
    bt = _batch_tile(B)
    nb = B // bt
    layer = lambda s1, s2: pl.BlockSpec((1, s1, s2), lambda b, l: (l, 0, 0))

    return pl.pallas_call(
        functools.partial(_block_kernel, bt=bt),
        out_shape=jax.ShapeDtypeStruct((rows, WIDTH), jnp.float32),
        grid=(nb, LAYERS),
        in_specs=[
            pl.BlockSpec((bt * SEQ_PAD, WIDTH), lambda b, l: (b, 0)),
            layer(1, WIDTH), layer(1, WIDTH),                  # ln1 gamma/beta
            layer(WIDTH, 3 * WIDTH), layer(1, 3 * WIDTH),      # fused qkv
            layer(WIDTH, WIDTH), layer(1, WIDTH),              # attn out-proj
            layer(1, WIDTH), layer(1, WIDTH),                  # ln2
            layer(WIDTH, MLP), layer(1, MLP),                  # fc1
            layer(MLP, WIDTH), layer(1, WIDTH),                # fc2
        ],
        out_specs=pl.BlockSpec((bt * SEQ_PAD, WIDTH), lambda b, l: (b, 0)),
        scratch_shapes=[pltpu.VMEM((bt * SEQ_PAD, WIDTH), jnp.float32)],
        compiler_params=pltpu.CompilerParams(
            dimension_semantics=("parallel", "arbitrary"),
            vmem_limit_bytes=VMEM_LIMIT),
    )(x,
      pk["ln1_g"], pk["ln1_b"],
      pk["w_qkv"], pk["b_qkv"],
      pk["w_out"], pk["b_out"],
      pk["ln2_g"], pk["ln2_b"],
      pk["w_fc1"], pk["b_fc1"],
      pk["w_fc2"], pk["b_fc2"])


def pool_and_classify(x, pk):
    rows = x.shape[0]
    B = rows // SEQ_PAD
    args = (x, pk["pool_q"],
            pk["pool_wq"], pk["pool_bq"],
            pk["pool_wkv"], pk["pool_bkv"],
            pk["pool_wo"], pk["pool_bo"],
            pk["ln_post_g"], pk["ln_post_b"],
            pk["proj_w"], pk["proj_b"],
            pk["cls_w_pad"], pk["cls_b_pad"])
    full = lambda a: pl.BlockSpec(a.shape, lambda i: (0,) * a.ndim)

    feats, logits = pl.pallas_call(
        functools.partial(_pool_head_kernel, batch=B),
        out_shape=(jax.ShapeDtypeStruct((B, EMBED_DIM), jnp.float32),
                   jax.ShapeDtypeStruct((B, NUM_OUT_PAD), jnp.float32)),
        grid=(1,),
        in_specs=[full(a) for a in args],
        out_specs=(pl.BlockSpec((B, EMBED_DIM), lambda i: (0, 0)),
                   pl.BlockSpec((B, NUM_OUT_PAD), lambda i: (0, 0))),
        scratch_shapes=[pltpu.VMEM((B, WIDTH), jnp.float32)],
        compiler_params=pltpu.CompilerParams(
            dimension_semantics=("arbitrary",),
            vmem_limit_bytes=VMEM_LIMIT),
    )(*args)
    return feats, logits[:, :NUM_OUTPUT]


# ----------------------------- model forward -----------------------------
def coca_vision_only_forward(packed, imgs, ret_features=False, ret_emb=False, freeze=False):
    # `freeze` only disables autograd in PyTorch; forward values are identical.
    x = embed_image(packed, imgs)            # patch embed + cls token + pos emb + ln_pre
    x = transformer_blocks(x, packed)        # all LAYERS in one pipelined pallas_call
    features, logits = pool_and_classify(x, packed)   # attn-pool + ln_post + proj + classifier
    if ret_features:
        return logits, features              # (classifier(features), features.data)
    if ret_emb:
        return logits, features              # (classifier(features), features)
    return logits


# ----------------------------- one-time parameter packing -----------------------------
def pack_params(p):
    """All per-forward parameter glue hoisted here: layer stacking, qkv/kv fusion,
    bias row reshapes, classifier lane padding, cls-token folding, bf16 casts."""
    bf16 = lambda w: w.astype(jnp.bfloat16)
    stack = lambda k: jnp.stack([blk[k] for blk in p["blocks"]])
    row = lambda v, n: v.reshape(1, n)
    lrow = lambda k, n: stack(k).reshape(LAYERS, 1, n)

    pos_cls = p["pos_emb"].at[0].add(p["cls_emb"][0])                       # fold cls token
    pos_cls_pad = jnp.zeros((SEQ_PAD, WIDTH), jnp.float32).at[:SEQ].set(pos_cls)

    return {
        # patch embed + ln_pre
        "patch_w": bf16(p["patch_w"]),
        "pos_cls_pad": pos_cls_pad,
        "ln_pre_g": row(p["ln_pre_g"], WIDTH), "ln_pre_b": row(p["ln_pre_b"], WIDTH),
        # transformer blocks, stacked on a leading [LAYERS] axis
        "ln1_g": lrow("ln1_g", WIDTH), "ln1_b": lrow("ln1_b", WIDTH),
        "w_qkv": bf16(stack("w_qkv")), "b_qkv": lrow("b_qkv", 3 * WIDTH),
        "w_out": bf16(stack("w_out")), "b_out": lrow("b_out", WIDTH),
        "ln2_g": lrow("ln2_g", WIDTH), "ln2_b": lrow("ln2_b", WIDTH),
        "w_fc1": bf16(stack("w_fc1")), "b_fc1": lrow("b_fc1", MLP),
        "w_fc2": bf16(stack("w_fc2")), "b_fc2": lrow("b_fc2", WIDTH),
        # attentional pooler + ln_post + proj + classifier
        "pool_q": p["pool_q"],
        "pool_wq": bf16(p["pool_wq"]), "pool_bq": row(p["pool_bq"], WIDTH),
        "pool_wkv": bf16(jnp.concatenate([p["pool_wk"], p["pool_wv"]], axis=1)),
        "pool_bkv": row(jnp.concatenate([p["pool_bk"], p["pool_bv"]]), 2 * WIDTH),
        "pool_wo": bf16(p["pool_wo"]), "pool_bo": row(p["pool_bo"], WIDTH),
        "ln_post_g": row(p["ln_post_g"], WIDTH), "ln_post_b": row(p["ln_post_b"], WIDTH),
        "proj_w": bf16(p["proj_w"]), "proj_b": row(p["proj_b"], EMBED_DIM),
        "cls_w_pad": bf16(jnp.zeros((EMBED_DIM, NUM_OUT_PAD), jnp.float32)
                          .at[:, :NUM_OUTPUT].set(p["cls_w"])),
        "cls_b_pad": jnp.zeros((1, NUM_OUT_PAD), jnp.float32)
                     .at[:, :NUM_OUTPUT].set(p["cls_b"]),
    }


# ----------------------------- deterministic params -----------------------------
def init_params(key):
    ks = iter(jax.random.split(key, 11 + 4 * LAYERS))
    nrm = lambda k, shp: 0.02 * jax.random.normal(k, shp, jnp.float32)
    zeros = lambda shp: jnp.zeros(shp, jnp.float32)
    ones = lambda shp: jnp.ones(shp, jnp.float32)
    params = {
        "patch_w": nrm(next(ks), (CPP, WIDTH)),          # Conv2d(..., bias=False)
        "cls_emb": nrm(next(ks), (1, WIDTH)),
        "pos_emb": nrm(next(ks), (SEQ, WIDTH)),
        "ln_pre_g": ones((WIDTH,)), "ln_pre_b": zeros((WIDTH,)),
        "blocks": [],
        "pool_q": nrm(next(ks), (1, WIDTH)),
        "pool_wq": nrm(next(ks), (WIDTH, WIDTH)), "pool_bq": zeros((WIDTH,)),
        "pool_wk": nrm(next(ks), (WIDTH, WIDTH)), "pool_bk": zeros((WIDTH,)),
        "pool_wv": nrm(next(ks), (WIDTH, WIDTH)), "pool_bv": zeros((WIDTH,)),
        "pool_wo": nrm(next(ks), (WIDTH, WIDTH)), "pool_bo": zeros((WIDTH,)),
        "ln_post_g": ones((WIDTH,)), "ln_post_b": zeros((WIDTH,)),
        "proj_w": nrm(next(ks), (WIDTH, EMBED_DIM)), "proj_b": zeros((EMBED_DIM,)),
        "cls_w": nrm(next(ks), (EMBED_DIM, NUM_OUTPUT)), "cls_b": zeros((NUM_OUTPUT,)),
    }
    for _ in range(LAYERS):
        params["blocks"].append({
            "ln1_g": ones((WIDTH,)), "ln1_b": zeros((WIDTH,)),
            "w_qkv": nrm(next(ks), (WIDTH, 3 * WIDTH)), "b_qkv": zeros((3 * WIDTH,)),
            "w_out": nrm(next(ks), (WIDTH, WIDTH)), "b_out": zeros((WIDTH,)),
            "ln2_g": ones((WIDTH,)), "ln2_b": zeros((WIDTH,)),
            "w_fc1": nrm(next(ks), (WIDTH, MLP)), "b_fc1": zeros((MLP,)),
            "w_fc2": nrm(next(ks), (MLP, WIDTH)), "b_fc2": zeros((WIDTH,)),
        })
    return params


if __name__ == "__main__":
    key = jax.random.PRNGKey(0)
    pkey, xkey = jax.random.split(key)
    packed = pack_params(init_params(pkey))                       # one-time param packing
    imgs = jax.random.normal(xkey, (2, CHANS, IMG, IMG), jnp.float32)   # NCHW

    fwd = jax.jit(functools.partial(coca_vision_only_forward, ret_emb=True))
    logits, feats = fwd(packed, imgs)
    jax.block_until_ready((logits, feats))

    assert logits.shape == (2, NUM_OUTPUT), logits.shape
    assert feats.shape == (2, EMBED_DIM), feats.shape
    assert jnp.all(jnp.isfinite(logits)) and jnp.all(jnp.isfinite(feats))
    print("KERNEL_OK")
</pallas_src>

<mosaic_0001>
module attributes {stable_mosaic.version = 11 : i64} {
  func.func @_embed_kernel(%arg0: i32, %arg1: memref<48x192xf32, #tpu.memory_space<vmem>>, %arg2: memref<192x64xbf16, #tpu.memory_space<vmem>>, %arg3: memref<24x64xf32, #tpu.memory_space<vmem>>, %arg4: memref<1x64xf32, #tpu.memory_space<vmem>>, %arg5: memref<1x64xf32, #tpu.memory_space<vmem>>, %arg6: memref<48x64xf32, #tpu.memory_space<vmem>>) attributes {dimension_semantics = [#tpu.dimension_semantics<parallel>], iteration_bounds = array<i64: 1>, scalar_prefetch = 0 : i64, scratch_operands = 0 : i64, tpu.core_type = #tpu.core_type<tc>, window_params = [{transform_indices = @transform_0, window_bounds = array<i64: 48, 192>}, {pipeline_mode = #tpu.pipeline_mode<synchronous>, transform_indices = @transform_1, window_bounds = array<i64: 192, 64>}, {pipeline_mode = #tpu.pipeline_mode<synchronous>, transform_indices = @transform_2, window_bounds = array<i64: 24, 64>}, {pipeline_mode = #tpu.pipeline_mode<synchronous>, transform_indices = @transform_3, window_bounds = array<i64: 1, 64>}, {pipeline_mode = #tpu.pipeline_mode<synchronous>, transform_indices = @transform_4, window_bounds = array<i64: 1, 64>}, {transform_indices = @transform_5, window_bounds = array<i64: 48, 64>}]} {
    %c0 = arith.constant 0 : index
    %c0_0 = arith.constant 0 : index
    %0 = vector.load %arg1[%c0, %c0_0] : memref<48x192xf32, #tpu.memory_space<vmem>>, vector<48x192xf32>
    %1 = arith.truncf %0 : vector<48x192xf32> to vector<48x192xbf16>
    %c0_1 = arith.constant 0 : index
    %c0_2 = arith.constant 0 : index
    %2 = vector.load %arg2[%c0_1, %c0_2] : memref<192x64xbf16, #tpu.memory_space<vmem>>, vector<192x64xbf16>
    %cst = arith.constant dense<0.000000e+00> : vector<48x64xf32>
    %3 = tpu.matmul %1, %2, %cst {dimension_numbers = #tpu.dot_dimension_numbers<[1], [0], [0], [1], [0, 0, 1, 1], [], []>} : vector<48x192xbf16>, vector<192x64xbf16>, vector<48x64xf32> -> vector<48x64xf32>
    %4 = vector.extract_strided_slice %3 {offsets = [0, 0], sizes = [24, 64], strides = [1, 1]} : vector<48x64xf32> to vector<24x64xf32>
    %c0_3 = arith.constant 0 : index
    %c0_4 = arith.constant 0 : index
    %5 = vector.load %arg3[%c0_3, %c0_4] : memref<24x64xf32, #tpu.memory_space<vmem>>, vector<24x64xf32>
    %6 = arith.addf %4, %5 : vector<24x64xf32>
    %c0_5 = arith.constant 0 : index
    %c0_6 = arith.constant 0 : index
    %7 = vector.load %arg4[%c0_5, %c0_6] : memref<1x64xf32, #tpu.memory_space<vmem>>, vector<1x64xf32>
    %c0_7 = arith.constant 0 : index
    %c0_8 = arith.constant 0 : index
    %8 = vector.load %arg5[%c0_7, %c0_8] : memref<1x64xf32, #tpu.memory_space<vmem>>, vector<1x64xf32>
    %cst_9 = arith.constant dense<0.000000e+00> : vector<24xf32>
    %9 = vector.multi_reduction <add>, %6, %cst_9 [1] : vector<24x64xf32> to vector<24xf32>
    %10 = vector.shape_cast %9 : vector<24xf32> to vector<24x1xf32>
    %cst_10 = arith.constant 6.400000e+01 : f32
    %11 = vector.broadcast %cst_10 : f32 to vector<24x1xf32>
    %12 = arith.divf %10, %11 : vector<24x1xf32>
    %13 = vector.broadcast %12 : vector<24x1xf32> to vector<24x64xf32>
    %14 = arith.subf %6, %13 : vector<24x64xf32>
    %15 = arith.mulf %14, %14 : vector<24x64xf32>
    %cst_11 = arith.constant dense<0.000000e+00> : vector<24xf32>
    %16 = vector.multi_reduction <add>, %15, %cst_11 [1] : vector<24x64xf32> to vector<24xf32>
    %17 = vector.shape_cast %16 : vector<24xf32> to vector<24x1xf32>
    %cst_12 = arith.constant 6.400000e+01 : f32
    %18 = vector.broadcast %cst_12 : f32 to vector<24x1xf32>
    %19 = arith.divf %17, %18 : vector<24x1xf32>
    %cst_13 = arith.constant 9.99999974E-6 : f32
    %20 = vector.broadcast %cst_13 : f32 to vector<24x1xf32>
    %21 = arith.addf %19, %20 : vector<24x1xf32>
    %22 = math.rsqrt %21 : vector<24x1xf32>
    %23 = vector.broadcast %22 : vector<24x1xf32> to vector<24x64xf32>
    %24 = arith.mulf %14, %23 : vector<24x64xf32>
    %25 = vector.broadcast %7 : vector<1x64xf32> to vector<24x64xf32>
    %26 = arith.mulf %24, %25 : vector<24x64xf32>
    %27 = vector.broadcast %8 : vector<1x64xf32> to vector<24x64xf32>
    %28 = arith.addf %26, %27 : vector<24x64xf32>
    %c0_14 = arith.constant 0 : index
    %c0_15 = arith.constant 0 : index
    %29 = vector.load %arg6[%c0_14, %c0_15] : memref<48x64xf32, #tpu.memory_space<vmem>>, vector<24x64xf32>
    tpu.vector_store %arg6[%c0_14, %c0_15], %28 {strides = array<i32>} : memref<48x64xf32, #tpu.memory_space<vmem>>, vector<24x64xf32>,
    %30 = vector.extract_strided_slice %3 {offsets = [24, 0], sizes = [24, 64], strides = [1, 1]} : vector<48x64xf32> to vector<24x64xf32>
    %c0_16 = arith.constant 0 : index
    %c0_17 = arith.constant 0 : index
    %31 = vector.load %arg3[%c0_16, %c0_17] : memref<24x64xf32, #tpu.memory_space<vmem>>, vector<24x64xf32>
    %32 = arith.addf %30, %31 : vector<24x64xf32>
    %c0_18 = arith.constant 0 : index
    %c0_19 = arith.constant 0 : index
    %33 = vector.load %arg4[%c0_18, %c0_19] : memref<1x64xf32, #tpu.memory_space<vmem>>, vector<1x64xf32>
    %c0_20 = arith.constant 0 : index
    %c0_21 = arith.constant 0 : index
    %34 = vector.load %arg5[%c0_20, %c0_21] : memref<1x64xf32, #tpu.memory_space<vmem>>, vector<1x64xf32>
    %cst_22 = arith.constant dense<0.000000e+00> : vector<24xf32>
    %35 = vector.multi_reduction <add>, %32, %cst_22 [1] : vector<24x64xf32> to vector<24xf32>
    %36 = vector.shape_cast %35 : vector<24xf32> to vector<24x1xf32>
    %cst_23 = arith.constant 6.400000e+01 : f32
    %37 = vector.broadcast %cst_23 : f32 to vector<24x1xf32>
    %38 = arith.divf %36, %37 : vector<24x1xf32>
    %39 = vector.broadcast %38 : vector<24x1xf32> to vector<24x64xf32>
    %40 = arith.subf %32, %39 : vector<24x64xf32>
    %41 = arith.mulf %40, %40 : vector<24x64xf32>
    %cst_24 = arith.constant dense<0.000000e+00> : vector<24xf32>
    %42 = vector.multi_reduction <add>, %41, %cst_24 [1] : vector<24x64xf32> to vector<24xf32>
    %43 = vector.shape_cast %42 : vector<24xf32> to vector<24x1xf32>
    %cst_25 = arith.constant 6.400000e+01 : f32
    %44 = vector.broadcast %cst_25 : f32 to vector<24x1xf32>
    %45 = arith.divf %43, %44 : vector<24x1xf32>
    %cst_26 = arith.constant 9.99999974E-6 : f32
    %46 = vector.broadcast %cst_26 : f32 to vector<24x1xf32>
    %47 = arith.addf %45, %46 : vector<24x1xf32>
    %48 = math.rsqrt %47 : vector<24x1xf32>
    %49 = vector.broadcast %48 : vector<24x1xf32> to vector<24x64xf32>
    %50 = arith.mulf %40, %49 : vector<24x64xf32>
    %51 = vector.broadcast %33 : vector<1x64xf32> to vector<24x64xf32>
    %52 = arith.mulf %50, %51 : vector<24x64xf32>
    %53 = vector.broadcast %34 : vector<1x64xf32> to vector<24x64xf32>
    %54 = arith.addf %52, %53 : vector<24x64xf32>
    %c24 = arith.constant 24 : index
    %c0_27 = arith.constant 0 : index
    %55 = vector.load %arg6[%c24, %c0_27] : memref<48x64xf32, #tpu.memory_space<vmem>>, vector<24x64xf32>
    tpu.vector_store %arg6[%c24, %c0_27], %54 {strides = array<i32>} : memref<48x64xf32, #tpu.memory_space<vmem>>, vector<24x64xf32>,
    return
  }
  func.func @transform_0(%arg0: i32) -> (i32, i32) {
    %c0_i32 = arith.constant 0 : i32
    %c0_i32_0 = arith.constant 0 : i32
    return %arg0, %c0_i32 : i32, i32
  }
  func.func @transform_1(%arg0: i32) -> (i32, i32) {
    %c0_i32 = arith.constant 0 : i32
    %c0_i32_0 = arith.constant 0 : i32
    %c0_i32_1 = arith.constant 0 : i32
    return %c0_i32, %c0_i32_0 : i32, i32
  }
  func.func @transform_2(%arg0: i32) -> (i32, i32) {
    %c0_i32 = arith.constant 0 : i32
    %c0_i32_0 = arith.constant 0 : i32
    %c0_i32_1 = arith.constant 0 : i32
    return %c0_i32, %c0_i32_0 : i32, i32
  }
  func.func @transform_3(%arg0: i32) -> (i32, i32) {
    %c0_i32 = arith.constant 0 : i32
    %c0_i32_0 = arith.constant 0 : i32
    %c0_i32_1 = arith.constant 0 : i32
    return %c0_i32, %c0_i32_0 : i32, i32
  }
  func.func @transform_4(%arg0: i32) -> (i32, i32) {
    %c0_i32 = arith.constant 0 : i32
    %c0_i32_0 = arith.constant 0 : i32
    %c0_i32_1 = arith.constant 0 : i32
    return %c0_i32, %c0_i32_0 : i32, i32
  }
  func.func @transform_5(%arg0: i32) -> (i32, i32) {
    %c0_i32 = arith.constant 0 : i32
    %c0_i32_0 = arith.constant 0 : i32
    return %arg0, %c0_i32 : i32, i32
  }
}

module attributes {stable_mosaic.version = 11 : i64} {
  func.func @_block_kernel(%arg0: i32, %arg1: i32, %arg2: memref<48x64xf32, #tpu.memory_space<vmem>>, %arg3: memref<1x1x64xf32, #tpu.memory_space<vmem>>, %arg4: memref<1x1x64xf32, #tpu.memory_space<vmem>>, %arg5: memref<1x64x192xbf16, #tpu.memory_space<vmem>>, %arg6: memref<1x1x192xf32, #tpu.memory_space<vmem>>, %arg7: memref<1x64x64xbf16, #tpu.memory_space<vmem>>, %arg8: memref<1x1x64xf32, #tpu.memory_space<vmem>>, %arg9: memref<1x1x64xf32, #tpu.memory_space<vmem>>, %arg10: memref<1x1x64xf32, #tpu.memory_space<vmem>>, %arg11: memref<1x64x256xbf16, #tpu.memory_space<vmem>>, %arg12: memref<1x1x256xf32, #tpu.memory_space<vmem>>, %arg13: memref<1x256x64xbf16, #tpu.memory_space<vmem>>, %arg14: memref<1x1x64xf32, #tpu.memory_space<vmem>>, %arg15: memref<48x64xf32, #tpu.memory_space<vmem>>, %arg16: memref<48x64xf32, #tpu.memory_space<vmem>>) attributes {dimension_semantics = [#tpu.dimension_semantics<parallel>, #tpu.dimension_semantics<arbitrary>], iteration_bounds = array<i64: 1, 2>, scalar_prefetch = 0 : i64, scratch_operands = 1 : i64, tpu.core_type = #tpu.core_type<tc>, window_params = [{transform_indices = @transform_0, window_bounds = array<i64: 48, 64>}, {transform_indices = @transform_1, window_bounds = array<i64: 1, 1, 64>}, {transform_indices = @transform_2, window_bounds = array<i64: 1, 1, 64>}, {transform_indices = @transform_3, window_bounds = array<i64: 1, 64, 192>}, {transform_indices = @transform_4, window_bounds = array<i64: 1, 1, 192>}, {transform_indices = @transform_5, window_bounds = array<i64: 1, 64, 64>}, {transform_indices = @transform_6, window_bounds = array<i64: 1, 1, 64>}, {transform_indices = @transform_7, window_bounds = array<i64: 1, 1, 64>}, {transform_indices = @transform_8, window_bounds = array<i64: 1, 1, 64>}, {transform_indices = @transform_9, window_bounds = array<i64: 1, 64, 256>}, {transform_indices = @transform_10, window_bounds = array<i64: 1, 1, 256>}, {transform_indices = @transform_11, window_bounds = array<i64: 1, 256, 64>}, {transform_indices = @transform_12, window_bounds = array<i64: 1, 1, 64>}, {transform_indices = @transform_13, window_bounds = array<i64: 48, 64>}]} {
    %c0_i32 = arith.constant 0 : i32
    %0 = arith.cmpi eq, %arg1, %c0_i32 : i32
    %1 = arith.extui %0 : i1 to i32
    %c0_i32_0 = arith.constant 0 : i32
    %2 = arith.cmpi ne, %1, %c0_i32_0 : i32
    scf.if %2 {
      %c0_112 = arith.constant 0 : index
      %c0_113 = arith.constant 0 : index
      %261 = vector.load %arg2[%c0_112, %c0_113] : memref<48x64xf32, #tpu.memory_space<vmem>>, vector<48x64xf32>
      %c0_114 = arith.constant 0 : index
      %c0_115 = arith.constant 0 : index
      %262 = vector.load %arg15[%c0_114, %c0_115] : memref<48x64xf32, #tpu.memory_space<vmem>>, vector<48x64xf32>
      tpu.vector_store %arg15[%c0_114, %c0_115], %261 {strides = array<i32>} : memref<48x64xf32, #tpu.memory_space<vmem>>, vector<48x64xf32>,
    } else {
    }
    %c0 = arith.constant 0 : index
    %c0_1 = arith.constant 0 : index
    %3 = vector.load %arg15[%c0, %c0_1] : memref<48x64xf32, #tpu.memory_space<vmem>>, vector<48x64xf32>
    %c0_2 = arith.constant 0 : index
    %c0_3 = arith.constant 0 : index
    %c0_4 = arith.constant 0 : index
    %4 = vector.load %arg3[%c0_2, %c0_3, %c0_4] : memref<1x1x64xf32, #tpu.memory_space<vmem>>, vector<1x1x64xf32>
    %5 = vector.shape_cast %4 : vector<1x1x64xf32> to vector<1x64xf32>
    %c0_5 = arith.constant 0 : index
    %c0_6 = arith.constant 0 : index
    %c0_7 = arith.constant 0 : index
    %6 = vector.load %arg4[%c0_5, %c0_6, %c0_7] : memref<1x1x64xf32, #tpu.memory_space<vmem>>, vector<1x1x64xf32>
    %7 = vector.shape_cast %6 : vector<1x1x64xf32> to vector<1x64xf32>
    %cst = arith.constant dense<0.000000e+00> : vector<48xf32>
    %8 = vector.multi_reduction <add>, %3, %cst [1] : vector<48x64xf32> to vector<48xf32>
    %9 = vector.shape_cast %8 : vector<48xf32> to vector<48x1xf32>
    %cst_8 = arith.constant 6.400000e+01 : f32
    %10 = vector.broadcast %cst_8 : f32 to vector<48x1xf32>
    %11 = arith.divf %9, %10 : vector<48x1xf32>
    %12 = vector.broadcast %11 : vector<48x1xf32> to vector<48x64xf32>
    %13 = arith.subf %3, %12 : vector<48x64xf32>
    %14 = arith.mulf %13, %13 : vector<48x64xf32>
    %cst_9 = arith.constant dense<0.000000e+00> : vector<48xf32>
    %15 = vector.multi_reduction <add>, %14, %cst_9 [1] : vector<48x64xf32> to vector<48xf32>
    %16 = vector.shape_cast %15 : vector<48xf32> to vector<48x1xf32>
    %cst_10 = arith.constant 6.400000e+01 : f32
    %17 = vector.broadcast %cst_10 : f32 to vector<48x1xf32>
    %18 = arith.divf %16, %17 : vector<48x1xf32>
    %cst_11 = arith.constant 9.99999974E-6 : f32
    %19 = vector.broadcast %cst_11 : f32 to vector<48x1xf32>
    %20 = arith.addf %18, %19 : vector<48x1xf32>
    %21 = math.rsqrt %20 : vector<48x1xf32>
    %22 = vector.broadcast %21 : vector<48x1xf32> to vector<48x64xf32>
    %23 = arith.mulf %13, %22 : vector<48x64xf32>
    %24 = vector.broadcast %5 : vector<1x64xf32> to vector<48x64xf32>
    %25 = arith.mulf %23, %24 : vector<48x64xf32>
    %26 = vector.broadcast %7 : vector<1x64xf32> to vector<48x64xf32>
    %27 = arith.addf %25, %26 : vector<48x64xf32>
    %28 = arith.truncf %27 : vector<48x64xf32> to vector<48x64xbf16>
    %c0_12 = arith.constant 0 : index
    %c0_13 = arith.constant 0 : index
    %c0_14 = arith.constant 0 : index
    %29 = vector.load %arg5[%c0_12, %c0_13, %c0_14] : memref<1x64x192xbf16, #tpu.memory_space<vmem>>, vector<1x64x192xbf16>
    %30 = vector.shape_cast %29 : vector<1x64x192xbf16> to vector<64x192xbf16>
    %cst_15 = arith.constant dense<0.000000e+00> : vector<48x192xf32>
    %31 = tpu.matmul %28, %30, %cst_15 {dimension_numbers = #tpu.dot_dimension_numbers<[1], [0], [0], [1], [0, 0, 1, 1], [], []>} : vector<48x64xbf16>, vector<64x192xbf16>, vector<48x192xf32> -> vector<48x192xf32>
    %c0_16 = arith.constant 0 : index
    %c0_17 = arith.constant 0 : index
    %c0_18 = arith.constant 0 : index
    %32 = vector.load %arg6[%c0_16, %c0_17, %c0_18] : memref<1x1x192xf32, #tpu.memory_space<vmem>>, vector<1x1x192xf32>
    %33 = vector.shape_cast %32 : vector<1x1x192xf32> to vector<1x192xf32>
    %34 = vector.broadcast %33 : vector<1x192xf32> to vector<48x192xf32>
    %35 = arith.addf %31, %34 : vector<48x192xf32>
    %36 = vector.extract_strided_slice %35 {offsets = [0, 0], sizes = [48, 64], strides = [1, 1]} : vector<48x192xf32> to vector<48x64xf32>
    %cst_19 = arith.constant 2.500000e-01 : f32
    %37 = vector.broadcast %cst_19 : f32 to vector<48x64xf32>
    %38 = arith.mulf %36, %37 : vector<48x64xf32>
    %39 = vector.extract_strided_slice %35 {offsets = [0, 64], sizes = [48, 64], strides = [1, 1]} : vector<48x192xf32> to vector<48x64xf32>
    %40 = vector.extract_strided_slice %35 {offsets = [0, 128], sizes = [48, 64], strides = [1, 1]} : vector<48x192xf32> to vector<48x64xf32>
    %41 = tpu.iota {dimensions = array<i32: 1>} : vector<1x24xi32>
    %c17_i32 = arith.constant 17 : i32
    %42 = vector.broadcast %c17_i32 : i32 to vector<1x24xi32>
    %43 = arith.cmpi slt, %41, %42 : vector<1x24xi32>
    %44 = vector.extract_strided_slice %38 {offsets = [0, 0], sizes = [24, 16], strides = [1, 1]} : vector<48x64xf32> to vector<24x16xf32>
    %45 = vector.extract_strided_slice %39 {offsets = [0, 0], sizes = [24, 16], strides = [1, 1]} : vector<48x64xf32> to vector<24x16xf32>
    %46 = vector.extract_strided_slice %40 {offsets = [0, 0], sizes = [24, 16], strides = [1, 1]} : vector<48x64xf32> to vector<24x16xf32>
    %cst_20 = arith.constant dense<0.000000e+00> : vector<24x24xf32>
    %47 = tpu.matmul %44, %45, %cst_20 {dimension_numbers = #tpu.dot_dimension_numbers<[1], [1], [0], [0], [0, 0, 1, 0], [], []>} : vector<24x16xf32>, vector<24x16xf32>, vector<24x24xf32> -> vector<24x24xf32>
    %cst_21 = arith.constant -1.000000e+30 : f32
    %48 = vector.shape_cast %43 : vector<1x24xi1> to vector<1x24xi1>
    %49 = vector.broadcast %48 : vector<1x24xi1> to vector<24x24xi1>
    %50 = vector.broadcast %cst_21 : f32 to vector<24x24xf32>
    %51 = arith.select %49, %47, %50 : vector<24x24xi1>, vector<24x24xf32>
    %cst_22 = arith.constant dense<0xFF800000> : vector<24xf32>
    %52 = vector.multi_reduction <maximumf>, %51, %cst_22 [1] : vector<24x24xf32> to vector<24xf32>
    %53 = vector.shape_cast %52 : vector<24xf32> to vector<24x1xf32>
    %54 = vector.broadcast %53 : vector<24x1xf32> to vector<24x24xf32>
    %55 = arith.subf %51, %54 : vector<24x24xf32>
    %56 = math.exp %55 : vector<24x24xf32>
    %cst_23 = arith.constant dense<0.000000e+00> : vector<24xf32>
    %57 = vector.multi_reduction <add>, %56, %cst_23 [1] : vector<24x24xf32> to vector<24xf32>
    %58 = vector.shape_cast %57 : vector<24xf32> to vector<24x1xf32>
    %59 = vector.broadcast %58 : vector<24x1xf32> to vector<24x24xf32>
    %60 = arith.divf %56, %59 : vector<24x24xf32>
    %cst_24 = arith.constant dense<0.000000e+00> : vector<24x16xf32>
    %61 = tpu.matmul %60, %46, %cst_24 {dimension_numbers = #tpu.dot_dimension_numbers<[1], [0], [0], [1], [0, 0, 1, 1], [], []>} : vector<24x24xf32>, vector<24x16xf32>, vector<24x16xf32> -> vector<24x16xf32>
    %c0_25 = arith.constant 0 : index
    %c0_26 = arith.constant 0 : index
    %62 = vector.load %arg16[%c0_25, %c0_26] : memref<48x64xf32, #tpu.memory_space<vmem>>, vector<24x16xf32>
    tpu.vector_store %arg16[%c0_25, %c0_26], %61 {strides = array<i32>} : memref<48x64xf32, #tpu.memory_space<vmem>>, vector<24x16xf32>,
    %63 = vector.extract_strided_slice %38 {offsets = [0, 16], sizes = [24, 16], strides = [1, 1]} : vector<48x64xf32> to vector<24x16xf32>
    %64 = vector.extract_strided_slice %39 {offsets = [0, 16], sizes = [24, 16], strides = [1, 1]} : vector<48x64xf32> to vector<24x16xf32>
    %65 = vector.extract_strided_slice %40 {offsets = [0, 16], sizes = [24, 16], strides = [1, 1]} : vector<48x64xf32> to vector<24x16xf32>
    %cst_27 = arith.constant dense<0.000000e+00> : vector<24x24xf32>
    %66 = tpu.matmul %63, %64, %cst_27 {dimension_numbers = #tpu.dot_dimension_numbers<[1], [1], [0], [0], [0, 0, 1, 0], [], []>} : vector<24x16xf32>, vector<24x16xf32>, vector<24x24xf32> -> vector<24x24xf32>
    %cst_28 = arith.constant -1.000000e+30 : f32
    %67 = vector.shape_cast %43 : vector<1x24xi1> to vector<1x24xi1>
    %68 = vector.broadcast %67 : vector<1x24xi1> to vector<24x24xi1>
    %69 = vector.broadcast %cst_28 : f32 to vector<24x24xf32>
    %70 = arith.select %68, %66, %69 : vector<24x24xi1>, vector<24x24xf32>
    %cst_29 = arith.constant dense<0xFF800000> : vector<24xf32>
    %71 = vector.multi_reduction <maximumf>, %70, %cst_29 [1] : vector<24x24xf32> to vector<24xf32>
    %72 = vector.shape_cast %71 : vector<24xf32> to vector<24x1xf32>
    %73 = vector.broadcast %72 : vector<24x1xf32> to vector<24x24xf32>
    %74 = arith.subf %70, %73 : vector<24x24xf32>
    %75 = math.exp %74 : vector<24x24xf32>
    %cst_30 = arith.constant dense<0.000000e+00> : vector<24xf32>
    %76 = vector.multi_reduction <add>, %75, %cst_30 [1] : vector<24x24xf32> to vector<24xf32>
    %77 = vector.shape_cast %76 : vector<24xf32> to vector<24x1xf32>
    %78 = vector.broadcast %77 : vector<24x1xf32> to vector<24x24xf32>
    %79 = arith.divf %75, %78 : vector<24x24xf32>
    %cst_31 = arith.constant dense<0.000000e+00> : vector<24x16xf32>
    %80 = tpu.matmul %79, %65, %cst_31 {dimension_numbers = #tpu.dot_dimension_numbers<[1], [0], [0], [1], [0, 0, 1, 1], [], []>} : vector<24x24xf32>, vector<24x16xf32>, vector<24x16xf32> -> vector<24x16xf32>
    %c0_32 = arith.constant 0 : index
    %c16 = arith.constant 16 : index
    %81 = vector.load %arg16[%c0_32, %c16] : memref<48x64xf32, #tpu.memory_space<vmem>>, vector<24x16xf32>
    tpu.vector_store %arg16[%c0_32, %c16], %80 {strides = array<i32>} : memref<48x64xf32, #tpu.memory_space<vmem>>, vector<24x16xf32>,
    %82 = vector.extract_strided_slice %38 {offsets = [0, 32], sizes = [24, 16], strides = [1, 1]} : vector<48x64xf32> to vector<24x16xf32>
    %83 = vector.extract_strided_slice %39 {offsets = [0, 32], sizes = [24, 16], strides = [1, 1]} : vector<48x64xf32> to vector<24x16xf32>
    %84 = vector.extract_strided_slice %40 {offsets = [0, 32], sizes = [24, 16], strides = [1, 1]} : vector<48x64xf32> to vector<24x16xf32>
    %cst_33 = arith.constant dense<0.000000e+00> : vector<24x24xf32>
    %85 = tpu.matmul %82, %83, %cst_33 {dimension_numbers = #tpu.dot_dimension_numbers<[1], [1], [0], [0], [0, 0, 1, 0], [], []>} : vector<24x16xf32>, vector<24x16xf32>, vector<24x24xf32> -> vector<24x24xf32>
    %cst_34 = arith.constant -1.000000e+30 : f32
    %86 = vector.shape_cast %43 : vector<1x24xi1> to vector<1x24xi1>
    %87 = vector.broadcast %86 : vector<1x24xi1> to vector<24x24xi1>
    %88 = vector.broadcast %cst_34 : f32 to vector<24x24xf32>
    %89 = arith.select %87, %85, %88 : vector<24x24xi1>, vector<24x24xf32>
    %cst_35 = arith.constant dense<0xFF800000> : vector<24xf32>
    %90 = vector.multi_reduction <maximumf>, %89, %cst_35 [1] : vector<24x24xf32> to vector<24xf32>
    %91 = vector.shape_cast %90 : vector<24xf32> to vector<24x1xf32>
    %92 = vector.broadcast %91 : vector<24x1xf32> to vector<24x24xf32>
    %93 = arith.subf %89, %92 : vector<24x24xf32>
    %94 = math.exp %93 : vector<24x24xf32>
    %cst_36 = arith.constant dense<0.000000e+00> : vector<24xf32>
    %95 = vector.multi_reduction <add>, %94, %cst_36 [1] : vector<24x24xf32> to vector<24xf32>
    %96 = vector.shape_cast %95 : vector<24xf32> to vector<24x1xf32>
    %97 = vector.broadcast %96 : vector<24x1xf32> to vector<24x24xf32>
    %98 = arith.divf %94, %97 : vector<24x24xf32>
    %cst_37 = arith.constant dense<0.000000e+00> : vector<24x16xf32>
    %99 = tpu.matmul %98, %84, %cst_37 {dimension_numbers = #tpu.dot_dimension_numbers<[1], [0], [0], [1], [0, 0, 1, 1], [], []>} : vector<24x24xf32>, vector<24x16xf32>, vector<24x16xf32> -> vector<24x16xf32>
    %c0_38 = arith.constant 0 : index
    %c32 = arith.constant 32 : index
    %100 = vector.load %arg16[%c0_38, %c32] : memref<48x64xf32, #tpu.memory_space<vmem>>, vector<24x16xf32>
    tpu.vector_store %arg16[%c0_38, %c32], %99 {strides = array<i32>} : memref<48x64xf32, #tpu.memory_space<vmem>>, vector<24x16xf32>,
    %101 = vector.extract_strided_slice %38 {offsets = [0, 48], sizes = [24, 16], strides = [1, 1]} : vector<48x64xf32> to vector<24x16xf32>
    %102 = vector.extract_strided_slice %39 {offsets = [0, 48], sizes = [24, 16], strides = [1, 1]} : vector<48x64xf32> to vector<24x16xf32>
    %103 = vector.extract_strided_slice %40 {offsets = [0, 48], sizes = [24, 16], strides = [1, 1]} : vector<48x64xf32> to vector<24x16xf32>
    %cst_39 = arith.constant dense<0.000000e+00> : vector<24x24xf32>
    %104 = tpu.matmul %101, %102, %cst_39 {dimension_numbers = #tpu.dot_dimension_numbers<[1], [1], [0], [0], [0, 0, 1, 0], [], []>} : vector<24x16xf32>, vector<24x16xf32>, vector<24x24xf32> -> vector<24x24xf32>
    %cst_40 = arith.constant -1.000000e+30 : f32
    %105 = vector.shape_cast %43 : vector<1x24xi1> to vector<1x24xi1>
    %106 = vector.broadcast %105 : vector<1x24xi1> to vector<24x24xi1>
    %107 = vector.broadcast %cst_40 : f32 to vector<24x24xf32>
    %108 = arith.select %106, %104, %107 : vector<24x24xi1>, vector<24x24xf32>
    %cst_41 = arith.constant dense<0xFF800000> : vector<24xf32>
    %109 = vector.multi_reduction <maximumf>, %108, %cst_41 [1] : vector<24x24xf32> to vector<24xf32>
    %110 = vector.shape_cast %109 : vector<24xf32> to vector<24x1xf32>
    %111 = vector.broadcast %110 : vector<24x1xf32> to vector<24x24xf32>
    %112 = arith.subf %108, %111 : vector<24x24xf32>
    %113 = math.exp %112 : vector<24x24xf32>
    %cst_42 = arith.constant dense<0.000000e+00> : vector<24xf32>
    %114 = vector.multi_reduction <add>, %113, %cst_42 [1] : vector<24x24xf32> to vector<24xf32>
    %115 = vector.shape_cast %114 : vector<24xf32> to vector<24x1xf32>
    %116 = vector.broadcast %115 : vector<24x1xf32> to vector<24x24xf32>
    %117 = arith.divf %113, %116 : vector<24x24xf32>
    %cst_43 = arith.constant dense<0.000000e+00> : vector<24x16xf32>
    %118 = tpu.matmul %117, %103, %cst_43 {dimension_numbers = #tpu.dot_dimension_numbers<[1], [0], [0], [1], [0, 0, 1, 1], [], []>} : vector<24x24xf32>, vector<24x16xf32>, vector<24x16xf32> -> vector<24x16xf32>
    %c0_44 = arith.constant 0 : index
    %c48 = arith.constant 48 : index
    %119 = vector.load %arg16[%c0_44, %c48] : memref<48x64xf32, #tpu.memory_space<vmem>>, vector<24x16xf32>
    tpu.vector_store %arg16[%c0_44, %c48], %118 {strides = array<i32>} : memref<48x64xf32, #tpu.memory_space<vmem>>, vector<24x16xf32>,
    %120 = vector.extract_strided_slice %38 {offsets = [24, 0], sizes = [24, 16], strides = [1, 1]} : vector<48x64xf32> to vector<24x16xf32>
    %121 = vector.extract_strided_slice %39 {offsets = [24, 0], sizes = [24, 16], strides = [1, 1]} : vector<48x64xf32> to vector<24x16xf32>
    %122 = vector.extract_strided_slice %40 {offsets = [24, 0], sizes = [24, 16], strides = [1, 1]} : vector<48x64xf32> to vector<24x16xf32>
    %cst_45 = arith.constant dense<0.000000e+00> : vector<24x24xf32>
    %123 = tpu.matmul %120, %121, %cst_45 {dimension_numbers = #tpu.dot_dimension_numbers<[1], [1], [0], [0], [0, 0, 1, 0], [], []>} : vector<24x16xf32>, vector<24x16xf32>, vector<24x24xf32> -> vector<24x24xf32>
    %cst_46 = arith.constant -1.000000e+30 : f32
    %124 = vector.shape_cast %43 : vector<1x24xi1> to vector<1x24xi1>
    %125 = vector.broadcast %124 : vector<1x24xi1> to vector<24x24xi1>
    %126 = vector.broadcast %cst_46 : f32 to vector<24x24xf32>
    %127 = arith.select %125, %123, %126 : vector<24x24xi1>, vector<24x24xf32>
    %cst_47 = arith.constant dense<0xFF800000> : vector<24xf32>
    %128 = vector.multi_reduction <maximumf>, %127, %cst_47 [1] : vector<24x24xf32> to vector<24xf32>
    %129 = vector.shape_cast %128 : vector<24xf32> to vector<24x1xf32>
    %130 = vector.broadcast %129 : vector<24x1xf32> to vector<24x24xf32>
    %131 = arith.subf %127, %130 : vector<24x24xf32>
    %132 = math.exp %131 : vector<24x24xf32>
    %cst_48 = arith.constant dense<0.000000e+00> : vector<24xf32>
    %133 = vector.multi_reduction <add>, %132, %cst_48 [1] : vector<24x24xf32> to vector<24xf32>
    %134 = vector.shape_cast %133 : vector<24xf32> to vector<24x1xf32>
    %135 = vector.broadcast %134 : vector<24x1xf32> to vector<24x24xf32>
    %136 = arith.divf %132, %135 : vector<24x24xf32>
    %cst_49 = arith.constant dense<0.000000e+00> : vector<24x16xf32>
    %137 = tpu.matmul %136, %122, %cst_49 {dimension_numbers = #tpu.dot_dimension_numbers<[1], [0], [0], [1], [0, 0, 1, 1], [], []>} : vector<24x24xf32>, vector<24x16xf32>, vector<24x16xf32> -> vector<24x16xf32>
    %c24 = arith.constant 24 : index
    %c0_50 = arith.constant 0 : index
    %138 = vector.load %arg16[%c24, %c0_50] : memref<48x64xf32, #tpu.memory_space<vmem>>, vector<24x16xf32>
    tpu.vector_store %arg16[%c24, %c0_50], %137 {strides = array<i32>} : memref<48x64xf32, #tpu.memory_space<vmem>>, vector<24x16xf32>,
    %139 = vector.extract_strided_slice %38 {offsets = [24, 16], sizes = [24, 16], strides = [1, 1]} : vector<48x64xf32> to vector<24x16xf32>
    %140 = vector.extract_strided_slice %39 {offsets = [24, 16], sizes = [24, 16], strides = [1, 1]} : vector<48x64xf32> to vector<24x16xf32>
    %141 = vector.extract_strided_slice %40 {offsets = [24, 16], sizes = [24, 16], strides = [1, 1]} : vector<48x64xf32> to vector<24x16xf32>
    %cst_51 = arith.constant dense<0.000000e+00> : vector<24x24xf32>
    %142 = tpu.matmul %139, %140, %cst_51 {dimension_numbers = #tpu.dot_dimension_numbers<[1], [1], [0], [0], [0, 0, 1, 0], [], []>} : vector<24x16xf32>, vector<24x16xf32>, vector<24x24xf32> -> vector<24x24xf32>
    %cst_52 = arith.constant -1.000000e+30 : f32
    %143 = vector.shape_cast %43 : vector<1x24xi1> to vector<1x24xi1>
    %144 = vector.broadcast %143 : vector<1x24xi1> to vector<24x24xi1>
    %145 = vector.broadcast %cst_52 : f32 to vector<24x24xf32>
    %146 = arith.select %144, %142, %145 : vector<24x24xi1>, vector<24x24xf32>
    %cst_53 = arith.constant dense<0xFF800000> : vector<24xf32>
    %147 = vector.multi_reduction <maximumf>, %146, %cst_53 [1] : vector<24x24xf32> to vector<24xf32>
    %148 = vector.shape_cast %147 : vector<24xf32> to vector<24x1xf32>
    %149 = vector.broadcast %148 : vector<24x1xf32> to vector<24x24xf32>
    %150 = arith.subf %146, %149 : vector<24x24xf32>
    %151 = math.exp %150 : vector<24x24xf32>
    %cst_54 = arith.constant dense<0.000000e+00> : vector<24xf32>
    %152 = vector.multi_reduction <add>, %151, %cst_54 [1] : vector<24x24xf32> to vector<24xf32>
    %153 = vector.shape_cast %152 : vector<24xf32> to vector<24x1xf32>
    %154 = vector.broadcast %153 : vector<24x1xf32> to vector<24x24xf32>
    %155 = arith.divf %151, %154 : vector<24x24xf32>
    %cst_55 = arith.constant dense<0.000000e+00> : vector<24x16xf32>
    %156 = tpu.matmul %155, %141, %cst_55 {dimension_numbers = #tpu.dot_dimension_numbers<[1], [0], [0], [1], [0, 0, 1, 1], [], []>} : vector<24x24xf32>, vector<24x16xf32>, vector<24x16xf32> -> vector<24x16xf32>
    %c24_56 = arith.constant 24 : index
    %c16_57 = arith.constant 16 : index
    %157 = vector.load %arg16[%c24_56, %c16_57] : memref<48x64xf32, #tpu.memory_space<vmem>>, vector<24x16xf32>
    tpu.vector_store %arg16[%c24_56, %c16_57], %156 {strides = array<i32>} : memref<48x64xf32, #tpu.memory_space<vmem>>, vector<24x16xf32>,
    %158 = vector.extract_strided_slice %38 {offsets = [24, 32], sizes = [24, 16], strides = [1, 1]} : vector<48x64xf32> to vector<24x16xf32>
    %159 = vector.extract_strided_slice %39 {offsets = [24, 32], sizes = [24, 16], strides = [1, 1]} : vector<48x64xf32> to vector<24x16xf32>
    %160 = vector.extract_strided_slice %40 {offsets = [24, 32], sizes = [24, 16], strides = [1, 1]} : vector<48x64xf32> to vector<24x16xf32>
    %cst_58 = arith.constant dense<0.000000e+00> : vector<24x24xf32>
    %161 = tpu.matmul %158, %159, %cst_58 {dimension_numbers = #tpu.dot_dimension_numbers<[1], [1], [0], [0], [0, 0, 1, 0], [], []>} : vector<24x16xf32>, vector<24x16xf32>, vector<24x24xf32> -> vector<24x24xf32>
    %cst_59 = arith.constant -1.000000e+30 : f32
    %162 = vector.shape_cast %43 : vector<1x24xi1> to vector<1x24xi1>
    %163 = vector.broadcast %162 : vector<1x24xi1> to vector<24x24xi1>
    %164 = vector.broadcast %cst_59 : f32 to vector<24x24xf32>
    %165 = arith.select %163, %161, %164 : vector<24x24xi1>, vector<24x24xf32>
    %cst_60 = arith.constant dense<0xFF800000> : vector<24xf32>
    %166 = vector.multi_reduction <maximumf>, %165, %cst_60 [1] : vector<24x24xf32> to vector<24xf32>
    %167 = vector.shape_cast %166 : vector<24xf32> to vector<24x1xf32>
    %168 = vector.broadcast %167 : vector<24x1xf32> to vector<24x24xf32>
    %169 = arith.subf %165, %168 : vector<24x24xf32>
    %170 = math.exp %169 : vector<24x24xf32>
    %cst_61 = arith.constant dense<0.000000e+00> : vector<24xf32>
    %171 = vector.multi_reduction <add>, %170, %cst_61 [1] : vector<24x24xf32> to vector<24xf32>
    %172 = vector.shape_cast %171 : vector<24xf32> to vector<24x1xf32>
    %173 = vector.broadcast %172 : vector<24x1xf32> to vector<24x24xf32>
    %174 = arith.divf %170, %173 : vector<24x24xf32>
    %cst_62 = arith.constant dense<0.000000e+00> : vector<24x16xf32>
    %175 = tpu.matmul %174, %160, %cst_62 {dimension_numbers = #tpu.dot_dimension_numbers<[1], [0], [0], [1], [0, 0, 1, 1], [], []>} : vector<24x24xf32>, vector<24x16xf32>, vector<24x16xf32> -> vector<24x16xf32>
    %c24_63 = arith.constant 24 : index
    %c32_64 = arith.constant 32 : index
    %176 = vector.load %arg16[%c24_63, %c32_64] : memref<48x64xf32, #tpu.memory_space<vmem>>, vector<24x16xf32>
    tpu.vector_store %arg16[%c24_63, %c32_64], %175 {strides = array<i32>} : memref<48x64xf32, #tpu.memory_space<vmem>>, vector<24x16xf32>,
    %177 = vector.extract_strided_slice %38 {offsets = [24, 48], sizes = [24, 16], strides = [1, 1]} : vector<48x64xf32> to vector<24x16xf32>
    %178 = vector.extract_strided_slice %39 {offsets = [24, 48], sizes = [24, 16], strides = [1, 1]} : vector<48x64xf32> to vector<24x16xf32>
    %179 = vector.extract_strided_slice %40 {offsets = [24, 48], sizes = [24, 16], strides = [1, 1]} : vector<48x64xf32> to vector<24x16xf32>
    %cst_65 = arith.constant dense<0.000000e+00> : vector<24x24xf32>
    %180 = tpu.matmul %177, %178, %cst_65 {dimension_numbers = #tpu.dot_dimension_numbers<[1], [1], [0], [0], [0, 0, 1, 0], [], []>} : vector<24x16xf32>, vector<24x16xf32>, vector<24x24xf32> -> vector<24x24xf32>
    %cst_66 = arith.constant -1.000000e+30 : f32
    %181 = vector.shape_cast %43 : vector<1x24xi1> to vector<1x24xi1>
    %182 = vector.broadcast %181 : vector<1x24xi1> to vector<24x24xi1>
    %183 = vector.broadcast %cst_66 : f32 to vector<24x24xf32>
    %184 = arith.select %182, %180, %183 : vector<24x24xi1>, vector<24x24xf32>
    %cst_67 = arith.constant dense<0xFF800000> : vector<24xf32>
    %185 = vector.multi_reduction <maximumf>, %184, %cst_67 [1] : vector<24x24xf32> to vector<24xf32>
    %186 = vector.shape_cast %185 : vector<24xf32> to vector<24x1xf32>
    %187 = vector.broadcast %186 : vector<24x1xf32> to vector<24x24xf32>
    %188 = arith.subf %184, %187 : vector<24x24xf32>
    %189 = math.exp %188 : vector<24x24xf32>
    %cst_68 = arith.constant dense<0.000000e+00> : vector<24xf32>
    %190 = vector.multi_reduction <add>, %189, %cst_68 [1] : vector<24x24xf32> to vector<24xf32>
    %191 = vector.shape_cast %190 : vector<24xf32> to vector<24x1xf32>
    %192 = vector.broadcast %191 : vector<24x1xf32> to vector<24x24xf32>
    %193 = arith.divf %189, %192 : vector<24x24xf32>
    %cst_69 = arith.constant dense<0.000000e+00> : vector<24x16xf32>
    %194 = tpu.matmul %193, %179, %cst_69 {dimension_numbers = #tpu.dot_dimension_numbers<[1], [0], [0], [1], [0, 0, 1, 1], [], []>} : vector<24x24xf32>, vector<24x16xf32>, vector<24x16xf32> -> vector<24x16xf32>
    %c24_70 = arith.constant 24 : index
    %c48_71 = arith.constant 48 : index
    %195 = vector.load %arg16[%c24_70, %c48_71] : memref<48x64xf32, #tpu.memory_space<vmem>>, vector<24x16xf32>
    tpu.vector_store %arg16[%c24_70, %c48_71], %194 {strides = array<i32>} : memref<48x64xf32, #tpu.memory_space<vmem>>, vector<24x16xf32>,
    %c0_72 = arith.constant 0 : index
    %c0_73 = arith.constant 0 : index
    %196 = vector.load %arg16[%c0_72, %c0_73] : memref<48x64xf32, #tpu.memory_space<vmem>>, vector<48x64xf32>
    %197 = arith.truncf %196 : vector<48x64xf32> to vector<48x64xbf16>
    %c0_74 = arith.constant 0 : index
    %c0_75 = arith.constant 0 : index
    %c0_76 = arith.constant 0 : index
    %198 = vector.load %arg7[%c0_74, %c0_75, %c0_76] : memref<1x64x64xbf16, #tpu.memory_space<vmem>>, vector<1x64x64xbf16>
    %199 = vector.shape_cast %198 : vector<1x64x64xbf16> to vector<64x64xbf16>
    %cst_77 = arith.constant dense<0.000000e+00> : vector<48x64xf32>
    %200 = tpu.matmul %197, %199, %cst_77 {dimension_numbers = #tpu.dot_dimension_numbers<[1], [0], [0], [1], [0, 0, 1, 1], [], []>} : vector<48x64xbf16>, vector<64x64xbf16>, vector<48x64xf32> -> vector<48x64xf32>
    %c0_78 = arith.constant 0 : index
    %c0_79 = arith.constant 0 : index
    %c0_80 = arith.constant 0 : index
    %201 = vector.load %arg8[%c0_78, %c0_79, %c0_80] : memref<1x1x64xf32, #tpu.memory_space<vmem>>, vector<1x1x64xf32>
    %202 = vector.shape_cast %201 : vector<1x1x64xf32> to vector<1x64xf32>
    %203 = vector.broadcast %202 : vector<1x64xf32> to vector<48x64xf32>
    %204 = arith.addf %200, %203 : vector<48x64xf32>
    %205 = arith.addf %3, %204 : vector<48x64xf32>
    %c0_81 = arith.constant 0 : index
    %c0_82 = arith.constant 0 : index
    %c0_83 = arith.constant 0 : index
    %206 = vector.load %arg9[%c0_81, %c0_82, %c0_83] : memref<1x1x64xf32, #tpu.memory_space<vmem>>, vector<1x1x64xf32>
    %207 = vector.shape_cast %206 : vector<1x1x64xf32> to vector<1x64xf32>
    %c0_84 = arith.constant 0 : index
    %c0_85 = arith.constant 0 : index
    %c0_86 = arith.constant 0 : index
    %208 = vector.load %arg10[%c0_84, %c0_85, %c0_86] : memref<1x1x64xf32, #tpu.memory_space<vmem>>, vector<1x1x64xf32>
    %209 = vector.shape_cast %208 : vector<1x1x64xf32> to vector<1x64xf32>
    %cst_87 = arith.constant dense<0.000000e+00> : vector<48xf32>
    %210 = vector.multi_reduction <add>, %205, %cst_87 [1] : vector<48x64xf32> to vector<48xf32>
    %211 = vector.shape_cast %210 : vector<48xf32> to vector<48x1xf32>
    %cst_88 = arith.constant 6.400000e+01 : f32
    %212 = vector.broadcast %cst_88 : f32 to vector<48x1xf32>
    %213 = arith.divf %211, %212 : vector<48x1xf32>
    %214 = vector.broadcast %213 : vector<48x1xf32> to vector<48x64xf32>
    %215 = arith.subf %205, %214 : vector<48x64xf32>
    %216 = arith.mulf %215, %215 : vector<48x64xf32>
    %cst_89 = arith.constant dense<0.000000e+00> : vector<48xf32>
    %217 = vector.multi_reduction <add>, %216, %cst_89 [1] : vector<48x64xf32> to vector<48xf32>
    %218 = vector.shape_cast %217 : vector<48xf32> to vector<48x1xf32>
    %cst_90 = arith.constant 6.400000e+01 : f32
    %219 = vector.broadcast %cst_90 : f32 to vector<48x1xf32>
    %220 = arith.divf %218, %219 : vector<48x1xf32>
    %cst_91 = arith.constant 9.99999974E-6 : f32
    %221 = vector.broadcast %cst_91 : f32 to vector<48x1xf32>
    %222 = arith.addf %220, %221 : vector<48x1xf32>
    %223 = math.rsqrt %222 : vector<48x1xf32>
    %224 = vector.broadcast %223 : vector<48x1xf32> to vector<48x64xf32>
    %225 = arith.mulf %215, %224 : vector<48x64xf32>
    %226 = vector.broadcast %207 : vector<1x64xf32> to vector<48x64xf32>
    %227 = arith.mulf %225, %226 : vector<48x64xf32>
    %228 = vector.broadcast %209 : vector<1x64xf32> to vector<48x64xf32>
    %229 = arith.addf %227, %228 : vector<48x64xf32>
    %230 = arith.truncf %229 : vector<48x64xf32> to vector<48x64xbf16>
    %c0_92 = arith.constant 0 : index
    %c0_93 = arith.constant 0 : index
    %c0_94 = arith.constant 0 : index
    %231 = vector.load %arg11[%c0_92, %c0_93, %c0_94] : memref<1x64x256xbf16, #tpu.memory_space<vmem>>, vector<1x64x256xbf16>
    %232 = vector.shape_cast %231 : vector<1x64x256xbf16> to vector<64x256xbf16>
    %cst_95 = arith.constant dense<0.000000e+00> : vector<48x256xf32>
    %233 = tpu.matmul %230, %232, %cst_95 {dimension_numbers = #tpu.dot_dimension_numbers<[1], [0], [0], [1], [0, 0, 1, 1], [], []>} : vector<48x64xbf16>, vector<64x256xbf16>, vector<48x256xf32> -> vector<48x256xf32>
    %c0_96 = arith.constant 0 : index
    %c0_97 = arith.constant 0 : index
    %c0_98 = arith.constant 0 : index
    %234 = vector.load %arg12[%c0_96, %c0_97, %c0_98] : memref<1x1x256xf32, #tpu.memory_space<vmem>>, vector<1x1x256xf32>
    %235 = vector.shape_cast %234 : vector<1x1x256xf32> to vector<1x256xf32>
    %236 = vector.broadcast %235 : vector<1x256xf32> to vector<48x256xf32>
    %237 = arith.addf %233, %236 : vector<48x256xf32>
    %238 = arith.mulf %237, %237 : vector<48x256xf32>
    %239 = arith.mulf %237, %238 : vector<48x256xf32>
    %cst_99 = arith.constant 4.471500e-02 : f32
    %240 = vector.broadcast %cst_99 : f32 to vector<48x256xf32>
    %241 = arith.mulf %240, %239 : vector<48x256xf32>
    %242 = arith.addf %237, %241 : vector<48x256xf32>
    %cst_100 = arith.constant 0.797884583 : f32
    %243 = vector.broadcast %cst_100 : f32 to vector<48x256xf32>
    %244 = arith.mulf %243, %242 : vector<48x256xf32>
    %245 = math.tanh %244 : vector<48x256xf32>
    %cst_101 = arith.constant 1.000000e+00 : f32
    %246 = vector.broadcast %cst_101 : f32 to vector<48x256xf32>
    %247 = arith.addf %246, %245 : vector<48x256xf32>
    %cst_102 = arith.constant 5.000000e-01 : f32
    %248 = vector.broadcast %cst_102 : f32 to vector<48x256xf32>
    %249 = arith.mulf %248, %247 : vector<48x256xf32>
    %250 = arith.mulf %237, %249 : vector<48x256xf32>
    %251 = arith.truncf %250 : vector<48x256xf32> to vector<48x256xbf16>
    %c0_103 = arith.constant 0 : index
    %c0_104 = arith.constant 0 : index
    %c0_105 = arith.constant 0 : index
    %252 = vector.load %arg13[%c0_103, %c0_104, %c0_105] : memref<1x256x64xbf16, #tpu.memory_space<vmem>>, vector<1x256x64xbf16>
    %253 = vector.shape_cast %252 : vector<1x256x64xbf16> to vector<256x64xbf16>
    %cst_106 = arith.constant dense<0.000000e+00> : vector<48x64xf32>
    %254 = tpu.matmul %251, %253, %cst_106 {dimension_numbers = #tpu.dot_dimension_numbers<[1], [0], [0], [1], [0, 0, 1, 1], [], []>} : vector<48x256xbf16>, vector<256x64xbf16>, vector<48x64xf32> -> vector<48x64xf32>
    %c0_107 = arith.constant 0 : index
    %c0_108 = arith.constant 0 : index
    %c0_109 = arith.constant 0 : index
    %255 = vector.load %arg14[%c0_107, %c0_108, %c0_109] : memref<1x1x64xf32, #tpu.memory_space<vmem>>, vector<1x1x64xf32>
    %256 = vector.shape_cast %255 : vector<1x1x64xf32> to vector<1x64xf32>
    %257 = vector.broadcast %256 : vector<1x64xf32> to vector<48x64xf32>
    %258 = arith.addf %254, %257 : vector<48x64xf32>
    %259 = arith.addf %205, %258 : vector<48x64xf32>
    %c0_110 = arith.constant 0 : index
    %c0_111 = arith.constant 0 : index
    %260 = vector.load %arg15[%c0_110, %c0_111] : memref<48x64xf32, #tpu.memory_space<vmem>>, vector<48x64xf32>
    tpu.vector_store %arg15[%c0_110, %c0_111], %259 {strides = array<i32>} : memref<48x64xf32, #tpu.memory_space<vmem>>, vector<48x64xf32>,
    return
  }
  func.func @transform_0(%arg0: i32, %arg1: i32) -> (i32, i32) {
    %c0_i32 = arith.constant 0 : i32
    %c0_i32_0 = arith.constant 0 : i32
    return %arg0, %c0_i32 : i32, i32
  }
  func.func @transform_1(%arg0: i32, %arg1: i32) -> (i32, i32, i32) {
    %c0_i32 = arith.constant 0 : i32
    %c0_i32_0 = arith.constant 0 : i32
    %c0_i32_1 = arith.constant 0 : i32
    return %arg1, %c0_i32, %c0_i32_0 : i32, i32, i32
  }
  func.func @transform_2(%arg0: i32, %arg1: i32) -> (i32, i32, i32) {
    %c0_i32 = arith.constant 0 : i32
    %c0_i32_0 = arith.constant 0 : i32
    %c0_i32_1 = arith.constant 0 : i32
    return %arg1, %c0_i32, %c0_i32_0 : i32, i32, i32
  }
  func.func @transform_3(%arg0: i32, %arg1: i32) -> (i32, i32, i32) {
    %c0_i32 = arith.constant 0 : i32
    %c0_i32_0 = arith.constant 0 : i32
    %c0_i32_1 = arith.constant 0 : i32
    return %arg1, %c0_i32, %c0_i32_0 : i32, i32, i32
  }
  func.func @transform_4(%arg0: i32, %arg1: i32) -> (i32, i32, i32) {
    %c0_i32 = arith.constant 0 : i32
    %c0_i32_0 = arith.constant 0 : i32
    %c0_i32_1 = arith.constant 0 : i32
    return %arg1, %c0_i32, %c0_i32_0 : i32, i32, i32
  }
  func.func @transform_5(%arg0: i32, %arg1: i32) -> (i32, i32, i32) {
    %c0_i32 = arith.constant 0 : i32
    %c0_i32_0 = arith.constant 0 : i32
    %c0_i32_1 = arith.constant 0 : i32
    return %arg1, %c0_i32, %c0_i32_0 : i32, i32, i32
  }
  func.func @transform_6(%arg0: i32, %arg1: i32) -> (i32, i32, i32) {
    %c0_i32 = arith.constant 0 : i32
    %c0_i32_0 = arith.constant 0 : i32
    %c0_i32_1 = arith.constant 0 : i32
    return %arg1, %c0_i32, %c0_i32_0 : i32, i32, i32
  }
  func.func @transform_7(%arg0: i32, %arg1: i32) -> (i32, i32, i32) {
    %c0_i32 = arith.constant 0 : i32
    %c0_i32_0 = arith.constant 0 : i32
    %c0_i32_1 = arith.constant 0 : i32
    return %arg1, %c0_i32, %c0_i32_0 : i32, i32, i32
  }
  func.func @transform_8(%arg0: i32, %arg1: i32) -> (i32, i32, i32) {
    %c0_i32 = arith.constant 0 : i32
    %c0_i32_0 = arith.constant 0 : i32
    %c0_i32_1 = arith.constant 0 : i32
    return %arg1, %c0_i32, %c0_i32_0 : i32, i32, i32
  }
  func.func @transform_9(%arg0: i32, %arg1: i32) -> (i32, i32, i32) {
    %c0_i32 = arith.constant 0 : i32
    %c0_i32_0 = arith.constant 0 : i32
    %c0_i32_1 = arith.constant 0 : i32
    return %arg1, %c0_i32, %c0_i32_0 : i32, i32, i32
  }
  func.func @transform_10(%arg0: i32, %arg1: i32) -> (i32, i32, i32) {
    %c0_i32 = arith.constant 0 : i32
    %c0_i32_0 = arith.constant 0 : i32
    %c0_i32_1 = arith.constant 0 : i32
    return %arg1, %c0_i32, %c0_i32_0 : i32, i32, i32
  }
  func.func @transform_11(%arg0: i32, %arg1: i32) -> (i32, i32, i32) {
    %c0_i32 = arith.constant 0 : i32
    %c0_i32_0 = arith.constant 0 : i32
    %c0_i32_1 = arith.constant 0 : i32
    return %arg1, %c0_i32, %c0_i32_0 : i32, i32, i32
  }
  func.func @transform_12(%arg0: i32, %arg1: i32) -> (i32, i32, i32) {
    %c0_i32 = arith.constant 0 : i32
    %c0_i32_0 = arith.constant 0 : i32
    %c0_i32_1 = arith.constant 0 : i32
    return %arg1, %c0_i32, %c0_i32_0 : i32, i32, i32
  }
  func.func @transform_13(%arg0: i32, %arg1: i32) -> (i32, i32) {
    %c0_i32 = arith.constant 0 : i32
    %c0_i32_0 = arith.constant 0 : i32
    return %arg0, %c0_i32 : i32, i32
  }
}

module attributes {stable_mosaic.version = 11 : i64} {
  func.func @_pool_head_kernel(%arg0: i32, %arg1: memref<48x64xf32, #tpu.memory_space<vmem>>, %arg2: memref<1x64xf32, #tpu.memory_space<vmem>>, %arg3: memref<64x64xbf16, #tpu.memory_space<vmem>>, %arg4: memref<1x64xf32, #tpu.memory_space<vmem>>, %arg5: memref<64x128xbf16, #tpu.memory_space<vmem>>, %arg6: memref<1x128xf32, #tpu.memory_space<vmem>>, %arg7: memref<64x64xbf16, #tpu.memory_space<vmem>>, %arg8: memref<1x64xf32, #tpu.memory_space<vmem>>, %arg9: memref<1x64xf32, #tpu.memory_space<vmem>>, %arg10: memref<1x64xf32, #tpu.memory_space<vmem>>, %arg11: memref<64x512xbf16, #tpu.memory_space<vmem>>, %arg12: memref<1x512xf32, #tpu.memory_space<vmem>>, %arg13: memref<512x128xbf16, #tpu.memory_space<vmem>>, %arg14: memref<1x128xf32, #tpu.memory_space<vmem>>, %arg15: memref<2x512xf32, #tpu.memory_space<vmem>>, %arg16: memref<2x128xf32, #tpu.memory_space<vmem>>, %arg17: memref<2x64xf32, #tpu.memory_space<vmem>>) attributes {dimension_semantics = [#tpu.dimension_semantics<arbitrary>], iteration_bounds = array<i64: 1>, scalar_prefetch = 0 : i64, scratch_operands = 1 : i64, tpu.core_type = #tpu.core_type<tc>, window_params = [{pipeline_mode = #tpu.pipeline_mode<synchronous>, transform_indices = @transform_0, window_bounds = array<i64: 48, 64>}, {pipeline_mode = #tpu.pipeline_mode<synchronous>, transform_indices = @transform_1, window_bounds = array<i64: 1, 64>}, {pipeline_mode = #tpu.pipeline_mode<synchronous>, transform_indices = @transform_2, window_bounds = array<i64: 64, 64>}, {pipeline_mode = #tpu.pipeline_mode<synchronous>, transform_indices = @transform_3, window_bounds = array<i64: 1, 64>}, {pipeline_mode = #tpu.pipeline_mode<synchronous>, transform_indices = @transform_4, window_bounds = array<i64: 64, 128>}, {pipeline_mode = #tpu.pipeline_mode<synchronous>, transform_indices = @transform_5, window_bounds = array<i64: 1, 128>}, {pipeline_mode = #tpu.pipeline_mode<synchronous>, transform_indices = @transform_6, window_bounds = array<i64: 64, 64>}, {pipeline_mode = #tpu.pipeline_mode<synchronous>, transform_indices = @transform_7, window_bounds = array<i64: 1, 64>}, {pipeline_mode = #tpu.pipeline_mode<synchronous>, transform_indices = @transform_8, window_bounds = array<i64: 1, 64>}, {pipeline_mode = #tpu.pipeline_mode<synchronous>, transform_indices = @transform_9, window_bounds = array<i64: 1, 64>}, {pipeline_mode = #tpu.pipeline_mode<synchronous>, transform_indices = @transform_10, window_bounds = array<i64: 64, 512>}, {pipeline_mode = #tpu.pipeline_mode<synchronous>, transform_indices = @transform_11, window_bounds = array<i64: 1, 512>}, {pipeline_mode = #tpu.pipeline_mode<synchronous>, transform_indices = @transform_12, window_bounds = array<i64: 512, 128>}, {pipeline_mode = #tpu.pipeline_mode<synchronous>, transform_indices = @transform_13, window_bounds = array<i64: 1, 128>}, {pipeline_mode = #tpu.pipeline_mode<synchronous>, transform_indices = @transform_14, window_bounds = array<i64: 2, 512>}, {pipeline_mode = #tpu.pipeline_mode<synchronous>, transform_indices = @transform_15, window_bounds = array<i64: 2, 128>}]} {
    %c0 = arith.constant 0 : index
    %c0_0 = arith.constant 0 : index
    %0 = vector.load %arg1[%c0, %c0_0] : memref<48x64xf32, #tpu.memory_space<vmem>>, vector<48x64xf32>
    %1 = arith.truncf %0 : vector<48x64xf32> to vector<48x64xbf16>
    %c0_1 = arith.constant 0 : index
    %c0_2 = arith.constant 0 : index
    %2 = vector.load %arg5[%c0_1, %c0_2] : memref<64x128xbf16, #tpu.memory_space<vmem>>, vector<64x128xbf16>
    %cst = arith.constant dense<0.000000e+00> : vector<48x128xf32>
    %3 = tpu.matmul %1, %2, %cst {dimension_numbers = #tpu.dot_dimension_numbers<[1], [0], [0], [1], [0, 0, 1, 1], [], []>} : vector<48x64xbf16>, vector<64x128xbf16>, vector<48x128xf32> -> vector<48x128xf32>
    %c0_3 = arith.constant 0 : index
    %c0_4 = arith.constant 0 : index
    %4 = vector.load %arg6[%c0_3, %c0_4] : memref<1x128xf32, #tpu.memory_space<vmem>>, vector<1x128xf32>
    %5 = vector.broadcast %4 : vector<1x128xf32> to vector<48x128xf32>
    %6 = arith.addf %3, %5 : vector<48x128xf32>
    %7 = vector.extract_strided_slice %6 {offsets = [0, 0], sizes = [48, 64], strides = [1, 1]} : vector<48x128xf32> to vector<48x64xf32>
    %8 = vector.extract_strided_slice %6 {offsets = [0, 64], sizes = [48, 64], strides = [1, 1]} : vector<48x128xf32> to vector<48x64xf32>
    %c0_5 = arith.constant 0 : index
    %c0_6 = arith.constant 0 : index
    %9 = vector.load %arg2[%c0_5, %c0_6] : memref<1x64xf32, #tpu.memory_space<vmem>>, vector<1x64xf32>
    %10 = arith.truncf %9 : vector<1x64xf32> to vector<1x64xbf16>
    %c0_7 = arith.constant 0 : index
    %c0_8 = arith.constant 0 : index
    %11 = vector.load %arg3[%c0_7, %c0_8] : memref<64x64xbf16, #tpu.memory_space<vmem>>, vector<64x64xbf16>
    %cst_9 = arith.constant dense<0.000000e+00> : vector<1x64xf32>
    %12 = tpu.matmul %10, %11, %cst_9 {dimension_numbers = #tpu.dot_dimension_numbers<[1], [0], [0], [1], [0, 0, 1, 1], [], []>} : vector<1x64xbf16>, vector<64x64xbf16>, vector<1x64xf32> -> vector<1x64xf32>
    %c0_10 = arith.constant 0 : index
    %c0_11 = arith.constant 0 : index
    %13 = vector.load %arg4[%c0_10, %c0_11] : memref<1x64xf32, #tpu.memory_space<vmem>>, vector<1x64xf32>
    %14 = arith.addf %12, %13 : vector<1x64xf32>
    %cst_12 = arith.constant 2.500000e-01 : f32
    %15 = vector.broadcast %cst_12 : f32 to vector<1x64xf32>
    %16 = arith.mulf %14, %15 : vector<1x64xf32>
    %17 = tpu.iota {dimensions = array<i32: 1>} : vector<1x24xi32>
    %c17_i32 = arith.constant 17 : i32
    %18 = vector.broadcast %c17_i32 : i32 to vector<1x24xi32>
    %19 = arith.cmpi slt, %17, %18 : vector<1x24xi32>
    %20 = vector.extract_strided_slice %7 {offsets = [0, 0], sizes = [24, 16], strides = [1, 1]} : vector<48x64xf32> to vector<24x16xf32>
    %21 = vector.extract_strided_slice %8 {offsets = [0, 0], sizes = [24, 16], strides = [1, 1]} : vector<48x64xf32> to vector<24x16xf32>
    %22 = vector.extract_strided_slice %16 {offsets = [0, 0], sizes = [1, 16], strides = [1, 1]} : vector<1x64xf32> to vector<1x16xf32>
    %cst_13 = arith.constant dense<0.000000e+00> : vector<1x24xf32>
    %23 = tpu.matmul %22, %20, %cst_13 {dimension_numbers = #tpu.dot_dimension_numbers<[1], [1], [0], [0], [0, 0, 1, 0], [], []>} : vector<1x16xf32>, vector<24x16xf32>, vector<1x24xf32> -> vector<1x24xf32>
    %cst_14 = arith.constant -1.000000e+30 : f32
    %24 = vector.broadcast %cst_14 : f32 to vector<1x24xf32>
    %25 = arith.select %19, %23, %24 : vector<1x24xi1>, vector<1x24xf32>
    %cst_15 = arith.constant dense<0xFF800000> : vector<1xf32>
    %26 = vector.multi_reduction <maximumf>, %25, %cst_15 [1] : vector<1x24xf32> to vector<1xf32>
    %27 = vector.shape_cast %26 : vector<1xf32> to vector<1x1xf32>
    %28 = vector.broadcast %27 : vector<1x1xf32> to vector<1x24xf32>
    %29 = arith.subf %25, %28 : vector<1x24xf32>
    %30 = math.exp %29 : vector<1x24xf32>
    %cst_16 = arith.constant dense<0.000000e+00> : vector<1xf32>
    %31 = vector.multi_reduction <add>, %30, %cst_16 [1] : vector<1x24xf32> to vector<1xf32>
    %32 = vector.shape_cast %31 : vector<1xf32> to vector<1x1xf32>
    %33 = vector.broadcast %32 : vector<1x1xf32> to vector<1x24xf32>
    %34 = arith.divf %30, %33 : vector<1x24xf32>
    %cst_17 = arith.constant dense<0.000000e+00> : vector<1x16xf32>
    %35 = tpu.matmul %34, %21, %cst_17 {dimension_numbers = #tpu.dot_dimension_numbers<[1], [0], [0], [1], [0, 0, 1, 1], [], []>} : vector<1x24xf32>, vector<24x16xf32>, vector<1x16xf32> -> vector<1x16xf32>
    %c0_18 = arith.constant 0 : index
    %c0_19 = arith.constant 0 : index
    %36 = vector.load %arg17[%c0_18, %c0_19] : memref<2x64xf32, #tpu.memory_space<vmem>>, vector<1x16xf32>
    tpu.vector_store %arg17[%c0_18, %c0_19], %35 {strides = array<i32>} : memref<2x64xf32, #tpu.memory_space<vmem>>, vector<1x16xf32>,
    %37 = vector.extract_strided_slice %7 {offsets = [0, 16], sizes = [24, 16], strides = [1, 1]} : vector<48x64xf32> to vector<24x16xf32>
    %38 = vector.extract_strided_slice %8 {offsets = [0, 16], sizes = [24, 16], strides = [1, 1]} : vector<48x64xf32> to vector<24x16xf32>
    %39 = vector.extract_strided_slice %16 {offsets = [0, 16], sizes = [1, 16], strides = [1, 1]} : vector<1x64xf32> to vector<1x16xf32>
    %cst_20 = arith.constant dense<0.000000e+00> : vector<1x24xf32>
    %40 = tpu.matmul %39, %37, %cst_20 {dimension_numbers = #tpu.dot_dimension_numbers<[1], [1], [0], [0], [0, 0, 1, 0], [], []>} : vector<1x16xf32>, vector<24x16xf32>, vector<1x24xf32> -> vector<1x24xf32>
    %cst_21 = arith.constant -1.000000e+30 : f32
    %41 = vector.broadcast %cst_21 : f32 to vector<1x24xf32>
    %42 = arith.select %19, %40, %41 : vector<1x24xi1>, vector<1x24xf32>
    %cst_22 = arith.constant dense<0xFF800000> : vector<1xf32>
    %43 = vector.multi_reduction <maximumf>, %42, %cst_22 [1] : vector<1x24xf32> to vector<1xf32>
    %44 = vector.shape_cast %43 : vector<1xf32> to vector<1x1xf32>
    %45 = vector.broadcast %44 : vector<1x1xf32> to vector<1x24xf32>
    %46 = arith.subf %42, %45 : vector<1x24xf32>
    %47 = math.exp %46 : vector<1x24xf32>
    %cst_23 = arith.constant dense<0.000000e+00> : vector<1xf32>
    %48 = vector.multi_reduction <add>, %47, %cst_23 [1] : vector<1x24xf32> to vector<1xf32>
    %49 = vector.shape_cast %48 : vector<1xf32> to vector<1x1xf32>
    %50 = vector.broadcast %49 : vector<1x1xf32> to vector<1x24xf32>
    %51 = arith.divf %47, %50 : vector<1x24xf32>
    %cst_24 = arith.constant dense<0.000000e+00> : vector<1x16xf32>
    %52 = tpu.matmul %51, %38, %cst_24 {dimension_numbers = #tpu.dot_dimension_numbers<[1], [0], [0], [1], [0, 0, 1, 1], [], []>} : vector<1x24xf32>, vector<24x16xf32>, vector<1x16xf32> -> vector<1x16xf32>
    %c0_25 = arith.constant 0 : index
    %c16 = arith.constant 16 : index
    %53 = vector.load %arg17[%c0_25, %c16] : memref<2x64xf32, #tpu.memory_space<vmem>>, vector<1x16xf32>
    tpu.vector_store %arg17[%c0_25, %c16], %52 {strides = array<i32>} : memref<2x64xf32, #tpu.memory_space<vmem>>, vector<1x16xf32>,
    %54 = vector.extract_strided_slice %7 {offsets = [0, 32], sizes = [24, 16], strides = [1, 1]} : vector<48x64xf32> to vector<24x16xf32>
    %55 = vector.extract_strided_slice %8 {offsets = [0, 32], sizes = [24, 16], strides = [1, 1]} : vector<48x64xf32> to vector<24x16xf32>
    %56 = vector.extract_strided_slice %16 {offsets = [0, 32], sizes = [1, 16], strides = [1, 1]} : vector<1x64xf32> to vector<1x16xf32>
    %cst_26 = arith.constant dense<0.000000e+00> : vector<1x24xf32>
    %57 = tpu.matmul %56, %54, %cst_26 {dimension_numbers = #tpu.dot_dimension_numbers<[1], [1], [0], [0], [0, 0, 1, 0], [], []>} : vector<1x16xf32>, vector<24x16xf32>, vector<1x24xf32> -> vector<1x24xf32>
    %cst_27 = arith.constant -1.000000e+30 : f32
    %58 = vector.broadcast %cst_27 : f32 to vector<1x24xf32>
    %59 = arith.select %19, %57, %58 : vector<1x24xi1>, vector<1x24xf32>
    %cst_28 = arith.constant dense<0xFF800000> : vector<1xf32>
    %60 = vector.multi_reduction <maximumf>, %59, %cst_28 [1] : vector<1x24xf32> to vector<1xf32>
    %61 = vector.shape_cast %60 : vector<1xf32> to vector<1x1xf32>
    %62 = vector.broadcast %61 : vector<1x1xf32> to vector<1x24xf32>
    %63 = arith.subf %59, %62 : vector<1x24xf32>
    %64 = math.exp %63 : vector<1x24xf32>
    %cst_29 = arith.constant dense<0.000000e+00> : vector<1xf32>
    %65 = vector.multi_reduction <add>, %64, %cst_29 [1] : vector<1x24xf32> to vector<1xf32>
    %66 = vector.shape_cast %65 : vector<1xf32> to vector<1x1xf32>
    %67 = vector.broadcast %66 : vector<1x1xf32> to vector<1x24xf32>
    %68 = arith.divf %64, %67 : vector<1x24xf32>
    %cst_30 = arith.constant dense<0.000000e+00> : vector<1x16xf32>
    %69 = tpu.matmul %68, %55, %cst_30 {dimension_numbers = #tpu.dot_dimension_numbers<[1], [0], [0], [1], [0, 0, 1, 1], [], []>} : vector<1x24xf32>, vector<24x16xf32>, vector<1x16xf32> -> vector<1x16xf32>
    %c0_31 = arith.constant 0 : index
    %c32 = arith.constant 32 : index
    %70 = vector.load %arg17[%c0_31, %c32] : memref<2x64xf32, #tpu.memory_space<vmem>>, vector<1x16xf32>
    tpu.vector_store %arg17[%c0_31, %c32], %69 {strides = array<i32>} : memref<2x64xf32, #tpu.memory_space<vmem>>, vector<1x16xf32>,
    %71 = vector.extract_strided_slice %7 {offsets = [0, 48], sizes = [24, 16], strides = [1, 1]} : vector<48x64xf32> to vector<24x16xf32>
    %72 = vector.extract_strided_slice %8 {offsets = [0, 48], sizes = [24, 16], strides = [1, 1]} : vector<48x64xf32> to vector<24x16xf32>
    %73 = vector.extract_strided_slice %16 {offsets = [0, 48], sizes = [1, 16], strides = [1, 1]} : vector<1x64xf32> to vector<1x16xf32>
    %cst_32 = arith.constant dense<0.000000e+00> : vector<1x24xf32>
    %74 = tpu.matmul %73, %71, %cst_32 {dimension_numbers = #tpu.dot_dimension_numbers<[1], [1], [0], [0], [0, 0, 1, 0], [], []>} : vector<1x16xf32>, vector<24x16xf32>, vector<1x24xf32> -> vector<1x24xf32>
    %cst_33 = arith.constant -1.000000e+30 : f32
    %75 = vector.broadcast %cst_33 : f32 to vector<1x24xf32>
    %76 = arith.select %19, %74, %75 : vector<1x24xi1>, vector<1x24xf32>
    %cst_34 = arith.constant dense<0xFF800000> : vector<1xf32>
    %77 = vector.multi_reduction <maximumf>, %76, %cst_34 [1] : vector<1x24xf32> to vector<1xf32>
    %78 = vector.shape_cast %77 : vector<1xf32> to vector<1x1xf32>
    %79 = vector.broadcast %78 : vector<1x1xf32> to vector<1x24xf32>
    %80 = arith.subf %76, %79 : vector<1x24xf32>
    %81 = math.exp %80 : vector<1x24xf32>
    %cst_35 = arith.constant dense<0.000000e+00> : vector<1xf32>
    %82 = vector.multi_reduction <add>, %81, %cst_35 [1] : vector<1x24xf32> to vector<1xf32>
    %83 = vector.shape_cast %82 : vector<1xf32> to vector<1x1xf32>
    %84 = vector.broadcast %83 : vector<1x1xf32> to vector<1x24xf32>
    %85 = arith.divf %81, %84 : vector<1x24xf32>
    %cst_36 = arith.constant dense<0.000000e+00> : vector<1x16xf32>
    %86 = tpu.matmul %85, %72, %cst_36 {dimension_numbers = #tpu.dot_dimension_numbers<[1], [0], [0], [1], [0, 0, 1, 1], [], []>} : vector<1x24xf32>, vector<24x16xf32>, vector<1x16xf32> -> vector<1x16xf32>
    %c0_37 = arith.constant 0 : index
    %c48 = arith.constant 48 : index
    %87 = vector.load %arg17[%c0_37, %c48] : memref<2x64xf32, #tpu.memory_space<vmem>>, vector<1x16xf32>
    tpu.vector_store %arg17[%c0_37, %c48], %86 {strides = array<i32>} : memref<2x64xf32, #tpu.memory_space<vmem>>, vector<1x16xf32>,
    %88 = vector.extract_strided_slice %7 {offsets = [24, 0], sizes = [24, 16], strides = [1, 1]} : vector<48x64xf32> to vector<24x16xf32>
    %89 = vector.extract_strided_slice %8 {offsets = [24, 0], sizes = [24, 16], strides = [1, 1]} : vector<48x64xf32> to vector<24x16xf32>
    %90 = vector.extract_strided_slice %16 {offsets = [0, 0], sizes = [1, 16], strides = [1, 1]} : vector<1x64xf32> to vector<1x16xf32>
    %cst_38 = arith.constant dense<0.000000e+00> : vector<1x24xf32>
    %91 = tpu.matmul %90, %88, %cst_38 {dimension_numbers = #tpu.dot_dimension_numbers<[1], [1], [0], [0], [0, 0, 1, 0], [], []>} : vector<1x16xf32>, vector<24x16xf32>, vector<1x24xf32> -> vector<1x24xf32>
    %cst_39 = arith.constant -1.000000e+30 : f32
    %92 = vector.broadcast %cst_39 : f32 to vector<1x24xf32>
    %93 = arith.select %19, %91, %92 : vector<1x24xi1>, vector<1x24xf32>
    %cst_40 = arith.constant dense<0xFF800000> : vector<1xf32>
    %94 = vector.multi_reduction <maximumf>, %93, %cst_40 [1] : vector<1x24xf32> to vector<1xf32>
    %95 = vector.shape_cast %94 : vector<1xf32> to vector<1x1xf32>
    %96 = vector.broadcast %95 : vector<1x1xf32> to vector<1x24xf32>
    %97 = arith.subf %93, %96 : vector<1x24xf32>
    %98 = math.exp %97 : vector<1x24xf32>
    %cst_41 = arith.constant dense<0.000000e+00> : vector<1xf32>
    %99 = vector.multi_reduction <add>, %98, %cst_41 [1] : vector<1x24xf32> to vector<1xf32>
    %100 = vector.shape_cast %99 : vector<1xf32> to vector<1x1xf32>
    %101 = vector.broadcast %100 : vector<1x1xf32> to vector<1x24xf32>
    %102 = arith.divf %98, %101 : vector<1x24xf32>
    %cst_42 = arith.constant dense<0.000000e+00> : vector<1x16xf32>
    %103 = tpu.matmul %102, %89, %cst_42 {dimension_numbers = #tpu.dot_dimension_numbers<[1], [0], [0], [1], [0, 0, 1, 1], [], []>} : vector<1x24xf32>, vector<24x16xf32>, vector<1x16xf32> -> vector<1x16xf32>
    %c1 = arith.constant 1 : index
    %c0_43 = arith.constant 0 : index
    %104 = vector.load %arg17[%c1, %c0_43] : memref<2x64xf32, #tpu.memory_space<vmem>>, vector<1x16xf32>
    tpu.vector_store %arg17[%c1, %c0_43], %103 {strides = array<i32>} : memref<2x64xf32, #tpu.memory_space<vmem>>, vector<1x16xf32>,
    %105 = vector.extract_strided_slice %7 {offsets = [24, 16], sizes = [24, 16], strides = [1, 1]} : vector<48x64xf32> to vector<24x16xf32>
    %106 = vector.extract_strided_slice %8 {offsets = [24, 16], sizes = [24, 16], strides = [1, 1]} : vector<48x64xf32> to vector<24x16xf32>
    %107 = vector.extract_strided_slice %16 {offsets = [0, 16], sizes = [1, 16], strides = [1, 1]} : vector<1x64xf32> to vector<1x16xf32>
    %cst_44 = arith.constant dense<0.000000e+00> : vector<1x24xf32>
    %108 = tpu.matmul %107, %105, %cst_44 {dimension_numbers = #tpu.dot_dimension_numbers<[1], [1], [0], [0], [0, 0, 1, 0], [], []>} : vector<1x16xf32>, vector<24x16xf32>, vector<1x24xf32> -> vector<1x24xf32>
    %cst_45 = arith.constant -1.000000e+30 : f32
    %109 = vector.broadcast %cst_45 : f32 to vector<1x24xf32>
    %110 = arith.select %19, %108, %109 : vector<1x24xi1>, vector<1x24xf32>
    %cst_46 = arith.constant dense<0xFF800000> : vector<1xf32>
    %111 = vector.multi_reduction <maximumf>, %110, %cst_46 [1] : vector<1x24xf32> to vector<1xf32>
    %112 = vector.shape_cast %111 : vector<1xf32> to vector<1x1xf32>
    %113 = vector.broadcast %112 : vector<1x1xf32> to vector<1x24xf32>
    %114 = arith.subf %110, %113 : vector<1x24xf32>
    %115 = math.exp %114 : vector<1x24xf32>
    %cst_47 = arith.constant dense<0.000000e+00> : vector<1xf32>
    %116 = vector.multi_reduction <add>, %115, %cst_47 [1] : vector<1x24xf32> to vector<1xf32>
    %117 = vector.shape_cast %116 : vector<1xf32> to vector<1x1xf32>
    %118 = vector.broadcast %117 : vector<1x1xf32> to vector<1x24xf32>
    %119 = arith.divf %115, %118 : vector<1x24xf32>
    %cst_48 = arith.constant dense<0.000000e+00> : vector<1x16xf32>
    %120 = tpu.matmul %119, %106, %cst_48 {dimension_numbers = #tpu.dot_dimension_numbers<[1], [0], [0], [1], [0, 0, 1, 1], [], []>} : vector<1x24xf32>, vector<24x16xf32>, vector<1x16xf32> -> vector<1x16xf32>
    %c1_49 = arith.constant 1 : index
    %c16_50 = arith.constant 16 : index
    %121 = vector.load %arg17[%c1_49, %c16_50] : memref<2x64xf32, #tpu.memory_space<vmem>>, vector<1x16xf32>
    tpu.vector_store %arg17[%c1_49, %c16_50], %120 {strides = array<i32>} : memref<2x64xf32, #tpu.memory_space<vmem>>, vector<1x16xf32>,
    %122 = vector.extract_strided_slice %7 {offsets = [24, 32], sizes = [24, 16], strides = [1, 1]} : vector<48x64xf32> to vector<24x16xf32>
    %123 = vector.extract_strided_slice %8 {offsets = [24, 32], sizes = [24, 16], strides = [1, 1]} : vector<48x64xf32> to vector<24x16xf32>
    %124 = vector.extract_strided_slice %16 {offsets = [0, 32], sizes = [1, 16], strides = [1, 1]} : vector<1x64xf32> to vector<1x16xf32>
    %cst_51 = arith.constant dense<0.000000e+00> : vector<1x24xf32>
    %125 = tpu.matmul %124, %122, %cst_51 {dimension_numbers = #tpu.dot_dimension_numbers<[1], [1], [0], [0], [0, 0, 1, 0], [], []>} : vector<1x16xf32>, vector<24x16xf32>, vector<1x24xf32> -> vector<1x24xf32>
    %cst_52 = arith.constant -1.000000e+30 : f32
    %126 = vector.broadcast %cst_52 : f32 to vector<1x24xf32>
    %127 = arith.select %19, %125, %126 : vector<1x24xi1>, vector<1x24xf32>
    %cst_53 = arith.constant dense<0xFF800000> : vector<1xf32>
    %128 = vector.multi_reduction <maximumf>, %127, %cst_53 [1] : vector<1x24xf32> to vector<1xf32>
    %129 = vector.shape_cast %128 : vector<1xf32> to vector<1x1xf32>
    %130 = vector.broadcast %129 : vector<1x1xf32> to vector<1x24xf32>
    %131 = arith.subf %127, %130 : vector<1x24xf32>
    %132 = math.exp %131 : vector<1x24xf32>
    %cst_54 = arith.constant dense<0.000000e+00> : vector<1xf32>
    %133 = vector.multi_reduction <add>, %132, %cst_54 [1] : vector<1x24xf32> to vector<1xf32>
    %134 = vector.shape_cast %133 : vector<1xf32> to vector<1x1xf32>
    %135 = vector.broadcast %134 : vector<1x1xf32> to vector<1x24xf32>
    %136 = arith.divf %132, %135 : vector<1x24xf32>
    %cst_55 = arith.constant dense<0.000000e+00> : vector<1x16xf32>
    %137 = tpu.matmul %136, %123, %cst_55 {dimension_numbers = #tpu.dot_dimension_numbers<[1], [0], [0], [1], [0, 0, 1, 1], [], []>} : vector<1x24xf32>, vector<24x16xf32>, vector<1x16xf32> -> vector<1x16xf32>
    %c1_56 = arith.constant 1 : index
    %c32_57 = arith.constant 32 : index
    %138 = vector.load %arg17[%c1_56, %c32_57] : memref<2x64xf32, #tpu.memory_space<vmem>>, vector<1x16xf32>
    tpu.vector_store %arg17[%c1_56, %c32_57], %137 {strides = array<i32>} : memref<2x64xf32, #tpu.memory_space<vmem>>, vector<1x16xf32>,
    %139 = vector.extract_strided_slice %7 {offsets = [24, 48], sizes = [24, 16], strides = [1, 1]} : vector<48x64xf32> to vector<24x16xf32>
    %140 = vector.extract_strided_slice %8 {offsets = [24, 48], sizes = [24, 16], strides = [1, 1]} : vector<48x64xf32> to vector<24x16xf32>
    %141 = vector.extract_strided_slice %16 {offsets = [0, 48], sizes = [1, 16], strides = [1, 1]} : vector<1x64xf32> to vector<1x16xf32>
    %cst_58 = arith.constant dense<0.000000e+00> : vector<1x24xf32>
    %142 = tpu.matmul %141, %139, %cst_58 {dimension_numbers = #tpu.dot_dimension_numbers<[1], [1], [0], [0], [0, 0, 1, 0], [], []>} : vector<1x16xf32>, vector<24x16xf32>, vector<1x24xf32> -> vector<1x24xf32>
    %cst_59 = arith.constant -1.000000e+30 : f32
    %143 = vector.broadcast %cst_59 : f32 to vector<1x24xf32>
    %144 = arith.select %19, %142, %143 : vector<1x24xi1>, vector<1x24xf32>
    %cst_60 = arith.constant dense<0xFF800000> : vector<1xf32>
    %145 = vector.multi_reduction <maximumf>, %144, %cst_60 [1] : vector<1x24xf32> to vector<1xf32>
    %146 = vector.shape_cast %145 : vector<1xf32> to vector<1x1xf32>
    %147 = vector.broadcast %146 : vector<1x1xf32> to vector<1x24xf32>
    %148 = arith.subf %144, %147 : vector<1x24xf32>
    %149 = math.exp %148 : vector<1x24xf32>
    %cst_61 = arith.constant dense<0.000000e+00> : vector<1xf32>
    %150 = vector.multi_reduction <add>, %149, %cst_61 [1] : vector<1x24xf32> to vector<1xf32>
    %151 = vector.shape_cast %150 : vector<1xf32> to vector<1x1xf32>
    %152 = vector.broadcast %151 : vector<1x1xf32> to vector<1x24xf32>
    %153 = arith.divf %149, %152 : vector<1x24xf32>
    %cst_62 = arith.constant dense<0.000000e+00> : vector<1x16xf32>
    %154 = tpu.matmul %153, %140, %cst_62 {dimension_numbers = #tpu.dot_dimension_numbers<[1], [0], [0], [1], [0, 0, 1, 1], [], []>} : vector<1x24xf32>, vector<24x16xf32>, vector<1x16xf32> -> vector<1x16xf32>
    %c1_63 = arith.constant 1 : index
    %c48_64 = arith.constant 48 : index
    %155 = vector.load %arg17[%c1_63, %c48_64] : memref<2x64xf32, #tpu.memory_space<vmem>>, vector<1x16xf32>
    tpu.vector_store %arg17[%c1_63, %c48_64], %154 {strides = array<i32>} : memref<2x64xf32, #tpu.memory_space<vmem>>, vector<1x16xf32>,
    %c0_65 = arith.constant 0 : index
    %c0_66 = arith.constant 0 : index
    %156 = vector.load %arg17[%c0_65, %c0_66] : memref<2x64xf32, #tpu.memory_space<vmem>>, vector<2x64xf32>
    %157 = arith.truncf %156 : vector<2x64xf32> to vector<2x64xbf16>
    %c0_67 = arith.constant 0 : index
    %c0_68 = arith.constant 0 : index
    %158 = vector.load %arg7[%c0_67, %c0_68] : memref<64x64xbf16, #tpu.memory_space<vmem>>, vector<64x64xbf16>
    %cst_69 = arith.constant dense<0.000000e+00> : vector<2x64xf32>
    %159 = tpu.matmul %157, %158, %cst_69 {dimension_numbers = #tpu.dot_dimension_numbers<[1], [0], [0], [1], [0, 0, 1, 1], [], []>} : vector<2x64xbf16>, vector<64x64xbf16>, vector<2x64xf32> -> vector<2x64xf32>
    %c0_70 = arith.constant 0 : index
    %c0_71 = arith.constant 0 : index
    %160 = vector.load %arg8[%c0_70, %c0_71] : memref<1x64xf32, #tpu.memory_space<vmem>>, vector<1x64xf32>
    %161 = vector.broadcast %160 : vector<1x64xf32> to vector<2x64xf32>
    %162 = arith.addf %159, %161 : vector<2x64xf32>
    %c0_72 = arith.constant 0 : index
    %c0_73 = arith.constant 0 : index
    %163 = vector.load %arg9[%c0_72, %c0_73] : memref<1x64xf32, #tpu.memory_space<vmem>>, vector<1x64xf32>
    %c0_74 = arith.constant 0 : index
    %c0_75 = arith.constant 0 : index
    %164 = vector.load %arg10[%c0_74, %c0_75] : memref<1x64xf32, #tpu.memory_space<vmem>>, vector<1x64xf32>
    %cst_76 = arith.constant dense<0.000000e+00> : vector<2xf32>
    %165 = vector.multi_reduction <add>, %162, %cst_76 [1] : vector<2x64xf32> to vector<2xf32>
    %166 = vector.shape_cast %165 : vector<2xf32> to vector<2x1xf32>
    %cst_77 = arith.constant 6.400000e+01 : f32
    %167 = vector.broadcast %cst_77 : f32 to vector<2x1xf32>
    %168 = arith.divf %166, %167 : vector<2x1xf32>
    %169 = vector.broadcast %168 : vector<2x1xf32> to vector<2x64xf32>
    %170 = arith.subf %162, %169 : vector<2x64xf32>
    %171 = arith.mulf %170, %170 : vector<2x64xf32>
    %cst_78 = arith.constant dense<0.000000e+00> : vector<2xf32>
    %172 = vector.multi_reduction <add>, %171, %cst_78 [1] : vector<2x64xf32> to vector<2xf32>
    %173 = vector.shape_cast %172 : vector<2xf32> to vector<2x1xf32>
    %cst_79 = arith.constant 6.400000e+01 : f32
    %174 = vector.broadcast %cst_79 : f32 to vector<2x1xf32>
    %175 = arith.divf %173, %174 : vector<2x1xf32>
    %cst_80 = arith.constant 9.99999974E-6 : f32
    %176 = vector.broadcast %cst_80 : f32 to vector<2x1xf32>
    %177 = arith.addf %175, %176 : vector<2x1xf32>
    %178 = math.rsqrt %177 : vector<2x1xf32>
    %179 = vector.broadcast %178 : vector<2x1xf32> to vector<2x64xf32>
    %180 = arith.mulf %170, %179 : vector<2x64xf32>
    %181 = vector.broadcast %163 : vector<1x64xf32> to vector<2x64xf32>
    %182 = arith.mulf %180, %181 : vector<2x64xf32>
    %183 = vector.broadcast %164 : vector<1x64xf32> to vector<2x64xf32>
    %184 = arith.addf %182, %183 : vector<2x64xf32>
    %185 = arith.truncf %184 : vector<2x64xf32> to vector<2x64xbf16>
    %c0_81 = arith.constant 0 : index
    %c0_82 = arith.constant 0 : index
    %186 = vector.load %arg11[%c0_81, %c0_82] : memref<64x512xbf16, #tpu.memory_space<vmem>>, vector<64x512xbf16>
    %cst_83 = arith.constant dense<0.000000e+00> : vector<2x512xf32>
    %187 = tpu.matmul %185, %186, %cst_83 {dimension_numbers = #tpu.dot_dimension_numbers<[1], [0], [0], [1], [0, 0, 1, 1], [], []>} : vector<2x64xbf16>, vector<64x512xbf16>, vector<2x512xf32> -> vector<2x512xf32>
    %c0_84 = arith.constant 0 : index
    %c0_85 = arith.constant 0 : index
    %188 = vector.load %arg12[%c0_84, %c0_85] : memref<1x512xf32, #tpu.memory_space<vmem>>, vector<1x512xf32>
    %189 = vector.broadcast %188 : vector<1x512xf32> to vector<2x512xf32>
    %190 = arith.addf %187, %189 : vector<2x512xf32>
    %191 = arith.truncf %190 : vector<2x512xf32> to vector<2x512xbf16>
    %c0_86 = arith.constant 0 : index
    %c0_87 = arith.constant 0 : index
    %192 = vector.load %arg13[%c0_86, %c0_87] : memref<512x128xbf16, #tpu.memory_space<vmem>>, vector<512x128xbf16>
    %cst_88 = arith.constant dense<0.000000e+00> : vector<2x128xf32>
    %193 = tpu.matmul %191, %192, %cst_88 {dimension_numbers = #tpu.dot_dimension_numbers<[1], [0], [0], [1], [0, 0, 1, 1], [], []>} : vector<2x512xbf16>, vector<512x128xbf16>, vector<2x128xf32> -> vector<2x128xf32>
    %c0_89 = arith.constant 0 : index
    %c0_90 = arith.constant 0 : index
    %194 = vector.load %arg14[%c0_89, %c0_90] : memref<1x128xf32, #tpu.memory_space<vmem>>, vector<1x128xf32>
    %195 = vector.broadcast %194 : vector<1x128xf32> to vector<2x128xf32>
    %196 = arith.addf %193, %195 : vector<2x128xf32>
    %c0_91 = arith.constant 0 : index
    %c0_92 = arith.constant 0 : index
    %197 = vector.load %arg15[%c0_91, %c0_92] : memref<2x512xf32, #tpu.memory_space<vmem>>, vector<2x512xf32>
    tpu.vector_store %arg15[%c0_91, %c0_92], %190 {strides = array<i32>} : memref<2x512xf32, #tpu.memory_space<vmem>>, vector<2x512xf32>,
    %c0_93 = arith.constant 0 : index
    %c0_94 = arith.constant 0 : index
    %198 = vector.load %arg16[%c0_93, %c0_94] : memref<2x128xf32, #tpu.memory_space<vmem>>, vector<2x128xf32>
    tpu.vector_store %arg16[%c0_93, %c0_94], %196 {strides = array<i32>} : memref<2x128xf32, #tpu.memory_space<vmem>>, vector<2x128xf32>,
    return
  }
  func.func @transform_0(%arg0: i32) -> (i32, i32) {
    %c0_i32 = arith.constant 0 : i32
    %c0_i32_0 = arith.constant 0 : i32
    %c0_i32_1 = arith.constant 0 : i32
    return %c0_i32, %c0_i32_0 : i32, i32
  }
  func.func @transform_1(%arg0: i32) -> (i32, i32) {
    %c0_i32 = arith.constant 0 : i32
    %c0_i32_0 = arith.constant 0 : i32
    %c0_i32_1 = arith.constant 0 : i32
    return %c0_i32, %c0_i32_0 : i32, i32
  }
  func.func @transform_2(%arg0: i32) -> (i32, i32) {
    %c0_i32 = arith.constant 0 : i32
    %c0_i32_0 = arith.constant 0 : i32
    %c0_i32_1 = arith.constant 0 : i32
    return %c0_i32, %c0_i32_0 : i32, i32
  }
  func.func @transform_3(%arg0: i32) -> (i32, i32) {
    %c0_i32 = arith.constant 0 : i32
    %c0_i32_0 = arith.constant 0 : i32
    %c0_i32_1 = arith.constant 0 : i32
    return %c0_i32, %c0_i32_0 : i32, i32
  }
  func.func @transform_4(%arg0: i32) -> (i32, i32) {
    %c0_i32 = arith.constant 0 : i32
    %c0_i32_0 = arith.constant 0 : i32
    %c0_i32_1 = arith.constant 0 : i32
    return %c0_i32, %c0_i32_0 : i32, i32
  }
  func.func @transform_5(%arg0: i32) -> (i32, i32) {
    %c0_i32 = arith.constant 0 : i32
    %c0_i32_0 = arith.constant 0 : i32
    %c0_i32_1 = arith.constant 0 : i32
    return %c0_i32, %c0_i32_0 : i32, i32
  }
  func.func @transform_6(%arg0: i32) -> (i32, i32) {
    %c0_i32 = arith.constant 0 : i32
    %c0_i32_0 = arith.constant 0 : i32
    %c0_i32_1 = arith.constant 0 : i32
    return %c0_i32, %c0_i32_0 : i32, i32
  }
  func.func @transform_7(%arg0: i32) -> (i32, i32) {
    %c0_i32 = arith.constant 0 : i32
    %c0_i32_0 = arith.constant 0 : i32
    %c0_i32_1 = arith.constant 0 : i32
    return %c0_i32, %c0_i32_0 : i32, i32
  }
  func.func @transform_8(%arg0: i32) -> (i32, i32) {
    %c0_i32 = arith.constant 0 : i32
    %c0_i32_0 = arith.constant 0 : i32
    %c0_i32_1 = arith.constant 0 : i32
    return %c0_i32, %c0_i32_0 : i32, i32
  }
  func.func @transform_9(%arg0: i32) -> (i32, i32) {
    %c0_i32 = arith.constant 0 : i32
    %c0_i32_0 = arith.constant 0 : i32
    %c0_i32_1 = arith.constant 0 : i32
    return %c0_i32, %c0_i32_0 : i32, i32
  }
  func.func @transform_10(%arg0: i32) -> (i32, i32) {
    %c0_i32 = arith.constant 0 : i32
    %c0_i32_0 = arith.constant 0 : i32
    %c0_i32_1 = arith.constant 0 : i32
    return %c0_i32, %c0_i32_0 : i32, i32
  }
  func.func @transform_11(%arg0: i32) -> (i32, i32) {
    %c0_i32 = arith.constant 0 : i32
    %c0_i32_0 = arith.constant 0 : i32
    %c0_i32_1 = arith.constant 0 : i32
    return %c0_i32, %c0_i32_0 : i32, i32
  }
  func.func @transform_12(%arg0: i32) -> (i32, i32) {
    %c0_i32 = arith.constant 0 : i32
    %c0_i32_0 = arith.constant 0 : i32
    %c0_i32_1 = arith.constant 0 : i32
    return %c0_i32, %c0_i32_0 : i32, i32
  }
  func.func @transform_13(%arg0: i32) -> (i32, i32) {
    %c0_i32 = arith.constant 0 : i32
    %c0_i32_0 = arith.constant 0 : i32
    %c0_i32_1 = arith.constant 0 : i32
    return %c0_i32, %c0_i32_0 : i32, i32
  }
  func.func @transform_14(%arg0: i32) -> (i32, i32) {
    %c0_i32 = arith.constant 0 : i32
    %c0_i32_0 = arith.constant 0 : i32
    %c0_i32_1 = arith.constant 0 : i32
    return %c0_i32, %c0_i32_0 : i32, i32
  }
  func.func @transform_15(%arg0: i32) -> (i32, i32) {
    %c0_i32 = arith.constant 0 : i32
    %c0_i32_0 = arith.constant 0 : i32
    %c0_i32_1 = arith.constant 0 : i32
    return %c0_i32, %c0_i32_0 : i32, i32
  }
}

</mosaic_0001>

<llo_original>
// kernel: coca_vision_only_forward.3
$region0: #{coca_vision_only_forward.3}
  #allocation0 [shape = 'u32[]', space=smem, size = 0x4, offset = 0x4, fixed_abs, tag = 'smem constant byte address 0x4 - core index']
  #allocation1 [shape = 'u32[144,128]{1,0:T(1,128)}', space=vmem, size = 0x12000, scoped, tag = 'internal scratch']
  %s0 = inlined_call_operand.vmem [shape: f32[48,192], index: 0, kind: input, shape index: {}]
  %s1 = inlined_call_operand.vmem [shape: bf16[192,64], index: 1, kind: input, shape index: {}]
  %s2 = inlined_call_operand.vmem [shape: f32[24,64], index: 2, kind: input, shape index: {}]
  %s3 = inlined_call_operand.vmem [shape: f32[1,64], index: 3, kind: input, shape index: {}]
  %s4 = inlined_call_operand.vmem [shape: f32[1,64], index: 4, kind: input, shape index: {}]
  %s5 = inlined_call_operand.vmem [shape: f32[48,64], index: 5, kind: output, shape index: {}]
  %s6 = sld [smem:[#allocation0]]
  $region30: #{coca_vision_only_forward.3} parent=0
    _
  %s8 = ssub.s32 1, %s6
  %s9 = scalar_select 0, %s8, %s6
  // Predicated region
  $region2: #{coca_vision_only_forward.3} parent=0 // pred_check
    _
  $region3: #{coca_vision_only_forward.3} parent=0 // pred_check_branch
    %11 = sbr.rel (0) target = $region5
  $region4: #{coca_vision_only_forward.3} parent=0 // pred_region
    _
  $region5: #{coca_vision_only_forward.3} parent=0 // pred_fallthru
    _
  // Predicated region
  $region6: #{coca_vision_only_forward.3} parent=0 // pred_check
    _
  $region7: #{coca_vision_only_forward.3} parent=0 // pred_check_branch
    %13 = sbr.rel (0) target = $region9
  $region8: #{coca_vision_only_forward.3} parent=0 // pred_region
    _
  $region9: #{coca_vision_only_forward.3} parent=0 // pred_fallthru
    _
  // Predicated region
  $region10: #{coca_vision_only_forward.3} parent=0 // pred_check
    _
  $region11: #{coca_vision_only_forward.3} parent=0 // pred_check_branch
    %15 = sbr.rel (0) target = $region13
  $region12: #{coca_vision_only_forward.3} parent=0 // pred_region
    _
  $region13: #{coca_vision_only_forward.3} parent=0 // pred_fallthru
    _
  // Predicated region
  $region14: #{coca_vision_only_forward.3} parent=0 // pred_check
    _
  $region15: #{coca_vision_only_forward.3} parent=0 // pred_check_branch
    %17 = sbr.rel (0) target = $region17
  $region16: #{coca_vision_only_forward.3} parent=0 // pred_region
    _
  $region17: #{coca_vision_only_forward.3} parent=0 // pred_fallthru
    _
  // Predicated region
  $region18: #{coca_vision_only_forward.3} parent=0 // pred_check
    _
  $region19: #{coca_vision_only_forward.3} parent=0 // pred_check_branch
    %19 = sbr.rel (0) target = $region21
  $region20: #{coca_vision_only_forward.3} parent=0 // pred_region
    _
  $region21: #{coca_vision_only_forward.3} parent=0 // pred_fallthru
    _
  %v21 = vld [vmem:[%s0] sm:$0xff]
  %v22 = vld [vmem:[%s0 + $0x8] sm:$0xff]
  %v23 = vld [vmem:[%s0 + $0x10] sm:$0xff]
  %v24 = vld [vmem:[%s0 + $0x18] sm:$0xff]
  %v25 = vld [vmem:[%s0 + $0x20] sm:$0xff]
  %v26 = vld [vmem:[%s0 + $0x28] sm:$0xff]
  %v27 = vld [vmem:[%s0 + $0x30] sm:$0xff]
  %v28 = vld [vmem:[%s0 + $0x38] sm:$0xff]
  %v29 = vld [vmem:[%s0 + $0x40] sm:$0xff]
  %v30 = vld [vmem:[%s0 + $0x48] sm:$0xff]
  %v31 = vld [vmem:[%s0 + $0x50] sm:$0xff]
  %v32 = vld [vmem:[%s0 + $0x58] sm:$0xff]
  %v33 = vpack.c.bf16 %v23, %v21
  %v34 = vpack.c.bf16 %v24, %v22
  %v35 = vpack.c.bf16 %v27, %v25
  %v36 = vpack.c.bf16 %v28, %v26
  %v37 = vpack.c.bf16 %v31, %v29
  %v38 = vpack.c.bf16 %v32, %v30
  %v39 = vld [vmem:[%s1] sm:$0xf]
  %v40 = vld [vmem:[%s1 + $0x4] sm:$0xf]
  %v41 = vld [vmem:[%s1 + $0x8] sm:$0xf]
  %v42 = vld [vmem:[%s1 + $0xc] sm:$0xf]
  %v43 = vld [vmem:[%s1 + $0x10] sm:$0xf]
  %v44 = vld [vmem:[%s1 + $0x14] sm:$0xf]
  %v45 = vld [vmem:[%s1 + $0x18] sm:$0xf]
  %v46 = vld [vmem:[%s1 + $0x1c] sm:$0xf]
  %v47 = vld [vmem:[%s1 + $0x20] sm:$0xf]
  %v48 = vld [vmem:[%s1 + $0x24] sm:$0xf]
  %v49 = vld [vmem:[%s1 + $0x28] sm:$0xf]
  %v50 = vld [vmem:[%s1 + $0x2c] sm:$0xf]
  %v51 = vld [vmem:[%s1 + $0x30] sm:$0xf]
  %v52 = vld [vmem:[%s1 + $0x34] sm:$0xf]
  %v53 = vld [vmem:[%s1 + $0x38] sm:$0xf]
  %v54 = vld [vmem:[%s1 + $0x3c] sm:$0xf]
  %v55 = vld [vmem:[%s1 + $0x40] sm:$0xf]
  %v56 = vld [vmem:[%s1 + $0x44] sm:$0xf]
  %v57 = vld [vmem:[%s1 + $0x48] sm:$0xf]
  %v58 = vld [vmem:[%s1 + $0x4c] sm:$0xf]
  %v59 = vld [vmem:[%s1 + $0x50] sm:$0xf]
  %v60 = vld [vmem:[%s1 + $0x54] sm:$0xf]
  %v61 = vld [vmem:[%s1 + $0x58] sm:$0xf]
  %v62 = vld [vmem:[%s1 + $0x5c] sm:$0xf]
  %v87 = vunpack.c.l.b16 %v39
  %v88 = vunpack.c.l.b16 %v40
  %v89 = vunpack.c.l.b16 %v41
  %v90 = vunpack.c.l.b16 %v42
  %v91 = vunpack.c.l.b16 %v43
  %v92 = vunpack.c.l.b16 %v44
  %v93 = vunpack.c.l.b16 %v45
  %v94 = vunpack.c.l.b16 %v46
  %v95 = vunpack.c.l.b16 %v47
  %v96 = vunpack.c.l.b16 %v48
  %v97 = vunpack.c.l.b16 %v49
  %v98 = vunpack.c.l.b16 %v50
  %v99 = vunpack.c.l.b16 %v51
  %v100 = vunpack.c.l.b16 %v52
  %v101 = vunpack.c.l.b16 %v53
  %v102 = vunpack.c.l.b16 %v54
  %v103 = vunpack.c.l.b16 %v55
  %v104 = vunpack.c.l.b16 %v56
  %v105 = vunpack.c.l.b16 %v57
  %v106 = vunpack.c.l.b16 %v58
  %v107 = vunpack.c.l.b16 %v59
  %v108 = vunpack.c.l.b16 %v60
  %v109 = vunpack.c.l.b16 %v61
  %v110 = vunpack.c.l.b16 %v62
  %v111 = vpack.c.b16 %v88, %v87
  %v112 = vpack.c.b16 %v90, %v89
  %v113 = vpack.c.b16 %v92, %v91
  %v114 = vpack.c.b16 %v94, %v93
  %v115 = vpack.c.b16 %v96, %v95
  %v116 = vpack.c.b16 %v98, %v97
  %v117 = vpack.c.b16 %v100, %v99
  %v118 = vpack.c.b16 %v102, %v101
  %v119 = vpack.c.b16 %v104, %v103
  %v120 = vpack.c.b16 %v106, %v105
  %v121 = vpack.c.b16 %v108, %v107
  %v122 = vpack.c.b16 %v110, %v109
  %vm135 = vcmask 523264
  %v137 = vsel %vm135, %v34, 0
  %v140 = vsel %vm135, %v36, 0
  %v143 = vsel %vm135, %v38, 0
  %145 = vmatprep.subr.bf16.mxu0 0
  %146 = vmatpush1.bf16.msra.mxu0 %v111
  %147 = vmatprep.subr.bf16.mxu0 0
  %148 = vmatpush1.bf16.msra.mxu0 %v112
  %149 = vmatprep.subr.bf16.mxu0 0
  %150 = vmatpush1.bf16.msra.mxu0 %v113
  %151 = vmatprep.subr.bf16.mxu0 0
  %152 = vmatpush1.bf16.msra.mxu0 %v114
  %153 = vmatprep.subr.bf16.mxu0 0
  %154 = vmatpush1.bf16.msra.mxu0 %v115
  %155 = vmatprep.subr.bf16.mxu0 0
  %156 = vmatpush1.bf16.msra.mxu0 %v116
  %157 = vmatprep.subr.bf16.mxu0 0
  %158 = vmatpush1.bf16.msra.mxu0 %v117
  %159 = vmatprep.subr.bf16.mxu0 0
  %160 = vmatpush1.bf16.msra.mxu0 %v118
  %161 = vmatprep.subr.bf16.mxu0 0
  %162 = vmatpush1.bf16.msra.mxu0 %v119
  %163 = vmatprep.subr.bf16.mxu0 0
  %164 = vmatpush1.bf16.msra.mxu0 %v120
  %165 = vmatprep.subr.bf16.mxu0 0
  %166 = vmatpush1.bf16.msra.mxu0 %v121
  %167 = vmatprep.subr.bf16.mxu0 0
  %168 = vmatpush1.bf16.msra.mxu0 %v122
  %169 = vmatprep.subr.bf16.mxu0 0
  %170 = vmatpush1.bf16.msra.mxu0 0
  %171 = vmatprep.subr.bf16.mxu0 0
  %172 = vmatpush1.bf16.msra.mxu0 0
  %173 = vmatprep.subr.bf16.mxu0 0
  %174 = vmatpush1.bf16.msra.mxu0 0
  %175 = vmatprep.subr.bf16.mxu0 0
  %176 = vmatpush1.bf16.msra.mxu0 0
  %177 = vmatprep.mubr.bf16.mxu0 %v137
  %178 = vmatmul.mubr.bf16.gmra.mrb[0].mxu0 %v33
  %v179 = vpop.f32.mrb[0].mxu0
  %v180 = vadd.f32 0.0, %v179
  %v181 = vpop.f32.mrb[0].mxu0
  %v182 = vpop.f32.mrb[0].mxu0
  %v183 = vadd.f32 0.0, %v182
  %v184 = vpop.f32.mrb[0].mxu0
  %185 = vmatprep.mubr.bf16.mxu0 %v140
  %186 = vmatmul.mubr.bf16.gmra.mrb[0].mxu0 %v35
  %v187 = vpop.f32.mrb[0].mxu0
  %v188 = vadd.f32 0.0, %v187
  %v189 = vpop.f32.mrb[0].mxu0
  %v190 = vpop.f32.mrb[0].mxu0
  %v191 = vadd.f32 0.0, %v190
  %v192 = vpop.f32.mrb[0].mxu0
  %193 = vmatprep.mubr.bf16.mxu0 %v143
  %194 = vmatmul.mubr.bf16.gmra.mrb[0].mxu0 %v37
  %v195 = vpop.f32.mrb[0].mxu0
  %v196 = vadd.f32 0.0, %v195
  %v197 = vpop.f32.mrb[0].mxu0
  %v198 = vpop.f32.mrb[0].mxu0
  %v199 = vadd.f32 0.0, %v198
  %v200 = vpop.f32.mrb[0].mxu0
  %201 = vdwg.mxu0
  %v202 = vld [vmem:[%s2] sm:$0xff]
  %v203 = vld [vmem:[%s2 + $0x8] sm:$0xff]
  %v204 = vld [vmem:[%s2 + $0x10] sm:$0xff]
  %v205 = vadd.f32 %v180, %v202
  %v206 = vadd.f32 %v183, %v203
  %v207 = vadd.f32 %v188, %v204
  %v208 = vld [vmem:[%s3] sm:$0x1]
  %v209 = vld [vmem:[%s4] sm:$0x1]
  %v210 = vsel %vm135, %v205, 0.0
  %211 = vadd.xlane.f32.xlu0 %v210
  %v212 = vpop.xlane.xlu0 %211
  %v213 = vsel %vm135, %v206, 0.0
  %214 = vadd.xlane.f32.xlu0 %v213
  %v215 = vpop.xlane.xlu0 %214
  %v216 = vsel %vm135, %v207, 0.0
  %217 = vadd.xlane.f32.xlu0 %v216
  %v218 = vpop.xlane.xlu0 %217
  %v219 = vrcp.pop 64.0
  %v220 = vmul.f32 %v212, %v219
  %v221 = vmul.f32 %v215, %v219
  %v222 = vmul.f32 %v218, %v219
  %v223 = vsub.f32 %v205, %v220
  %v224 = vsub.f32 %v206, %v221
  %v225 = vsub.f32 %v207, %v222
  %v226 = vmul.f32 %v223, %v223
  %v227 = vmul.f32 %v224, %v224
  %v228 = vmul.f32 %v225, %v225
  %v229 = vsel %vm135, %v226, 0.0
  %230 = vadd.xlane.f32.xlu0 %v229
  %v231 = vpop.xlane.xlu0 %230
  %v232 = vsel %vm135, %v227, 0.0
  %233 = vadd.xlane.f32.xlu0 %v232
  %v234 = vpop.xlane.xlu0 %233
  %v235 = vsel %vm135, %v228, 0.0
  %236 = vadd.xlane.f32.xlu0 %v235
  %v237 = vpop.xlane.xlu0 %236
  %v238 = vmul.f32 %v231, %v219
  %v239 = vmul.f32 %v234, %v219
  %v240 = vmul.f32 %v237, %v219
  %v241 = vadd.f32 %v238, 1e-05
  %v242 = vadd.f32 %v239, 1e-05
  %v243 = vadd.f32 %v240, 1e-05
  %v244 = vrsqrt.pop %v241
  %v245 = vrsqrt.pop %v242
  %v246 = vrsqrt.pop %v243
  %v247 = vmul.f32 %v223, %v244
  %v248 = vmul.f32 %v224, %v245
  %v249 = vmul.f32 %v225, %v246
  %v251 = vlaneseq
  %v252 = vshrl.u32 %v251, 7
  %v253 = vsub.s32 0, %v252
  %v254 = vrot.slane %v208, %v253
  %v256 = vmul.f32 %v247, %v254
  %v257 = vmul.f32 %v248, %v254
  %v258 = vmul.f32 %v249, %v254
  %v260 = vlaneseq
  %v261 = vshrl.u32 %v260, 7
  %v262 = vsub.s32 0, %v261
  %v263 = vrot.slane %v209, %v262
  %v265 = vadd.f32 %v256, %v263
  %v266 = vadd.f32 %v257, %v263
  %v267 = vadd.f32 %v258, %v263
  %268 = vst.msk [vmem:[%s5] sm:$0xff] %vm135, %v265
  %269 = vst.msk [vmem:[%s5 + $0x8] sm:$0xff] %vm135, %v266
  %270 = vst.msk [vmem:[%s5 + $0x10] sm:$0xff] %vm135, %v267
  %v271 = vld [vmem:[%s2] sm:$0xff]
  %v272 = vld [vmem:[%s2 + $0x8] sm:$0xff]
  %v273 = vld [vmem:[%s2 + $0x10] sm:$0xff]
  %v274 = vadd.f32 %v191, %v271
  %v275 = vadd.f32 %v196, %v272
  %v276 = vadd.f32 %v199, %v273
  %v277 = vld [vmem:[%s3] sm:$0x1]
  %v278 = vld [vmem:[%s4] sm:$0x1]
  %v279 = vsel %vm135, %v274, 0.0
  %280 = vadd.xlane.f32.xlu0 %v279
  %v281 = vpop.xlane.xlu0 %280
  %v282 = vsel %vm135, %v275, 0.0
  %283 = vadd.xlane.f32.xlu0 %v282
  %v284 = vpop.xlane.xlu0 %283
  %v285 = vsel %vm135, %v276, 0.0
  %286 = vadd.xlane.f32.xlu0 %v285
  %v287 = vpop.xlane.xlu0 %286
  %v288 = vmul.f32 %v281, %v219
  %v289 = vmul.f32 %v284, %v219
  %v290 = vmul.f32 %v287, %v219
  %v291 = vsub.f32 %v274, %v288
  %v292 = vsub.f32 %v275, %v289
  %v293 = vsub.f32 %v276, %v290
  %v294 = vmul.f32 %v291, %v291
  %v295 = vmul.f32 %v292, %v292
  %v296 = vmul.f32 %v293, %v293
  %v297 = vsel %vm135, %v294, 0.0
  %298 = vadd.xlane.f32.xlu0 %v297
  %v299 = vpop.xlane.xlu0 %298
  %v300 = vsel %vm135, %v295, 0.0
  %301 = vadd.xlane.f32.xlu0 %v300
  %v302 = vpop.xlane.xlu0 %301
  %v303 = vsel %vm135, %v296, 0.0
  %304 = vadd.xlane.f32.xlu0 %v303
  %v305 = vpop.xlane.xlu0 %304
  %v306 = vmul.f32 %v299, %v219
  %v307 = vmul.f32 %v302, %v219
  %v308 = vmul.f32 %v305, %v219
  %v309 = vadd.f32 %v306, 1e-05
  %v310 = vadd.f32 %v307, 1e-05
  %v311 = vadd.f32 %v308, 1e-05
  %v312 = vrsqrt.pop %v309
  %v313 = vrsqrt.pop %v310
  %v314 = vrsqrt.pop %v311
  %v315 = vmul.f32 %v291, %v312
  %v316 = vmul.f32 %v292, %v313
  %v317 = vmul.f32 %v293, %v314
  %v319 = vlaneseq
  %v320 = vshrl.u32 %v319, 7
  %v321 = vsub.s32 0, %v320
  %v322 = vrot.slane %v277, %v321
  %v324 = vmul.f32 %v315, %v322
  %v325 = vmul.f32 %v316, %v322
  %v326 = vmul.f32 %v317, %v322
  %v328 = vlaneseq
  %v329 = vshrl.u32 %v328, 7
  %v330 = vsub.s32 0, %v329
  %v331 = vrot.slane %v278, %v330
  %v333 = vadd.f32 %v324, %v331
  %v334 = vadd.f32 %v325, %v331
  %v335 = vadd.f32 %v326, %v331
  %336 = vst.msk [vmem:[%s5 + $0x18] sm:$0xff] %vm135, %v333
  %337 = vst.msk [vmem:[%s5 + $0x20] sm:$0xff] %vm135, %v334
  %338 = vst.msk [vmem:[%s5 + $0x28] sm:$0xff] %vm135, %v335
  // Predicated region
  $region22: #{coca_vision_only_forward.3} parent=0 // pred_check
    _
  $region23: #{coca_vision_only_forward.3} parent=0 // pred_check_branch
    %340 = sbr.rel (0) target = $region25
  $region24: #{coca_vision_only_forward.3} parent=0 // pred_region
    _
  $region25: #{coca_vision_only_forward.3} parent=0 // pred_fallthru
    _
  // Predicated region
  $region26: #{coca_vision_only_forward.3} parent=0 // pred_check
    _
  $region27: #{coca_vision_only_forward.3} parent=0 // pred_check_branch
    %342 = sbr.rel (0) target = $region29
  $region28: #{coca_vision_only_forward.3} parent=0 // pred_region
    _
  $region29: #{coca_vision_only_forward.3} parent=0 // pred_fallthru
    _

// kernel: coca_vision_only_forward.4
$region0: #{coca_vision_only_forward.4}
  #allocation0 [shape = 'u32[]', space=smem, size = 0x4, offset = 0x4, fixed_abs, tag = 'smem constant byte address 0x4 - core index']
  #allocation1 [shape = 'u32[144,128]{1,0:T(1,128)}', space=vmem, size = 0x12000, scoped, tag = 'internal scratch']
  #allocation2 [shape = 'f32[48,64]{1,0:T(8,128)}', space=vmem, size = 0x6000, scoped, tag = 'scratch operand']
  %s0 = inlined_call_operand.vmem [shape: f32[48,64], index: 0, kind: input, shape index: {}]
  %s1 = inlined_call_operand.vmem [shape: f32[2,1,64], index: 1, kind: input, shape index: {}]
  %s2 = inlined_call_operand.vmem [shape: f32[2,1,64], index: 2, kind: input, shape index: {}]
  %s3 = inlined_call_operand.vmem [shape: bf16[2,64,192], index: 3, kind: input, shape index: {}]
  %s4 = inlined_call_operand.vmem [shape: f32[2,1,192], index: 4, kind: input, shape index: {}]
  %s5 = inlined_call_operand.vmem [shape: bf16[2,64,64], index: 5, kind: input, shape index: {}]
  %s6 = inlined_call_operand.vmem [shape: f32[2,1,64], index: 6, kind: input, shape index: {}]
  %s7 = inlined_call_operand.vmem [shape: f32[2,1,64], index: 7, kind: input, shape index: {}]
  %s8 = inlined_call_operand.vmem [shape: f32[2,1,64], index: 8, kind: input, shape index: {}]
  %s9 = inlined_call_operand.vmem [shape: bf16[2,64,256], index: 9, kind: input, shape index: {}]
  %s10 = inlined_call_operand.vmem [shape: f32[2,1,256], index: 10, kind: input, shape index: {}]
  %s11 = inlined_call_operand.vmem [shape: bf16[2,256,64], index: 11, kind: input, shape index: {}]
  %s12 = inlined_call_operand.vmem [shape: f32[2,1,64], index: 12, kind: input, shape index: {}]
  %s13 = inlined_call_operand.vmem [shape: f32[48,64], index: 13, kind: output, shape index: {}]
  %s14 = sld [smem:[#allocation0]]
  $region89: #{coca_vision_only_forward.4} parent=0
    _
  %s16 = ssub.s32 1, %s14
  %s17 = scalar_select 0, %s16, %s14
  loop: start=0, step=1, limit=4
  $region2: #{coca_vision_only_forward.4} parent=0 // loop_pre_header
    _
  $region3: #{coca_vision_only_forward.4} parent=0 // loop_header
    %s19 = sphi 0, %s23
    %p20 = scmp.ge.s32.totalorder %s19, 4
    %s26 = sphi 0, %s38
    %s27 = sphi 0, %s34
    %s28 = sphi 0, %s26
    %s29 = sphi 0, %s27
    %s30 = sphi 0, %s28
    %s31 = sphi 0, %s29
    %s41 = sphi 0, %s43
    %s44 = sphi 0, %s41
    %s45 = sphi 0, %s44
    %s61 = sphi 0, %s45
    %s67 = sphi 0, %s69
    %s70 = sphi 0, %s67
    %s71 = sphi 0, %s70
    %s87 = sphi 0, %s71
    %s93 = sphi 0, %s95
    %s96 = sphi 0, %s93
    %s97 = sphi 0, %s96
    %s113 = sphi 0, %s97
    %s119 = sphi 0, %s121
    %s122 = sphi 0, %s119
    %s123 = sphi 0, %s122
    %s139 = sphi 0, %s123
    %s145 = sphi 0, %s147
    %s148 = sphi 0, %s145
    %s149 = sphi 0, %s148
    %s165 = sphi 0, %s149
    %s171 = sphi 0, %s173
    %s174 = sphi 0, %s171
    %s175 = sphi 0, %s174
    %s191 = sphi 0, %s175
    %s197 = sphi 0, %s199
    %s200 = sphi 0, %s197
    %s201 = sphi 0, %s200
    %s217 = sphi 0, %s201
    %s223 = sphi 0, %s225
    %s226 = sphi 0, %s223
    %s227 = sphi 0, %s226
    %s243 = sphi 0, %s227
    %s249 = sphi 0, %s251
    %s252 = sphi 0, %s249
    %s253 = sphi 0, %s252
    %s269 = sphi 0, %s253
    %s275 = sphi 0, %s277
    %s278 = sphi 0, %s275
    %s279 = sphi 0, %s278
    %s295 = sphi 0, %s279
    %s301 = sphi 0, %s303
    %s304 = sphi 0, %s301
    %s305 = sphi 0, %s304
    %s321 = sphi 0, %s305
    %s327 = sphi 0, %s329
    %s330 = sphi 0, %s327
    %s331 = sphi 0, %s330
    %s347 = sphi 0, %s331
    %s353 = sphi 0, %s355
    %s356 = sphi 0, %s353
    %s357 = sphi 0, %s356
    %s373 = sphi 0, %s357
    %s379 = sphi 0, %s381
    %s382 = sphi 0, %s379
    %s383 = sphi 0, %s382
    %s399 = sphi 0, %s383
  $region4: #{coca_vision_only_forward.4} parent=0 // loop_header_branch
    %22 = sbr.rel (%p20) target = $region8
  $region5: #{coca_vision_only_forward.4} parent=0 // loop_body
    %s24 = ssub.s32 %s19, 1
    %s25 = ssub.s32 %s19, 2
    %s32 = sadd.s32 1, %s27
    %p33 = scmp.ge.s32.totalorder %s32, 2
    %s34 = scalar_select %p33, 0, %s32
    %s35 = sadd.s32 1, %s26
    %s36 = scalar_select %p33, %s35, %s26
    %p37 = scmp.ge.s32.totalorder %s36, 1
    %s38 = scalar_select %p37, 0, %s36
    %s39 = ssub.s32 %s26, %s38
    %p40 = scmp.eq.s32.totalorder %s39, 0
    %s42 = sadd.s32 %s41, 1
    %s43 = scalar_select %p40, %s41, %s42
    %p46 = pneg %p40
    %p47 = scmp.eq.s32.totalorder %s19, 1
    %p48 = por %p46, %p47
    %p49 = scmp.ne.s32.totalorder %s41, %s44
    %p50 = scmp.eq.s32.totalorder %s19, 0
    %p51 = por %p49, %p50
    %p52 = scmp.ne.s32.totalorder %s41, %s44
    %p53 = scmp.eq.s32.totalorder %s24, 1
    %p54 = por %p52, %p53
    %p55 = scmp.ne.s32.totalorder %s44, %s45
    %p56 = scmp.eq.s32.totalorder %s24, 0
    %p57 = por %p55, %p56
    %p58 = scmp.ne.s32.totalorder %s44, %s45
    %p59 = scmp.eq.s32.totalorder %s25, 1
    %p60 = por %p58, %p59
    %p62 = scmp.ne.s32.totalorder %s45, %s61
    %p63 = scmp.eq.s32.totalorder %s25, 0
    %p64 = por %p62, %p63
    %s65 = ssub.s32 %s27, %s34
    %p66 = scmp.eq.s32.totalorder %s65, 0
    %s68 = sadd.s32 %s67, 1
    %s69 = scalar_select %p66, %s67, %s68
    %p72 = pneg %p66
    %p73 = scmp.eq.s32.totalorder %s19, 1
    %p74 = por %p72, %p73
    %p75 = scmp.ne.s32.totalorder %s67, %s70
    %p76 = scmp.eq.s32.totalorder %s19, 0
    %p77 = por %p75, %p76
    %p78 = scmp.ne.s32.totalorder %s67, %s70
    %p79 = scmp.eq.s32.totalorder %s24, 1
    %p80 = por %p78, %p79
    %p81 = scmp.ne.s32.totalorder %s70, %s71
    %p82 = scmp.eq.s32.totalorder %s24, 0
    %p83 = por %p81, %p82
    %p84 = scmp.ne.s32.totalorder %s70, %s71
    %p85 = scmp.eq.s32.totalorder %s25, 1
    %p86 = por %p84, %p85
    %p88 = scmp.ne.s32.totalorder %s71, %s87
    %p89 = scmp.eq.s32.totalorder %s25, 0
    %p90 = por %p88, %p89
    %s91 = ssub.s32 %s27, %s34
    %p92 = scmp.eq.s32.totalorder %s91, 0
    %s94 = sadd.s32 %s93, 1
    %s95 = scalar_select %p92, %s93, %s94
    %p98 = pneg %p92
    %p99 = scmp.eq.s32.totalorder %s19, 1
    %p100 = por %p98, %p99
    %p101 = scmp.ne.s32.totalorder %s93, %s96
    %p102 = scmp.eq.s32.totalorder %s19, 0
    %p103 = por %p101, %p102
    %p104 = scmp.ne.s32.totalorder %s93, %s96
    %p105 = scmp.eq.s32.totalorder %s24, 1
    %p106 = por %p104, %p105
    %p107 = scmp.ne.s32.totalorder %s96, %s97
    %p108 = scmp.eq.s32.totalorder %s24, 0
    %p109 = por %p107, %p108
    %p110 = scmp.ne.s32.totalorder %s96, %s97
    %p111 = scmp.eq.s32.totalorder %s25, 1
    %p112 = por %p110, %p111
    %p114 = scmp.ne.s32.totalorder %s97, %s113
    %p115 = scmp.eq.s32.totalorder %s25, 0
    %p116 = por %p114, %p115
    %s117 = ssub.s32 %s27, %s34
    %p118 = scmp.eq.s32.totalorder %s117, 0
    %s120 = sadd.s32 %s119, 1
    %s121 = scalar_select %p118, %s119, %s120
    %p124 = pneg %p118
    %p125 = scmp.eq.s32.totalorder %s19, 1
    %p126 = por %p124, %p125
    %p127 = scmp.ne.s32.totalorder %s119, %s122
    %p128 = scmp.eq.s32.totalorder %s19, 0
    %p129 = por %p127, %p128
    %p130 = scmp.ne.s32.totalorder %s119, %s122
    %p131 = scmp.eq.s32.totalorder %s24, 1
    %p132 = por %p130, %p131
    %p133 = scmp.ne.s32.totalorder %s122, %s123
    %p134 = scmp.eq.s32.totalorder %s24, 0
    %p135 = por %p133, %p134
    %p136 = scmp.ne.s32.totalorder %s122, %s123
    %p137 = scmp.eq.s32.totalorder %s25, 1
    %p138 = por %p136, %p137
    %p140 = scmp.ne.s32.totalorder %s123, %s139
    %p141 = scmp.eq.s32.totalorder %s25, 0
    %p142 = por %p140, %p141
    %s143 = ssub.s32 %s27, %s34
    %p144 = scmp.eq.s32.totalorder %s143, 0
    %s146 = sadd.s32 %s145, 1
    %s147 = scalar_select %p144, %s145, %s146
    %p150 = pneg %p144
    %p151 = scmp.eq.s32.totalorder %s19, 1
    %p152 = por %p150, %p151
    %p153 = scmp.ne.s32.totalorder %s145, %s148
    %p154 = scmp.eq.s32.totalorder %s19, 0
    %p155 = por %p153, %p154
    %p156 = scmp.ne.s32.totalorder %s145, %s148
    %p157 = scmp.eq.s32.totalorder %s24, 1
    %p158 = por %p156, %p157
    %p159 = scmp.ne.s32.totalorder %s148, %s149
    %p160 = scmp.eq.s32.totalorder %s24, 0
    %p161 = por %p159, %p160
    %p162 = scmp.ne.s32.totalorder %s148, %s149
    %p163 = scmp.eq.s32.totalorder %s25, 1
    %p164 = por %p162, %p163
    %p166 = scmp.ne.s32.totalorder %s149, %s165
    %p167 = scmp.eq.s32.totalorder %s25, 0
    %p168 = por %p166, %p167
    %s169 = ssub.s32 %s27, %s34
    %p170 = scmp.eq.s32.totalorder %s169, 0
    %s172 = sadd.s32 %s171, 1
    %s173 = scalar_select %p170, %s171, %s172
    %p176 = pneg %p170
    %p177 = scmp.eq.s32.totalorder %s19, 1
    %p178 = por %p176, %p177
    %p179 = scmp.ne.s32.totalorder %s171, %s174
    %p180 = scmp.eq.s32.totalorder %s19, 0
    %p181 = por %p179, %p180
    %p182 = scmp.ne.s32.totalorder %s171, %s174
    %p183 = scmp.eq.s32.totalorder %s24, 1
    %p184 = por %p182, %p183
    %p185 = scmp.ne.s32.totalorder %s174, %s175
    %p186 = scmp.eq.s32.totalorder %s24, 0
    %p187 = por %p185, %p186
    %p188 = scmp.ne.s32.totalorder %s174, %s175
    %p189 = scmp.eq.s32.totalorder %s25, 1
    %p190 = por %p188, %p189
    %p192 = scmp.ne.s32.totalorder %s175, %s191
    %p193 = scmp.eq.s32.totalorder %s25, 0
    %p194 = por %p192, %p193
    %s195 = ssub.s32 %s27, %s34
    %p196 = scmp.eq.s32.totalorder %s195, 0
    %s198 = sadd.s32 %s197, 1
    %s199 = scalar_select %p196, %s197, %s198
    %p202 = pneg %p196
    %p203 = scmp.eq.s32.totalorder %s19, 1
    %p204 = por %p202, %p203
    %p205 = scmp.ne.s32.totalorder %s197, %s200
    %p206 = scmp.eq.s32.totalorder %s19, 0
    %p207 = por %p205, %p206
    %p208 = scmp.ne.s32.totalorder %s197, %s200
    %p209 = scmp.eq.s32.totalorder %s24, 1
    %p210 = por %p208, %p209
    %p211 = scmp.ne.s32.totalorder %s200, %s201
    %p212 = scmp.eq.s32.totalorder %s24, 0
    %p213 = por %p211, %p212
    %p214 = scmp.ne.s32.totalorder %s200, %s201
    %p215 = scmp.eq.s32.totalorder %s25, 1
    %p216 = por %p214, %p215
    %p218 = scmp.ne.s32.totalorder %s201, %s217
    %p219 = scmp.eq.s32.totalorder %s25, 0
    %p220 = por %p218, %p219
    %s221 = ssub.s32 %s27, %s34
    %p222 = scmp.eq.s32.totalorder %s221, 0
    %s224 = sadd.s32 %s223, 1
    %s225 = scalar_select %p222, %s223, %s224
    %p228 = pneg %p222
    %p229 = scmp.eq.s32.totalorder %s19, 1
    %p230 = por %p228, %p229
    %p231 = scmp.ne.s32.totalorder %s223, %s226
    %p232 = scmp.eq.s32.totalorder %s19, 0
    %p233 = por %p231, %p232
    %p234 = scmp.ne.s32.totalorder %s223, %s226
    %p235 = scmp.eq.s32.totalorder %s24, 1
    %p236 = por %p234, %p235
    %p237 = scmp.ne.s32.totalorder %s226, %s227
    %p238 = scmp.eq.s32.totalorder %s24, 0
    %p239 = por %p237, %p238
    %p240 = scmp.ne.s32.totalorder %s226, %s227
    %p241 = scmp.eq.s32.totalorder %s25, 1
    %p242 = por %p240, %p241
    %p244 = scmp.ne.s32.totalorder %s227, %s243
    %p245 = scmp.eq.s32.totalorder %s25, 0
    %p246 = por %p244, %p245
    %s247 = ssub.s32 %s27, %s34
    %p248 = scmp.eq.s32.totalorder %s247, 0
    %s250 = sadd.s32 %s249, 1
    %s251 = scalar_select %p248, %s249, %s250
    %p254 = pneg %p248
    %p255 = scmp.eq.s32.totalorder %s19, 1
    %p256 = por %p254, %p255
    %p257 = scmp.ne.s32.totalorder %s249, %s252
    %p258 = scmp.eq.s32.totalorder %s19, 0
    %p259 = por %p257, %p258
    %p260 = scmp.ne.s32.totalorder %s249, %s252
    %p261 = scmp.eq.s32.totalorder %s24, 1
    %p262 = por %p260, %p261
    %p263 = scmp.ne.s32.totalorder %s252, %s253
    %p264 = scmp.eq.s32.totalorder %s24, 0
    %p265 = por %p263, %p264
    %p266 = scmp.ne.s32.totalorder %s252, %s253
    %p267 = scmp.eq.s32.totalorder %s25, 1
    %p268 = por %p266, %p267
    %p270 = scmp.ne.s32.totalorder %s253, %s269
    %p271 = scmp.eq.s32.totalorder %s25, 0
    %p272 = por %p270, %p271
    %s273 = ssub.s32 %s27, %s34
    %p274 = scmp.eq.s32.totalorder %s273, 0
    %s276 = sadd.s32 %s275, 1
    %s277 = scalar_select %p274, %s275, %s276
    %p280 = pneg %p274
    %p281 = scmp.eq.s32.totalorder %s19, 1
    %p282 = por %p280, %p281
    %p283 = scmp.ne.s32.totalorder %s275, %s278
    %p284 = scmp.eq.s32.totalorder %s19, 0
    %p285 = por %p283, %p284
    %p286 = scmp.ne.s32.totalorder %s275, %s278
    %p287 = scmp.eq.s32.totalorder %s24, 1
    %p288 = por %p286, %p287
    %p289 = scmp.ne.s32.totalorder %s278, %s279
    %p290 = scmp.eq.s32.totalorder %s24, 0
    %p291 = por %p289, %p290
    %p292 = scmp.ne.s32.totalorder %s278, %s279
    %p293 = scmp.eq.s32.totalorder %s25, 1
    %p294 = por %p292, %p293
    %p296 = scmp.ne.s32.totalorder %s279, %s295
    %p297 = scmp.eq.s32.totalorder %s25, 0
    %p298 = por %p296, %p297
    %s299 = ssub.s32 %s27, %s34
    %p300 = scmp.eq.s32.totalorder %s299, 0
    %s302 = sadd.s32 %s301, 1
    %s303 = scalar_select %p300, %s301, %s302
    %p306 = pneg %p300
    %p307 = scmp.eq.s32.totalorder %s19, 1
    %p308 = por %p306, %p307
    %p309 = scmp.ne.s32.totalorder %s301, %s304
    %p310 = scmp.eq.s32.totalorder %s19, 0
    %p311 = por %p309, %p310
    %p312 = scmp.ne.s32.totalorder %s301, %s304
    %p313 = scmp.eq.s32.totalorder %s24, 1
    %p314 = por %p312, %p313
    %p315 = scmp.ne.s32.totalorder %s304, %s305
    %p316 = scmp.eq.s32.totalorder %s24, 0
    %p317 = por %p315, %p316
    %p318 = scmp.ne.s32.totalorder %s304, %s305
    %p319 = scmp.eq.s32.totalorder %s25, 1
    %p320 = por %p318, %p319
    %p322 = scmp.ne.s32.totalorder %s305, %s321
    %p323 = scmp.eq.s32.totalorder %s25, 0
    %p324 = por %p322, %p323
    %s325 = ssub.s32 %s27, %s34
    %p326 = scmp.eq.s32.totalorder %s325, 0
    %s328 = sadd.s32 %s327, 1
    %s329 = scalar_select %p326, %s327, %s328
    %p332 = pneg %p326
    %p333 = scmp.eq.s32.totalorder %s19, 1
    %p334 = por %p332, %p333
    %p335 = scmp.ne.s32.totalorder %s327, %s330
    %p336 = scmp.eq.s32.totalorder %s19, 0
    %p337 = por %p335, %p336
    %p338 = scmp.ne.s32.totalorder %s327, %s330
    %p339 = scmp.eq.s32.totalorder %s24, 1
    %p340 = por %p338, %p339
    %p341 = scmp.ne.s32.totalorder %s330, %s331
    %p342 = scmp.eq.s32.totalorder %s24, 0
    %p343 = por %p341, %p342
    %p344 = scmp.ne.s32.totalorder %s330, %s331
    %p345 = scmp.eq.s32.totalorder %s25, 1
    %p346 = por %p344, %p345
    %p348 = scmp.ne.s32.totalorder %s331, %s347
    %p349 = scmp.eq.s32.totalorder %s25, 0
    %p350 = por %p348, %p349
    %s351 = ssub.s32 %s27, %s34
    %p352 = scmp.eq.s32.totalorder %s351, 0
    %s354 = sadd.s32 %s353, 1
    %s355 = scalar_select %p352, %s353, %s354
    %p358 = pneg %p352
    %p359 = scmp.eq.s32.totalorder %s19, 1
    %p360 = por %p358, %p359
    %p361 = scmp.ne.s32.totalorder %s353, %s356
    %p362 = scmp.eq.s32.totalorder %s19, 0
    %p363 = por %p361, %p362
    %p364 = scmp.ne.s32.totalorder %s353, %s356
    %p365 = scmp.eq.s32.totalorder %s24, 1
    %p366 = por %p364, %p365
    %p367 = scmp.ne.s32.totalorder %s356, %s357
    %p368 = scmp.eq.s32.totalorder %s24, 0
    %p369 = por %p367, %p368
    %p370 = scmp.ne.s32.totalorder %s356, %s357
    %p371 = scmp.eq.s32.totalorder %s25, 1
    %p372 = por %p370, %p371
    %p374 = scmp.ne.s32.totalorder %s357, %s373
    %p375 = scmp.eq.s32.totalorder %s25, 0
    %p376 = por %p374, %p375
    %s377 = ssub.s32 %s26, %s38
    %p378 = scmp.eq.s32.totalorder %s377, 0
    %s380 = sadd.s32 %s379, 1
    %s381 = scalar_select %p378, %s379, %s380
    %p384 = pneg %p378
    %p385 = scmp.eq.s32.totalorder %s19, 1
    %p386 = por %p384, %p385
    %p387 = scmp.ne.s32.totalorder %s379, %s382
    %p388 = scmp.eq.s32.totalorder %s19, 0
    %p389 = por %p387, %p388
    %p390 = scmp.ne.s32.totalorder %s379, %s382
    %p391 = scmp.eq.s32.totalorder %s24, 1
    %p392 = por %p390, %p391
    %p393 = scmp.ne.s32.totalorder %s382, %s383
    %p394 = scmp.eq.s32.totalorder %s24, 0
    %p395 = por %p393, %p394
    %p396 = scmp.ne.s32.totalorder %s382, %s383
    %p397 = scmp.eq.s32.totalorder %s25, 1
    %p398 = por %p396, %p397
    %p400 = scmp.ne.s32.totalorder %s383, %s399
    %p401 = scmp.eq.s32.totalorder %s25, 0
    %p402 = por %p400, %p401
    %p403 = scmp.le.s32.totalorder 1, %s19
    %p404 = scmp.lt.s32.totalorder %s19, 3
    %p405 = pnand %p403, %p404
    %p406 = pneg %p405
    // Predicated region
    $region9: #{coca_vision_only_forward.4} parent=5 // pred_check
      _
    $region10: #{coca_vision_only_forward.4} parent=5 // pred_check_branch
      %408 = sbr.rel (%p405) target = $region12
    $region11: #{coca_vision_only_forward.4} parent=5 // pred_region
      %s409 = ssub.s32 %s19, 1
      // Predicated region
      $region13: #{coca_vision_only_forward.4} parent=11 // pred_check
        %p410 = pneg %p57
      $region14: #{coca_vision_only_forward.4} parent=11 // pred_check_branch
        %412 = sbr.rel (%p410) target = $region16
      $region15: #{coca_vision_only_forward.4} parent=11 // pred_region
        %s413 = smul.u32 6, %s28
        %p414 = scmp.lt.s32.totalorder %s413, 5
        %s415 = scalar_select %p414, %s413, 5
        %s416 = smul.addr %s415, 8
        %s417 = scalar_lea.vmem %s0, %s416
        %s418 = smul.u32 6, %s28
      $region16: #{coca_vision_only_forward.4} parent=11 // pred_fallthru
        _
    $region12: #{coca_vision_only_forward.4} parent=5 // pred_fallthru
      _
    %p419 = scmp.lt.s32.totalorder %s19, 2
    // Predicated region
    $region17: #{coca_vision_only_forward.4} parent=5 // pred_check
      %p420 = pneg %p419
    $region18: #{coca_vision_only_forward.4} parent=5 // pred_check_branch
      %422 = sbr.rel (%p420) target = $region20
    $region19: #{coca_vision_only_forward.4} parent=5 // pred_region
      // Predicated region
      $region21: #{coca_vision_only_forward.4} parent=19 // pred_check
        %p423 = pneg %p77
      $region22: #{coca_vision_only_forward.4} parent=19 // pred_check_branch
        %425 = sbr.rel (%p423) target = $region24
      $region23: #{coca_vision_only_forward.4} parent=19 // pred_region
        %p426 = scmp.lt.s32.totalorder %s27, 1
        %s427 = scalar_select %p426, %s27, 1
        %s428 = scalar_lea.vmem %s1, %s427
      $region24: #{coca_vision_only_forward.4} parent=19 // pred_fallthru
        _
      // Predicated region
      $region25: #{coca_vision_only_forward.4} parent=19 // pred_check
        %p429 = pneg %p103
      $region26: #{coca_vision_only_forward.4} parent=19 // pred_check_branch
        %431 = sbr.rel (%p429) target = $region28
      $region27: #{coca_vision_only_forward.4} parent=19 // pred_region
        %p432 = scmp.lt.s32.totalorder %s27, 1
        %s433 = scalar_select %p432, %s27, 1
        %s434 = scalar_lea.vmem %s2, %s433
      $region28: #{coca_vision_only_forward.4} parent=19 // pred_fallthru
        _
      // Predicated region
      $region29: #{coca_vision_only_forward.4} parent=19 // pred_check
        %p435 = pneg %p129
      $region30: #{coca_vision_only_forward.4} parent=19 // pred_check_branch
        %437 = sbr.rel (%p435) target = $region32
      $region31: #{coca_vision_only_forward.4} parent=19 // pred_region
        %p438 = scmp.lt.s32.totalorder %s27, 1
        %s439 = scalar_select %p438, %s27, 1
        %s440 = smul.addr %s439, 16
        %s441 = smul.addr %s440, 4
        %s442 = scalar_lea.vmem %s3, %s441
      $region32: #{coca_vision_only_forward.4} parent=19 // pred_fallthru
        _
      // Predicated region
      $region33: #{coca_vision_only_forward.4} parent=19 // pred_check
        %p443 = pneg %p155
      $region34: #{coca_vision_only_forward.4} parent=19 // pred_check_branch
        %445 = sbr.rel (%p443) target = $region36
      $region35: #{coca_vision_only_forward.4} parent=19 // pred_region
        %p446 = scmp.lt.s32.totalorder %s27, 1
        %s447 = scalar_select %p446, %s27, 1
        %s448 = smul.addr %s447, 2
        %s449 = scalar_lea.vmem %s4, %s448
      $region36: #{coca_vision_only_forward.4} parent=19 // pred_fallthru
        _
      // Predicated region
      $region37: #{coca_vision_only_forward.4} parent=19 // pred_check
        %p450 = pneg %p181
      $region38: #{coca_vision_only_forward.4} parent=19 // pred_check_branch
        %452 = sbr.rel (%p450) target = $region40
      $region39: #{coca_vision_only_forward.4} parent=19 // pred_region
        %p453 = scmp.lt.s32.totalorder %s27, 1
        %s454 = scalar_select %p453, %s27, 1
        %s455 = smul.addr %s454, 8
        %s456 = smul.addr %s455, 4
        %s457 = scalar_lea.vmem %s5, %s456
      $region40: #{coca_vision_only_forward.4} parent=19 // pred_fallthru
        _
      // Predicated region
      $region41: #{coca_vision_only_forward.4} parent=19 // pred_check
        %p458 = pneg %p207
      $region42: #{coca_vision_only_forward.4} parent=19 // pred_check_branch
        %460 = sbr.rel (%p458) target = $region44
      $region43: #{coca_vision_only_forward.4} parent=19 // pred_region
        %p461 = scmp.lt.s32.totalorder %s27, 1
        %s462 = scalar_select %p461, %s27, 1
        %s463 = scalar_lea.vmem %s6, %s462
      $region44: #{coca_vision_only_forward.4} parent=19 // pred_fallthru
        _
      // Predicated region
      $region45: #{coca_vision_only_forward.4} parent=19 // pred_check
        %p464 = pneg %p233
      $region46: #{coca_vision_only_forward.4} parent=19 // pred_check_branch
        %466 = sbr.rel (%p464) target = $region48
      $region47: #{coca_vision_only_forward.4} parent=19 // pred_region
        %p467 = scmp.lt.s32.totalorder %s27, 1
        %s468 = scalar_select %p467, %s27, 1
        %s469 = scalar_lea.vmem %s7, %s468
      $region48: #{coca_vision_only_forward.4} parent=19 // pred_fallthru
        _
      // Predicated region
      $region49: #{coca_vision_only_forward.4} parent=19 // pred_check
        %p470 = pneg %p259
      $region50: #{coca_vision_only_forward.4} parent=19 // pred_check_branch
        %472 = sbr.rel (%p470) target = $region52
      $region51: #{coca_vision_only_forward.4} parent=19 // pred_region
        %p473 = scmp.lt.s32.totalorder %s27, 1
        %s474 = scalar_select %p473, %s27, 1
        %s475 = scalar_lea.vmem %s8, %s474
      $region52: #{coca_vision_only_forward.4} parent=19 // pred_fallthru
        _
      // Predicated region
      $region53: #{coca_vision_only_forward.4} parent=19 // pred_check
        %p476 = pneg %p285
      $region54: #{coca_vision_only_forward.4} parent=19 // pred_check_branch
        %478 = sbr.rel (%p476) target = $region56
      $region55: #{coca_vision_only_forward.4} parent=19 // pred_region
        %p479 = scmp.lt.s32.totalorder %s27, 1
        %s480 = scalar_select %p479, %s27, 1
        %s481 = smul.addr %s480, 16
        %s482 = smul.addr %s481, 4
        %s483 = scalar_lea.vmem %s9, %s482
      $region56: #{coca_vision_only_forward.4} parent=19 // pred_fallthru
        _
      // Predicated region
      $region57: #{coca_vision_only_forward.4} parent=19 // pred_check
        %p484 = pneg %p311
      $region58: #{coca_vision_only_forward.4} parent=19 // pred_check_branch
        %486 = sbr.rel (%p484) target = $region60
      $region59: #{coca_vision_only_forward.4} parent=19 // pred_region
        %p487 = scmp.lt.s32.totalorder %s27, 1
        %s488 = scalar_select %p487, %s27, 1
        %s489 = smul.addr %s488, 2
        %s490 = scalar_lea.vmem %s10, %s489
      $region60: #{coca_vision_only_forward.4} parent=19 // pred_fallthru
        _
      // Predicated region
      $region61: #{coca_vision_only_forward.4} parent=19 // pred_check
        %p491 = pneg %p337
      $region62: #{coca_vision_only_forward.4} parent=19 // pred_check_branch
        %493 = sbr.rel (%p491) target = $region64
      $region63: #{coca_vision_only_forward.4} parent=19 // pred_region
        %p494 = scmp.lt.s32.totalorder %s27, 1
        %s495 = scalar_select %p494, %s27, 1
        %s496 = smul.addr %s495, 32
        %s497 = smul.addr %s496, 4
        %s498 = scalar_lea.vmem %s11, %s497
      $region64: #{coca_vision_only_forward.4} parent=19 // pred_fallthru
        _
      // Predicated region
      $region65: #{coca_vision_only_forward.4} parent=19 // pred_check
        %p499 = pneg %p363
      $region66: #{coca_vision_only_forward.4} parent=19 // pred_check_branch
        %501 = sbr.rel (%p499) target = $region68
      $region67: #{coca_vision_only_forward.4} parent=19 // pred_region
        %p502 = scmp.lt.s32.totalorder %s27, 1
        %s503 = scalar_select %p502, %s27, 1
        %s504 = scalar_lea.vmem %s12, %s503
      $region68: #{coca_vision_only_forward.4} parent=19 // pred_fallthru
        _
    $region20: #{coca_vision_only_forward.4} parent=5 // pred_fallthru
      _
    %p505 = scmp.le.s32.totalorder 1, %s19
    %p506 = scmp.lt.s32.totalorder %s19, 3
    %p507 = pnand %p505, %p506
    %p508 = pneg %p507
    // Predicated region
    $region69: #{coca_vision_only_forward.4} parent=5 // pred_check
      _
    $region70: #{coca_vision_only_forward.4} parent=5 // pred_check_branch
      %510 = sbr.rel (%p507) target = $region72
    $region71: #{coca_vision_only_forward.4} parent=5 // pred_region
      %s511 = ssub.s32 %s19, 1
      %s512 = smul.u32 6, %s28
      %p513 = scmp.lt.s32.totalorder %s512, 5
      %s514 = scalar_select %p513, %s512, 5
      %s515 = smul.addr %s514, 8
      %s516 = scalar_lea.vmem %s0, %s515
      %p517 = pneg %p57
      %p518 = pneg %p54
      %p519 = scmp.lt.s32.totalorder %s29, 1
      %s520 = scalar_select %p519, %s29, 1
      %s521 = scalar_lea.vmem %s1, %s520
      %p522 = pneg %p83
      %p523 = pneg %p80
      %p524 = scmp.lt.s32.totalorder %s29, 1
      %s525 = scalar_select %p524, %s29, 1
      %s526 = scalar_lea.vmem %s2, %s525
      %p527 = pneg %p109
      %p528 = pneg %p106
      %p529 = scmp.lt.s32.totalorder %s29, 1
      %s530 = scalar_select %p529, %s29, 1
      %s531 = smul.addr %s530, 16
      %s532 = smul.addr %s531, 4
      %s533 = scalar_lea.vmem %s3, %s532
      %p534 = pneg %p135
      %p535 = pneg %p132
      %p536 = scmp.lt.s32.totalorder %s29, 1
      %s537 = scalar_select %p536, %s29, 1
      %s538 = smul.addr %s537, 2
      %s539 = scalar_lea.vmem %s4, %s538
      %p540 = pneg %p161
      %p541 = pneg %p158
      %p542 = scmp.lt.s32.totalorder %s29, 1
      %s543 = scalar_select %p542, %s29, 1
      %s544 = smul.addr %s543, 8
      %s545 = smul.addr %s544, 4
      %s546 = scalar_lea.vmem %s5, %s545
      %p547 = pneg %p187
      %p548 = pneg %p184
      %p549 = scmp.lt.s32.totalorder %s29, 1
      %s550 = scalar_select %p549, %s29, 1
      %s551 = scalar_lea.vmem %s6, %s550
      %p552 = pneg %p213
      %p553 = pneg %p210
      %p554 = scmp.lt.s32.totalorder %s29, 1
      %s555 = scalar_select %p554, %s29, 1
      %s556 = scalar_lea.vmem %s7, %s555
      %p557 = pneg %p239
      %p558 = pneg %p236
      %p559 = scmp.lt.s32.totalorder %s29, 1
      %s560 = scalar_select %p559, %s29, 1
      %s561 = scalar_lea.vmem %s8, %s560
      %p562 = pneg %p265
      %p563 = pneg %p262
      %p564 = scmp.lt.s32.totalorder %s29, 1
      %s565 = scalar_select %p564, %s29, 1
      %s566 = smul.addr %s565, 16
      %s567 = smul.addr %s566, 4
      %s568 = scalar_lea.vmem %s9, %s567
      %p569 = pneg %p291
      %p570 = pneg %p288
      %p571 = scmp.lt.s32.totalorder %s29, 1
      %s572 = scalar_select %p571, %s29, 1
      %s573 = smul.addr %s572, 2
      %s574 = scalar_lea.vmem %s10, %s573
      %p575 = pneg %p317
      %p576 = pneg %p314
      %p577 = scmp.lt.s32.totalorder %s29, 1
      %s578 = scalar_select %p577, %s29, 1
      %s579 = smul.addr %s578, 32
      %s580 = smul.addr %s579, 4
      %s581 = scalar_lea.vmem %s11, %s580
      %p582 = pneg %p343
      %p583 = pneg %p340
      %p584 = scmp.lt.s32.totalorder %s29, 1
      %s585 = scalar_select %p584, %s29, 1
      %s586 = scalar_lea.vmem %s12, %s585
      %p587 = pneg %p369
      %p588 = pneg %p366
      %p589 = pneg %p395
      %p590 = pneg %p392
      %s591 = smul.u32 6, %s28
      %p592 = scmp.lt.s32.totalorder %s591, 5
      %s593 = scalar_select %p592, %s591, 5
      %s594 = smul.addr %s593, 8
      %s595 = scalar_lea.vmem %s13, %s594
      %s596 = smul.u32 6, %s28
      %p597 = scmp.lt.s32.totalorder %s596, 5
      %s598 = scalar_select %p597, %s596, 5
      %s599 = smul.addr %s598, 8
      %s600 = scalar_lea.vmem %s0, %s599
      %s601 = smul.u32 6, %s28
      %p602 = scmp.lt.s32.totalorder %s29, 1
      %s603 = scalar_select %p602, %s29, 1
      %s604 = scalar_lea.vmem %s1, %s603
      %p605 = scmp.lt.s32.totalorder %s29, 1
      %s606 = scalar_select %p605, %s29, 1
      %s607 = scalar_lea.vmem %s2, %s606
      %p608 = scmp.lt.s32.totalorder %s29, 1
      %s609 = scalar_select %p608, %s29, 1
      %s610 = smul.addr %s609, 16
      %s611 = smul.addr %s610, 4
      %s612 = scalar_lea.vmem %s3, %s611
      %p613 = scmp.lt.s32.totalorder %s29, 1
      %s614 = scalar_select %p613, %s29, 1
      %s615 = smul.addr %s614, 2
      %s616 = scalar_lea.vmem %s4, %s615
      %p617 = scmp.lt.s32.totalorder %s29, 1
      %s618 = scalar_select %p617, %s29, 1
      %s619 = smul.addr %s618, 8
      %s620 = smul.addr %s619, 4
      %s621 = scalar_lea.vmem %s5, %s620
      %p622 = scmp.lt.s32.totalorder %s29, 1
      %s623 = scalar_select %p622, %s29, 1
      %s624 = scalar_lea.vmem %s6, %s623
      %p625 = scmp.lt.s32.totalorder %s29, 1
      %s626 = scalar_select %p625, %s29, 1
      %s627 = scalar_lea.vmem %s7, %s626
      %p628 = scmp.lt.s32.totalorder %s29, 1
      %s629 = scalar_select %p628, %s29, 1
      %s630 = scalar_lea.vmem %s8, %s629
      %p631 = scmp.lt.s32.totalorder %s29, 1
      %s632 = scalar_select %p631, %s29, 1
      %s633 = smul.addr %s632, 16
      %s634 = smul.addr %s633, 4
      %s635 = scalar_lea.vmem %s9, %s634
      %p636 = scmp.lt.s32.totalorder %s29, 1
      %s637 = scalar_select %p636, %s29, 1
      %s638 = smul.addr %s637, 2
      %s639 = scalar_lea.vmem %s10, %s638
      %p640 = scmp.lt.s32.totalorder %s29, 1
      %s641 = scalar_select %p640, %s29, 1
      %s642 = smul.addr %s641, 32
      %s643 = smul.addr %s642, 4
      %s644 = scalar_lea.vmem %s11, %s643
      %p645 = scmp.lt.s32.totalorder %s29, 1
      %s646 = scalar_select %p645, %s29, 1
      %s647 = scalar_lea.vmem %s12, %s646
      %s648 = smul.u32 6, %s28
      %p649 = scmp.lt.s32.totalorder %s648, 5
      %s650 = scalar_select %p649, %s648, 5
      %s651 = smul.addr %s650, 8
      %s652 = scalar_lea.vmem %s13, %s651
      %s653 = smul.u32 6, %s28
      %p655 = scmp.eq.s32.totalorder %s29, 0
      // Predicated region
      $region73: #{coca_vision_only_forward.4} parent=71 // pred_check
        %p656 = pneg %p655
      $region74: #{coca_vision_only_forward.4} parent=71 // pred_check_branch
        %658 = sbr.rel (%p656) target = $region76
      $region75: #{coca_vision_only_forward.4} parent=71 // pred_region
        %v659 = vld [vmem:[%s600] sm:$0xff]
        %v660 = vld [vmem:[%s600 + $0x8] sm:$0xff]
        %v661 = vld [vmem:[%s600 + $0x10] sm:$0xff]
        %v662 = vld [vmem:[%s600 + $0x18] sm:$0xff]
        %v663 = vld [vmem:[%s600 + $0x20] sm:$0xff]
        %v664 = vld [vmem:[%s600 + $0x28] sm:$0xff]
        %vm665 = vcmask 523264
        %666 = vst.msk [vmem:[%s652] sm:$0xff] %vm665, %v659
        %667 = vst.msk [vmem:[%s652 + $0x8] sm:$0xff] %vm665, %v660
        %668 = vst.msk [vmem:[%s652 + $0x10] sm:$0xff] %vm665, %v661
        %669 = vst.msk [vmem:[%s652 + $0x18] sm:$0xff] %vm665, %v662
        %670 = vst.msk [vmem:[%s652 + $0x20] sm:$0xff] %vm665, %v663
        %671 = vst.msk [vmem:[%s652 + $0x28] sm:$0xff] %vm665, %v664
      $region76: #{coca_vision_only_forward.4} parent=71 // pred_fallthru
        _
      %v672 = vld [vmem:[%s652] sm:$0xff]
      %v673 = vld [vmem:[%s652 + $0x8] sm:$0xff]
      %v674 = vld [vmem:[%s652 + $0x10] sm:$0xff]
      %v675 = vld [vmem:[%s652 + $0x18] sm:$0xff]
      %v676 = vld [vmem:[%s652 + $0x20] sm:$0xff]
      %v677 = vld [vmem:[%s652 + $0x28] sm:$0xff]
      %v678 = vld [vmem:[%s604] sm:$0x1]
      %v679 = vld [vmem:[%s607] sm:$0x1]
      %vm680 = vcmask 523264
      %v681 = vsel %vm680, %v672, 0.0
      %682 = vadd.xlane.f32.xlu0 %v681
      %v683 = vpop.xlane.xlu0 %682
      %v684 = vsel %vm680, %v673, 0.0
      %685 = vadd.xlane.f32.xlu0 %v684
      %v686 = vpop.xlane.xlu0 %685
      %v687 = vsel %vm680, %v674, 0.0
      %688 = vadd.xlane.f32.xlu0 %v687
      %v689 = vpop.xlane.xlu0 %688
      %v690 = vsel %vm680, %v675, 0.0
      %691 = vadd.xlane.f32.xlu0 %v690
      %v692 = vpop.xlane.xlu0 %691
      %v693 = vsel %vm680, %v676, 0.0
      %694 = vadd.xlane.f32.xlu0 %v693
      %v695 = vpop.xlane.xlu0 %694
      %v696 = vsel %vm680, %v677, 0.0
      %697 = vadd.xlane.f32.xlu0 %v696
      %v698 = vpop.xlane.xlu0 %697
      %v699 = vrcp.pop 64.0
      %v700 = vmul.f32 %v683, %v699
      %v701 = vmul.f32 %v686, %v699
      %v702 = vmul.f32 %v689, %v699
      %v703 = vmul.f32 %v692, %v699
      %v704 = vmul.f32 %v695, %v699
      %v705 = vmul.f32 %v698, %v699
      %v706 = vsub.f32 %v672, %v700
      %v707 = vsub.f32 %v673, %v701
      %v708 = vsub.f32 %v674, %v702
      %v709 = vsub.f32 %v675, %v703
      %v710 = vsub.f32 %v676, %v704
      %v711 = vsub.f32 %v677, %v705
      %v712 = vmul.f32 %v706, %v706
      %v713 = vmul.f32 %v707, %v707
      %v714 = vmul.f32 %v708, %v708
      %v715 = vmul.f32 %v709, %v709
      %v716 = vmul.f32 %v710, %v710
      %v717 = vmul.f32 %v711, %v711
      %v718 = vsel %vm680, %v712, 0.0
      %719 = vadd.xlane.f32.xlu0 %v718
      %v720 = vpop.xlane.xlu0 %719
      %v721 = vsel %vm680, %v713, 0.0
      %722 = vadd.xlane.f32.xlu0 %v721
      %v723 = vpop.xlane.xlu0 %722
      %v724 = vsel %vm680, %v714, 0.0
      %725 = vadd.xlane.f32.xlu0 %v724
      %v726 = vpop.xlane.xlu0 %725
      %v727 = vsel %vm680, %v715, 0.0
      %728 = vadd.xlane.f32.xlu0 %v727
      %v729 = vpop.xlane.xlu0 %728
      %v730 = vsel %vm680, %v716, 0.0
      %731 = vadd.xlane.f32.xlu0 %v730
      %v732 = vpop.xlane.xlu0 %731
      %v733 = vsel %vm680, %v717, 0.0
      %734 = vadd.xlane.f32.xlu0 %v733
      %v735 = vpop.xlane.xlu0 %734
      %v736 = vmul.f32 %v720, %v699
      %v737 = vmul.f32 %v723, %v699
      %v738 = vmul.f32 %v726, %v699
      %v739 = vmul.f32 %v729, %v699
      %v740 = vmul.f32 %v732, %v699
      %v741 = vmul.f32 %v735, %v699
      %v742 = vadd.f32 %v736, 1e-05
      %v743 = vadd.f32 %v737, 1e-05
      %v744 = vadd.f32 %v738, 1e-05
      %v745 = vadd.f32 %v739, 1e-05
      %v746 = vadd.f32 %v740, 1e-05
      %v747 = vadd.f32 %v741, 1e-05
      %v748 = vrsqrt.pop %v742
      %v749 = vrsqrt.pop %v743
      %v750 = vrsqrt.pop %v744
      %v751 = vrsqrt.pop %v745
      %v752 = vrsqrt.pop %v746
      %v753 = vrsqrt.pop %v747
      %v754 = vmul.f32 %v706, %v748
      %v755 = vmul.f32 %v707, %v749
      %v756 = vmul.f32 %v708, %v750
      %v757 = vmul.f32 %v709, %v751
      %v758 = vmul.f32 %v710, %v752
      %v759 = vmul.f32 %v711, %v753
      %v761 = vlaneseq
      %v762 = vshrl.u32 %v761, 7
      %v763 = vsub.s32 0, %v762
      %v764 = vrot.slane %v678, %v763
      %v766 = vmul.f32 %v754, %v764
      %v767 = vmul.f32 %v755, %v764
      %v768 = vmul.f32 %v756, %v764
      %v769 = vmul.f32 %v757, %v764
      %v770 = vmul.f32 %v758, %v764
      %v771 = vmul.f32 %v759, %v764
      %v773 = vlaneseq
      %v774 = vshrl.u32 %v773, 7
      %v775 = vsub.s32 0, %v774
      %v776 = vrot.slane %v679, %v775
      %v778 = vadd.f32 %v766, %v776
      %v779 = vadd.f32 %v767, %v776
      %v780 = vadd.f32 %v768, %v776
      %v781 = vadd.f32 %v769, %v776
      %v782 = vadd.f32 %v770, %v776
      %v783 = vadd.f32 %v771, %v776
      %v784 = vpack.c.bf16 %v779, %v778
      %v785 = vpack.c.bf16 %v781, %v780
      %v786 = vpack.c.bf16 %v783, %v782
      %v787 = vld [vmem:[%s612] sm:$0xff]
      %v788 = vld [vmem:[%s612 + $0x8] sm:$0xff]
      %v789 = vld [vmem:[%s612 + $0x10] sm:$0xff]
      %v790 = vld [vmem:[%s612 + $0x18] sm:$0xff]
      %v791 = vld [vmem:[%s612 + $0x20] sm:$0xff]
      %v792 = vld [vmem:[%s612 + $0x28] sm:$0xff]
      %v793 = vld [vmem:[%s612 + $0x30] sm:$0xff]
      %v794 = vld [vmem:[%s612 + $0x38] sm:$0xff]
      %v795 = vld [vmem:[%s616] sm:$0x3]
      %v797 = vlaneseq
      %v798 = vshrl.u32 %v797, 7
      %v799 = vsub.s32 0, %v798
      %v800 = vrot.slane %v795, %v799
      %v801 = vlaneseq
      %v802 = vshrl.u32 %v801, 7
      %v803 = vsub.s32 1, %v802
      %v804 = vrot.slane %v795, %v803
      %v815 = vunpack.c.l.b16 %v787
      %v816 = vunpack.c.h.b16 %v787
      %v817 = vunpack.c.l.b16 %v788
      %v818 = vunpack.c.h.b16 %v788
      %v819 = vunpack.c.l.b16 %v789
      %v820 = vunpack.c.h.b16 %v789
      %v821 = vunpack.c.l.b16 %v790
      %v822 = vunpack.c.h.b16 %v790
      %v823 = vunpack.c.l.b16 %v791
      %v824 = vunpack.c.h.b16 %v791
      %v825 = vunpack.c.l.b16 %v792
      %v826 = vunpack.c.h.b16 %v792
      %v827 = vunpack.c.l.b16 %v793
      %v828 = vunpack.c.h.b16 %v793
      %v829 = vunpack.c.l.b16 %v794
      %v830 = vunpack.c.h.b16 %v794
      %v831 = vpack.c.b16 %v817, %v815
      %v832 = vpack.c.b16 %v818, %v816
      %v833 = vpack.c.b16 %v821, %v819
      %v834 = vpack.c.b16 %v822, %v820
      %v835 = vpack.c.b16 %v825, %v823
      %v836 = vpack.c.b16 %v826, %v824
      %v837 = vpack.c.b16 %v829, %v827
      %v838 = vpack.c.b16 %v830, %v828
      %v848 = vsel %vm680, %v784, 0
      %v851 = vsel %vm680, %v785, 0
      %v854 = vsel %vm680, %v786, 0
      %856 = vmatprep.subr.bf16.mxu0 %v832
      %857 = vmatpush1.bf16.msra.mxu0 %v831
      %858 = vmatprep.subr.bf16.mxu0 %v834
      %859 = vmatpush1.bf16.msra.mxu0 %v833
      %860 = vmatprep.subr.bf16.mxu0 %v836
      %861 = vmatpush1.bf16.msra.mxu0 %v835
      %862 = vmatprep.subr.bf16.mxu0 %v838
      %863 = vmatpush1.bf16.msra.mxu0 %v837
      %864 = vmatprep.subr.bf16.mxu0 0
      %865 = vmatpush1.bf16.msra.mxu0 0
      %866 = vmatprep.subr.bf16.mxu0 0
      %867 = vmatpush1.bf16.msra.mxu0 0
      %868 = vmatprep.subr.bf16.mxu0 0
      %869 = vmatpush1.bf16.msra.mxu0 0
      %870 = vmatprep.subr.bf16.mxu0 0
      %871 = vmatpush1.bf16.msra.mxu0 0
      %872 = vmatprep.subr.bf16.mxu0 0
      %873 = vmatpush1.bf16.msra.mxu0 0
      %874 = vmatprep.subr.bf16.mxu0 0
      %875 = vmatpush1.bf16.msra.mxu0 0
      %876 = vmatprep.subr.bf16.mxu0 0
      %877 = vmatpush1.bf16.msra.mxu0 0
      %878 = vmatprep.subr.bf16.mxu0 0
      %879 = vmatpush1.bf16.msra.mxu0 0
      %880 = vmatprep.subr.bf16.mxu0 0
      %881 = vmatpush1.bf16.msra.mxu0 0
      %882 = vmatprep.subr.bf16.mxu0 0
      %883 = vmatpush1.bf16.msra.mxu0 0
      %884 = vmatprep.subr.bf16.mxu0 0
      %885 = vmatpush1.bf16.msra.mxu0 0
      %886 = vmatprep.subr.bf16.mxu0 0
      %887 = vmatpush1.bf16.msra.mxu0 0
      %888 = vmatprep.mubr.bf16.mxu0 0
      %889 = vmatmul.mubr.bf16.gmra.mrb[0].mxu0 %v848
      %v890 = vpop.f32.mrb[0].mxu0
      %v891 = vadd.f32 %v800, %v890
      %v892 = vpop.f32.mrb[0].mxu0
      %v893 = vadd.f32 %v804, %v892
      %v894 = vpop.f32.mrb[0].mxu0
      %v895 = vadd.f32 %v800, %v894
      %v896 = vpop.f32.mrb[0].mxu0
      %v897 = vadd.f32 %v804, %v896
      %898 = vmatprep.mubr.bf16.mxu0 0
      %899 = vmatmul.mubr.bf16.gmra.mrb[0].mxu0 %v851
      %v900 = vpop.f32.mrb[0].mxu0
      %v901 = vadd.f32 %v800, %v900
      %v902 = vpop.f32.mrb[0].mxu0
      %v903 = vadd.f32 %v804, %v902
      %v904 = vpop.f32.mrb[0].mxu0
      %v905 = vadd.f32 %v800, %v904
      %v906 = vpop.f32.mrb[0].mxu0
      %v907 = vadd.f32 %v804, %v906
      %908 = vmatprep.mubr.bf16.mxu0 0
      %909 = vmatmul.mubr.bf16.gmra.mrb[0].mxu0 %v854
      %v910 = vpop.f32.mrb[0].mxu0
      %v911 = vadd.f32 %v800, %v910
      %v912 = vpop.f32.mrb[0].mxu0
      %v913 = vadd.f32 %v804, %v912
      %v914 = vpop.f32.mrb[0].mxu0
      %v915 = vadd.f32 %v800, %v914
      %v916 = vpop.f32.mrb[0].mxu0
      %v917 = vadd.f32 %v804, %v916
      %918 = vdwg.mxu0
      %v919 = vmul.f32 %v891, 0.25
      %v920 = vmul.f32 %v895, 0.25
      %v921 = vmul.f32 %v901, 0.25
      %v922 = vmul.f32 %v905, 0.25
      %v923 = vmul.f32 %v911, 0.25
      %v924 = vmul.f32 %v915, 0.25
      %v925 = vlaneseq
      %v926 = vand.u32 %v925, 127
      %vm927 = vcmp.lt.s32.totalorder %v926, 17
      %931 = vrot.lane.b32.xlu0 %v891, 64
      %v932 = vpop.permute.xlu0 %931
      %933 = vrot.lane.b32.xlu0 %v895, 64
      %v934 = vpop.permute.xlu0 %933
      %935 = vrot.lane.b32.xlu0 %v901, 64
      %v936 = vpop.permute.xlu0 %935
      %vm937 = vcmask 130048
      %v939 = vsel %vm937, %v919, 0
      %v942 = vsel %vm937, %v920, 0
      %v945 = vsel %vm937, %v921, 0
      %v947 = vsel %vm937, %v932, 0
      %v949 = vsel %vm937, %v934, 0
      %v951 = vsel %vm937, %v936, 0
      %953 = vmatprep.subr.mxu0 0.0
      %954 = vmatpush1.xpose.msra.mxu0 %v947
      %955 = vmatprep.subr.mxu0 0.0
      %956 = vmatpush1.xpose.msra.mxu0 %v949
      %957 = vmatprep.subr.mxu0 0.0
      %958 = vmatpush1.xpose.msra.mxu0 %v951
      %959 = vmatprep.subr.mxu0 0.0
      %960 = vmatpush1.xpose.msra.mxu0 0.0
      %961 = vmatprep.subr.mxu0 0.0
      %962 = vmatpush1.xpose.msra.mxu0 0.0
      %963 = vmatprep.subr.mxu0 0.0
      %964 = vmatpush1.xpose.msra.mxu0 0.0
      %965 = vmatprep.subr.mxu0 0.0
      %966 = vmatpush1.xpose.msra.mxu0 0.0
      %967 = vmatprep.subr.mxu0 0.0
      %968 = vmatpush1.xpose.msra.mxu0 0.0
      %969 = vmatprep.subr.mxu0 0.0
      %970 = vmatpush1.xpose.msra.mxu0 0.0
      %971 = vmatprep.subr.mxu0 0.0
      %972 = vmatpush1.xpose.msra.mxu0 0.0
      %973 = vmatprep.subr.mxu0 0.0
      %974 = vmatpush1.xpose.msra.mxu0 0.0
      %975 = vmatprep.subr.mxu0 0.0
      %976 = vmatpush1.xpose.msra.mxu0 0.0
      %977 = vmatprep.subr.mxu0 0.0
      %978 = vmatpush1.xpose.msra.mxu0 0.0
      %979 = vmatprep.subr.mxu0 0.0
      %980 = vmatpush1.xpose.msra.mxu0 0.0
      %981 = vmatprep.subr.mxu0 0.0
      %982 = vmatpush1.xpose.msra.mxu0 0.0
      %983 = vmatprep.subr.mxu0 0.0
      %984 = vmatpush1.xpose.msra.mxu0 0.0
      %985 = vmatprep.subr.mxu0 0.0
      %986 = vmatpush1.xpose.msra.mxu0 0.0
      %987 = vmatprep.subr.mxu0 0.0
      %988 = vmatpush1.xpose.msra.mxu0 0.0
      %989 = vmatprep.subr.mxu0 0.0
      %990 = vmatpush1.xpose.msra.mxu0 0.0
      %991 = vmatprep.subr.mxu0 0.0
      %992 = vmatpush1.xpose.msra.mxu0 0.0
      %993 = vmatprep.subr.mxu0 0.0
      %994 = vmatpush1.xpose.msra.mxu0 0.0
      %995 = vmatprep.subr.mxu0 0.0
      %996 = vmatpush1.xpose.msra.mxu0 0.0
      %997 = vmatprep.subr.mxu0 0.0
      %998 = vmatpush1.xpose.msra.mxu0 0.0
      %999 = vmatprep.subr.mxu0 0.0
      %1000 = vmatpush1.xpose.msra.mxu0 0.0
      %1001 = vmatprep.subr.mxu0 0.0
      %1002 = vmatpush1.xpose.msra.mxu0 0.0
      %1003 = vmatprep.subr.mxu0 0.0
      %1004 = vmatpush1.xpose.msra.mxu0 0.0
      %1005 = vmatprep.subr.mxu0 0.0
      %1006 = vmatpush1.xpose.msra.mxu0 0.0
      %1007 = vmatprep.subr.mxu0 0.0
      %1008 = vmatpush1.xpose.msra.mxu0 0.0
      %1009 = vmatprep.subr.mxu0 0.0
      %1010 = vmatpush1.xpose.msra.mxu0 0.0
      %1011 = vmatprep.subr.mxu0 0.0
      %1012 = vmatpush1.xpose.msra.mxu0 0.0
      %1013 = vmatprep.subr.mxu0 0.0
      %1014 = vmatpush1.xpose.msra.mxu0 0.0
      %1015 = vmatprep.subr.mxu0 0.0
      %1016 = vmatpush1.xpose.msra.mxu0 0.0
      %1017 = vmatprep.mubr.f32.mxu0 0.0
      %1018 = vmatmul.mubr.f32.gmra.mrb[0].mxu0 %v939
      %v1019 = vpop.f32.mrb[0].mxu0
      %v1020 = vadd.f32 0.0, %v1019
      %v1021 = vpop.f32.mrb[0].mxu0
      %1022 = vmatprep.mubr.f32.mxu0 0.0
      %1023 = vmatmul.mubr.f32.gmra.mrb[0].mxu0 %v942
      %v1024 = vpop.f32.mrb[0].mxu0
      %v1025 = vadd.f32 0.0, %v1024
      %v1026 = vpop.f32.mrb[0].mxu0
      %1027 = vmatprep.mubr.f32.mxu0 0.0
      %1028 = vmatmul.mubr.f32.gmra.mrb[0].mxu0 %v945
      %v1029 = vpop.f32.mrb[0].mxu0
      %v1030 = vadd.f32 0.0, %v1029
      %v1031 = vpop.f32.mrb[0].mxu0
      %1032 = vdwg.mxu0
      %v1033 = vsel %vm927, 1, 0
      %vm1034 = vcmp.eq.s32.totalorder %v1033, 1
      %v1035 = vsel %vm1034, %v1020, -1e+30
      %v1036 = vsel %vm1034, %v1025, -1e+30
      %v1037 = vsel %vm1034, %v1030, -1e+30
      %vm1038 = vcmask 195584
      %v1039 = vsel %vm1038, %v1035, -inf
      %1040 = vmax.xlane.f32.xlu0 %v1039
      %v1041 = vpop.xlane.xlu0 %1040
      %v1042 = vsel %vm1038, %v1036, -inf
      %1043 = vmax.xlane.f32.xlu0 %v1042
      %v1044 = vpop.xlane.xlu0 %1043
      %v1045 = vsel %vm1038, %v1037, -inf
      %1046 = vmax.xlane.f32.xlu0 %v1045
      %v1047 = vpop.xlane.xlu0 %1046
      %v1048 = vsub.f32 %v1035, %v1041
      %v1049 = vsub.f32 %v1036, %v1044
      %v1050 = vsub.f32 %v1037, %v1047
      %v1051 = vmul.f32 %v1048, 1.442695
      %v1052 = vpow.pop %v1051
      %v1053 = vmul.f32 %v1049, 1.442695
      %v1054 = vpow.pop %v1053
      %v1055 = vmul.f32 %v1050, 1.442695
      %v1056 = vpow.pop %v1055
      %v1057 = vsel %vm1038, %v1052, 0.0
      %1058 = vadd.xlane.f32.xlu0 %v1057
      %v1059 = vpop.xlane.xlu0 %1058
      %v1060 = vsel %vm1038, %v1054, 0.0
      %1061 = vadd.xlane.f32.xlu0 %v1060
      %v1062 = vpop.xlane.xlu0 %1061
      %v1063 = vsel %vm1038, %v1056, 0.0
      %1064 = vadd.xlane.f32.xlu0 %v1063
      %v1065 = vpop.xlane.xlu0 %1064
      %v1066 = vrcp.pop %v1059
      %v1067 = vmul.f32 %v1052, %v1066
      %v1068 = vrcp.pop %v1062
      %v1069 = vmul.f32 %v1054, %v1068
      %v1070 = vrcp.pop %v1065
      %v1071 = vmul.f32 %v1056, %v1070
      %v1073 = vsel %vm1038, %v1067, 0
      %v1076 = vsel %vm1038, %v1069, 0
      %v1079 = vsel %vm1038, %v1071, 0
      %1081 = vmatprep.subr.mxu0 0.0
      %1082 = vmatpush1.msra.mxu0 %v893
      %1083 = vmatprep.subr.mxu0 0.0
      %1084 = vmatpush1.msra.mxu0 %v897
      %1085 = vmatprep.subr.mxu0 0.0
      %1086 = vmatpush1.msra.mxu0 %v903
      %1087 = vmatprep.subr.mxu0 0.0
      %1088 = vmatpush1.msra.mxu0 0.0
      %1089 = vmatprep.subr.mxu0 0.0
      %1090 = vmatpush1.msra.mxu0 0.0
      %1091 = vmatprep.subr.mxu0 0.0
      %1092 = vmatpush1.msra.mxu0 0.0
      %1093 = vmatprep.subr.mxu0 0.0
      %1094 = vmatpush1.msra.mxu0 0.0
      %1095 = vmatprep.subr.mxu0 0.0
      %1096 = vmatpush1.msra.mxu0 0.0
      %1097 = vmatprep.subr.mxu0 0.0
      %1098 = vmatpush1.msra.mxu0 0.0
      %1099 = vmatprep.subr.mxu0 0.0
      %1100 = vmatpush1.msra.mxu0 0.0
      %1101 = vmatprep.subr.mxu0 0.0
      %1102 = vmatpush1.msra.mxu0 0.0
      %1103 = vmatprep.subr.mxu0 0.0
      %1104 = vmatpush1.msra.mxu0 0.0
      %1105 = vmatprep.subr.mxu0 0.0
      %1106 = vmatpush1.msra.mxu0 0.0
      %1107 = vmatprep.subr.mxu0 0.0
      %1108 = vmatpush1.msra.mxu0 0.0
      %1109 = vmatprep.subr.mxu0 0.0
      %1110 = vmatpush1.msra.mxu0 0.0
      %1111 = vmatprep.subr.mxu0 0.0
      %1112 = vmatpush1.msra.mxu0 0.0
      %1113 = vmatprep.subr.mxu0 0.0
      %1114 = vmatpush1.msra.mxu0 0.0
      %1115 = vmatprep.subr.mxu0 0.0
      %1116 = vmatpush1.msra.mxu0 0.0
      %1117 = vmatprep.subr.mxu0 0.0
      %1118 = vmatpush1.msra.mxu0 0.0
      %1119 = vmatprep.subr.mxu0 0.0
      %1120 = vmatpush1.msra.mxu0 0.0
      %1121 = vmatprep.subr.mxu0 0.0
      %1122 = vmatpush1.msra.mxu0 0.0
      %1123 = vmatprep.subr.mxu0 0.0
      %1124 = vmatpush1.msra.mxu0 0.0
      %1125 = vmatprep.subr.mxu0 0.0
      %1126 = vmatpush1.msra.mxu0 0.0
      %1127 = vmatprep.subr.mxu0 0.0
      %1128 = vmatpush1.msra.mxu0 0.0
      %1129 = vmatprep.subr.mxu0 0.0
      %1130 = vmatpush1.msra.mxu0 0.0
      %1131 = vmatprep.subr.mxu0 0.0
      %1132 = vmatpush1.msra.mxu0 0.0
      %1133 = vmatprep.subr.mxu0 0.0
      %1134 = vmatpush1.msra.mxu0 0.0
      %1135 = vmatprep.subr.mxu0 0.0
      %1136 = vmatpush1.msra.mxu0 0.0
      %1137 = vmatprep.subr.mxu0 0.0
      %1138 = vmatpush1.msra.mxu0 0.0
      %1139 = vmatprep.subr.mxu0 0.0
      %1140 = vmatpush1.msra.mxu0 0.0
      %1141 = vmatprep.subr.mxu0 0.0
      %1142 = vmatpush1.msra.mxu0 0.0
      %1143 = vmatprep.subr.mxu0 0.0
      %1144 = vmatpush1.msra.mxu0 0.0
      %1145 = vmatprep.mubr.f32.mxu0 0.0
      %1146 = vmatmul.mubr.f32.gmra.mrb[0].mxu0 %v1073
      %v1147 = vpop.f32.mrb[0].mxu0
      %v1148 = vadd.f32 0.0, %v1147
      %v1149 = vpop.f32.mrb[0].mxu0
      %1150 = vmatprep.mubr.f32.mxu0 0.0
      %1151 = vmatmul.mubr.f32.gmra.mrb[0].mxu0 %v1076
      %v1152 = vpop.f32.mrb[0].mxu0
      %v1153 = vadd.f32 0.0, %v1152
      %v1154 = vpop.f32.mrb[0].mxu0
      %1155 = vmatprep.mubr.f32.mxu0 0.0
      %1156 = vmatmul.mubr.f32.gmra.mrb[0].mxu0 %v1079
      %v1157 = vpop.f32.mrb[0].mxu0
      %v1158 = vadd.f32 0.0, %v1157
      %v1159 = vpop.f32.mrb[0].mxu0
      %1160 = vdwg.mxu0
      %1161 = vst.msk [vmem:[#allocation2] sm:$0xff] %vm937, %v1148
      %1162 = vst.msk [vmem:[#allocation2 + $0x8] sm:$0xff] %vm937, %v1153
      %1163 = vst.msk [vmem:[#allocation2 + $0x10] sm:$0xff] %vm937, %v1158
      %1164 = vrot.lane.b32.xlu0 %v919, 112
      %v1165 = vpop.permute.xlu0 %1164
      %1166 = vrot.lane.b32.xlu0 %v920, 112
      %v1167 = vpop.permute.xlu0 %1166
      %1168 = vrot.lane.b32.xlu0 %v921, 112
      %v1169 = vpop.permute.xlu0 %1168
      %1170 = vrot.lane.b32.xlu0 %v891, 48
      %v1171 = vpop.permute.xlu0 %1170
      %1172 = vrot.lane.b32.xlu0 %v895, 48
      %v1173 = vpop.permute.xlu0 %1172
      %1174 = vrot.lane.b32.xlu0 %v901, 48
      %v1175 = vpop.permute.xlu0 %1174
      %v1176 = vsel %vm937, %v1165, 0
      %v1178 = vsel %vm937, %v1167, 0
      %v1180 = vsel %vm937, %v1169, 0
      %v1182 = vsel %vm937, %v1171, 0
      %v1184 = vsel %vm937, %v1173, 0
      %v1186 = vsel %vm937, %v1175, 0
      %1188 = vmatprep.subr.mxu0 0.0
      %1189 = vmatpush1.xpose.msra.mxu0 %v1182
      %1190 = vmatprep.subr.mxu0 0.0
      %1191 = vmatpush1.xpose.msra.mxu0 %v1184
      %1192 = vmatprep.subr.mxu0 0.0
      %1193 = vmatpush1.xpose.msra.mxu0 %v1186
      %1194 = vmatprep.subr.mxu0 0.0
      %1195 = vmatpush1.xpose.msra.mxu0 0.0
      %1196 = vmatprep.subr.mxu0 0.0
      %1197 = vmatpush1.xpose.msra.mxu0 0.0
      %1198 = vmatprep.subr.mxu0 0.0
      %1199 = vmatpush1.xpose.msra.mxu0 0.0
      %1200 = vmatprep.subr.mxu0 0.0
      %1201 = vmatpush1.xpose.msra.mxu0 0.0
      %1202 = vmatprep.subr.mxu0 0.0
      %1203 = vmatpush1.xpose.msra.mxu0 0.0
      %1204 = vmatprep.subr.mxu0 0.0
      %1205 = vmatpush1.xpose.msra.mxu0 0.0
      %1206 = vmatprep.subr.mxu0 0.0
      %1207 = vmatpush1.xpose.msra.mxu0 0.0
      %1208 = vmatprep.subr.mxu0 0.0
      %1209 = vmatpush1.xpose.msra.mxu0 0.0
      %1210 = vmatprep.subr.mxu0 0.0
      %1211 = vmatpush1.xpose.msra.mxu0 0.0
      %1212 = vmatprep.subr.mxu0 0.0
      %1213 = vmatpush1.xpose.msra.mxu0 0.0
      %1214 = vmatprep.subr.mxu0 0.0
      %1215 = vmatpush1.xpose.msra.mxu0 0.0
      %1216 = vmatprep.subr.mxu0 0.0
      %1217 = vmatpush1.xpose.msra.mxu0 0.0
      %1218 = vmatprep.subr.mxu0 0.0
      %1219 = vmatpush1.xpose.msra.mxu0 0.0
      %1220 = vmatprep.subr.mxu0 0.0
      %1221 = vmatpush1.xpose.msra.mxu0 0.0
      %1222 = vmatprep.subr.mxu0 0.0
      %1223 = vmatpush1.xpose.msra.mxu0 0.0
      %1224 = vmatprep.subr.mxu0 0.0
      %1225 = vmatpush1.xpose.msra.mxu0 0.0
      %1226 = vmatprep.subr.mxu0 0.0
      %1227 = vmatpush1.xpose.msra.mxu0 0.0
      %1228 = vmatprep.subr.mxu0 0.0
      %1229 = vmatpush1.xpose.msra.mxu0 0.0
      %1230 = vmatprep.subr.mxu0 0.0
      %1231 = vmatpush1.xpose.msra.mxu0 0.0
      %1232 = vmatprep.subr.mxu0 0.0
      %1233 = vmatpush1.xpose.msra.mxu0 0.0
      %1234 = vmatprep.subr.mxu0 0.0
      %1235 = vmatpush1.xpose.msra.mxu0 0.0
      %1236 = vmatprep.subr.mxu0 0.0
      %1237 = vmatpush1.xpose.msra.mxu0 0.0
      %1238 = vmatprep.subr.mxu0 0.0
      %1239 = vmatpush1.xpose.msra.mxu0 0.0
      %1240 = vmatprep.subr.mxu0 0.0
      %1241 = vmatpush1.xpose.msra.mxu0 0.0
      %1242 = vmatprep.subr.mxu0 0.0
      %1243 = vmatpush1.xpose.msra.mxu0 0.0
      %1244 = vmatprep.subr.mxu0 0.0
      %1245 = vmatpush1.xpose.msra.mxu0 0.0
      %1246 = vmatprep.subr.mxu0 0.0
      %1247 = vmatpush1.xpose.msra.mxu0 0.0
      %1248 = vmatprep.subr.mxu0 0.0
      %1249 = vmatpush1.xpose.msra.mxu0 0.0
      %1250 = vmatprep.subr.mxu0 0.0
      %1251 = vmatpush1.xpose.msra.mxu0 0.0
      %1252 = vmatprep.mubr.f32.mxu0 0.0
      %1253 = vmatmul.mubr.f32.gmra.mrb[0].mxu0 %v1176
      %v1254 = vpop.f32.mrb[0].mxu0
      %v1255 = vadd.f32 0.0, %v1254
      %v1256 = vpop.f32.mrb[0].mxu0
      %1257 = vmatprep.mubr.f32.mxu0 0.0
      %1258 = vmatmul.mubr.f32.gmra.mrb[0].mxu0 %v1178
      %v1259 = vpop.f32.mrb[0].mxu0
      %v1260 = vadd.f32 0.0, %v1259
      %v1261 = vpop.f32.mrb[0].mxu0
      %1262 = vmatprep.mubr.f32.mxu0 0.0
      %1263 = vmatmul.mubr.f32.gmra.mrb[0].mxu0 %v1180
      %v1264 = vpop.f32.mrb[0].mxu0
      %v1265 = vadd.f32 0.0, %v1264
      %v1266 = vpop.f32.mrb[0].mxu0
      %1267 = vdwg.mxu0
      %v1268 = vsel %vm1034, %v1255, -1e+30
      %v1269 = vsel %vm1034, %v1260, -1e+30
      %v1270 = vsel %vm1034, %v1265, -1e+30
      %v1271 = vsel %vm1038, %v1268, -inf
      %1272 = vmax.xlane.f32.xlu0 %v1271
      %v1273 = vpop.xlane.xlu0 %1272
      %v1274 = vsel %vm1038, %v1269, -inf
      %1275 = vmax.xlane.f32.xlu0 %v1274
      %v1276 = vpop.xlane.xlu0 %1275
      %v1277 = vsel %vm1038, %v1270, -inf
      %1278 = vmax.xlane.f32.xlu0 %v1277
      %v1279 = vpop.xlane.xlu0 %1278
      %v1280 = vsub.f32 %v1268, %v1273
      %v1281 = vsub.f32 %v1269, %v1276
      %v1282 = vsub.f32 %v1270, %v1279
      %v1283 = vmul.f32 %v1280, 1.442695
      %v1284 = vpow.pop %v1283
      %v1285 = vmul.f32 %v1281, 1.442695
      %v1286 = vpow.pop %v1285
      %v1287 = vmul.f32 %v1282, 1.442695
      %v1288 = vpow.pop %v1287
      %v1289 = vsel %vm1038, %v1284, 0.0
      %1290 = vadd.xlane.f32.xlu0 %v1289
      %v1291 = vpop.xlane.xlu0 %1290
      %v1292 = vsel %vm1038, %v1286, 0.0
      %1293 = vadd.xlane.f32.xlu0 %v1292
      %v1294 = vpop.xlane.xlu0 %1293
      %v1295 = vsel %vm1038, %v1288, 0.0
      %1296 = vadd.xlane.f32.xlu0 %v1295
      %v1297 = vpop.xlane.xlu0 %1296
      %v1298 = vrcp.pop %v1291
      %v1299 = vmul.f32 %v1284, %v1298
      %v1300 = vrcp.pop %v1294
      %v1301 = vmul.f32 %v1286, %v1300
      %v1302 = vrcp.pop %v1297
      %v1303 = vmul.f32 %v1288, %v1302
      %1307 = vrot.lane.b32.xlu0 %v893, 112
      %v1308 = vpop.permute.xlu0 %1307
      %1309 = vrot.lane.b32.xlu0 %v897, 112
      %v1310 = vpop.permute.xlu0 %1309
      %1311 = vrot.lane.b32.xlu0 %v903, 112
      %v1312 = vpop.permute.xlu0 %1311
      %v1317 = vsel %vm1038, %v1299, 0
      %v1320 = vsel %vm1038, %v1301, 0
      %v1323 = vsel %vm1038, %v1303, 0
      %1325 = vmatprep.subr.mxu0 0.0
      %1326 = vmatpush1.msra.mxu0 %v1308
      %1327 = vmatprep.subr.mxu0 0.0
      %1328 = vmatpush1.msra.mxu0 %v1310
      %1329 = vmatprep.subr.mxu0 0.0
      %1330 = vmatpush1.msra.mxu0 %v1312
      %1331 = vmatprep.subr.mxu0 0.0
      %1332 = vmatpush1.msra.mxu0 0.0
      %1333 = vmatprep.subr.mxu0 0.0
      %1334 = vmatpush1.msra.mxu0 0.0
      %1335 = vmatprep.subr.mxu0 0.0
      %1336 = vmatpush1.msra.mxu0 0.0
      %1337 = vmatprep.subr.mxu0 0.0
      %1338 = vmatpush1.msra.mxu0 0.0
      %1339 = vmatprep.subr.mxu0 0.0
      %1340 = vmatpush1.msra.mxu0 0.0
      %1341 = vmatprep.subr.mxu0 0.0
      %1342 = vmatpush1.msra.mxu0 0.0
      %1343 = vmatprep.subr.mxu0 0.0
      %1344 = vmatpush1.msra.mxu0 0.0
      %1345 = vmatprep.subr.mxu0 0.0
      %1346 = vmatpush1.msra.mxu0 0.0
      %1347 = vmatprep.subr.mxu0 0.0
      %1348 = vmatpush1.msra.mxu0 0.0
      %1349 = vmatprep.subr.mxu0 0.0
      %1350 = vmatpush1.msra.mxu0 0.0
      %1351 = vmatprep.subr.mxu0 0.0
      %1352 = vmatpush1.msra.mxu0 0.0
      %1353 = vmatprep.subr.mxu0 0.0
      %1354 = vmatpush1.msra.mxu0 0.0
      %1355 = vmatprep.subr.mxu0 0.0
      %1356 = vmatpush1.msra.mxu0 0.0
      %1357 = vmatprep.subr.mxu0 0.0
      %1358 = vmatpush1.msra.mxu0 0.0
      %1359 = vmatprep.subr.mxu0 0.0
      %1360 = vmatpush1.msra.mxu0 0.0
      %1361 = vmatprep.subr.mxu0 0.0
      %1362 = vmatpush1.msra.mxu0 0.0
      %1363 = vmatprep.subr.mxu0 0.0
      %1364 = vmatpush1.msra.mxu0 0.0
      %1365 = vmatprep.subr.mxu0 0.0
      %1366 = vmatpush1.msra.mxu0 0.0
      %1367 = vmatprep.subr.mxu0 0.0
      %1368 = vmatpush1.msra.mxu0 0.0
      %1369 = vmatprep.subr.mxu0 0.0
      %1370 = vmatpush1.msra.mxu0 0.0
      %1371 = vmatprep.subr.mxu0 0.0
      %1372 = vmatpush1.msra.mxu0 0.0
      %1373 = vmatprep.subr.mxu0 0.0
      %1374 = vmatpush1.msra.mxu0 0.0
      %1375 = vmatprep.subr.mxu0 0.0
      %1376 = vmatpush1.msra.mxu0 0.0
      %1377 = vmatprep.subr.mxu0 0.0
      %1378 = vmatpush1.msra.mxu0 0.0
      %1379 = vmatprep.subr.mxu0 0.0
      %1380 = vmatpush1.msra.mxu0 0.0
      %1381 = vmatprep.subr.mxu0 0.0
      %1382 = vmatpush1.msra.mxu0 0.0
      %1383 = vmatprep.subr.mxu0 0.0
      %1384 = vmatpush1.msra.mxu0 0.0
      %1385 = vmatprep.subr.mxu0 0.0
      %1386 = vmatpush1.msra.mxu0 0.0
      %1387 = vmatprep.subr.mxu0 0.0
      %1388 = vmatpush1.msra.mxu0 0.0
      %1389 = vmatprep.mubr.f32.mxu0 0.0
      %1390 = vmatmul.mubr.f32.gmra.mrb[0].mxu0 %v1317
      %v1391 = vpop.f32.mrb[0].mxu0
      %v1392 = vadd.f32 0.0, %v1391
      %v1393 = vpop.f32.mrb[0].mxu0
      %1394 = vmatprep.mubr.f32.mxu0 0.0
      %1395 = vmatmul.mubr.f32.gmra.mrb[0].mxu0 %v1320
      %v1396 = vpop.f32.mrb[0].mxu0
      %v1397 = vadd.f32 0.0, %v1396
      %v1398 = vpop.f32.mrb[0].mxu0
      %1399 = vmatprep.mubr.f32.mxu0 0.0
      %1400 = vmatmul.mubr.f32.gmra.mrb[0].mxu0 %v1323
      %v1401 = vpop.f32.mrb[0].mxu0
      %v1402 = vadd.f32 0.0, %v1401
      %v1403 = vpop.f32.mrb[0].mxu0
      %1404 = vdwg.mxu0
      %1408 = vrot.lane.b32.xlu0 %v1392, 16
      %v1409 = vpop.permute.xlu0 %1408
      %1410 = vrot.lane.b32.xlu0 %v1397, 16
      %v1411 = vpop.permute.xlu0 %1410
      %1412 = vrot.lane.b32.xlu0 %v1402, 16
      %v1413 = vpop.permute.xlu0 %1412
      %vm1417 = vcmask 261248
      %1418 = vst.msk [vmem:[#allocation2] sm:$0xff] %vm1417, %v1409
      %1419 = vst.msk [vmem:[#allocation2 + $0x8] sm:$0xff] %vm1417, %v1411
      %1420 = vst.msk [vmem:[#allocation2 + $0x10] sm:$0xff] %vm1417, %v1413
      %1421 = vrot.lane.b32.xlu0 %v919, 96
      %v1422 = vpop.permute.xlu0 %1421
      %1423 = vrot.lane.b32.xlu0 %v920, 96
      %v1424 = vpop.permute.xlu0 %1423
      %1425 = vrot.lane.b32.xlu0 %v921, 96
      %v1426 = vpop.permute.xlu0 %1425
      %1427 = vrot.lane.b32.xlu0 %v891, 32
      %v1428 = vpop.permute.xlu0 %1427
      %1429 = vrot.lane.b32.xlu0 %v895, 32
      %v1430 = vpop.permute.xlu0 %1429
      %1431 = vrot.lane.b32.xlu0 %v901, 32
      %v1432 = vpop.permute.xlu0 %1431
      %v1433 = vsel %vm937, %v1422, 0
      %v1435 = vsel %vm937, %v1424, 0
      %v1437 = vsel %vm937, %v1426, 0
      %v1439 = vsel %vm937, %v1428, 0
      %v1441 = vsel %vm937, %v1430, 0
      %v1443 = vsel %vm937, %v1432, 0
      %1445 = vmatprep.subr.mxu0 0.0
      %1446 = vmatpush1.xpose.msra.mxu0 %v1439
      %1447 = vmatprep.subr.mxu0 0.0
      %1448 = vmatpush1.xpose.msra.mxu0 %v1441
      %1449 = vmatprep.subr.mxu0 0.0
      %1450 = vmatpush1.xpose.msra.mxu0 %v1443
      %1451 = vmatprep.subr.mxu0 0.0
      %1452 = vmatpush1.xpose.msra.mxu0 0.0
      %1453 = vmatprep.subr.mxu0 0.0
      %1454 = vmatpush1.xpose.msra.mxu0 0.0
      %1455 = vmatprep.subr.mxu0 0.0
      %1456 = vmatpush1.xpose.msra.mxu0 0.0
      %1457 = vmatprep.subr.mxu0 0.0
      %1458 = vmatpush1.xpose.msra.mxu0 0.0
      %1459 = vmatprep.subr.mxu0 0.0
      %1460 = vmatpush1.xpose.msra.mxu0 0.0
      %1461 = vmatprep.subr.mxu0 0.0
      %1462 = vmatpush1.xpose.msra.mxu0 0.0
      %1463 = vmatprep.subr.mxu0 0.0
      %1464 = vmatpush1.xpose.msra.mxu0 0.0
      %1465 = vmatprep.subr.mxu0 0.0
      %1466 = vmatpush1.xpose.msra.mxu0 0.0
      %1467 = vmatprep.subr.mxu0 0.0
      %1468 = vmatpush1.xpose.msra.mxu0 0.0
      %1469 = vmatprep.subr.mxu0 0.0
      %1470 = vmatpush1.xpose.msra.mxu0 0.0
      %1471 = vmatprep.subr.mxu0 0.0
      %1472 = vmatpush1.xpose.msra.mxu0 0.0
      %1473 = vmatprep.subr.mxu0 0.0
      %1474 = vmatpush1.xpose.msra.mxu0 0.0
      %1475 = vmatprep.subr.mxu0 0.0
      %1476 = vmatpush1.xpose.msra.mxu0 0.0
      %1477 = vmatprep.subr.mxu0 0.0
      %1478 = vmatpush1.xpose.msra.mxu0 0.0
      %1479 = vmatprep.subr.mxu0 0.0
      %1480 = vmatpush1.xpose.msra.mxu0 0.0
      %1481 = vmatprep.subr.mxu0 0.0
      %1482 = vmatpush1.xpose.msra.mxu0 0.0
      %1483 = vmatprep.subr.mxu0 0.0
      %1484 = vmatpush1.xpose.msra.mxu0 0.0
      %1485 = vmatprep.subr.mxu0 0.0
      %1486 = vmatpush1.xpose.msra.mxu0 0.0
      %1487 = vmatprep.subr.mxu0 0.0
      %1488 = vmatpush1.xpose.msra.mxu0 0.0
      %1489 = vmatprep.subr.mxu0 0.0
      %1490 = vmatpush1.xpose.msra.mxu0 0.0
      %1491 = vmatprep.subr.mxu0 0.0
      %1492 = vmatpush1.xpose.msra.mxu0 0.0
      %1493 = vmatprep.subr.mxu0 0.0
      %1494 = vmatpush1.xpose.msra.mxu0 0.0
      %1495 = vmatprep.subr.mxu0 0.0
      %1496 = vmatpush1.xpose.msra.mxu0 0.0
      %1497 = vmatprep.subr.mxu0 0.0
      %1498 = vmatpush1.xpose.msra.mxu0 0.0
      %1499 = vmatprep.subr.mxu0 0.0
      %1500 = vmatpush1.xpose.msra.mxu0 0.0
      %1501 = vmatprep.subr.mxu0 0.0
      %1502 = vmatpush1.xpose.msra.mxu0 0.0
      %1503 = vmatprep.subr.mxu0 0.0
      %1504 = vmatpush1.xpose.msra.mxu0 0.0
      %1505 = vmatprep.subr.mxu0 0.0
      %1506 = vmatpush1.xpose.msra.mxu0 0.0
      %1507 = vmatprep.subr.mxu0 0.0
      %1508 = vmatpush1.xpose.msra.mxu0 0.0
      %1509 = vmatprep.mubr.f32.mxu0 0.0
      %1510 = vmatmul.mubr.f32.gmra.mrb[0].mxu0 %v1433
      %v1511 = vpop.f32.mrb[0].mxu0
      %v1512 = vadd.f32 0.0, %v1511
      %v1513 = vpop.f32.mrb[0].mxu0
      %1514 = vmatprep.mubr.f32.mxu0 0.0
      %1515 = vmatmul.mubr.f32.gmra.mrb[0].mxu0 %v1435
      %v1516 = vpop.f32.mrb[0].mxu0
      %v1517 = vadd.f32 0.0, %v1516
      %v1518 = vpop.f32.mrb[0].mxu0
      %1519 = vmatprep.mubr.f32.mxu0 0.0
      %1520 = vmatmul.mubr.f32.gmra.mrb[0].mxu0 %v1437
      %v1521 = vpop.f32.mrb[0].mxu0
      %v1522 = vadd.f32 0.0, %v1521
      %v1523 = vpop.f32.mrb[0].mxu0
      %1524 = vdwg.mxu0
      %v1525 = vsel %vm1034, %v1512, -1e+30
      %v1526 = vsel %vm1034, %v1517, -1e+30
      %v1527 = vsel %vm1034, %v1522, -1e+30
      %v1528 = vsel %vm1038, %v1525, -inf
      %1529 = vmax.xlane.f32.xlu0 %v1528
      %v1530 = vpop.xlane.xlu0 %1529
      %v1531 = vsel %vm1038, %v1526, -inf
      %1532 = vmax.xlane.f32.xlu0 %v1531
      %v1533 = vpop.xlane.xlu0 %1532
      %v1534 = vsel %vm1038, %v1527, -inf
      %1535 = vmax.xlane.f32.xlu0 %v1534
      %v1536 = vpop.xlane.xlu0 %1535
      %v1537 = vsub.f32 %v1525, %v1530
      %v1538 = vsub.f32 %v1526, %v1533
      %v1539 = vsub.f32 %v1527, %v1536
      %v1540 = vmul.f32 %v1537, 1.442695
      %v1541 = vpow.pop %v1540
      %v1542 = vmul.f32 %v1538, 1.442695
      %v1543 = vpow.pop %v1542
      %v1544 = vmul.f32 %v1539, 1.442695
      %v1545 = vpow.pop %v1544
      %v1546 = vsel %vm1038, %v1541, 0.0
      %1547 = vadd.xlane.f32.xlu0 %v1546
      %v1548 = vpop.xlane.xlu0 %1547
      %v1549 = vsel %vm1038, %v1543, 0.0
      %1550 = vadd.xlane.f32.xlu0 %v1549
      %v1551 = vpop.xlane.xlu0 %1550
      %v1552 = vsel %vm1038, %v1545, 0.0
      %1553 = vadd.xlane.f32.xlu0 %v1552
      %v1554 = vpop.xlane.xlu0 %1553
      %v1555 = vrcp.pop %v1548
      %v1556 = vmul.f32 %v1541, %v1555
      %v1557 = vrcp.pop %v1551
      %v1558 = vmul.f32 %v1543, %v1557
      %v1559 = vrcp.pop %v1554
      %v1560 = vmul.f32 %v1545, %v1559
      %1561 = vrot.lane.b32.xlu0 %v893, 96
      %v1562 = vpop.permute.xlu0 %1561
      %1563 = vrot.lane.b32.xlu0 %v897, 96
      %v1564 = vpop.permute.xlu0 %1563
      %1565 = vrot.lane.b32.xlu0 %v903, 96
      %v1566 = vpop.permute.xlu0 %1565
      %v1571 = vsel %vm1038, %v1556, 0
      %v1574 = vsel %vm1038, %v1558, 0
      %v1577 = vsel %vm1038, %v1560, 0
      %1579 = vmatprep.subr.mxu0 0.0
      %1580 = vmatpush1.msra.mxu0 %v1562
      %1581 = vmatprep.subr.mxu0 0.0
      %1582 = vmatpush1.msra.mxu0 %v1564
      %1583 = vmatprep.subr.mxu0 0.0
      %1584 = vmatpush1.msra.mxu0 %v1566
      %1585 = vmatprep.subr.mxu0 0.0
      %1586 = vmatpush1.msra.mxu0 0.0
      %1587 = vmatprep.subr.mxu0 0.0
      %1588 = vmatpush1.msra.mxu0 0.0
      %1589 = vmatprep.subr.mxu0 0.0
      %1590 = vmatpush1.msra.mxu0 0.0
      %1591 = vmatprep.subr.mxu0 0.0
      %1592 = vmatpush1.msra.mxu0 0.0
      %1593 = vmatprep.subr.mxu0 0.0
      %1594 = vmatpush1.msra.mxu0 0.0
      %1595 = vmatprep.subr.mxu0 0.0
      %1596 = vmatpush1.msra.mxu0 0.0
      %1597 = vmatprep.subr.mxu0 0.0
      %1598 = vmatpush1.msra.mxu0 0.0
      %1599 = vmatprep.subr.mxu0 0.0
      %1600 = vmatpush1.msra.mxu0 0.0
      %1601 = vmatprep.subr.mxu0 0.0
      %1602 = vmatpush1.msra.mxu0 0.0
      %1603 = vmatprep.subr.mxu0 0.0
      %1604 = vmatpush1.msra.mxu0 0.0
      %1605 = vmatprep.subr.mxu0 0.0
      %1606 = vmatpush1.msra.mxu0 0.0
      %1607 = vmatprep.subr.mxu0 0.0
      %1608 = vmatpush1.msra.mxu0 0.0
      %1609 = vmatprep.subr.mxu0 0.0
      %1610 = vmatpush1.msra.mxu0 0.0
      %1611 = vmatprep.subr.mxu0 0.0
      %1612 = vmatpush1.msra.mxu0 0.0
      %1613 = vmatprep.subr.mxu0 0.0
      %1614 = vmatpush1.msra.mxu0 0.0
      %1615 = vmatprep.subr.mxu0 0.0
      %1616 = vmatpush1.msra.mxu0 0.0
      %1617 = vmatprep.subr.mxu0 0.0
      %1618 = vmatpush1.msra.mxu0 0.0
      %1619 = vmatprep.subr.mxu0 0.0
      %1620 = vmatpush1.msra.mxu0 0.0
      %1621 = vmatprep.subr.mxu0 0.0
      %1622 = vmatpush1.msra.mxu0 0.0
      %1623 = vmatprep.subr.mxu0 0.0
      %1624 = vmatpush1.msra.mxu0 0.0
      %1625 = vmatprep.subr.mxu0 0.0
      %1626 = vmatpush1.msra.mxu0 0.0
      %1627 = vmatprep.subr.mxu0 0.0
      %1628 = vmatpush1.msra.mxu0 0.0
      %1629 = vmatprep.subr.mxu0 0.0
      %1630 = vmatpush1.msra.mxu0 0.0
      %1631 = vmatprep.subr.mxu0 0.0
      %1632 = vmatpush1.msra.mxu0 0.0
      %1633 = vmatprep.subr.mxu0 0.0
      %1634 = vmatpush1.msra.mxu0 0.0
      %1635 = vmatprep.subr.mxu0 0.0
      %1636 = vmatpush1.msra.mxu0 0.0
      %1637 = vmatprep.subr.mxu0 0.0
      %1638 = vmatpush1.msra.mxu0 0.0
      %1639 = vmatprep.subr.mxu0 0.0
      %1640 = vmatpush1.msra.mxu0 0.0
      %1641 = vmatprep.subr.mxu0 0.0
      %1642 = vmatpush1.msra.mxu0 0.0
      %1643 = vmatprep.mubr.f32.mxu0 0.0
      %1644 = vmatmul.mubr.f32.gmra.mrb[0].mxu0 %v1571
      %v1645 = vpop.f32.mrb[0].mxu0
      %v1646 = vadd.f32 0.0, %v1645
      %v1647 = vpop.f32.mrb[0].mxu0
      %1648 = vmatprep.mubr.f32.mxu0 0.0
      %1649 = vmatmul.mubr.f32.gmra.mrb[0].mxu0 %v1574
      %v1650 = vpop.f32.mrb[0].mxu0
      %v1651 = vadd.f32 0.0, %v1650
      %v1652 = vpop.f32.mrb[0].mxu0
      %1653 = vmatprep.mubr.f32.mxu0 0.0
      %1654 = vmatmul.mubr.f32.gmra.mrb[0].mxu0 %v1577
      %v1655 = vpop.f32.mrb[0].mxu0
      %v1656 = vadd.f32 0.0, %v1655
      %v1657 = vpop.f32.mrb[0].mxu0
      %1658 = vdwg.mxu0
      %1662 = vrot.lane.b32.xlu0 %v1646, 32
      %v1663 = vpop.permute.xlu0 %1662
      %1664 = vrot.lane.b32.xlu0 %v1651, 32
      %v1665 = vpop.permute.xlu0 %1664
      %1666 = vrot.lane.b32.xlu0 %v1656, 32
      %v1667 = vpop.permute.xlu0 %1666
      %vm1671 = vcmask 392448
      %1672 = vst.msk [vmem:[#allocation2] sm:$0xff] %vm1671, %v1663
      %1673 = vst.msk [vmem:[#allocation2 + $0x8] sm:$0xff] %vm1671, %v1665
      %1674 = vst.msk [vmem:[#allocation2 + $0x10] sm:$0xff] %vm1671, %v1667
      %1675 = vrot.lane.b32.xlu0 %v919, 80
      %v1676 = vpop.permute.xlu0 %1675
      %1677 = vrot.lane.b32.xlu0 %v920, 80
      %v1678 = vpop.permute.xlu0 %1677
      %1679 = vrot.lane.b32.xlu0 %v921, 80
      %v1680 = vpop.permute.xlu0 %1679
      %1681 = vrot.lane.b32.xlu0 %v891, 16
      %v1682 = vpop.permute.xlu0 %1681
      %1683 = vrot.lane.b32.xlu0 %v895, 16
      %v1684 = vpop.permute.xlu0 %1683
      %1685 = vrot.lane.b32.xlu0 %v901, 16
      %v1686 = vpop.permute.xlu0 %1685
      %v1687 = vsel %vm937, %v1676, 0
      %v1689 = vsel %vm937, %v1678, 0
      %v1691 = vsel %vm937, %v1680, 0
      %v1693 = vsel %vm937, %v1682, 0
      %v1695 = vsel %vm937, %v1684, 0
      %v1697 = vsel %vm937, %v1686, 0
      %1699 = vmatprep.subr.mxu0 0.0
      %1700 = vmatpush1.xpose.msra.mxu0 %v1693
      %1701 = vmatprep.subr.mxu0 0.0
      %1702 = vmatpush1.xpose.msra.mxu0 %v1695
      %1703 = vmatprep.subr.mxu0 0.0
      %1704 = vmatpush1.xpose.msra.mxu0 %v1697
      %1705 = vmatprep.subr.mxu0 0.0
      %1706 = vmatpush1.xpose.msra.mxu0 0.0
      %1707 = vmatprep.subr.mxu0 0.0
      %1708 = vmatpush1.xpose.msra.mxu0 0.0
      %1709 = vmatprep.subr.mxu0 0.0
      %1710 = vmatpush1.xpose.msra.mxu0 0.0
      %1711 = vmatprep.subr.mxu0 0.0
      %1712 = vmatpush1.xpose.msra.mxu0 0.0
      %1713 = vmatprep.subr.mxu0 0.0
      %1714 = vmatpush1.xpose.msra.mxu0 0.0
      %1715 = vmatprep.subr.mxu0 0.0
      %1716 = vmatpush1.xpose.msra.mxu0 0.0
      %1717 = vmatprep.subr.mxu0 0.0
      %1718 = vmatpush1.xpose.msra.mxu0 0.0
      %1719 = vmatprep.subr.mxu0 0.0
      %1720 = vmatpush1.xpose.msra.mxu0 0.0
      %1721 = vmatprep.subr.mxu0 0.0
      %1722 = vmatpush1.xpose.msra.mxu0 0.0
      %1723 = vmatprep.subr.mxu0 0.0
      %1724 = vmatpush1.xpose.msra.mxu0 0.0
      %1725 = vmatprep.subr.mxu0 0.0
      %1726 = vmatpush1.xpose.msra.mxu0 0.0
      %1727 = vmatprep.subr.mxu0 0.0
      %1728 = vmatpush1.xpose.msra.mxu0 0.0
      %1729 = vmatprep.subr.mxu0 0.0
      %1730 = vmatpush1.xpose.msra.mxu0 0.0
      %1731 = vmatprep.subr.mxu0 0.0
      %1732 = vmatpush1.xpose.msra.mxu0 0.0
      %1733 = vmatprep.subr.mxu0 0.0
      %1734 = vmatpush1.xpose.msra.mxu0 0.0
      %1735 = vmatprep.subr.mxu0 0.0
      %1736 = vmatpush1.xpose.msra.mxu0 0.0
      %1737 = vmatprep.subr.mxu0 0.0
      %1738 = vmatpush1.xpose.msra.mxu0 0.0
      %1739 = vmatprep.subr.mxu0 0.0
      %1740 = vmatpush1.xpose.msra.mxu0 0.0
      %1741 = vmatprep.subr.mxu0 0.0
      %1742 = vmatpush1.xpose.msra.mxu0 0.0
      %1743 = vmatprep.subr.mxu0 0.0
      %1744 = vmatpush1.xpose.msra.mxu0 0.0
      %1745 = vmatprep.subr.mxu0 0.0
      %1746 = vmatpush1.xpose.msra.mxu0 0.0
      %1747 = vmatprep.subr.mxu0 0.0
      %1748 = vmatpush1.xpose.msra.mxu0 0.0
      %1749 = vmatprep.subr.mxu0 0.0
      %1750 = vmatpush1.xpose.msra.mxu0 0.0
      %1751 = vmatprep.subr.mxu0 0.0
      %1752 = vmatpush1.xpose.msra.mxu0 0.0
      %1753 = vmatprep.subr.mxu0 0.0
      %1754 = vmatpush1.xpose.msra.mxu0 0.0
      %1755 = vmatprep.subr.mxu0 0.0
      %1756 = vmatpush1.xpose.msra.mxu0 0.0
      %1757 = vmatprep.subr.mxu0 0.0
      %1758 = vmatpush1.xpose.msra.mxu0 0.0
      %1759 = vmatprep.subr.mxu0 0.0
      %1760 = vmatpush1.xpose.msra.mxu0 0.0
      %1761 = vmatprep.subr.mxu0 0.0
      %1762 = vmatpush1.xpose.msra.mxu0 0.0
      %1763 = vmatprep.mubr.f32.mxu0 0.0
      %1764 = vmatmul.mubr.f32.gmra.mrb[0].mxu0 %v1687
      %v1765 = vpop.f32.mrb[0].mxu0
      %v1766 = vadd.f32 0.0, %v1765
      %v1767 = vpop.f32.mrb[0].mxu0
      %1768 = vmatprep.mubr.f32.mxu0 0.0
      %1769 = vmatmul.mubr.f32.gmra.mrb[0].mxu0 %v1689
      %v1770 = vpop.f32.mrb[0].mxu0
      %v1771 = vadd.f32 0.0, %v1770
      %v1772 = vpop.f32.mrb[0].mxu0
      %1773 = vmatprep.mubr.f32.mxu0 0.0
      %1774 = vmatmul.mubr.f32.gmra.mrb[0].mxu0 %v1691
      %v1775 = vpop.f32.mrb[0].mxu0
      %v1776 = vadd.f32 0.0, %v1775
      %v1777 = vpop.f32.mrb[0].mxu0
      %1778 = vdwg.mxu0
      %v1779 = vsel %vm1034, %v1766, -1e+30
      %v1780 = vsel %vm1034, %v1771, -1e+30
      %v1781 = vsel %vm1034, %v1776, -1e+30
      %v1782 = vsel %vm1038, %v1779, -inf
      %1783 = vmax.xlane.f32.xlu0 %v1782
      %v1784 = vpop.xlane.xlu0 %1783
      %v1785 = vsel %vm1038, %v1780, -inf
      %1786 = vmax.xlane.f32.xlu0 %v1785
      %v1787 = vpop.xlane.xlu0 %1786
      %v1788 = vsel %vm1038, %v1781, -inf
      %1789 = vmax.xlane.f32.xlu0 %v1788
      %v1790 = vpop.xlane.xlu0 %1789
      %v1791 = vsub.f32 %v1779, %v1784
      %v1792 = vsub.f32 %v1780, %v1787
      %v1793 = vsub.f32 %v1781, %v1790
      %v1794 = vmul.f32 %v1791, 1.442695
      %v1795 = vpow.pop %v1794
      %v1796 = vmul.f32 %v1792, 1.442695
      %v1797 = vpow.pop %v1796
      %v1798 = vmul.f32 %v1793, 1.442695
      %v1799 = vpow.pop %v1798
      %v1800 = vsel %vm1038, %v1795, 0.0
      %1801 = vadd.xlane.f32.xlu0 %v1800
      %v1802 = vpop.xlane.xlu0 %1801
      %v1803 = vsel %vm1038, %v1797, 0.0
      %1804 = vadd.xlane.f32.xlu0 %v1803
      %v1805 = vpop.xlane.xlu0 %1804
      %v1806 = vsel %vm1038, %v1799, 0.0
      %1807 = vadd.xlane.f32.xlu0 %v1806
      %v1808 = vpop.xlane.xlu0 %1807
      %v1809 = vrcp.pop %v1802
      %v1810 = vmul.f32 %v1795, %v1809
      %v1811 = vrcp.pop %v1805
      %v1812 = vmul.f32 %v1797, %v1811
      %v1813 = vrcp.pop %v1808
      %v1814 = vmul.f32 %v1799, %v1813
      %1815 = vrot.lane.b32.xlu0 %v893, 80
      %v1816 = vpop.permute.xlu0 %1815
      %1817 = vrot.lane.b32.xlu0 %v897, 80
      %v1818 = vpop.permute.xlu0 %1817
      %1819 = vrot.lane.b32.xlu0 %v903, 80
      %v1820 = vpop.permute.xlu0 %1819
      %v1825 = vsel %vm1038, %v1810, 0
      %v1828 = vsel %vm1038, %v1812, 0
      %v1831 = vsel %vm1038, %v1814, 0
      %1833 = vmatprep.subr.mxu0 0.0
      %1834 = vmatpush1.msra.mxu0 %v1816
      %1835 = vmatprep.subr.mxu0 0.0
      %1836 = vmatpush1.msra.mxu0 %v1818
      %1837 = vmatprep.subr.mxu0 0.0
      %1838 = vmatpush1.msra.mxu0 %v1820
      %1839 = vmatprep.subr.mxu0 0.0
      %1840 = vmatpush1.msra.mxu0 0.0
      %1841 = vmatprep.subr.mxu0 0.0
      %1842 = vmatpush1.msra.mxu0 0.0
      %1843 = vmatprep.subr.mxu0 0.0
      %1844 = vmatpush1.msra.mxu0 0.0
      %1845 = vmatprep.subr.mxu0 0.0
      %1846 = vmatpush1.msra.mxu0 0.0
      %1847 = vmatprep.subr.mxu0 0.0
      %1848 = vmatpush1.msra.mxu0 0.0
      %1849 = vmatprep.subr.mxu0 0.0
      %1850 = vmatpush1.msra.mxu0 0.0
      %1851 = vmatprep.subr.mxu0 0.0
      %1852 = vmatpush1.msra.mxu0 0.0
      %1853 = vmatprep.subr.mxu0 0.0
      %1854 = vmatpush1.msra.mxu0 0.0
      %1855 = vmatprep.subr.mxu0 0.0
      %1856 = vmatpush1.msra.mxu0 0.0
      %1857 = vmatprep.subr.mxu0 0.0
      %1858 = vmatpush1.msra.mxu0 0.0
      %1859 = vmatprep.subr.mxu0 0.0
      %1860 = vmatpush1.msra.mxu0 0.0
      %1861 = vmatprep.subr.mxu0 0.0
      %1862 = vmatpush1.msra.mxu0 0.0
      %1863 = vmatprep.subr.mxu0 0.0
      %1864 = vmatpush1.msra.mxu0 0.0
      %1865 = vmatprep.subr.mxu0 0.0
      %1866 = vmatpush1.msra.mxu0 0.0
      %1867 = vmatprep.subr.mxu0 0.0
      %1868 = vmatpush1.msra.mxu0 0.0
      %1869 = vmatprep.subr.mxu0 0.0
      %1870 = vmatpush1.msra.mxu0 0.0
      %1871 = vmatprep.subr.mxu0 0.0
      %1872 = vmatpush1.msra.mxu0 0.0
      %1873 = vmatprep.subr.mxu0 0.0
      %1874 = vmatpush1.msra.mxu0 0.0
      %1875 = vmatprep.subr.mxu0 0.0
      %1876 = vmatpush1.msra.mxu0 0.0
      %1877 = vmatprep.subr.mxu0 0.0
      %1878 = vmatpush1.msra.mxu0 0.0
      %1879 = vmatprep.subr.mxu0 0.0
      %1880 = vmatpush1.msra.mxu0 0.0
      %1881 = vmatprep.subr.mxu0 0.0
      %1882 = vmatpush1.msra.mxu0 0.0
      %1883 = vmatprep.subr.mxu0 0.0
      %1884 = vmatpush1.msra.mxu0 0.0
      %1885 = vmatprep.subr.mxu0 0.0
      %1886 = vmatpush1.msra.mxu0 0.0
      %1887 = vmatprep.subr.mxu0 0.0
      %1888 = vmatpush1.msra.mxu0 0.0
      %1889 = vmatprep.subr.mxu0 0.0
      %1890 = vmatpush1.msra.mxu0 0.0
      %1891 = vmatprep.subr.mxu0 0.0
      %1892 = vmatpush1.msra.mxu0 0.0
      %1893 = vmatprep.subr.mxu0 0.0
      %1894 = vmatpush1.msra.mxu0 0.0
      %1895 = vmatprep.subr.mxu0 0.0
      %1896 = vmatpush1.msra.mxu0 0.0
      %1897 = vmatprep.mubr.f32.mxu0 0.0
      %1898 = vmatmul.mubr.f32.gmra.mrb[0].mxu0 %v1825
      %v1899 = vpop.f32.mrb[0].mxu0
      %v1900 = vadd.f32 0.0, %v1899
      %v1901 = vpop.f32.mrb[0].mxu0
      %1902 = vmatprep.mubr.f32.mxu0 0.0
      %1903 = vmatmul.mubr.f32.gmra.mrb[0].mxu0 %v1828
      %v1904 = vpop.f32.mrb[0].mxu0
      %v1905 = vadd.f32 0.0, %v1904
      %v1906 = vpop.f32.mrb[0].mxu0
      %1907 = vmatprep.mubr.f32.mxu0 0.0
      %1908 = vmatmul.mubr.f32.gmra.mrb[0].mxu0 %v1831
      %v1909 = vpop.f32.mrb[0].mxu0
      %v1910 = vadd.f32 0.0, %v1909
      %v1911 = vpop.f32.mrb[0].mxu0
      %1912 = vdwg.mxu0
      %1916 = vrot.lane.b32.xlu0 %v1900, 48
      %v1917 = vpop.permute.xlu0 %1916
      %1918 = vrot.lane.b32.xlu0 %v1905, 48
      %v1919 = vpop.permute.xlu0 %1918
      %1920 = vrot.lane.b32.xlu0 %v1910, 48
      %v1921 = vpop.permute.xlu0 %1920
      %vm1925 = vcmask 523648
      %1926 = vst.msk [vmem:[#allocation2] sm:$0xff] %vm1925, %v1917
      %1927 = vst.msk [vmem:[#allocation2 + $0x8] sm:$0xff] %vm1925, %v1919
      %1928 = vst.msk [vmem:[#allocation2 + $0x10] sm:$0xff] %vm1925, %v1921
      %1932 = vrot.lane.b32.xlu0 %v905, 64
      %v1933 = vpop.permute.xlu0 %1932
      %1934 = vrot.lane.b32.xlu0 %v911, 64
      %v1935 = vpop.permute.xlu0 %1934
      %1936 = vrot.lane.b32.xlu0 %v915, 64
      %v1937 = vpop.permute.xlu0 %1936
      %v1939 = vsel %vm937, %v922, 0
      %v1942 = vsel %vm937, %v923, 0
      %v1945 = vsel %vm937, %v924, 0
      %v1947 = vsel %vm937, %v1933, 0
      %v1949 = vsel %vm937, %v1935, 0
      %v1951 = vsel %vm937, %v1937, 0
      %1953 = vmatprep.subr.mxu0 0.0
      %1954 = vmatpush1.xpose.msra.mxu0 %v1947
      %1955 = vmatprep.subr.mxu0 0.0
      %1956 = vmatpush1.xpose.msra.mxu0 %v1949
      %1957 = vmatprep.subr.mxu0 0.0
      %1958 = vmatpush1.xpose.msra.mxu0 %v1951
      %1959 = vmatprep.subr.mxu0 0.0
      %1960 = vmatpush1.xpose.msra.mxu0 0.0
      %1961 = vmatprep.subr.mxu0 0.0
      %1962 = vmatpush1.xpose.msra.mxu0 0.0
      %1963 = vmatprep.subr.mxu0 0.0
      %1964 = vmatpush1.xpose.msra.mxu0 0.0
      %1965 = vmatprep.subr.mxu0 0.0
      %1966 = vmatpush1.xpose.msra.mxu0 0.0
      %1967 = vmatprep.subr.mxu0 0.0
      %1968 = vmatpush1.xpose.msra.mxu0 0.0
      %1969 = vmatprep.subr.mxu0 0.0
      %1970 = vmatpush1.xpose.msra.mxu0 0.0
      %1971 = vmatprep.subr.mxu0 0.0
      %1972 = vmatpush1.xpose.msra.mxu0 0.0
      %1973 = vmatprep.subr.mxu0 0.0
      %1974 = vmatpush1.xpose.msra.mxu0 0.0
      %1975 = vmatprep.subr.mxu0 0.0
      %1976 = vmatpush1.xpose.msra.mxu0 0.0
      %1977 = vmatprep.subr.mxu0 0.0
      %1978 = vmatpush1.xpose.msra.mxu0 0.0
      %1979 = vmatprep.subr.mxu0 0.0
      %1980 = vmatpush1.xpose.msra.mxu0 0.0
      %1981 = vmatprep.subr.mxu0 0.0
      %1982 = vmatpush1.xpose.msra.mxu0 0.0
      %1983 = vmatprep.subr.mxu0 0.0
      %1984 = vmatpush1.xpose.msra.mxu0 0.0
      %1985 = vmatprep.subr.mxu0 0.0
      %1986 = vmatpush1.xpose.msra.mxu0 0.0
      %1987 = vmatprep.subr.mxu0 0.0
      %1988 = vmatpush1.xpose.msra.mxu0 0.0
      %1989 = vmatprep.subr.mxu0 0.0
      %1990 = vmatpush1.xpose.msra.mxu0 0.0
      %1991 = vmatprep.subr.mxu0 0.0
      %1992 = vmatpush1.xpose.msra.mxu0 0.0
      %1993 = vmatprep.subr.mxu0 0.0
      %1994 = vmatpush1.xpose.msra.mxu0 0.0
      %1995 = vmatprep.subr.mxu0 0.0
      %1996 = vmatpush1.xpose.msra.mxu0 0.0
      %1997 = vmatprep.subr.mxu0 0.0
      %1998 = vmatpush1.xpose.msra.mxu0 0.0
      %1999 = vmatprep.subr.mxu0 0.0
      %2000 = vmatpush1.xpose.msra.mxu0 0.0
      %2001 = vmatprep.subr.mxu0 0.0
      %2002 = vmatpush1.xpose.msra.mxu0 0.0
      %2003 = vmatprep.subr.mxu0 0.0
      %2004 = vmatpush1.xpose.msra.mxu0 0.0
      %2005 = vmatprep.subr.mxu0 0.0
      %2006 = vmatpush1.xpose.msra.mxu0 0.0
      %2007 = vmatprep.subr.mxu0 0.0
      %2008 = vmatpush1.xpose.msra.mxu0 0.0
      %2009 = vmatprep.subr.mxu0 0.0
      %2010 = vmatpush1.xpose.msra.mxu0 0.0
      %2011 = vmatprep.subr.mxu0 0.0
      %2012 = vmatpush1.xpose.msra.mxu0 0.0
      %2013 = vmatprep.subr.mxu0 0.0
      %2014 = vmatpush1.xpose.msra.mxu0 0.0
      %2015 = vmatprep.subr.mxu0 0.0
      %2016 = vmatpush1.xpose.msra.mxu0 0.0
      %2017 = vmatprep.mubr.f32.mxu0 0.0
      %2018 = vmatmul.mubr.f32.gmra.mrb[0].mxu0 %v1939
      %v2019 = vpop.f32.mrb[0].mxu0
      %v2020 = vadd.f32 0.0, %v2019
      %v2021 = vpop.f32.mrb[0].mxu0
      %2022 = vmatprep.mubr.f32.mxu0 0.0
      %2023 = vmatmul.mubr.f32.gmra.mrb[0].mxu0 %v1942
      %v2024 = vpop.f32.mrb[0].mxu0
      %v2025 = vadd.f32 0.0, %v2024
      %v2026 = vpop.f32.mrb[0].mxu0
      %2027 = vmatprep.mubr.f32.mxu0 0.0
      %2028 = vmatmul.mubr.f32.gmra.mrb[0].mxu0 %v1945
      %v2029 = vpop.f32.mrb[0].mxu0
      %v2030 = vadd.f32 0.0, %v2029
      %v2031 = vpop.f32.mrb[0].mxu0
      %2032 = vdwg.mxu0
      %v2033 = vsel %vm1034, %v2020, -1e+30
      %v2034 = vsel %vm1034, %v2025, -1e+30
      %v2035 = vsel %vm1034, %v2030, -1e+30
      %v2036 = vsel %vm1038, %v2033, -inf
      %2037 = vmax.xlane.f32.xlu0 %v2036
      %v2038 = vpop.xlane.xlu0 %2037
      %v2039 = vsel %vm1038, %v2034, -inf
      %2040 = vmax.xlane.f32.xlu0 %v2039
      %v2041 = vpop.xlane.xlu0 %2040
      %v2042 = vsel %vm1038, %v2035, -inf
      %2043 = vmax.xlane.f32.xlu0 %v2042
      %v2044 = vpop.xlane.xlu0 %2043
      %v2045 = vsub.f32 %v2033, %v2038
      %v2046 = vsub.f32 %v2034, %v2041
      %v2047 = vsub.f32 %v2035, %v2044
      %v2048 = vmul.f32 %v2045, 1.442695
      %v2049 = vpow.pop %v2048
      %v2050 = vmul.f32 %v2046, 1.442695
      %v2051 = vpow.pop %v2050
      %v2052 = vmul.f32 %v2047, 1.442695
      %v2053 = vpow.pop %v2052
      %v2054 = vsel %vm1038, %v2049, 0.0
      %2055 = vadd.xlane.f32.xlu0 %v2054
      %v2056 = vpop.xlane.xlu0 %2055
      %v2057 = vsel %vm1038, %v2051, 0.0
      %2058 = vadd.xlane.f32.xlu0 %v2057
      %v2059 = vpop.xlane.xlu0 %2058
      %v2060 = vsel %vm1038, %v2053, 0.0
      %2061 = vadd.xlane.f32.xlu0 %v2060
      %v2062 = vpop.xlane.xlu0 %2061
      %v2063 = vrcp.pop %v2056
      %v2064 = vmul.f32 %v2049, %v2063
      %v2065 = vrcp.pop %v2059
      %v2066 = vmul.f32 %v2051, %v2065
      %v2067 = vrcp.pop %v2062
      %v2068 = vmul.f32 %v2053, %v2067
      %v2070 = vsel %vm1038, %v2064, 0
      %v2073 = vsel %vm1038, %v2066, 0
      %v2076 = vsel %vm1038, %v2068, 0
      %2078 = vmatprep.subr.mxu0 0.0
      %2079 = vmatpush1.msra.mxu0 %v907
      %2080 = vmatprep.subr.mxu0 0.0
      %2081 = vmatpush1.msra.mxu0 %v913
      %2082 = vmatprep.subr.mxu0 0.0
      %2083 = vmatpush1.msra.mxu0 %v917
      %2084 = vmatprep.subr.mxu0 0.0
      %2085 = vmatpush1.msra.mxu0 0.0
      %2086 = vmatprep.subr.mxu0 0.0
      %2087 = vmatpush1.msra.mxu0 0.0
      %2088 = vmatprep.subr.mxu0 0.0
      %2089 = vmatpush1.msra.mxu0 0.0
      %2090 = vmatprep.subr.mxu0 0.0
      %2091 = vmatpush1.msra.mxu0 0.0
      %2092 = vmatprep.subr.mxu0 0.0
      %2093 = vmatpush1.msra.mxu0 0.0
      %2094 = vmatprep.subr.mxu0 0.0
      %2095 = vmatpush1.msra.mxu0 0.0
      %2096 = vmatprep.subr.mxu0 0.0
      %2097 = vmatpush1.msra.mxu0 0.0
      %2098 = vmatprep.subr.mxu0 0.0
      %2099 = vmatpush1.msra.mxu0 0.0
      %2100 = vmatprep.subr.mxu0 0.0
      %2101 = vmatpush1.msra.mxu0 0.0
      %2102 = vmatprep.subr.mxu0 0.0
      %2103 = vmatpush1.msra.mxu0 0.0
      %2104 = vmatprep.subr.mxu0 0.0
      %2105 = vmatpush1.msra.mxu0 0.0
      %2106 = vmatprep.subr.mxu0 0.0
      %2107 = vmatpush1.msra.mxu0 0.0
      %2108 = vmatprep.subr.mxu0 0.0
      %2109 = vmatpush1.msra.mxu0 0.0
      %2110 = vmatprep.subr.mxu0 0.0
      %2111 = vmatpush1.msra.mxu0 0.0
      %2112 = vmatprep.subr.mxu0 0.0
      %2113 = vmatpush1.msra.mxu0 0.0
      %2114 = vmatprep.subr.mxu0 0.0
      %2115 = vmatpush1.msra.mxu0 0.0
      %2116 = vmatprep.subr.mxu0 0.0
      %2117 = vmatpush1.msra.mxu0 0.0
      %2118 = vmatprep.subr.mxu0 0.0
      %2119 = vmatpush1.msra.mxu0 0.0
      %2120 = vmatprep.subr.mxu0 0.0
      %2121 = vmatpush1.msra.mxu0 0.0
      %2122 = vmatprep.subr.mxu0 0.0
      %2123 = vmatpush1.msra.mxu0 0.0
      %2124 = vmatprep.subr.mxu0 0.0
      %2125 = vmatpush1.msra.mxu0 0.0
      %2126 = vmatprep.subr.mxu0 0.0
      %2127 = vmatpush1.msra.mxu0 0.0
      %2128 = vmatprep.subr.mxu0 0.0
      %2129 = vmatpush1.msra.mxu0 0.0
      %2130 = vmatprep.subr.mxu0 0.0
      %2131 = vmatpush1.msra.mxu0 0.0
      %2132 = vmatprep.subr.mxu0 0.0
      %2133 = vmatpush1.msra.mxu0 0.0
      %2134 = vmatprep.subr.mxu0 0.0
      %2135 = vmatpush1.msra.mxu0 0.0
      %2136 = vmatprep.subr.mxu0 0.0
      %2137 = vmatpush1.msra.mxu0 0.0
      %2138 = vmatprep.subr.mxu0 0.0
      %2139 = vmatpush1.msra.mxu0 0.0
      %2140 = vmatprep.subr.mxu0 0.0
      %2141 = vmatpush1.msra.mxu0 0.0
      %2142 = vmatprep.mubr.f32.mxu0 0.0
      %2143 = vmatmul.mubr.f32.gmra.mrb[0].mxu0 %v2070
      %v2144 = vpop.f32.mrb[0].mxu0
      %v2145 = vadd.f32 0.0, %v2144
      %v2146 = vpop.f32.mrb[0].mxu0
      %2147 = vmatprep.mubr.f32.mxu0 0.0
      %2148 = vmatmul.mubr.f32.gmra.mrb[0].mxu0 %v2073
      %v2149 = vpop.f32.mrb[0].mxu0
      %v2150 = vadd.f32 0.0, %v2149
      %v2151 = vpop.f32.mrb[0].mxu0
      %2152 = vmatprep.mubr.f32.mxu0 0.0
      %2153 = vmatmul.mubr.f32.gmra.mrb[0].mxu0 %v2076
      %v2154 = vpop.f32.mrb[0].mxu0
      %v2155 = vadd.f32 0.0, %v2154
      %v2156 = vpop.f32.mrb[0].mxu0
      %2157 = vdwg.mxu0
      %2158 = vst.msk [vmem:[#allocation2 + $0x18] sm:$0xff] %vm937, %v2145
      %2159 = vst.msk [vmem:[#allocation2 + $0x20] sm:$0xff] %vm937, %v2150
      %2160 = vst.msk [vmem:[#allocation2 + $0x28] sm:$0xff] %vm937, %v2155
      %2161 = vrot.lane.b32.xlu0 %v922, 112
      %v2162 = vpop.permute.xlu0 %2161
      %2163 = vrot.lane.b32.xlu0 %v923, 112
      %v2164 = vpop.permute.xlu0 %2163
      %2165 = vrot.lane.b32.xlu0 %v924, 112
      %v2166 = vpop.permute.xlu0 %2165
      %2167 = vrot.lane.b32.xlu0 %v905, 48
      %v2168 = vpop.permute.xlu0 %2167
      %2169 = vrot.lane.b32.xlu0 %v911, 48
      %v2170 = vpop.permute.xlu0 %2169
      %2171 = vrot.lane.b32.xlu0 %v915, 48
      %v2172 = vpop.permute.xlu0 %2171
      %v2173 = vsel %vm937, %v2162, 0
      %v2175 = vsel %vm937, %v2164, 0
      %v2177 = vsel %vm937, %v2166, 0
      %v2179 = vsel %vm937, %v2168, 0
      %v2181 = vsel %vm937, %v2170, 0
      %v2183 = vsel %vm937, %v2172, 0
      %2185 = vmatprep.subr.mxu0 0.0
      %2186 = vmatpush1.xpose.msra.mxu0 %v2179
      %2187 = vmatprep.subr.mxu0 0.0
      %2188 = vmatpush1.xpose.msra.mxu0 %v2181
      %2189 = vmatprep.subr.mxu0 0.0
      %2190 = vmatpush1.xpose.msra.mxu0 %v2183
      %2191 = vmatprep.subr.mxu0 0.0
      %2192 = vmatpush1.xpose.msra.mxu0 0.0
      %2193 = vmatprep.subr.mxu0 0.0
      %2194 = vmatpush1.xpose.msra.mxu0 0.0
      %2195 = vmatprep.subr.mxu0 0.0
      %2196 = vmatpush1.xpose.msra.mxu0 0.0
      %2197 = vmatprep.subr.mxu0 0.0
      %2198 = vmatpush1.xpose.msra.mxu0 0.0
      %2199 = vmatprep.subr.mxu0 0.0
      %2200 = vmatpush1.xpose.msra.mxu0 0.0
      %2201 = vmatprep.subr.mxu0 0.0
      %2202 = vmatpush1.xpose.msra.mxu0 0.0
      %2203 = vmatprep.subr.mxu0 0.0
      %2204 = vmatpush1.xpose.msra.mxu0 0.0
      %2205 = vmatprep.subr.mxu0 0.0
      %2206 = vmatpush1.xpose.msra.mxu0 0.0
      %2207 = vmatprep.subr.mxu0 0.0
      %2208 = vmatpush1.xpose.msra.mxu0 0.0
      %2209 = vmatprep.subr.mxu0 0.0
      %2210 = vmatpush1.xpose.msra.mxu0 0.0
      %2211 = vmatprep.subr.mxu0 0.0
      %2212 = vmatpush1.xpose.msra.mxu0 0.0
      %2213 = vmatprep.subr.mxu0 0.0
      %2214 = vmatpush1.xpose.msra.mxu0 0.0
      %2215 = vmatprep.subr.mxu0 0.0
      %2216 = vmatpush1.xpose.msra.mxu0 0.0
      %2217 = vmatprep.subr.mxu0 0.0
      %2218 = vmatpush1.xpose.msra.mxu0 0.0
      %2219 = vmatprep.subr.mxu0 0.0
      %2220 = vmatpush1.xpose.msra.mxu0 0.0
      %2221 = vmatprep.subr.mxu0 0.0
      %2222 = vmatpush1.xpose.msra.mxu0 0.0
      %2223 = vmatprep.subr.mxu0 0.0
      %2224 = vmatpush1.xpose.msra.mxu0 0.0
      %2225 = vmatprep.subr.mxu0 0.0
      %2226 = vmatpush1.xpose.msra.mxu0 0.0
      %2227 = vmatprep.subr.mxu0 0.0
      %2228 = vmatpush1.xpose.msra.mxu0 0.0
      %2229 = vmatprep.subr.mxu0 0.0
      %2230 = vmatpush1.xpose.msra.mxu0 0.0
      %2231 = vmatprep.subr.mxu0 0.0
      %2232 = vmatpush1.xpose.msra.mxu0 0.0
      %2233 = vmatprep.subr.mxu0 0.0
      %2234 = vmatpush1.xpose.msra.mxu0 0.0
      %2235 = vmatprep.subr.mxu0 0.0
      %2236 = vmatpush1.xpose.msra.mxu0 0.0
      %2237 = vmatprep.subr.mxu0 0.0
      %2238 = vmatpush1.xpose.msra.mxu0 0.0
      %2239 = vmatprep.subr.mxu0 0.0
      %2240 = vmatpush1.xpose.msra.mxu0 0.0
      %2241 = vmatprep.subr.mxu0 0.0
      %2242 = vmatpush1.xpose.msra.mxu0 0.0
      %2243 = vmatprep.subr.mxu0 0.0
      %2244 = vmatpush1.xpose.msra.mxu0 0.0
      %2245 = vmatprep.subr.mxu0 0.0
      %2246 = vmatpush1.xpose.msra.mxu0 0.0
      %2247 = vmatprep.subr.mxu0 0.0
      %2248 = vmatpush1.xpose.msra.mxu0 0.0
      %2249 = vmatprep.mubr.f32.mxu0 0.0
      %2250 = vmatmul.mubr.f32.gmra.mrb[0].mxu0 %v2173
      %v2251 = vpop.f32.mrb[0].mxu0
      %v2252 = vadd.f32 0.0, %v2251
      %v2253 = vpop.f32.mrb[0].mxu0
      %2254 = vmatprep.mubr.f32.mxu0 0.0
      %2255 = vmatmul.mubr.f32.gmra.mrb[0].mxu0 %v2175
      %v2256 = vpop.f32.mrb[0].mxu0
      %v2257 = vadd.f32 0.0, %v2256
      %v2258 = vpop.f32.mrb[0].mxu0
      %2259 = vmatprep.mubr.f32.mxu0 0.0
      %2260 = vmatmul.mubr.f32.gmra.mrb[0].mxu0 %v2177
      %v2261 = vpop.f32.mrb[0].mxu0
      %v2262 = vadd.f32 0.0, %v2261
      %v2263 = vpop.f32.mrb[0].mxu0
      %2264 = vdwg.mxu0
      %v2265 = vsel %vm1034, %v2252, -1e+30
      %v2266 = vsel %vm1034, %v2257, -1e+30
      %v2267 = vsel %vm1034, %v2262, -1e+30
      %v2268 = vsel %vm1038, %v2265, -inf
      %2269 = vmax.xlane.f32.xlu0 %v2268
      %v2270 = vpop.xlane.xlu0 %2269
      %v2271 = vsel %vm1038, %v2266, -inf
      %2272 = vmax.xlane.f32.xlu0 %v2271
      %v2273 = vpop.xlane.xlu0 %2272
      %v2274 = vsel %vm1038, %v2267, -inf
      %2275 = vmax.xlane.f32.xlu0 %v2274
      %v2276 = vpop.xlane.xlu0 %2275
      %v2277 = vsub.f32 %v2265, %v2270
      %v2278 = vsub.f32 %v2266, %v2273
      %v2279 = vsub.f32 %v2267, %v2276
      %v2280 = vmul.f32 %v2277, 1.442695
      %v2281 = vpow.pop %v2280
      %v2282 = vmul.f32 %v2278, 1.442695
      %v2283 = vpow.pop %v2282
      %v2284 = vmul.f32 %v2279, 1.442695
      %v2285 = vpow.pop %v2284
      %v2286 = vsel %vm1038, %v2281, 0.0
      %2287 = vadd.xlane.f32.xlu0 %v2286
      %v2288 = vpop.xlane.xlu0 %2287
      %v2289 = vsel %vm1038, %v2283, 0.0
      %2290 = vadd.xlane.f32.xlu0 %v2289
      %v2291 = vpop.xlane.xlu0 %2290
      %v2292 = vsel %vm1038, %v2285, 0.0
      %2293 = vadd.xlane.f32.xlu0 %v2292
      %v2294 = vpop.xlane.xlu0 %2293
      %v2295 = vrcp.pop %v2288
      %v2296 = vmul.f32 %v2281, %v2295
      %v2297 = vrcp.pop %v2291
      %v2298 = vmul.f32 %v2283, %v2297
      %v2299 = vrcp.pop %v2294
      %v2300 = vmul.f32 %v2285, %v2299
      %2304 = vrot.lane.b32.xlu0 %v907, 112
      %v2305 = vpop.permute.xlu0 %2304
      %2306 = vrot.lane.b32.xlu0 %v913, 112
      %v2307 = vpop.permute.xlu0 %2306
      %2308 = vrot.lane.b32.xlu0 %v917, 112
      %v2309 = vpop.permute.xlu0 %2308
      %v2314 = vsel %vm1038, %v2296, 0
      %v2317 = vsel %vm1038, %v2298, 0
      %v2320 = vsel %vm1038, %v2300, 0
      %2322 = vmatprep.subr.mxu0 0.0
      %2323 = vmatpush1.msra.mxu0 %v2305
      %2324 = vmatprep.subr.mxu0 0.0
      %2325 = vmatpush1.msra.mxu0 %v2307
      %2326 = vmatprep.subr.mxu0 0.0
      %2327 = vmatpush1.msra.mxu0 %v2309
      %2328 = vmatprep.subr.mxu0 0.0
      %2329 = vmatpush1.msra.mxu0 0.0
      %2330 = vmatprep.subr.mxu0 0.0
      %2331 = vmatpush1.msra.mxu0 0.0
      %2332 = vmatprep.subr.mxu0 0.0
      %2333 = vmatpush1.msra.mxu0 0.0
      %2334 = vmatprep.subr.mxu0 0.0
      %2335 = vmatpush1.msra.mxu0 0.0
      %2336 = vmatprep.subr.mxu0 0.0
      %2337 = vmatpush1.msra.mxu0 0.0
      %2338 = vmatprep.subr.mxu0 0.0
      %2339 = vmatpush1.msra.mxu0 0.0
      %2340 = vmatprep.subr.mxu0 0.0
      %2341 = vmatpush1.msra.mxu0 0.0
      %2342 = vmatprep.subr.mxu0 0.0
      %2343 = vmatpush1.msra.mxu0 0.0
      %2344 = vmatprep.subr.mxu0 0.0
      %2345 = vmatpush1.msra.mxu0 0.0
      %2346 = vmatprep.subr.mxu0 0.0
      %2347 = vmatpush1.msra.mxu0 0.0
      %2348 = vmatprep.subr.mxu0 0.0
      %2349 = vmatpush1.msra.mxu0 0.0
      %2350 = vmatprep.subr.mxu0 0.0
      %2351 = vmatpush1.msra.mxu0 0.0
      %2352 = vmatprep.subr.mxu0 0.0
      %2353 = vmatpush1.msra.mxu0 0.0
      %2354 = vmatprep.subr.mxu0 0.0
      %2355 = vmatpush1.msra.mxu0 0.0
      %2356 = vmatprep.subr.mxu0 0.0
      %2357 = vmatpush1.msra.mxu0 0.0
      %2358 = vmatprep.subr.mxu0 0.0
      %2359 = vmatpush1.msra.mxu0 0.0
      %2360 = vmatprep.subr.mxu0 0.0
      %2361 = vmatpush1.msra.mxu0 0.0
      %2362 = vmatprep.subr.mxu0 0.0
      %2363 = vmatpush1.msra.mxu0 0.0
      %2364 = vmatprep.subr.mxu0 0.0
      %2365 = vmatpush1.msra.mxu0 0.0
      %2366 = vmatprep.subr.mxu0 0.0
      %2367 = vmatpush1.msra.mxu0 0.0
      %2368 = vmatprep.subr.mxu0 0.0
      %2369 = vmatpush1.msra.mxu0 0.0
      %2370 = vmatprep.subr.mxu0 0.0
      %2371 = vmatpush1.msra.mxu0 0.0
      %2372 = vmatprep.subr.mxu0 0.0
      %2373 = vmatpush1.msra.mxu0 0.0
      %2374 = vmatprep.subr.mxu0 0.0
      %2375 = vmatpush1.msra.mxu0 0.0
      %2376 = vmatprep.subr.mxu0 0.0
      %2377 = vmatpush1.msra.mxu0 0.0
      %2378 = vmatprep.subr.mxu0 0.0
      %2379 = vmatpush1.msra.mxu0 0.0
      %2380 = vmatprep.subr.mxu0 0.0
      %2381 = vmatpush1.msra.mxu0 0.0
      %2382 = vmatprep.subr.mxu0 0.0
      %2383 = vmatpush1.msra.mxu0 0.0
      %2384 = vmatprep.subr.mxu0 0.0
      %2385 = vmatpush1.msra.mxu0 0.0
      %2386 = vmatprep.mubr.f32.mxu0 0.0
      %2387 = vmatmul.mubr.f32.gmra.mrb[0].mxu0 %v2314
      %v2388 = vpop.f32.mrb[0].mxu0
      %v2389 = vadd.f32 0.0, %v2388
      %v2390 = vpop.f32.mrb[0].mxu0
      %2391 = vmatprep.mubr.f32.mxu0 0.0
      %2392 = vmatmul.mubr.f32.gmra.mrb[0].mxu0 %v2317
      %v2393 = vpop.f32.mrb[0].mxu0
      %v2394 = vadd.f32 0.0, %v2393
      %v2395 = vpop.f32.mrb[0].mxu0
      %2396 = vmatprep.mubr.f32.mxu0 0.0
      %2397 = vmatmul.mubr.f32.gmra.mrb[0].mxu0 %v2320
      %v2398 = vpop.f32.mrb[0].mxu0
      %v2399 = vadd.f32 0.0, %v2398
      %v2400 = vpop.f32.mrb[0].mxu0
      %2401 = vdwg.mxu0
      %2405 = vrot.lane.b32.xlu0 %v2389, 16
      %v2406 = vpop.permute.xlu0 %2405
      %2407 = vrot.lane.b32.xlu0 %v2394, 16
      %v2408 = vpop.permute.xlu0 %2407
      %2409 = vrot.lane.b32.xlu0 %v2399, 16
      %v2410 = vpop.permute.xlu0 %2409
      %2414 = vst.msk [vmem:[#allocation2 + $0x18] sm:$0xff] %vm1417, %v2406
      %2415 = vst.msk [vmem:[#allocation2 + $0x20] sm:$0xff] %vm1417, %v2408
      %2416 = vst.msk [vmem:[#allocation2 + $0x28] sm:$0xff] %vm1417, %v2410
      %2417 = vrot.lane.b32.xlu0 %v922, 96
      %v2418 = vpop.permute.xlu0 %2417
      %2419 = vrot.lane.b32.xlu0 %v923, 96
      %v2420 = vpop.permute.xlu0 %2419
      %2421 = vrot.lane.b32.xlu0 %v924, 96
      %v2422 = vpop.permute.xlu0 %2421
      %2423 = vrot.lane.b32.xlu0 %v905, 32
      %v2424 = vpop.permute.xlu0 %2423
      %2425 = vrot.lane.b32.xlu0 %v911, 32
      %v2426 = vpop.permute.xlu0 %2425
      %2427 = vrot.lane.b32.xlu0 %v915, 32
      %v2428 = vpop.permute.xlu0 %2427
      %v2429 = vsel %vm937, %v2418, 0
      %v2431 = vsel %vm937, %v2420, 0
      %v2433 = vsel %vm937, %v2422, 0
      %v2435 = vsel %vm937, %v2424, 0
      %v2437 = vsel %vm937, %v2426, 0
      %v2439 = vsel %vm937, %v2428, 0
      %2441 = vmatprep.subr.mxu0 0.0
      %2442 = vmatpush1.xpose.msra.mxu0 %v2435
      %2443 = vmatprep.subr.mxu0 0.0
      %2444 = vmatpush1.xpose.msra.mxu0 %v2437
      %2445 = vmatprep.subr.mxu0 0.0
      %2446 = vmatpush1.xpose.msra.mxu0 %v2439
      %2447 = vmatprep.subr.mxu0 0.0
      %2448 = vmatpush1.xpose.msra.mxu0 0.0
      %2449 = vmatprep.subr.mxu0 0.0
      %2450 = vmatpush1.xpose.msra.mxu0 0.0
      %2451 = vmatprep.subr.mxu0 0.0
      %2452 = vmatpush1.xpose.msra.mxu0 0.0
      %2453 = vmatprep.subr.mxu0 0.0
      %2454 = vmatpush1.xpose.msra.mxu0 0.0
      %2455 = vmatprep.subr.mxu0 0.0
      %2456 = vmatpush1.xpose.msra.mxu0 0.0
      %2457 = vmatprep.subr.mxu0 0.0
      %2458 = vmatpush1.xpose.msra.mxu0 0.0
      %2459 = vmatprep.subr.mxu0 0.0
      %2460 = vmatpush1.xpose.msra.mxu0 0.0
      %2461 = vmatprep.subr.mxu0 0.0
      %2462 = vmatpush1.xpose.msra.mxu0 0.0
      %2463 = vmatprep.subr.mxu0 0.0
      %2464 = vmatpush1.xpose.msra.mxu0 0.0
      %2465 = vmatprep.subr.mxu0 0.0
      %2466 = vmatpush1.xpose.msra.mxu0 0.0
      %2467 = vmatprep.subr.mxu0 0.0
      %2468 = vmatpush1.xpose.msra.mxu0 0.0
      %2469 = vmatprep.subr.mxu0 0.0
      %2470 = vmatpush1.xpose.msra.mxu0 0.0
      %2471 = vmatprep.subr.mxu0 0.0
      %2472 = vmatpush1.xpose.msra.mxu0 0.0
      %2473 = vmatprep.subr.mxu0 0.0
      %2474 = vmatpush1.xpose.msra.mxu0 0.0
      %2475 = vmatprep.subr.mxu0 0.0
      %2476 = vmatpush1.xpose.msra.mxu0 0.0
      %2477 = vmatprep.subr.mxu0 0.0
      %2478 = vmatpush1.xpose.msra.mxu0 0.0
      %2479 = vmatprep.subr.mxu0 0.0
      %2480 = vmatpush1.xpose.msra.mxu0 0.0
      %2481 = vmatprep.subr.mxu0 0.0
      %2482 = vmatpush1.xpose.msra.mxu0 0.0
      %2483 = vmatprep.subr.mxu0 0.0
      %2484 = vmatpush1.xpose.msra.mxu0 0.0
      %2485 = vmatprep.subr.mxu0 0.0
      %2486 = vmatpush1.xpose.msra.mxu0 0.0
      %2487 = vmatprep.subr.mxu0 0.0
      %2488 = vmatpush1.xpose.msra.mxu0 0.0
      %2489 = vmatprep.subr.mxu0 0.0
      %2490 = vmatpush1.xpose.msra.mxu0 0.0
      %2491 = vmatprep.subr.mxu0 0.0
      %2492 = vmatpush1.xpose.msra.mxu0 0.0
      %2493 = vmatprep.subr.mxu0 0.0
      %2494 = vmatpush1.xpose.msra.mxu0 0.0
      %2495 = vmatprep.subr.mxu0 0.0
      %2496 = vmatpush1.xpose.msra.mxu0 0.0
      %2497 = vmatprep.subr.mxu0 0.0
      %2498 = vmatpush1.xpose.msra.mxu0 0.0
      %2499 = vmatprep.subr.mxu0 0.0
      %2500 = vmatpush1.xpose.msra.mxu0 0.0
      %2501 = vmatprep.subr.mxu0 0.0
      %2502 = vmatpush1.xpose.msra.mxu0 0.0
      %2503 = vmatprep.subr.mxu0 0.0
      %2504 = vmatpush1.xpose.msra.mxu0 0.0
      %2505 = vmatprep.mubr.f32.mxu0 0.0
      %2506 = vmatmul.mubr.f32.gmra.mrb[0].mxu0 %v2429
      %v2507 = vpop.f32.mrb[0].mxu0
      %v2508 = vadd.f32 0.0, %v2507
      %v2509 = vpop.f32.mrb[0].mxu0
      %2510 = vmatprep.mubr.f32.mxu0 0.0
      %2511 = vmatmul.mubr.f32.gmra.mrb[0].mxu0 %v2431
      %v2512 = vpop.f32.mrb[0].mxu0
      %v2513 = vadd.f32 0.0, %v2512
      %v2514 = vpop.f32.mrb[0].mxu0
      %2515 = vmatprep.mubr.f32.mxu0 0.0
      %2516 = vmatmul.mubr.f32.gmra.mrb[0].mxu0 %v2433
      %v2517 = vpop.f32.mrb[0].mxu0
      %v2518 = vadd.f32 0.0, %v2517
      %v2519 = vpop.f32.mrb[0].mxu0
      %2520 = vdwg.mxu0
      %v2521 = vsel %vm1034, %v2508, -1e+30
      %v2522 = vsel %vm1034, %v2513, -1e+30
      %v2523 = vsel %vm1034, %v2518, -1e+30
      %v2524 = vsel %vm1038, %v2521, -inf
      %2525 = vmax.xlane.f32.xlu0 %v2524
      %v2526 = vpop.xlane.xlu0 %2525
      %v2527 = vsel %vm1038, %v2522, -inf
      %2528 = vmax.xlane.f32.xlu0 %v2527
      %v2529 = vpop.xlane.xlu0 %2528
      %v2530 = vsel %vm1038, %v2523, -inf
      %2531 = vmax.xlane.f32.xlu0 %v2530
      %v2532 = vpop.xlane.xlu0 %2531
      %v2533 = vsub.f32 %v2521, %v2526
      %v2534 = vsub.f32 %v2522, %v2529
      %v2535 = vsub.f32 %v2523, %v2532
      %v2536 = vmul.f32 %v2533, 1.442695
      %v2537 = vpow.pop %v2536
      %v2538 = vmul.f32 %v2534, 1.442695
      %v2539 = vpow.pop %v2538
      %v2540 = vmul.f32 %v2535, 1.442695
      %v2541 = vpow.pop %v2540
      %v2542 = vsel %vm1038, %v2537, 0.0
      %2543 = vadd.xlane.f32.xlu0 %v2542
      %v2544 = vpop.xlane.xlu0 %2543
      %v2545 = vsel %vm1038, %v2539, 0.0
      %2546 = vadd.xlane.f32.xlu0 %v2545
      %v2547 = vpop.xlane.xlu0 %2546
      %v2548 = vsel %vm1038, %v2541, 0.0
      %2549 = vadd.xlane.f32.xlu0 %v2548
      %v2550 = vpop.xlane.xlu0 %2549
      %v2551 = vrcp.pop %v2544
      %v2552 = vmul.f32 %v2537, %v2551
      %v2553 = vrcp.pop %v2547
      %v2554 = vmul.f32 %v2539, %v2553
      %v2555 = vrcp.pop %v2550
      %v2556 = vmul.f32 %v2541, %v2555
      %2557 = vrot.lane.b32.xlu0 %v907, 96
      %v2558 = vpop.permute.xlu0 %2557
      %2559 = vrot.lane.b32.xlu0 %v913, 96
      %v2560 = vpop.permute.xlu0 %2559
      %2561 = vrot.lane.b32.xlu0 %v917, 96
      %v2562 = vpop.permute.xlu0 %2561
      %v2567 = vsel %vm1038, %v2552, 0
      %v2570 = vsel %vm1038, %v2554, 0
      %v2573 = vsel %vm1038, %v2556, 0
      %2575 = vmatprep.subr.mxu0 0.0
      %2576 = vmatpush1.msra.mxu0 %v2558
      %2577 = vmatprep.subr.mxu0 0.0
      %2578 = vmatpush1.msra.mxu0 %v2560
      %2579 = vmatprep.subr.mxu0 0.0
      %2580 = vmatpush1.msra.mxu0 %v2562
      %2581 = vmatprep.subr.mxu0 0.0
      %2582 = vmatpush1.msra.mxu0 0.0
      %2583 = vmatprep.subr.mxu0 0.0
      %2584 = vmatpush1.msra.mxu0 0.0
      %2585 = vmatprep.subr.mxu0 0.0
      %2586 = vmatpush1.msra.mxu0 0.0
      %2587 = vmatprep.subr.mxu0 0.0
      %2588 = vmatpush1.msra.mxu0 0.0
      %2589 = vmatprep.subr.mxu0 0.0
      %2590 = vmatpush1.msra.mxu0 0.0
      %2591 = vmatprep.subr.mxu0 0.0
      %2592 = vmatpush1.msra.mxu0 0.0
      %2593 = vmatprep.subr.mxu0 0.0
      %2594 = vmatpush1.msra.mxu0 0.0
      %2595 = vmatprep.subr.mxu0 0.0
      %2596 = vmatpush1.msra.mxu0 0.0
      %2597 = vmatprep.subr.mxu0 0.0
      %2598 = vmatpush1.msra.mxu0 0.0
      %2599 = vmatprep.subr.mxu0 0.0
      %2600 = vmatpush1.msra.mxu0 0.0
      %2601 = vmatprep.subr.mxu0 0.0
      %2602 = vmatpush1.msra.mxu0 0.0
      %2603 = vmatprep.subr.mxu0 0.0
      %2604 = vmatpush1.msra.mxu0 0.0
      %2605 = vmatprep.subr.mxu0 0.0
      %2606 = vmatpush1.msra.mxu0 0.0
      %2607 = vmatprep.subr.mxu0 0.0
      %2608 = vmatpush1.msra.mxu0 0.0
      %2609 = vmatprep.subr.mxu0 0.0
      %2610 = vmatpush1.msra.mxu0 0.0
      %2611 = vmatprep.subr.mxu0 0.0
      %2612 = vmatpush1.msra.mxu0 0.0
      %2613 = vmatprep.subr.mxu0 0.0
      %2614 = vmatpush1.msra.mxu0 0.0
      %2615 = vmatprep.subr.mxu0 0.0
      %2616 = vmatpush1.msra.mxu0 0.0
      %2617 = vmatprep.subr.mxu0 0.0
      %2618 = vmatpush1.msra.mxu0 0.0
      %2619 = vmatprep.subr.mxu0 0.0
      %2620 = vmatpush1.msra.mxu0 0.0
      %2621 = vmatprep.subr.mxu0 0.0
      %2622 = vmatpush1.msra.mxu0 0.0
      %2623 = vmatprep.subr.mxu0 0.0
      %2624 = vmatpush1.msra.mxu0 0.0
      %2625 = vmatprep.subr.mxu0 0.0
      %2626 = vmatpush1.msra.mxu0 0.0
      %2627 = vmatprep.subr.mxu0 0.0
      %2628 = vmatpush1.msra.mxu0 0.0
      %2629 = vmatprep.subr.mxu0 0.0
      %2630 = vmatpush1.msra.mxu0 0.0
      %2631 = vmatprep.subr.mxu0 0.0
      %2632 = vmatpush1.msra.mxu0 0.0
      %2633 = vmatprep.subr.mxu0 0.0
      %2634 = vmatpush1.msra.mxu0 0.0
      %2635 = vmatprep.subr.mxu0 0.0
      %2636 = vmatpush1.msra.mxu0 0.0
      %2637 = vmatprep.subr.mxu0 0.0
      %2638 = vmatpush1.msra.mxu0 0.0
      %2639 = vmatprep.mubr.f32.mxu0 0.0
      %2640 = vmatmul.mubr.f32.gmra.mrb[0].mxu0 %v2567
      %v2641 = vpop.f32.mrb[0].mxu0
      %v2642 = vadd.f32 0.0, %v2641
      %v2643 = vpop.f32.mrb[0].mxu0
      %2644 = vmatprep.mubr.f32.mxu0 0.0
      %2645 = vmatmul.mubr.f32.gmra.mrb[0].mxu0 %v2570
      %v2646 = vpop.f32.mrb[0].mxu0
      %v2647 = vadd.f32 0.0, %v2646
      %v2648 = vpop.f32.mrb[0].mxu0
      %2649 = vmatprep.mubr.f32.mxu0 0.0
      %2650 = vmatmul.mubr.f32.gmra.mrb[0].mxu0 %v2573
      %v2651 = vpop.f32.mrb[0].mxu0
      %v2652 = vadd.f32 0.0, %v2651
      %v2653 = vpop.f32.mrb[0].mxu0
      %2654 = vdwg.mxu0
      %2658 = vrot.lane.b32.xlu0 %v2642, 32
      %v2659 = vpop.permute.xlu0 %2658
      %2660 = vrot.lane.b32.xlu0 %v2647, 32
      %v2661 = vpop.permute.xlu0 %2660
      %2662 = vrot.lane.b32.xlu0 %v2652, 32
      %v2663 = vpop.permute.xlu0 %2662
      %2667 = vst.msk [vmem:[#allocation2 + $0x18] sm:$0xff] %vm1671, %v2659
      %2668 = vst.msk [vmem:[#allocation2 + $0x20] sm:$0xff] %vm1671, %v2661
      %2669 = vst.msk [vmem:[#allocation2 + $0x28] sm:$0xff] %vm1671, %v2663
      %2670 = vrot.lane.b32.xlu0 %v922, 80
      %v2671 = vpop.permute.xlu0 %2670
      %2672 = vrot.lane.b32.xlu0 %v923, 80
      %v2673 = vpop.permute.xlu0 %2672
      %2674 = vrot.lane.b32.xlu0 %v924, 80
      %v2675 = vpop.permute.xlu0 %2674
      %2676 = vrot.lane.b32.xlu0 %v905, 16
      %v2677 = vpop.permute.xlu0 %2676
      %2678 = vrot.lane.b32.xlu0 %v911, 16
      %v2679 = vpop.permute.xlu0 %2678
      %2680 = vrot.lane.b32.xlu0 %v915, 16
      %v2681 = vpop.permute.xlu0 %2680
      %v2682 = vsel %vm937, %v2671, 0
      %v2684 = vsel %vm937, %v2673, 0
      %v2686 = vsel %vm937, %v2675, 0
      %v2688 = vsel %vm937, %v2677, 0
      %v2690 = vsel %vm937, %v2679, 0
      %v2692 = vsel %vm937, %v2681, 0
      %2694 = vmatprep.subr.mxu0 0.0
      %2695 = vmatpush1.xpose.msra.mxu0 %v2688
      %2696 = vmatprep.subr.mxu0 0.0
      %2697 = vmatpush1.xpose.msra.mxu0 %v2690
      %2698 = vmatprep.subr.mxu0 0.0
      %2699 = vmatpush1.xpose.msra.mxu0 %v2692
      %2700 = vmatprep.subr.mxu0 0.0
      %2701 = vmatpush1.xpose.msra.mxu0 0.0
      %2702 = vmatprep.subr.mxu0 0.0
      %2703 = vmatpush1.xpose.msra.mxu0 0.0
      %2704 = vmatprep.subr.mxu0 0.0
      %2705 = vmatpush1.xpose.msra.mxu0 0.0
      %2706 = vmatprep.subr.mxu0 0.0
      %2707 = vmatpush1.xpose.msra.mxu0 0.0
      %2708 = vmatprep.subr.mxu0 0.0
      %2709 = vmatpush1.xpose.msra.mxu0 0.0
      %2710 = vmatprep.subr.mxu0 0.0
      %2711 = vmatpush1.xpose.msra.mxu0 0.0
      %2712 = vmatprep.subr.mxu0 0.0
      %2713 = vmatpush1.xpose.msra.mxu0 0.0
      %2714 = vmatprep.subr.mxu0 0.0
      %2715 = vmatpush1.xpose.msra.mxu0 0.0
      %2716 = vmatprep.subr.mxu0 0.0
      %2717 = vmatpush1.xpose.msra.mxu0 0.0
      %2718 = vmatprep.subr.mxu0 0.0
      %2719 = vmatpush1.xpose.msra.mxu0 0.0
      %2720 = vmatprep.subr.mxu0 0.0
      %2721 = vmatpush1.xpose.msra.mxu0 0.0
      %2722 = vmatprep.subr.mxu0 0.0
      %2723 = vmatpush1.xpose.msra.mxu0 0.0
      %2724 = vmatprep.subr.mxu0 0.0
      %2725 = vmatpush1.xpose.msra.mxu0 0.0
      %2726 = vmatprep.subr.mxu0 0.0
      %2727 = vmatpush1.xpose.msra.mxu0 0.0
      %2728 = vmatprep.subr.mxu0 0.0
      %2729 = vmatpush1.xpose.msra.mxu0 0.0
      %2730 = vmatprep.subr.mxu0 0.0
      %2731 = vmatpush1.xpose.msra.mxu0 0.0
      %2732 = vmatprep.subr.mxu0 0.0
      %2733 = vmatpush1.xpose.msra.mxu0 0.0
      %2734 = vmatprep.subr.mxu0 0.0
      %2735 = vmatpush1.xpose.msra.mxu0 0.0
      %2736 = vmatprep.subr.mxu0 0.0
      %2737 = vmatpush1.xpose.msra.mxu0 0.0
      %2738 = vmatprep.subr.mxu0 0.0
      %2739 = vmatpush1.xpose.msra.mxu0 0.0
      %2740 = vmatprep.subr.mxu0 0.0
      %2741 = vmatpush1.xpose.msra.mxu0 0.0
      %2742 = vmatprep.subr.mxu0 0.0
      %2743 = vmatpush1.xpose.msra.mxu0 0.0
      %2744 = vmatprep.subr.mxu0 0.0
      %2745 = vmatpush1.xpose.msra.mxu0 0.0
      %2746 = vmatprep.subr.mxu0 0.0
      %2747 = vmatpush1.xpose.msra.mxu0 0.0
      %2748 = vmatprep.subr.mxu0 0.0
      %2749 = vmatpush1.xpose.msra.mxu0 0.0
      %2750 = vmatprep.subr.mxu0 0.0
      %2751 = vmatpush1.xpose.msra.mxu0 0.0
      %2752 = vmatprep.subr.mxu0 0.0
      %2753 = vmatpush1.xpose.msra.mxu0 0.0
      %2754 = vmatprep.subr.mxu0 0.0
      %2755 = vmatpush1.xpose.msra.mxu0 0.0
      %2756 = vmatprep.subr.mxu0 0.0
      %2757 = vmatpush1.xpose.msra.mxu0 0.0
      %2758 = vmatprep.mubr.f32.mxu0 0.0
      %2759 = vmatmul.mubr.f32.gmra.mrb[0].mxu0 %v2682
      %v2760 = vpop.f32.mrb[0].mxu0
      %v2761 = vadd.f32 0.0, %v2760
      %v2762 = vpop.f32.mrb[0].mxu0
      %2763 = vmatprep.mubr.f32.mxu0 0.0
      %2764 = vmatmul.mubr.f32.gmra.mrb[0].mxu0 %v2684
      %v2765 = vpop.f32.mrb[0].mxu0
      %v2766 = vadd.f32 0.0, %v2765
      %v2767 = vpop.f32.mrb[0].mxu0
      %2768 = vmatprep.mubr.f32.mxu0 0.0
      %2769 = vmatmul.mubr.f32.gmra.mrb[0].mxu0 %v2686
      %v2770 = vpop.f32.mrb[0].mxu0
      %v2771 = vadd.f32 0.0, %v2770
      %v2772 = vpop.f32.mrb[0].mxu0
      %2773 = vdwg.mxu0
      %v2774 = vsel %vm1034, %v2761, -1e+30
      %v2775 = vsel %vm1034, %v2766, -1e+30
      %v2776 = vsel %vm1034, %v2771, -1e+30
      %v2777 = vsel %vm1038, %v2774, -inf
      %2778 = vmax.xlane.f32.xlu0 %v2777
      %v2779 = vpop.xlane.xlu0 %2778
      %v2780 = vsel %vm1038, %v2775, -inf
      %2781 = vmax.xlane.f32.xlu0 %v2780
      %v2782 = vpop.xlane.xlu0 %2781
      %v2783 = vsel %vm1038, %v2776, -inf
      %2784 = vmax.xlane.f32.xlu0 %v2783
      %v2785 = vpop.xlane.xlu0 %2784
      %v2786 = vsub.f32 %v2774, %v2779
      %v2787 = vsub.f32 %v2775, %v2782
      %v2788 = vsub.f32 %v2776, %v2785
      %v2789 = vmul.f32 %v2786, 1.442695
      %v2790 = vpow.pop %v2789
      %v2791 = vmul.f32 %v2787, 1.442695
      %v2792 = vpow.pop %v2791
      %v2793 = vmul.f32 %v2788, 1.442695
      %v2794 = vpow.pop %v2793
      %v2795 = vsel %vm1038, %v2790, 0.0
      %2796 = vadd.xlane.f32.xlu0 %v2795
      %v2797 = vpop.xlane.xlu0 %2796
      %v2798 = vsel %vm1038, %v2792, 0.0
      %2799 = vadd.xlane.f32.xlu0 %v2798
      %v2800 = vpop.xlane.xlu0 %2799
      %v2801 = vsel %vm1038, %v2794, 0.0
      %2802 = vadd.xlane.f32.xlu0 %v2801
      %v2803 = vpop.xlane.xlu0 %2802
      %v2804 = vrcp.pop %v2797
      %v2805 = vmul.f32 %v2790, %v2804
      %v2806 = vrcp.pop %v2800
      %v2807 = vmul.f32 %v2792, %v2806
      %v2808 = vrcp.pop %v2803
      %v2809 = vmul.f32 %v2794, %v2808
      %2810 = vrot.lane.b32.xlu0 %v907, 80
      %v2811 = vpop.permute.xlu0 %2810
      %2812 = vrot.lane.b32.xlu0 %v913, 80
      %v2813 = vpop.permute.xlu0 %2812
      %2814 = vrot.lane.b32.xlu0 %v917, 80
      %v2815 = vpop.permute.xlu0 %2814
      %v2820 = vsel %vm1038, %v2805, 0
      %v2823 = vsel %vm1038, %v2807, 0
      %v2826 = vsel %vm1038, %v2809, 0
      %2828 = vmatprep.subr.mxu0 0.0
      %2829 = vmatpush1.msra.mxu0 %v2811
      %2830 = vmatprep.subr.mxu0 0.0
      %2831 = vmatpush1.msra.mxu0 %v2813
      %2832 = vmatprep.subr.mxu0 0.0
      %2833 = vmatpush1.msra.mxu0 %v2815
      %2834 = vmatprep.subr.mxu0 0.0
      %2835 = vmatpush1.msra.mxu0 0.0
      %2836 = vmatprep.subr.mxu0 0.0
      %2837 = vmatpush1.msra.mxu0 0.0
      %2838 = vmatprep.subr.mxu0 0.0
      %2839 = vmatpush1.msra.mxu0 0.0
      %2840 = vmatprep.subr.mxu0 0.0
      %2841 = vmatpush1.msra.mxu0 0.0
      %2842 = vmatprep.subr.mxu0 0.0
      %2843 = vmatpush1.msra.mxu0 0.0
      %2844 = vmatprep.subr.mxu0 0.0
      %2845 = vmatpush1.msra.mxu0 0.0
      %2846 = vmatprep.subr.mxu0 0.0
      %2847 = vmatpush1.msra.mxu0 0.0
      %2848 = vmatprep.subr.mxu0 0.0
      %2849 = vmatpush1.msra.mxu0 0.0
      %2850 = vmatprep.subr.mxu0 0.0
      %2851 = vmatpush1.msra.mxu0 0.0
      %2852 = vmatprep.subr.mxu0 0.0
      %2853 = vmatpush1.msra.mxu0 0.0
      %2854 = vmatprep.subr.mxu0 0.0
      %2855 = vmatpush1.msra.mxu0 0.0
      %2856 = vmatprep.subr.mxu0 0.0
      %2857 = vmatpush1.msra.mxu0 0.0
      %2858 = vmatprep.subr.mxu0 0.0
      %2859 = vmatpush1.msra.mxu0 0.0
      %2860 = vmatprep.subr.mxu0 0.0
      %2861 = vmatpush1.msra.mxu0 0.0
      %2862 = vmatprep.subr.mxu0 0.0
      %2863 = vmatpush1.msra.mxu0 0.0
      %2864 = vmatprep.subr.mxu0 0.0
      %2865 = vmatpush1.msra.mxu0 0.0
      %2866 = vmatprep.subr.mxu0 0.0
      %2867 = vmatpush1.msra.mxu0 0.0
      %2868 = vmatprep.subr.mxu0 0.0
      %2869 = vmatpush1.msra.mxu0 0.0
      %2870 = vmatprep.subr.mxu0 0.0
      %2871 = vmatpush1.msra.mxu0 0.0
      %2872 = vmatprep.subr.mxu0 0.0
      %2873 = vmatpush1.msra.mxu0 0.0
      %2874 = vmatprep.subr.mxu0 0.0
      %2875 = vmatpush1.msra.mxu0 0.0
      %2876 = vmatprep.subr.mxu0 0.0
      %2877 = vmatpush1.msra.mxu0 0.0
      %2878 = vmatprep.subr.mxu0 0.0
      %2879 = vmatpush1.msra.mxu0 0.0
      %2880 = vmatprep.subr.mxu0 0.0
      %2881 = vmatpush1.msra.mxu0 0.0
      %2882 = vmatprep.subr.mxu0 0.0
      %2883 = vmatpush1.msra.mxu0 0.0
      %2884 = vmatprep.subr.mxu0 0.0
      %2885 = vmatpush1.msra.mxu0 0.0
      %2886 = vmatprep.subr.mxu0 0.0
      %2887 = vmatpush1.msra.mxu0 0.0
      %2888 = vmatprep.subr.mxu0 0.0
      %2889 = vmatpush1.msra.mxu0 0.0
      %2890 = vmatprep.subr.mxu0 0.0
      %2891 = vmatpush1.msra.mxu0 0.0
      %2892 = vmatprep.mubr.f32.mxu0 0.0
      %2893 = vmatmul.mubr.f32.gmra.mrb[0].mxu0 %v2820
      %v2894 = vpop.f32.mrb[0].mxu0
      %v2895 = vadd.f32 0.0, %v2894
      %v2896 = vpop.f32.mrb[0].mxu0
      %2897 = vmatprep.mubr.f32.mxu0 0.0
      %2898 = vmatmul.mubr.f32.gmra.mrb[0].mxu0 %v2823
      %v2899 = vpop.f32.mrb[0].mxu0
      %v2900 = vadd.f32 0.0, %v2899
      %v2901 = vpop.f32.mrb[0].mxu0
      %2902 = vmatprep.mubr.f32.mxu0 0.0
      %2903 = vmatmul.mubr.f32.gmra.mrb[0].mxu0 %v2826
      %v2904 = vpop.f32.mrb[0].mxu0
      %v2905 = vadd.f32 0.0, %v2904
      %v2906 = vpop.f32.mrb[0].mxu0
      %2907 = vdwg.mxu0
      %2911 = vrot.lane.b32.xlu0 %v2895, 48
      %v2912 = vpop.permute.xlu0 %2911
      %2913 = vrot.lane.b32.xlu0 %v2900, 48
      %v2914 = vpop.permute.xlu0 %2913
      %2915 = vrot.lane.b32.xlu0 %v2905, 48
      %v2916 = vpop.permute.xlu0 %2915
      %2920 = vst.msk [vmem:[#allocation2 + $0x18] sm:$0xff] %vm1925, %v2912
      %2921 = vst.msk [vmem:[#allocation2 + $0x20] sm:$0xff] %vm1925, %v2914
      %2922 = vst.msk [vmem:[#allocation2 + $0x28] sm:$0xff] %vm1925, %v2916
      %v2923 = vld [vmem:[#allocation2] sm:$0xff]
      %v2924 = vld [vmem:[#allocation2 + $0x8] sm:$0xff]
      %v2925 = vld [vmem:[#allocation2 + $0x10] sm:$0xff]
      %v2926 = vld [vmem:[#allocation2 + $0x18] sm:$0xff]
      %v2927 = vld [vmem:[#allocation2 + $0x20] sm:$0xff]
      %v2928 = vld [vmem:[#allocation2 + $0x28] sm:$0xff]
      %v2929 = vpack.c.bf16 %v2924, %v2923
      %v2930 = vpack.c.bf16 %v2926, %v2925
      %v2931 = vpack.c.bf16 %v2928, %v2927
      %v2932 = vld [vmem:[%s621] sm:$0xf]
      %v2933 = vld [vmem:[%s621 + $0x4] sm:$0xf]
      %v2934 = vld [vmem:[%s621 + $0x8] sm:$0xf]
      %v2935 = vld [vmem:[%s621 + $0xc] sm:$0xf]
      %v2936 = vld [vmem:[%s621 + $0x10] sm:$0xf]
      %v2937 = vld [vmem:[%s621 + $0x14] sm:$0xf]
      %v2938 = vld [vmem:[%s621 + $0x18] sm:$0xf]
      %v2939 = vld [vmem:[%s621 + $0x1c] sm:$0xf]
      %v2940 = vld [vmem:[%s624] sm:$0x1]
      %v2942 = vlaneseq
      %v2943 = vshrl.u32 %v2942, 7
      %v2944 = vsub.s32 0, %v2943
      %v2945 = vrot.slane %v2940, %v2944
      %v2955 = vunpack.c.l.b16 %v2932
      %v2956 = vunpack.c.l.b16 %v2933
      %v2957 = vunpack.c.l.b16 %v2934
      %v2958 = vunpack.c.l.b16 %v2935
      %v2959 = vunpack.c.l.b16 %v2936
      %v2960 = vunpack.c.l.b16 %v2937
      %v2961 = vunpack.c.l.b16 %v2938
      %v2962 = vunpack.c.l.b16 %v2939
      %v2963 = vpack.c.b16 %v2956, %v2955
      %v2964 = vpack.c.b16 %v2958, %v2957
      %v2965 = vpack.c.b16 %v2960, %v2959
      %v2966 = vpack.c.b16 %v2962, %v2961
      %v2972 = vsel %vm680, %v2929, 0
      %v2975 = vsel %vm680, %v2930, 0
      %v2978 = vsel %vm680, %v2931, 0
      %2980 = vmatprep.subr.bf16.mxu0 0
      %2981 = vmatpush1.bf16.msra.mxu0 %v2963
      %2982 = vmatprep.subr.bf16.mxu0 0
      %2983 = vmatpush1.bf16.msra.mxu0 %v2964
      %2984 = vmatprep.subr.bf16.mxu0 0
      %2985 = vmatpush1.bf16.msra.mxu0 %v2965
      %2986 = vmatprep.subr.bf16.mxu0 0
      %2987 = vmatpush1.bf16.msra.mxu0 %v2966
      %2988 = vmatprep.subr.bf16.mxu0 0
      %2989 = vmatpush1.bf16.msra.mxu0 0
      %2990 = vmatprep.subr.bf16.mxu0 0
      %2991 = vmatpush1.bf16.msra.mxu0 0
      %2992 = vmatprep.subr.bf16.mxu0 0
      %2993 = vmatpush1.bf16.msra.mxu0 0
      %2994 = vmatprep.subr.bf16.mxu0 0
      %2995 = vmatpush1.bf16.msra.mxu0 0
      %2996 = vmatprep.subr.bf16.mxu0 0
      %2997 = vmatpush1.bf16.msra.mxu0 0
      %2998 = vmatprep.subr.bf16.mxu0 0
      %2999 = vmatpush1.bf16.msra.mxu0 0
      %3000 = vmatprep.subr.bf16.mxu0 0
      %3001 = vmatpush1.bf16.msra.mxu0 0
      %3002 = vmatprep.subr.bf16.mxu0 0
      %3003 = vmatpush1.bf16.msra.mxu0 0
      %3004 = vmatprep.subr.bf16.mxu0 0
      %3005 = vmatpush1.bf16.msra.mxu0 0
      %3006 = vmatprep.subr.bf16.mxu0 0
      %3007 = vmatpush1.bf16.msra.mxu0 0
      %3008 = vmatprep.subr.bf16.mxu0 0
      %3009 = vmatpush1.bf16.msra.mxu0 0
      %3010 = vmatprep.subr.bf16.mxu0 0
      %3011 = vmatpush1.bf16.msra.mxu0 0
      %3012 = vmatprep.mubr.bf16.mxu0 0
      %3013 = vmatmul.mubr.bf16.gmra.mrb[0].mxu0 %v2972
      %v3014 = vpop.f32.mrb[0].mxu0
      %v3015 = vadd.f32 %v2945, %v3014
      %v3016 = vpop.f32.mrb[0].mxu0
      %v3017 = vpop.f32.mrb[0].mxu0
      %v3018 = vadd.f32 %v2945, %v3017
      %v3019 = vpop.f32.mrb[0].mxu0
      %3020 = vmatprep.mubr.bf16.mxu0 0
      %3021 = vmatmul.mubr.bf16.gmra.mrb[0].mxu0 %v2975
      %v3022 = vpop.f32.mrb[0].mxu0
      %v3023 = vadd.f32 %v2945, %v3022
      %v3024 = vpop.f32.mrb[0].mxu0
      %v3025 = vpop.f32.mrb[0].mxu0
      %v3026 = vadd.f32 %v2945, %v3025
      %v3027 = vpop.f32.mrb[0].mxu0
      %3028 = vmatprep.mubr.bf16.mxu0 0
      %3029 = vmatmul.mubr.bf16.gmra.mrb[0].mxu0 %v2978
      %v3030 = vpop.f32.mrb[0].mxu0
      %v3031 = vadd.f32 %v2945, %v3030
      %v3032 = vpop.f32.mrb[0].mxu0
      %v3033 = vpop.f32.mrb[0].mxu0
      %v3034 = vadd.f32 %v2945, %v3033
      %v3035 = vpop.f32.mrb[0].mxu0
      %3036 = vdwg.mxu0
      %v3037 = vadd.f32 %v672, %v3015
      %v3038 = vadd.f32 %v673, %v3018
      %v3039 = vadd.f32 %v674, %v3023
      %v3040 = vadd.f32 %v675, %v3026
      %v3041 = vadd.f32 %v676, %v3031
      %v3042 = vadd.f32 %v677, %v3034
      %v3043 = vld [vmem:[%s627] sm:$0x1]
      %v3044 = vld [vmem:[%s630] sm:$0x1]
      %v3045 = vsel %vm680, %v3037, 0.0
      %3046 = vadd.xlane.f32.xlu0 %v3045
      %v3047 = vpop.xlane.xlu0 %3046
      %v3048 = vsel %vm680, %v3038, 0.0
      %3049 = vadd.xlane.f32.xlu0 %v3048
      %v3050 = vpop.xlane.xlu0 %3049
      %v3051 = vsel %vm680, %v3039, 0.0
      %3052 = vadd.xlane.f32.xlu0 %v3051
      %v3053 = vpop.xlane.xlu0 %3052
      %v3054 = vsel %vm680, %v3040, 0.0
      %3055 = vadd.xlane.f32.xlu0 %v3054
      %v3056 = vpop.xlane.xlu0 %3055
      %v3057 = vsel %vm680, %v3041, 0.0
      %3058 = vadd.xlane.f32.xlu0 %v3057
      %v3059 = vpop.xlane.xlu0 %3058
      %v3060 = vsel %vm680, %v3042, 0.0
      %3061 = vadd.xlane.f32.xlu0 %v3060
      %v3062 = vpop.xlane.xlu0 %3061
      %v3063 = vmul.f32 %v3047, %v699
      %v3064 = vmul.f32 %v3050, %v699
      %v3065 = vmul.f32 %v3053, %v699
      %v3066 = vmul.f32 %v3056, %v699
      %v3067 = vmul.f32 %v3059, %v699
      %v3068 = vmul.f32 %v3062, %v699
      %v3069 = vsub.f32 %v3037, %v3063
      %v3070 = vsub.f32 %v3038, %v3064
      %v3071 = vsub.f32 %v3039, %v3065
      %v3072 = vsub.f32 %v3040, %v3066
      %v3073 = vsub.f32 %v3041, %v3067
      %v3074 = vsub.f32 %v3042, %v3068
      %v3075 = vmul.f32 %v3069, %v3069
      %v3076 = vmul.f32 %v3070, %v3070
      %v3077 = vmul.f32 %v3071, %v3071
      %v3078 = vmul.f32 %v3072, %v3072
      %v3079 = vmul.f32 %v3073, %v3073
      %v3080 = vmul.f32 %v3074, %v3074
      %v3081 = vsel %vm680, %v3075, 0.0
      %3082 = vadd.xlane.f32.xlu0 %v3081
      %v3083 = vpop.xlane.xlu0 %3082
      %v3084 = vsel %vm680, %v3076, 0.0
      %3085 = vadd.xlane.f32.xlu0 %v3084
      %v3086 = vpop.xlane.xlu0 %3085
      %v3087 = vsel %vm680, %v3077, 0.0
      %3088 = vadd.xlane.f32.xlu0 %v3087
      %v3089 = vpop.xlane.xlu0 %3088
      %v3090 = vsel %vm680, %v3078, 0.0
      %3091 = vadd.xlane.f32.xlu0 %v3090
      %v3092 = vpop.xlane.xlu0 %3091
      %v3093 = vsel %vm680, %v3079, 0.0
      %3094 = vadd.xlane.f32.xlu0 %v3093
      %v3095 = vpop.xlane.xlu0 %3094
      %v3096 = vsel %vm680, %v3080, 0.0
      %3097 = vadd.xlane.f32.xlu0 %v3096
      %v3098 = vpop.xlane.xlu0 %3097
      %v3099 = vmul.f32 %v3083, %v699
      %v3100 = vmul.f32 %v3086, %v699
      %v3101 = vmul.f32 %v3089, %v699
      %v3102 = vmul.f32 %v3092, %v699
      %v3103 = vmul.f32 %v3095, %v699
      %v3104 = vmul.f32 %v3098, %v699
      %v3105 = vadd.f32 %v3099, 1e-05
      %v3106 = vadd.f32 %v3100, 1e-05
      %v3107 = vadd.f32 %v3101, 1e-05
      %v3108 = vadd.f32 %v3102, 1e-05
      %v3109 = vadd.f32 %v3103, 1e-05
      %v3110 = vadd.f32 %v3104, 1e-05
      %v3111 = vrsqrt.pop %v3105
      %v3112 = vrsqrt.pop %v3106
      %v3113 = vrsqrt.pop %v3107
      %v3114 = vrsqrt.pop %v3108
      %v3115 = vrsqrt.pop %v3109
      %v3116 = vrsqrt.pop %v3110
      %v3117 = vmul.f32 %v3069, %v3111
      %v3118 = vmul.f32 %v3070, %v3112
      %v3119 = vmul.f32 %v3071, %v3113
      %v3120 = vmul.f32 %v3072, %v3114
      %v3121 = vmul.f32 %v3073, %v3115
      %v3122 = vmul.f32 %v3074, %v3116
      %v3124 = vlaneseq
      %v3125 = vshrl.u32 %v3124, 7
      %v3126 = vsub.s32 0, %v3125
      %v3127 = vrot.slane %v3043, %v3126
      %v3129 = vmul.f32 %v3117, %v3127
      %v3130 = vmul.f32 %v3118, %v3127
      %v3131 = vmul.f32 %v3119, %v3127
      %v3132 = vmul.f32 %v3120, %v3127
      %v3133 = vmul.f32 %v3121, %v3127
      %v3134 = vmul.f32 %v3122, %v3127
      %v3136 = vlaneseq
      %v3137 = vshrl.u32 %v3136, 7
      %v3138 = vsub.s32 0, %v3137
      %v3139 = vrot.slane %v3044, %v3138
      %v3141 = vadd.f32 %v3129, %v3139
      %v3142 = vadd.f32 %v3130, %v3139
      %v3143 = vadd.f32 %v3131, %v3139
      %v3144 = vadd.f32 %v3132, %v3139
      %v3145 = vadd.f32 %v3133, %v3139
      %v3146 = vadd.f32 %v3134, %v3139
      %v3147 = vpack.c.bf16 %v3142, %v3141
      %v3148 = vpack.c.bf16 %v3144, %v3143
      %v3149 = vpack.c.bf16 %v3146, %v3145
      %v3150 = vld [vmem:[%s635] sm:$0xff]
      %v3151 = vld [vmem:[%s635 + $0x8] sm:$0xff]
      %v3152 = vld [vmem:[%s635 + $0x10] sm:$0xff]
      %v3153 = vld [vmem:[%s635 + $0x18] sm:$0xff]
      %v3154 = vld [vmem:[%s635 + $0x20] sm:$0xff]
      %v3155 = vld [vmem:[%s635 + $0x28] sm:$0xff]
      %v3156 = vld [vmem:[%s635 + $0x30] sm:$0xff]
      %v3157 = vld [vmem:[%s635 + $0x38] sm:$0xff]
      %v3158 = vld [vmem:[%s639] sm:$0x3]
      %v3160 = vlaneseq
      %v3161 = vshrl.u32 %v3160, 7
      %v3162 = vsub.s32 0, %v3161
      %v3163 = vrot.slane %v3158, %v3162
      %v3164 = vlaneseq
      %v3165 = vshrl.u32 %v3164, 7
      %v3166 = vsub.s32 1, %v3165
      %v3167 = vrot.slane %v3158, %v3166
      %v3178 = vunpack.c.l.b16 %v3150
      %v3179 = vunpack.c.h.b16 %v3150
      %v3180 = vunpack.c.l.b16 %v3151
      %v3181 = vunpack.c.h.b16 %v3151
      %v3182 = vunpack.c.l.b16 %v3152
      %v3183 = vunpack.c.h.b16 %v3152
      %v3184 = vunpack.c.l.b16 %v3153
      %v3185 = vunpack.c.h.b16 %v3153
      %v3186 = vunpack.c.l.b16 %v3154
      %v3187 = vunpack.c.h.b16 %v3154
      %v3188 = vunpack.c.l.b16 %v3155
      %v3189 = vunpack.c.h.b16 %v3155
      %v3190 = vunpack.c.l.b16 %v3156
      %v3191 = vunpack.c.h.b16 %v3156
      %v3192 = vunpack.c.l.b16 %v3157
      %v3193 = vunpack.c.h.b16 %v3157
      %v3194 = vpack.c.b16 %v3180, %v3178
      %v3195 = vpack.c.b16 %v3181, %v3179
      %v3196 = vpack.c.b16 %v3184, %v3182
      %v3197 = vpack.c.b16 %v3185, %v3183
      %v3198 = vpack.c.b16 %v3188, %v3186
      %v3199 = vpack.c.b16 %v3189, %v3187
      %v3200 = vpack.c.b16 %v3192, %v3190
      %v3201 = vpack.c.b16 %v3193, %v3191
      %v3211 = vsel %vm680, %v3147, 0
      %v3214 = vsel %vm680, %v3148, 0
      %v3217 = vsel %vm680, %v3149, 0
      %3219 = vmatprep.subr.bf16.mxu0 %v3195
      %3220 = vmatpush1.bf16.msra.mxu0 %v3194
      %3221 = vmatprep.subr.bf16.mxu0 %v3197
      %3222 = vmatpush1.bf16.msra.mxu0 %v3196
      %3223 = vmatprep.subr.bf16.mxu0 %v3199
      %3224 = vmatpush1.bf16.msra.mxu0 %v3198
      %3225 = vmatprep.subr.bf16.mxu0 %v3201
      %3226 = vmatpush1.bf16.msra.mxu0 %v3200
      %3227 = vmatprep.subr.bf16.mxu0 0
      %3228 = vmatpush1.bf16.msra.mxu0 0
      %3229 = vmatprep.subr.bf16.mxu0 0
      %3230 = vmatpush1.bf16.msra.mxu0 0
      %3231 = vmatprep.subr.bf16.mxu0 0
      %3232 = vmatpush1.bf16.msra.mxu0 0
      %3233 = vmatprep.subr.bf16.mxu0 0
      %3234 = vmatpush1.bf16.msra.mxu0 0
      %3235 = vmatprep.subr.bf16.mxu0 0
      %3236 = vmatpush1.bf16.msra.mxu0 0
      %3237 = vmatprep.subr.bf16.mxu0 0
      %3238 = vmatpush1.bf16.msra.mxu0 0
      %3239 = vmatprep.subr.bf16.mxu0 0
      %3240 = vmatpush1.bf16.msra.mxu0 0
      %3241 = vmatprep.subr.bf16.mxu0 0
      %3242 = vmatpush1.bf16.msra.mxu0 0
      %3243 = vmatprep.subr.bf16.mxu0 0
      %3244 = vmatpush1.bf16.msra.mxu0 0
      %3245 = vmatprep.subr.bf16.mxu0 0
      %3246 = vmatpush1.bf16.msra.mxu0 0
      %3247 = vmatprep.subr.bf16.mxu0 0
      %3248 = vmatpush1.bf16.msra.mxu0 0
      %3249 = vmatprep.subr.bf16.mxu0 0
      %3250 = vmatpush1.bf16.msra.mxu0 0
      %3251 = vmatprep.mubr.bf16.mxu0 0
      %3252 = vmatmul.mubr.bf16.gmra.mrb[0].mxu0 %v3211
      %v3253 = vpop.f32.mrb[0].mxu0
      %v3254 = vadd.f32 %v3163, %v3253
      %v3255 = vpop.f32.mrb[0].mxu0
      %v3256 = vadd.f32 %v3167, %v3255
      %v3257 = vpop.f32.mrb[0].mxu0
      %v3258 = vadd.f32 %v3163, %v3257
      %v3259 = vpop.f32.mrb[0].mxu0
      %v3260 = vadd.f32 %v3167, %v3259
      %3261 = vmatprep.mubr.bf16.mxu0 0
      %3262 = vmatmul.mubr.bf16.gmra.mrb[0].mxu0 %v3214
      %v3263 = vpop.f32.mrb[0].mxu0
      %v3264 = vadd.f32 %v3163, %v3263
      %v3265 = vpop.f32.mrb[0].mxu0
      %v3266 = vadd.f32 %v3167, %v3265
      %v3267 = vpop.f32.mrb[0].mxu0
      %v3268 = vadd.f32 %v3163, %v3267
      %v3269 = vpop.f32.mrb[0].mxu0
      %v3270 = vadd.f32 %v3167, %v3269
      %3271 = vmatprep.mubr.bf16.mxu0 0
      %3272 = vmatmul.mubr.bf16.gmra.mrb[0].mxu0 %v3217
      %v3273 = vpop.f32.mrb[0].mxu0
      %v3274 = vadd.f32 %v3163, %v3273
      %v3275 = vpop.f32.mrb[0].mxu0
      %v3276 = vadd.f32 %v3167, %v3275
      %v3277 = vpop.f32.mrb[0].mxu0
      %v3278 = vadd.f32 %v3163, %v3277
      %v3279 = vpop.f32.mrb[0].mxu0
      %v3280 = vadd.f32 %v3167, %v3279
      %3281 = vdwg.mxu0
      %v3282 = vmul.f32 %v3254, %v3254
      %v3283 = vmul.f32 %v3256, %v3256
      %v3284 = vmul.f32 %v3258, %v3258
      %v3285 = vmul.f32 %v3260, %v3260
      %v3286 = vmul.f32 %v3264, %v3264
      %v3287 = vmul.f32 %v3266, %v3266
      %v3288 = vmul.f32 %v3268, %v3268
      %v3289 = vmul.f32 %v3270, %v3270
      %v3290 = vmul.f32 %v3274, %v3274
      %v3291 = vmul.f32 %v3276, %v3276
      %v3292 = vmul.f32 %v3278, %v3278
      %v3293 = vmul.f32 %v3280, %v3280
      %v3294 = vmul.f32 %v3254, %v3282
      %v3295 = vmul.f32 %v3256, %v3283
      %v3296 = vmul.f32 %v3258, %v3284
      %v3297 = vmul.f32 %v3260, %v3285
      %v3298 = vmul.f32 %v3264, %v3286
      %v3299 = vmul.f32 %v3266, %v3287
      %v3300 = vmul.f32 %v3268, %v3288
      %v3301 = vmul.f32 %v3270, %v3289
      %v3302 = vmul.f32 %v3274, %v3290
      %v3303 = vmul.f32 %v3276, %v3291
      %v3304 = vmul.f32 %v3278, %v3292
      %v3305 = vmul.f32 %v3280, %v3293
      %v3306 = vmul.f32 %v3294, 0.044715
      %v3307 = vmul.f32 %v3295, 0.044715
      %v3308 = vmul.f32 %v3296, 0.044715
      %v3309 = vmul.f32 %v3297, 0.044715
      %v3310 = vmul.f32 %v3298, 0.044715
      %v3311 = vmul.f32 %v3299, 0.044715
      %v3312 = vmul.f32 %v3300, 0.044715
      %v3313 = vmul.f32 %v3301, 0.044715
      %v3314 = vmul.f32 %v3302, 0.044715
      %v3315 = vmul.f32 %v3303, 0.044715
      %v3316 = vmul.f32 %v3304, 0.044715
      %v3317 = vmul.f32 %v3305, 0.044715
      %v3318 = vadd.f32 %v3254, %v3306
      %v3319 = vadd.f32 %v3256, %v3307
      %v3320 = vadd.f32 %v3258, %v3308
      %v3321 = vadd.f32 %v3260, %v3309
      %v3322 = vadd.f32 %v3264, %v3310
      %v3323 = vadd.f32 %v3266, %v3311
      %v3324 = vadd.f32 %v3268, %v3312
      %v3325 = vadd.f32 %v3270, %v3313
      %v3326 = vadd.f32 %v3274, %v3314
      %v3327 = vadd.f32 %v3276, %v3315
      %v3328 = vadd.f32 %v3278, %v3316
      %v3329 = vadd.f32 %v3280, %v3317
      %v3330 = vmul.f32 %v3318, 0.7978846
      %v3331 = vmul.f32 %v3319, 0.7978846
      %v3332 = vmul.f32 %v3320, 0.7978846
      %v3333 = vmul.f32 %v3321, 0.7978846
      %v3334 = vmul.f32 %v3322, 0.7978846
      %v3335 = vmul.f32 %v3323, 0.7978846
      %v3336 = vmul.f32 %v3324, 0.7978846
      %v3337 = vmul.f32 %v3325, 0.7978846
      %v3338 = vmul.f32 %v3326, 0.7978846
      %v3339 = vmul.f32 %v3327, 0.7978846
      %v3340 = vmul.f32 %v3328, 0.7978846
      %v3341 = vmul.f32 %v3329, 0.7978846
      %v3342 = vtanh.pop %v3330
      %v3343 = vtanh.pop %v3331
      %v3344 = vtanh.pop %v3332
      %v3345 = vtanh.pop %v3333
      %v3346 = vtanh.pop %v3334
      %v3347 = vtanh.pop %v3335
      %v3348 = vtanh.pop %v3336
      %v3349 = vtanh.pop %v3337
      %v3350 = vtanh.pop %v3338
      %v3351 = vtanh.pop %v3339
      %v3352 = vtanh.pop %v3340
      %v3353 = vtanh.pop %v3341
      %v3354 = vadd.f32 %v3342, 1.0
      %v3355 = vadd.f32 %v3343, 1.0
      %v3356 = vadd.f32 %v3344, 1.0
      %v3357 = vadd.f32 %v3345, 1.0
      %v3358 = vadd.f32 %v3346, 1.0
      %v3359 = vadd.f32 %v3347, 1.0
      %v3360 = vadd.f32 %v3348, 1.0
      %v3361 = vadd.f32 %v3349, 1.0
      %v3362 = vadd.f32 %v3350, 1.0
      %v3363 = vadd.f32 %v3351, 1.0
      %v3364 = vadd.f32 %v3352, 1.0
      %v3365 = vadd.f32 %v3353, 1.0
      %v3366 = vmul.f32 %v3354, 0.5
      %v3367 = vmul.f32 %v3355, 0.5
      %v3368 = vmul.f32 %v3356, 0.5
      %v3369 = vmul.f32 %v3357, 0.5
      %v3370 = vmul.f32 %v3358, 0.5
      %v3371 = vmul.f32 %v3359, 0.5
      %v3372 = vmul.f32 %v3360, 0.5
      %v3373 = vmul.f32 %v3361, 0.5
      %v3374 = vmul.f32 %v3362, 0.5
      %v3375 = vmul.f32 %v3363, 0.5
      %v3376 = vmul.f32 %v3364, 0.5
      %v3377 = vmul.f32 %v3365, 0.5
      %v3378 = vmul.f32 %v3254, %v3366
      %v3379 = vmul.f32 %v3256, %v3367
      %v3380 = vmul.f32 %v3258, %v3368
      %v3381 = vmul.f32 %v3260, %v3369
      %v3382 = vmul.f32 %v3264, %v3370
      %v3383 = vmul.f32 %v3266, %v3371
      %v3384 = vmul.f32 %v3268, %v3372
      %v3385 = vmul.f32 %v3270, %v3373
      %v3386 = vmul.f32 %v3274, %v3374
      %v3387 = vmul.f32 %v3276, %v3375
      %v3388 = vmul.f32 %v3278, %v3376
      %v3389 = vmul.f32 %v3280, %v3377
      %v3390 = vpack.c.bf16 %v3380, %v3378
      %v3391 = vpack.c.bf16 %v3381, %v3379
      %v3392 = vpack.c.bf16 %v3384, %v3382
      %v3393 = vpack.c.bf16 %v3385, %v3383
      %v3394 = vpack.c.bf16 %v3388, %v3386
      %v3395 = vpack.c.bf16 %v3389, %v3387
      %v3396 = vld [vmem:[%s644] sm:$0xf]
      %v3397 = vld [vmem:[%s644 + $0x4] sm:$0xf]
      %v3398 = vld [vmem:[%s644 + $0x8] sm:$0xf]
      %v3399 = vld [vmem:[%s644 + $0xc] sm:$0xf]
      %v3400 = vld [vmem:[%s644 + $0x10] sm:$0xf]
      %v3401 = vld [vmem:[%s644 + $0x14] sm:$0xf]
      %v3402 = vld [vmem:[%s644 + $0x18] sm:$0xf]
      %v3403 = vld [vmem:[%s644 + $0x1c] sm:$0xf]
      %v3404 = vld [vmem:[%s644 + $0x20] sm:$0xf]
      %v3405 = vld [vmem:[%s644 + $0x24] sm:$0xf]
      %v3406 = vld [vmem:[%s644 + $0x28] sm:$0xf]
      %v3407 = vld [vmem:[%s644 + $0x2c] sm:$0xf]
      %v3408 = vld [vmem:[%s644 + $0x30] sm:$0xf]
      %v3409 = vld [vmem:[%s644 + $0x34] sm:$0xf]
      %v3410 = vld [vmem:[%s644 + $0x38] sm:$0xf]
      %v3411 = vld [vmem:[%s644 + $0x3c] sm:$0xf]
      %v3412 = vld [vmem:[%s644 + $0x40] sm:$0xf]
      %v3413 = vld [vmem:[%s644 + $0x44] sm:$0xf]
      %v3414 = vld [vmem:[%s644 + $0x48] sm:$0xf]
      %v3415 = vld [vmem:[%s644 + $0x4c] sm:$0xf]
      %v3416 = vld [vmem:[%s644 + $0x50] sm:$0xf]
      %v3417 = vld [vmem:[%s644 + $0x54] sm:$0xf]
      %v3418 = vld [vmem:[%s644 + $0x58] sm:$0xf]
      %v3419 = vld [vmem:[%s644 + $0x5c] sm:$0xf]
      %v3420 = vld [vmem:[%s644 + $0x60] sm:$0xf]
      %v3421 = vld [vmem:[%s644 + $0x64] sm:$0xf]
      %v3422 = vld [vmem:[%s644 + $0x68] sm:$0xf]
      %v3423 = vld [vmem:[%s644 + $0x6c] sm:$0xf]
      %v3424 = vld [vmem:[%s644 + $0x70] sm:$0xf]
      %v3425 = vld [vmem:[%s644 + $0x74] sm:$0xf]
      %v3426 = vld [vmem:[%s644 + $0x78] sm:$0xf]
      %v3427 = vld [vmem:[%s644 + $0x7c] sm:$0xf]
      %v3428 = vld [vmem:[%s647] sm:$0x1]
      %v3430 = vlaneseq
      %v3431 = vshrl.u32 %v3430, 7
      %v3432 = vsub.s32 0, %v3431
      %v3433 = vrot.slane %v3428, %v3432
      %v3467 = vunpack.c.l.b16 %v3396
      %v3468 = vunpack.c.l.b16 %v3397
      %v3469 = vunpack.c.l.b16 %v3398
      %v3470 = vunpack.c.l.b16 %v3399
      %v3471 = vunpack.c.l.b16 %v3400
      %v3472 = vunpack.c.l.b16 %v3401
      %v3473 = vunpack.c.l.b16 %v3402
      %v3474 = vunpack.c.l.b16 %v3403
      %v3475 = vunpack.c.l.b16 %v3404
      %v3476 = vunpack.c.l.b16 %v3405
      %v3477 = vunpack.c.l.b16 %v3406
      %v3478 = vunpack.c.l.b16 %v3407
      %v3479 = vunpack.c.l.b16 %v3408
      %v3480 = vunpack.c.l.b16 %v3409
      %v3481 = vunpack.c.l.b16 %v3410
      %v3482 = vunpack.c.l.b16 %v3411
      %v3483 = vunpack.c.l.b16 %v3412
      %v3484 = vunpack.c.l.b16 %v3413
      %v3485 = vunpack.c.l.b16 %v3414
      %v3486 = vunpack.c.l.b16 %v3415
      %v3487 = vunpack.c.l.b16 %v3416
      %v3488 = vunpack.c.l.b16 %v3417
      %v3489 = vunpack.c.l.b16 %v3418
      %v3490 = vunpack.c.l.b16 %v3419
      %v3491 = vunpack.c.l.b16 %v3420
      %v3492 = vunpack.c.l.b16 %v3421
      %v3493 = vunpack.c.l.b16 %v3422
      %v3494 = vunpack.c.l.b16 %v3423
      %v3495 = vunpack.c.l.b16 %v3424
      %v3496 = vunpack.c.l.b16 %v3425
      %v3497 = vunpack.c.l.b16 %v3426
      %v3498 = vunpack.c.l.b16 %v3427
      %v3499 = vpack.c.b16 %v3468, %v3467
      %v3500 = vpack.c.b16 %v3470, %v3469
      %v3501 = vpack.c.b16 %v3472, %v3471
      %v3502 = vpack.c.b16 %v3474, %v3473
      %v3503 = vpack.c.b16 %v3476, %v3475
      %v3504 = vpack.c.b16 %v3478, %v3477
      %v3505 = vpack.c.b16 %v3480, %v3479
      %v3506 = vpack.c.b16 %v3482, %v3481
      %v3507 = vpack.c.b16 %v3484, %v3483
      %v3508 = vpack.c.b16 %v3486, %v3485
      %v3509 = vpack.c.b16 %v3488, %v3487
      %v3510 = vpack.c.b16 %v3490, %v3489
      %v3511 = vpack.c.b16 %v3492, %v3491
      %v3512 = vpack.c.b16 %v3494, %v3493
      %v3513 = vpack.c.b16 %v3496, %v3495
      %v3514 = vpack.c.b16 %v3498, %v3497
      %3531 = vmatprep.subr.bf16.mxu0 0
      %3532 = vmatpush1.bf16.msra.mxu0 %v3499
      %3533 = vmatprep.subr.bf16.mxu0 0
      %3534 = vmatpush1.bf16.msra.mxu0 %v3500
      %3535 = vmatprep.subr.bf16.mxu0 0
      %3536 = vmatpush1.bf16.msra.mxu0 %v3501
      %3537 = vmatprep.subr.bf16.mxu0 0
      %3538 = vmatpush1.bf16.msra.mxu0 %v3502
      %3539 = vmatprep.subr.bf16.mxu0 0
      %3540 = vmatpush1.bf16.msra.mxu0 %v3503
      %3541 = vmatprep.subr.bf16.mxu0 0
      %3542 = vmatpush1.bf16.msra.mxu0 %v3504
      %3543 = vmatprep.subr.bf16.mxu0 0
      %3544 = vmatpush1.bf16.msra.mxu0 %v3505
      %3545 = vmatprep.subr.bf16.mxu0 0
      %3546 = vmatpush1.bf16.msra.mxu0 %v3506
      %3547 = vmatprep.subr.bf16.mxu0 0
      %3548 = vmatpush1.bf16.msra.mxu0 %v3507
      %3549 = vmatprep.subr.bf16.mxu0 0
      %3550 = vmatpush1.bf16.msra.mxu0 %v3508
      %3551 = vmatprep.subr.bf16.mxu0 0
      %3552 = vmatpush1.bf16.msra.mxu0 %v3509
      %3553 = vmatprep.subr.bf16.mxu0 0
      %3554 = vmatpush1.bf16.msra.mxu0 %v3510
      %3555 = vmatprep.subr.bf16.mxu0 0
      %3556 = vmatpush1.bf16.msra.mxu0 %v3511
      %3557 = vmatprep.subr.bf16.mxu0 0
      %3558 = vmatpush1.bf16.msra.mxu0 %v3512
      %3559 = vmatprep.subr.bf16.mxu0 0
      %3560 = vmatpush1.bf16.msra.mxu0 %v3513
      %3561 = vmatprep.subr.bf16.mxu0 0
      %3562 = vmatpush1.bf16.msra.mxu0 %v3514
      %3563 = vmatprep.mubr.bf16.mxu0 %v3391
      %3564 = vmatmul.mubr.bf16.gmra.mrb[0].mxu0 %v3390
      %v3565 = vpop.f32.mrb[0].mxu0
      %v3566 = vadd.f32 %v3433, %v3565
      %v3567 = vpop.f32.mrb[0].mxu0
      %v3568 = vpop.f32.mrb[0].mxu0
      %v3569 = vadd.f32 %v3433, %v3568
      %v3570 = vpop.f32.mrb[0].mxu0
      %3571 = vmatprep.mubr.bf16.mxu0 %v3393
      %3572 = vmatmul.mubr.bf16.gmra.mrb[0].mxu0 %v3392
      %v3573 = vpop.f32.mrb[0].mxu0
      %v3574 = vadd.f32 %v3433, %v3573
      %v3575 = vpop.f32.mrb[0].mxu0
      %v3576 = vpop.f32.mrb[0].mxu0
      %v3577 = vadd.f32 %v3433, %v3576
      %v3578 = vpop.f32.mrb[0].mxu0
      %3579 = vmatprep.mubr.bf16.mxu0 %v3395
      %3580 = vmatmul.mubr.bf16.gmra.mrb[0].mxu0 %v3394
      %v3581 = vpop.f32.mrb[0].mxu0
      %v3582 = vadd.f32 %v3433, %v3581
      %v3583 = vpop.f32.mrb[0].mxu0
      %v3584 = vpop.f32.mrb[0].mxu0
      %v3585 = vadd.f32 %v3433, %v3584
      %v3586 = vpop.f32.mrb[0].mxu0
      %3587 = vdwg.mxu0
      %v3588 = vadd.f32 %v3037, %v3566
      %v3589 = vadd.f32 %v3038, %v3569
      %v3590 = vadd.f32 %v3039, %v3574
      %v3591 = vadd.f32 %v3040, %v3577
      %v3592 = vadd.f32 %v3041, %v3582
      %v3593 = vadd.f32 %v3042, %v3585
      %3594 = vst.msk [vmem:[%s652] sm:$0xff] %vm680, %v3588
      %3595 = vst.msk [vmem:[%s652 + $0x8] sm:$0xff] %vm680, %v3589
      %3596 = vst.msk [vmem:[%s652 + $0x10] sm:$0xff] %vm680, %v3590
      %3597 = vst.msk [vmem:[%s652 + $0x18] sm:$0xff] %vm680, %v3591
      %3598 = vst.msk [vmem:[%s652 + $0x20] sm:$0xff] %vm680, %v3592
      %3599 = vst.msk [vmem:[%s652 + $0x28] sm:$0xff] %vm680, %v3593
      %s3600 = smul.u32 6, %s28
      %p3601 = scmp.lt.s32.totalorder %s3600, 5
      %s3602 = scalar_select %p3601, %s3600, 5
      %s3603 = smul.addr %s3602, 8
      %s3604 = scalar_lea.vmem %s13, %s3603
      // Predicated region
      $region77: #{coca_vision_only_forward.4} parent=71 // pred_check
        %p3605 = pneg %p392
      $region78: #{coca_vision_only_forward.4} parent=71 // pred_check_branch
        %3607 = sbr.rel (%p3605) target = $region80
      $region79: #{coca_vision_only_forward.4} parent=71 // pred_region
        %s3608 = smul.u32 6, %s28
      $region80: #{coca_vision_only_forward.4} parent=71 // pred_fallthru
        _
      // Predicated region
      $region81: #{coca_vision_only_forward.4} parent=71 // pred_check
        %p3609 = pneg %p392
      $region82: #{coca_vision_only_forward.4} parent=71 // pred_check_branch
        %3611 = sbr.rel (%p3609) target = $region84
      $region83: #{coca_vision_only_forward.4} parent=71 // pred_region
        %s3612 = smul.u32 6, %s28
        %p3613 = scmp.lt.s32.totalorder %s3612, 5
        %s3614 = scalar_select %p3613, %s3612, 5
        %s3615 = smul.addr %s3614, 8
        %s3616 = scalar_lea.vmem %s13, %s3615
      $region84: #{coca_vision_only_forward.4} parent=71 // pred_fallthru
        _
    $region72: #{coca_vision_only_forward.4} parent=5 // pred_fallthru
      _
    %p3617 = scmp.le.s32.totalorder 2, %s19
    // Predicated region
    $region85: #{coca_vision_only_forward.4} parent=5 // pred_check
      %p3618 = pneg %p3617
    $region86: #{coca_vision_only_forward.4} parent=5 // pred_check_branch
      %3620 = sbr.rel (%p3618) target = $region88
    $region87: #{coca_vision_only_forward.4} parent=5 // pred_region
      %s3621 = ssub.s32 %s19, 2
    $region88: #{coca_vision_only_forward.4} parent=5 // pred_fallthru
      _
  $region6: #{coca_vision_only_forward.4} parent=0 // loop_footer
    %s23 = sadd.s32 1, %s19
  $region7: #{coca_vision_only_forward.4} parent=0 // loop_footer_branch
    %18 = sbr.rel target = $region3
  $region8: #{coca_vision_only_forward.4} parent=0 // loop_exit
    _

// kernel: coca_vision_only_forward.5
$region0: #{coca_vision_only_forward.5}
  #allocation0 [shape = 'u32[]', space=smem, size = 0x4, offset = 0x4, fixed_abs, tag = 'smem constant byte address 0x4 - core index']
  #allocation1 [shape = 'u32[144,128]{1,0:T(1,128)}', space=vmem, size = 0x12000, scoped, tag = 'internal scratch']
  #allocation2 [shape = 'f32[2,64]{1,0:T(2,128)}', space=vmem, size = 0x400, scoped, tag = 'scratch operand']
  %s0 = inlined_call_operand.vmem [shape: f32[48,64], index: 0, kind: input, shape index: {}]
  %s1 = inlined_call_operand.vmem [shape: f32[1,64], index: 1, kind: input, shape index: {}]
  %s2 = inlined_call_operand.vmem [shape: bf16[64,64], index: 2, kind: input, shape index: {}]
  %s3 = inlined_call_operand.vmem [shape: f32[1,64], index: 3, kind: input, shape index: {}]
  %s4 = inlined_call_operand.vmem [shape: bf16[64,128], index: 4, kind: input, shape index: {}]
  %s5 = inlined_call_operand.vmem [shape: f32[1,128], index: 5, kind: input, shape index: {}]
  %s6 = inlined_call_operand.vmem [shape: bf16[64,64], index: 6, kind: input, shape index: {}]
  %s7 = inlined_call_operand.vmem [shape: f32[1,64], index: 7, kind: input, shape index: {}]
  %s8 = inlined_call_operand.vmem [shape: f32[1,64], index: 8, kind: input, shape index: {}]
  %s9 = inlined_call_operand.vmem [shape: f32[1,64], index: 9, kind: input, shape index: {}]
  %s10 = inlined_call_operand.vmem [shape: bf16[64,512], index: 10, kind: input, shape index: {}]
  %s11 = inlined_call_operand.vmem [shape: f32[1,512], index: 11, kind: input, shape index: {}]
  %s12 = inlined_call_operand.vmem [shape: bf16[512,128], index: 12, kind: input, shape index: {}]
  %s13 = inlined_call_operand.vmem [shape: f32[1,128], index: 13, kind: input, shape index: {}]
  %s14 = inlined_call_operand.hbm [shape: f32[2,512], index: 14, kind: output, shape index: {0}]
  %s15 = inlined_call_operand.hbm [shape: f32[2,128], index: 15, kind: output, shape index: {1}]
  %16 = xla_tuple %s14, %s15
  %s17 = sld [smem:[#allocation0]]
  $region74: #{coca_vision_only_forward.5} parent=0
    _
  %s19 = ssub.s32 1, %s17
  %s20 = scalar_select 0, %s19, %s17
  $region1: #{coca_vision_only_forward.5} parent=0
    #allocation3 [shape = 'u8[4096]{0}', space=vmem, size = 0x1000, scoped, tag = 'output window, operand 0, single buffered']
    #allocation4 [shape = 's32[1]{0}', space=sflag, size = 0x4, scoped, tag = 'scoped memory for coca_vision_only_forward.5']
    #allocation5 [shape = 'u8[1024]{0}', space=vmem, size = 0x400, scoped, tag = 'output window, operand 1, single buffered']
    #allocation6 [shape = 's32[1]{0}', space=sflag, size = 0x4, scoped, tag = 'scoped memory for coca_vision_only_forward.5']
    %21 = vsyncpa [#allocation4], 0
    %22 = vsyncpa [#allocation6], 0
    // Predicated region
    $region2: #{coca_vision_only_forward.5} parent=1 // pred_check
      _
    $region3: #{coca_vision_only_forward.5} parent=1 // pred_check_branch
      %24 = sbr.rel (0) target = $region5
    $region4: #{coca_vision_only_forward.5} parent=1 // pred_region
      _
    $region5: #{coca_vision_only_forward.5} parent=1 // pred_fallthru
      _
    // Predicated region
    $region6: #{coca_vision_only_forward.5} parent=1 // pred_check
      _
    $region7: #{coca_vision_only_forward.5} parent=1 // pred_check_branch
      %26 = sbr.rel (0) target = $region9
    $region8: #{coca_vision_only_forward.5} parent=1 // pred_region
      _
    $region9: #{coca_vision_only_forward.5} parent=1 // pred_fallthru
      _
    // Predicated region
    $region10: #{coca_vision_only_forward.5} parent=1 // pred_check
      _
    $region11: #{coca_vision_only_forward.5} parent=1 // pred_check_branch
      %28 = sbr.rel (0) target = $region13
    $region12: #{coca_vision_only_forward.5} parent=1 // pred_region
      _
    $region13: #{coca_vision_only_forward.5} parent=1 // pred_fallthru
      _
    // Predicated region
    $region14: #{coca_vision_only_forward.5} parent=1 // pred_check
      _
    $region15: #{coca_vision_only_forward.5} parent=1 // pred_check_branch
      %30 = sbr.rel (0) target = $region17
    $region16: #{coca_vision_only_forward.5} parent=1 // pred_region
      _
    $region17: #{coca_vision_only_forward.5} parent=1 // pred_fallthru
      _
    // Predicated region
    $region18: #{coca_vision_only_forward.5} parent=1 // pred_check
      _
    $region19: #{coca_vision_only_forward.5} parent=1 // pred_check_branch
      %32 = sbr.rel (0) target = $region21
    $region20: #{coca_vision_only_forward.5} parent=1 // pred_region
      _
    $region21: #{coca_vision_only_forward.5} parent=1 // pred_fallthru
      _
    // Predicated region
    $region22: #{coca_vision_only_forward.5} parent=1 // pred_check
      _
    $region23: #{coca_vision_only_forward.5} parent=1 // pred_check_branch
      %34 = sbr.rel (0) target = $region25
    $region24: #{coca_vision_only_forward.5} parent=1 // pred_region
      _
    $region25: #{coca_vision_only_forward.5} parent=1 // pred_fallthru
      _
    // Predicated region
    $region26: #{coca_vision_only_forward.5} parent=1 // pred_check
      _
    $region27: #{coca_vision_only_forward.5} parent=1 // pred_check_branch
      %36 = sbr.rel (0) target = $region29
    $region28: #{coca_vision_only_forward.5} parent=1 // pred_region
      _
    $region29: #{coca_vision_only_forward.5} parent=1 // pred_fallthru
      _
    // Predicated region
    $region30: #{coca_vision_only_forward.5} parent=1 // pred_check
      _
    $region31: #{coca_vision_only_forward.5} parent=1 // pred_check_branch
      %38 = sbr.rel (0) target = $region33
    $region32: #{coca_vision_only_forward.5} parent=1 // pred_region
      _
    $region33: #{coca_vision_only_forward.5} parent=1 // pred_fallthru
      _
    // Predicated region
    $region34: #{coca_vision_only_forward.5} parent=1 // pred_check
      _
    $region35: #{coca_vision_only_forward.5} parent=1 // pred_check_branch
      %40 = sbr.rel (0) target = $region37
    $region36: #{coca_vision_only_forward.5} parent=1 // pred_region
      _
    $region37: #{coca_vision_only_forward.5} parent=1 // pred_fallthru
      _
    // Predicated region
    $region38: #{coca_vision_only_forward.5} parent=1 // pred_check
      _
    $region39: #{coca_vision_only_forward.5} parent=1 // pred_check_branch
      %42 = sbr.rel (0) target = $region41
    $region40: #{coca_vision_only_forward.5} parent=1 // pred_region
      _
    $region41: #{coca_vision_only_forward.5} parent=1 // pred_fallthru
      _
    // Predicated region
    $region42: #{coca_vision_only_forward.5} parent=1 // pred_check
      _
    $region43: #{coca_vision_only_forward.5} parent=1 // pred_check_branch
      %44 = sbr.rel (0) target = $region45
    $region44: #{coca_vision_only_forward.5} parent=1 // pred_region
      _
    $region45: #{coca_vision_only_forward.5} parent=1 // pred_fallthru
      _
    // Predicated region
    $region46: #{coca_vision_only_forward.5} parent=1 // pred_check
      _
    $region47: #{coca_vision_only_forward.5} parent=1 // pred_check_branch
      %46 = sbr.rel (0) target = $region49
    $region48: #{coca_vision_only_forward.5} parent=1 // pred_region
      _
    $region49: #{coca_vision_only_forward.5} parent=1 // pred_fallthru
      _
    // Predicated region
    $region50: #{coca_vision_only_forward.5} parent=1 // pred_check
      _
    $region51: #{coca_vision_only_forward.5} parent=1 // pred_check_branch
      %48 = sbr.rel (0) target = $region53
    $region52: #{coca_vision_only_forward.5} parent=1 // pred_region
      _
    $region53: #{coca_vision_only_forward.5} parent=1 // pred_fallthru
      _
    // Predicated region
    $region54: #{coca_vision_only_forward.5} parent=1 // pred_check
      _
    $region55: #{coca_vision_only_forward.5} parent=1 // pred_check_branch
      %50 = sbr.rel (0) target = $region57
    $region56: #{coca_vision_only_forward.5} parent=1 // pred_region
      _
    $region57: #{coca_vision_only_forward.5} parent=1 // pred_fallthru
      _
    %v52 = vld [vmem:[%s0] sm:$0xff]
    %v53 = vld [vmem:[%s0 + $0x8] sm:$0xff]
    %v54 = vld [vmem:[%s0 + $0x10] sm:$0xff]
    %v55 = vld [vmem:[%s0 + $0x18] sm:$0xff]
    %v56 = vld [vmem:[%s0 + $0x20] sm:$0xff]
    %v57 = vld [vmem:[%s0 + $0x28] sm:$0xff]
    %v58 = vpack.c.bf16 %v53, %v52
    %v59 = vpack.c.bf16 %v55, %v54
    %v60 = vpack.c.bf16 %v57, %v56
    %v61 = vld [vmem:[%s4] sm:$0xf]
    %v62 = vld [vmem:[%s4 + $0x4] sm:$0xf]
    %v63 = vld [vmem:[%s4 + $0x8] sm:$0xf]
    %v64 = vld [vmem:[%s4 + $0xc] sm:$0xf]
    %v65 = vld [vmem:[%s4 + $0x10] sm:$0xf]
    %v66 = vld [vmem:[%s4 + $0x14] sm:$0xf]
    %v67 = vld [vmem:[%s4 + $0x18] sm:$0xf]
    %v68 = vld [vmem:[%s4 + $0x1c] sm:$0xf]
    %v69 = vld [vmem:[%s5] sm:$0x1]
    %v71 = vlaneseq
    %v72 = vshrl.u32 %v71, 7
    %v73 = vsub.s32 0, %v72
    %v74 = vrot.slane %v69, %v73
    %v84 = vunpack.c.l.b16 %v61
    %v85 = vunpack.c.l.b16 %v62
    %v86 = vunpack.c.l.b16 %v63
    %v87 = vunpack.c.l.b16 %v64
    %v88 = vunpack.c.l.b16 %v65
    %v89 = vunpack.c.l.b16 %v66
    %v90 = vunpack.c.l.b16 %v67
    %v91 = vunpack.c.l.b16 %v68
    %v92 = vpack.c.b16 %v85, %v84
    %v93 = vpack.c.b16 %v87, %v86
    %v94 = vpack.c.b16 %v89, %v88
    %v95 = vpack.c.b16 %v91, %v90
    %vm100 = vcmask 523264
    %v102 = vsel %vm100, %v58, 0
    %v105 = vsel %vm100, %v59, 0
    %v108 = vsel %vm100, %v60, 0
    %110 = vmatprep.subr.bf16.mxu0 0
    %111 = vmatpush1.bf16.msra.mxu0 %v92
    %112 = vmatprep.subr.bf16.mxu0 0
    %113 = vmatpush1.bf16.msra.mxu0 %v93
    %114 = vmatprep.subr.bf16.mxu0 0
    %115 = vmatpush1.bf16.msra.mxu0 %v94
    %116 = vmatprep.subr.bf16.mxu0 0
    %117 = vmatpush1.bf16.msra.mxu0 %v95
    %118 = vmatprep.subr.bf16.mxu0 0
    %119 = vmatpush1.bf16.msra.mxu0 0
    %120 = vmatprep.subr.bf16.mxu0 0
    %121 = vmatpush1.bf16.msra.mxu0 0
    %122 = vmatprep.subr.bf16.mxu0 0
    %123 = vmatpush1.bf16.msra.mxu0 0
    %124 = vmatprep.subr.bf16.mxu0 0
    %125 = vmatpush1.bf16.msra.mxu0 0
    %126 = vmatprep.subr.bf16.mxu0 0
    %127 = vmatpush1.bf16.msra.mxu0 0
    %128 = vmatprep.subr.bf16.mxu0 0
    %129 = vmatpush1.bf16.msra.mxu0 0
    %130 = vmatprep.subr.bf16.mxu0 0
    %131 = vmatpush1.bf16.msra.mxu0 0
    %132 = vmatprep.subr.bf16.mxu0 0
    %133 = vmatpush1.bf16.msra.mxu0 0
    %134 = vmatprep.subr.bf16.mxu0 0
    %135 = vmatpush1.bf16.msra.mxu0 0
    %136 = vmatprep.subr.bf16.mxu0 0
    %137 = vmatpush1.bf16.msra.mxu0 0
    %138 = vmatprep.subr.bf16.mxu0 0
    %139 = vmatpush1.bf16.msra.mxu0 0
    %140 = vmatprep.subr.bf16.mxu0 0
    %141 = vmatpush1.bf16.msra.mxu0 0
    %142 = vmatprep.mubr.bf16.mxu0 0
    %143 = vmatmul.mubr.bf16.gmra.mrb[0].mxu0 %v102
    %v144 = vpop.f32.mrb[0].mxu0
    %v145 = vadd.f32 %v74, %v144
    %v146 = vpop.f32.mrb[0].mxu0
    %v147 = vpop.f32.mrb[0].mxu0
    %v148 = vadd.f32 %v74, %v147
    %v149 = vpop.f32.mrb[0].mxu0
    %150 = vmatprep.mubr.bf16.mxu0 0
    %151 = vmatmul.mubr.bf16.gmra.mrb[0].mxu0 %v105
    %v152 = vpop.f32.mrb[0].mxu0
    %v153 = vadd.f32 %v74, %v152
    %v154 = vpop.f32.mrb[0].mxu0
    %v155 = vpop.f32.mrb[0].mxu0
    %v156 = vadd.f32 %v74, %v155
    %v157 = vpop.f32.mrb[0].mxu0
    %158 = vmatprep.mubr.bf16.mxu0 0
    %159 = vmatmul.mubr.bf16.gmra.mrb[0].mxu0 %v108
    %v160 = vpop.f32.mrb[0].mxu0
    %v161 = vadd.f32 %v74, %v160
    %v162 = vpop.f32.mrb[0].mxu0
    %v163 = vpop.f32.mrb[0].mxu0
    %v164 = vadd.f32 %v74, %v163
    %v165 = vpop.f32.mrb[0].mxu0
    %166 = vdwg.mxu0
    %v167 = vld [vmem:[%s1] sm:$0x1]
    %v168 = vpack.c.bf16 %v167, %v167
    %v169 = vld [vmem:[%s2] sm:$0xf]
    %v170 = vld [vmem:[%s2 + $0x4] sm:$0xf]
    %v171 = vld [vmem:[%s2 + $0x8] sm:$0xf]
    %v172 = vld [vmem:[%s2 + $0xc] sm:$0xf]
    %v173 = vld [vmem:[%s2 + $0x10] sm:$0xf]
    %v174 = vld [vmem:[%s2 + $0x14] sm:$0xf]
    %v175 = vld [vmem:[%s2 + $0x18] sm:$0xf]
    %v176 = vld [vmem:[%s2 + $0x1c] sm:$0xf]
    %v177 = vld [vmem:[%s3] sm:$0x1]
    %v186 = vunpack.c.l.b16 %v169
    %v187 = vunpack.c.l.b16 %v170
    %v188 = vunpack.c.l.b16 %v171
    %v189 = vunpack.c.l.b16 %v172
    %v190 = vunpack.c.l.b16 %v173
    %v191 = vunpack.c.l.b16 %v174
    %v192 = vunpack.c.l.b16 %v175
    %v193 = vunpack.c.l.b16 %v176
    %v194 = vpack.c.b16 %v187, %v186
    %v195 = vpack.c.b16 %v189, %v188
    %v196 = vpack.c.b16 %v191, %v190
    %v197 = vpack.c.b16 %v193, %v192
    %v203 = vsel %vm100, %v168, 0
    %205 = vmatprep.subr.bf16.mxu0 0
    %206 = vmatpush1.bf16.msra.mxu0 %v194
    %207 = vmatprep.subr.bf16.mxu0 0
    %208 = vmatpush1.bf16.msra.mxu0 %v195
    %209 = vmatprep.subr.bf16.mxu0 0
    %210 = vmatpush1.bf16.msra.mxu0 %v196
    %211 = vmatprep.subr.bf16.mxu0 0
    %212 = vmatpush1.bf16.msra.mxu0 %v197
    %213 = vmatprep.subr.bf16.mxu0 0
    %214 = vmatpush1.bf16.msra.mxu0 0
    %215 = vmatprep.subr.bf16.mxu0 0
    %216 = vmatpush1.bf16.msra.mxu0 0
    %217 = vmatprep.subr.bf16.mxu0 0
    %218 = vmatpush1.bf16.msra.mxu0 0
    %219 = vmatprep.subr.bf16.mxu0 0
    %220 = vmatpush1.bf16.msra.mxu0 0
    %221 = vmatprep.subr.bf16.mxu0 0
    %222 = vmatpush1.bf16.msra.mxu0 0
    %223 = vmatprep.subr.bf16.mxu0 0
    %224 = vmatpush1.bf16.msra.mxu0 0
    %225 = vmatprep.subr.bf16.mxu0 0
    %226 = vmatpush1.bf16.msra.mxu0 0
    %227 = vmatprep.subr.bf16.mxu0 0
    %228 = vmatpush1.bf16.msra.mxu0 0
    %229 = vmatprep.subr.bf16.mxu0 0
    %230 = vmatpush1.bf16.msra.mxu0 0
    %231 = vmatprep.subr.bf16.mxu0 0
    %232 = vmatpush1.bf16.msra.mxu0 0
    %233 = vmatprep.subr.bf16.mxu0 0
    %234 = vmatpush1.bf16.msra.mxu0 0
    %235 = vmatprep.subr.bf16.mxu0 0
    %236 = vmatpush1.bf16.msra.mxu0 0
    %237 = vmatprep.mubr.bf16.mxu0 0
    %238 = vmatmul.mubr.bf16.gmra.mrb[0].mxu0 %v203
    %v239 = vpop.f32.mrb[0].mxu0
    %v240 = vadd.f32 %v177, %v239
    %v241 = vpop.f32.mrb[0].mxu0
    %v242 = vpop.f32.mrb[0].mxu0
    %v243 = vpop.f32.mrb[0].mxu0
    %244 = vdwg.mxu0
    %v245 = vmul.f32 %v240, 0.25
    %v246 = vlaneseq
    %v247 = vand.u32 %v246, 127
    %vm248 = vcmp.lt.s32.totalorder %v247, 17
    %vm249 = vcmask 130048
    %v251 = vsel %vm249, %v245, 0
    %v254 = vsel %vm249, %v145, 0
    %v257 = vsel %vm249, %v148, 0
    %v260 = vsel %vm249, %v153, 0
    %262 = vmatprep.subr.mxu0 0.0
    %263 = vmatpush1.xpose.msra.mxu0 %v254
    %264 = vmatprep.subr.mxu0 0.0
    %265 = vmatpush1.xpose.msra.mxu0 %v257
    %266 = vmatprep.subr.mxu0 0.0
    %267 = vmatpush1.xpose.msra.mxu0 %v260
    %268 = vmatprep.subr.mxu0 0.0
    %269 = vmatpush1.xpose.msra.mxu0 0.0
    %270 = vmatprep.subr.mxu0 0.0
    %271 = vmatpush1.xpose.msra.mxu0 0.0
    %272 = vmatprep.subr.mxu0 0.0
    %273 = vmatpush1.xpose.msra.mxu0 0.0
    %274 = vmatprep.subr.mxu0 0.0
    %275 = vmatpush1.xpose.msra.mxu0 0.0
    %276 = vmatprep.subr.mxu0 0.0
    %277 = vmatpush1.xpose.msra.mxu0 0.0
    %278 = vmatprep.subr.mxu0 0.0
    %279 = vmatpush1.xpose.msra.mxu0 0.0
    %280 = vmatprep.subr.mxu0 0.0
    %281 = vmatpush1.xpose.msra.mxu0 0.0
    %282 = vmatprep.subr.mxu0 0.0
    %283 = vmatpush1.xpose.msra.mxu0 0.0
    %284 = vmatprep.subr.mxu0 0.0
    %285 = vmatpush1.xpose.msra.mxu0 0.0
    %286 = vmatprep.subr.mxu0 0.0
    %287 = vmatpush1.xpose.msra.mxu0 0.0
    %288 = vmatprep.subr.mxu0 0.0
    %289 = vmatpush1.xpose.msra.mxu0 0.0
    %290 = vmatprep.subr.mxu0 0.0
    %291 = vmatpush1.xpose.msra.mxu0 0.0
    %292 = vmatprep.subr.mxu0 0.0
    %293 = vmatpush1.xpose.msra.mxu0 0.0
    %294 = vmatprep.subr.mxu0 0.0
    %295 = vmatpush1.xpose.msra.mxu0 0.0
    %296 = vmatprep.subr.mxu0 0.0
    %297 = vmatpush1.xpose.msra.mxu0 0.0
    %298 = vmatprep.subr.mxu0 0.0
    %299 = vmatpush1.xpose.msra.mxu0 0.0
    %300 = vmatprep.subr.mxu0 0.0
    %301 = vmatpush1.xpose.msra.mxu0 0.0
    %302 = vmatprep.subr.mxu0 0.0
    %303 = vmatpush1.xpose.msra.mxu0 0.0
    %304 = vmatprep.subr.mxu0 0.0
    %305 = vmatpush1.xpose.msra.mxu0 0.0
    %306 = vmatprep.subr.mxu0 0.0
    %307 = vmatpush1.xpose.msra.mxu0 0.0
    %308 = vmatprep.subr.mxu0 0.0
    %309 = vmatpush1.xpose.msra.mxu0 0.0
    %310 = vmatprep.subr.mxu0 0.0
    %311 = vmatpush1.xpose.msra.mxu0 0.0
    %312 = vmatprep.subr.mxu0 0.0
    %313 = vmatpush1.xpose.msra.mxu0 0.0
    %314 = vmatprep.subr.mxu0 0.0
    %315 = vmatpush1.xpose.msra.mxu0 0.0
    %316 = vmatprep.subr.mxu0 0.0
    %317 = vmatpush1.xpose.msra.mxu0 0.0
    %318 = vmatprep.subr.mxu0 0.0
    %319 = vmatpush1.xpose.msra.mxu0 0.0
    %320 = vmatprep.subr.mxu0 0.0
    %321 = vmatpush1.xpose.msra.mxu0 0.0
    %322 = vmatprep.subr.mxu0 0.0
    %323 = vmatpush1.xpose.msra.mxu0 0.0
    %324 = vmatprep.subr.mxu0 0.0
    %325 = vmatpush1.xpose.msra.mxu0 0.0
    %326 = vmatprep.mubr.f32.mxu0 0.0
    %327 = vmatmul.mubr.f32.gmra.mrb[0].mxu0 %v251
    %v328 = vpop.f32.mrb[0].mxu0
    %v329 = vadd.f32 0.0, %v328
    %v330 = vpop.f32.mrb[0].mxu0
    %331 = vdwg.mxu0
    %v332 = vsel %vm248, %v329, -1e+30
    %vm333 = vcmask 188416
    %v334 = vsel %vm333, %v332, -inf
    %335 = vmax.xlane.f32.xlu0 %v334
    %v336 = vpop.xlane.xlu0 %335
    %v337 = vsub.f32 %v332, %v336
    %v338 = vmul.f32 %v337, 1.442695
    %v339 = vpow.pop %v338
    %v340 = vsel %vm333, %v339, 0.0
    %341 = vadd.xlane.f32.xlu0 %v340
    %v342 = vpop.xlane.xlu0 %341
    %v343 = vrcp.pop %v342
    %v344 = vmul.f32 %v339, %v343
    %345 = vrot.lane.b32.xlu0 %v145, 64
    %v346 = vpop.permute.xlu0 %345
    %347 = vrot.lane.b32.xlu0 %v148, 64
    %v348 = vpop.permute.xlu0 %347
    %349 = vrot.lane.b32.xlu0 %v153, 64
    %v350 = vpop.permute.xlu0 %349
    %vm354 = vcmask 195584
    %v356 = vsel %vm354, %v344, 0
    %358 = vmatprep.subr.mxu0 0.0
    %359 = vmatpush1.msra.mxu0 %v346
    %360 = vmatprep.subr.mxu0 0.0
    %361 = vmatpush1.msra.mxu0 %v348
    %362 = vmatprep.subr.mxu0 0.0
    %363 = vmatpush1.msra.mxu0 %v350
    %364 = vmatprep.subr.mxu0 0.0
    %365 = vmatpush1.msra.mxu0 0.0
    %366 = vmatprep.subr.mxu0 0.0
    %367 = vmatpush1.msra.mxu0 0.0
    %368 = vmatprep.subr.mxu0 0.0
    %369 = vmatpush1.msra.mxu0 0.0
    %370 = vmatprep.subr.mxu0 0.0
    %371 = vmatpush1.msra.mxu0 0.0
    %372 = vmatprep.subr.mxu0 0.0
    %373 = vmatpush1.msra.mxu0 0.0
    %374 = vmatprep.subr.mxu0 0.0
    %375 = vmatpush1.msra.mxu0 0.0
    %376 = vmatprep.subr.mxu0 0.0
    %377 = vmatpush1.msra.mxu0 0.0
    %378 = vmatprep.subr.mxu0 0.0
    %379 = vmatpush1.msra.mxu0 0.0
    %380 = vmatprep.subr.mxu0 0.0
    %381 = vmatpush1.msra.mxu0 0.0
    %382 = vmatprep.subr.mxu0 0.0
    %383 = vmatpush1.msra.mxu0 0.0
    %384 = vmatprep.subr.mxu0 0.0
    %385 = vmatpush1.msra.mxu0 0.0
    %386 = vmatprep.subr.mxu0 0.0
    %387 = vmatpush1.msra.mxu0 0.0
    %388 = vmatprep.subr.mxu0 0.0
    %389 = vmatpush1.msra.mxu0 0.0
    %390 = vmatprep.subr.mxu0 0.0
    %391 = vmatpush1.msra.mxu0 0.0
    %392 = vmatprep.subr.mxu0 0.0
    %393 = vmatpush1.msra.mxu0 0.0
    %394 = vmatprep.subr.mxu0 0.0
    %395 = vmatpush1.msra.mxu0 0.0
    %396 = vmatprep.subr.mxu0 0.0
    %397 = vmatpush1.msra.mxu0 0.0
    %398 = vmatprep.subr.mxu0 0.0
    %399 = vmatpush1.msra.mxu0 0.0
    %400 = vmatprep.subr.mxu0 0.0
    %401 = vmatpush1.msra.mxu0 0.0
    %402 = vmatprep.subr.mxu0 0.0
    %403 = vmatpush1.msra.mxu0 0.0
    %404 = vmatprep.subr.mxu0 0.0
    %405 = vmatpush1.msra.mxu0 0.0
    %406 = vmatprep.subr.mxu0 0.0
    %407 = vmatpush1.msra.mxu0 0.0
    %408 = vmatprep.subr.mxu0 0.0
    %409 = vmatpush1.msra.mxu0 0.0
    %410 = vmatprep.subr.mxu0 0.0
    %411 = vmatpush1.msra.mxu0 0.0
    %412 = vmatprep.subr.mxu0 0.0
    %413 = vmatpush1.msra.mxu0 0.0
    %414 = vmatprep.subr.mxu0 0.0
    %415 = vmatpush1.msra.mxu0 0.0
    %416 = vmatprep.subr.mxu0 0.0
    %417 = vmatpush1.msra.mxu0 0.0
    %418 = vmatprep.subr.mxu0 0.0
    %419 = vmatpush1.msra.mxu0 0.0
    %420 = vmatprep.subr.mxu0 0.0
    %421 = vmatpush1.msra.mxu0 0.0
    %422 = vmatprep.mubr.f32.mxu0 0.0
    %423 = vmatmul.mubr.f32.gmra.mrb[0].mxu0 %v356
    %v424 = vpop.f32.mrb[0].mxu0
    %v425 = vadd.f32 0.0, %v424
    %v426 = vpop.f32.mrb[0].mxu0
    %427 = vdwg.mxu0
    %vm428 = vcmask 122880
    %429 = vst.msk [vmem:[#allocation2] sm:$0x1] %vm428, %v425
    %430 = vrot.lane.b32.xlu0 %v245, 112
    %v431 = vpop.permute.xlu0 %430
    %432 = vrot.lane.b32.xlu0 %v145, 112
    %v433 = vpop.permute.xlu0 %432
    %434 = vrot.lane.b32.xlu0 %v148, 112
    %v435 = vpop.permute.xlu0 %434
    %436 = vrot.lane.b32.xlu0 %v153, 112
    %v437 = vpop.permute.xlu0 %436
    %v438 = vsel %vm249, %v431, 0
    %v440 = vsel %vm249, %v433, 0
    %v442 = vsel %vm249, %v435, 0
    %v444 = vsel %vm249, %v437, 0
    %446 = vmatprep.subr.mxu0 0.0
    %447 = vmatpush1.xpose.msra.mxu0 %v440
    %448 = vmatprep.subr.mxu0 0.0
    %449 = vmatpush1.xpose.msra.mxu0 %v442
    %450 = vmatprep.subr.mxu0 0.0
    %451 = vmatpush1.xpose.msra.mxu0 %v444
    %452 = vmatprep.subr.mxu0 0.0
    %453 = vmatpush1.xpose.msra.mxu0 0.0
    %454 = vmatprep.subr.mxu0 0.0
    %455 = vmatpush1.xpose.msra.mxu0 0.0
    %456 = vmatprep.subr.mxu0 0.0
    %457 = vmatpush1.xpose.msra.mxu0 0.0
    %458 = vmatprep.subr.mxu0 0.0
    %459 = vmatpush1.xpose.msra.mxu0 0.0
    %460 = vmatprep.subr.mxu0 0.0
    %461 = vmatpush1.xpose.msra.mxu0 0.0
    %462 = vmatprep.subr.mxu0 0.0
    %463 = vmatpush1.xpose.msra.mxu0 0.0
    %464 = vmatprep.subr.mxu0 0.0
    %465 = vmatpush1.xpose.msra.mxu0 0.0
    %466 = vmatprep.subr.mxu0 0.0
    %467 = vmatpush1.xpose.msra.mxu0 0.0
    %468 = vmatprep.subr.mxu0 0.0
    %469 = vmatpush1.xpose.msra.mxu0 0.0
    %470 = vmatprep.subr.mxu0 0.0
    %471 = vmatpush1.xpose.msra.mxu0 0.0
    %472 = vmatprep.subr.mxu0 0.0
    %473 = vmatpush1.xpose.msra.mxu0 0.0
    %474 = vmatprep.subr.mxu0 0.0
    %475 = vmatpush1.xpose.msra.mxu0 0.0
    %476 = vmatprep.subr.mxu0 0.0
    %477 = vmatpush1.xpose.msra.mxu0 0.0
    %478 = vmatprep.subr.mxu0 0.0
    %479 = vmatpush1.xpose.msra.mxu0 0.0
    %480 = vmatprep.subr.mxu0 0.0
    %481 = vmatpush1.xpose.msra.mxu0 0.0
    %482 = vmatprep.subr.mxu0 0.0
    %483 = vmatpush1.xpose.msra.mxu0 0.0
    %484 = vmatprep.subr.mxu0 0.0
    %485 = vmatpush1.xpose.msra.mxu0 0.0
    %486 = vmatprep.subr.mxu0 0.0
    %487 = vmatpush1.xpose.msra.mxu0 0.0
    %488 = vmatprep.subr.mxu0 0.0
    %489 = vmatpush1.xpose.msra.mxu0 0.0
    %490 = vmatprep.subr.mxu0 0.0
    %491 = vmatpush1.xpose.msra.mxu0 0.0
    %492 = vmatprep.subr.mxu0 0.0
    %493 = vmatpush1.xpose.msra.mxu0 0.0
    %494 = vmatprep.subr.mxu0 0.0
    %495 = vmatpush1.xpose.msra.mxu0 0.0
    %496 = vmatprep.subr.mxu0 0.0
    %497 = vmatpush1.xpose.msra.mxu0 0.0
    %498 = vmatprep.subr.mxu0 0.0
    %499 = vmatpush1.xpose.msra.mxu0 0.0
    %500 = vmatprep.subr.mxu0 0.0
    %501 = vmatpush1.xpose.msra.mxu0 0.0
    %502 = vmatprep.subr.mxu0 0.0
    %503 = vmatpush1.xpose.msra.mxu0 0.0
    %504 = vmatprep.subr.mxu0 0.0
    %505 = vmatpush1.xpose.msra.mxu0 0.0
    %506 = vmatprep.subr.mxu0 0.0
    %507 = vmatpush1.xpose.msra.mxu0 0.0
    %508 = vmatprep.subr.mxu0 0.0
    %509 = vmatpush1.xpose.msra.mxu0 0.0
    %510 = vmatprep.mubr.f32.mxu0 0.0
    %511 = vmatmul.mubr.f32.gmra.mrb[0].mxu0 %v438
    %v512 = vpop.f32.mrb[0].mxu0
    %v513 = vadd.f32 0.0, %v512
    %v514 = vpop.f32.mrb[0].mxu0
    %515 = vdwg.mxu0
    %v516 = vsel %vm248, %v513, -1e+30
    %v517 = vsel %vm333, %v516, -inf
    %518 = vmax.xlane.f32.xlu0 %v517
    %v519 = vpop.xlane.xlu0 %518
    %v520 = vsub.f32 %v516, %v519
    %v521 = vmul.f32 %v520, 1.442695
    %v522 = vpow.pop %v521
    %v523 = vsel %vm333, %v522, 0.0
    %524 = vadd.xlane.f32.xlu0 %v523
    %v525 = vpop.xlane.xlu0 %524
    %v526 = vrcp.pop %v525
    %v527 = vmul.f32 %v522, %v526
    %528 = vrot.lane.b32.xlu0 %v145, 48
    %v529 = vpop.permute.xlu0 %528
    %530 = vrot.lane.b32.xlu0 %v148, 48
    %v531 = vpop.permute.xlu0 %530
    %532 = vrot.lane.b32.xlu0 %v153, 48
    %v533 = vpop.permute.xlu0 %532
    %v538 = vsel %vm354, %v527, 0
    %540 = vmatprep.subr.mxu0 0.0
    %541 = vmatpush1.msra.mxu0 %v529
    %542 = vmatprep.subr.mxu0 0.0
    %543 = vmatpush1.msra.mxu0 %v531
    %544 = vmatprep.subr.mxu0 0.0
    %545 = vmatpush1.msra.mxu0 %v533
    %546 = vmatprep.subr.mxu0 0.0
    %547 = vmatpush1.msra.mxu0 0.0
    %548 = vmatprep.subr.mxu0 0.0
    %549 = vmatpush1.msra.mxu0 0.0
    %550 = vmatprep.subr.mxu0 0.0
    %551 = vmatpush1.msra.mxu0 0.0
    %552 = vmatprep.subr.mxu0 0.0
    %553 = vmatpush1.msra.mxu0 0.0
    %554 = vmatprep.subr.mxu0 0.0
    %555 = vmatpush1.msra.mxu0 0.0
    %556 = vmatprep.subr.mxu0 0.0
    %557 = vmatpush1.msra.mxu0 0.0
    %558 = vmatprep.subr.mxu0 0.0
    %559 = vmatpush1.msra.mxu0 0.0
    %560 = vmatprep.subr.mxu0 0.0
    %561 = vmatpush1.msra.mxu0 0.0
    %562 = vmatprep.subr.mxu0 0.0
    %563 = vmatpush1.msra.mxu0 0.0
    %564 = vmatprep.subr.mxu0 0.0
    %565 = vmatpush1.msra.mxu0 0.0
    %566 = vmatprep.subr.mxu0 0.0
    %567 = vmatpush1.msra.mxu0 0.0
    %568 = vmatprep.subr.mxu0 0.0
    %569 = vmatpush1.msra.mxu0 0.0
    %570 = vmatprep.subr.mxu0 0.0
    %571 = vmatpush1.msra.mxu0 0.0
    %572 = vmatprep.subr.mxu0 0.0
    %573 = vmatpush1.msra.mxu0 0.0
    %574 = vmatprep.subr.mxu0 0.0
    %575 = vmatpush1.msra.mxu0 0.0
    %576 = vmatprep.subr.mxu0 0.0
    %577 = vmatpush1.msra.mxu0 0.0
    %578 = vmatprep.subr.mxu0 0.0
    %579 = vmatpush1.msra.mxu0 0.0
    %580 = vmatprep.subr.mxu0 0.0
    %581 = vmatpush1.msra.mxu0 0.0
    %582 = vmatprep.subr.mxu0 0.0
    %583 = vmatpush1.msra.mxu0 0.0
    %584 = vmatprep.subr.mxu0 0.0
    %585 = vmatpush1.msra.mxu0 0.0
    %586 = vmatprep.subr.mxu0 0.0
    %587 = vmatpush1.msra.mxu0 0.0
    %588 = vmatprep.subr.mxu0 0.0
    %589 = vmatpush1.msra.mxu0 0.0
    %590 = vmatprep.subr.mxu0 0.0
    %591 = vmatpush1.msra.mxu0 0.0
    %592 = vmatprep.subr.mxu0 0.0
    %593 = vmatpush1.msra.mxu0 0.0
    %594 = vmatprep.subr.mxu0 0.0
    %595 = vmatpush1.msra.mxu0 0.0
    %596 = vmatprep.subr.mxu0 0.0
    %597 = vmatpush1.msra.mxu0 0.0
    %598 = vmatprep.subr.mxu0 0.0
    %599 = vmatpush1.msra.mxu0 0.0
    %600 = vmatprep.subr.mxu0 0.0
    %601 = vmatpush1.msra.mxu0 0.0
    %602 = vmatprep.subr.mxu0 0.0
    %603 = vmatpush1.msra.mxu0 0.0
    %604 = vmatprep.mubr.f32.mxu0 0.0
    %605 = vmatmul.mubr.f32.gmra.mrb[0].mxu0 %v538
    %v606 = vpop.f32.mrb[0].mxu0
    %v607 = vadd.f32 0.0, %v606
    %v608 = vpop.f32.mrb[0].mxu0
    %609 = vdwg.mxu0
    %611 = vrot.lane.b32.xlu0 %v607, 16
    %v612 = vpop.permute.xlu0 %611
    %vm614 = vcmask 254080
    %615 = vst.msk [vmem:[#allocation2] sm:$0x1] %vm614, %v612
    %616 = vrot.lane.b32.xlu0 %v245, 96
    %v617 = vpop.permute.xlu0 %616
    %618 = vrot.lane.b32.xlu0 %v145, 96
    %v619 = vpop.permute.xlu0 %618
    %620 = vrot.lane.b32.xlu0 %v148, 96
    %v621 = vpop.permute.xlu0 %620
    %622 = vrot.lane.b32.xlu0 %v153, 96
    %v623 = vpop.permute.xlu0 %622
    %v624 = vsel %vm249, %v617, 0
    %v626 = vsel %vm249, %v619, 0
    %v628 = vsel %vm249, %v621, 0
    %v630 = vsel %vm249, %v623, 0
    %632 = vmatprep.subr.mxu0 0.0
    %633 = vmatpush1.xpose.msra.mxu0 %v626
    %634 = vmatprep.subr.mxu0 0.0
    %635 = vmatpush1.xpose.msra.mxu0 %v628
    %636 = vmatprep.subr.mxu0 0.0
    %637 = vmatpush1.xpose.msra.mxu0 %v630
    %638 = vmatprep.subr.mxu0 0.0
    %639 = vmatpush1.xpose.msra.mxu0 0.0
    %640 = vmatprep.subr.mxu0 0.0
    %641 = vmatpush1.xpose.msra.mxu0 0.0
    %642 = vmatprep.subr.mxu0 0.0
    %643 = vmatpush1.xpose.msra.mxu0 0.0
    %644 = vmatprep.subr.mxu0 0.0
    %645 = vmatpush1.xpose.msra.mxu0 0.0
    %646 = vmatprep.subr.mxu0 0.0
    %647 = vmatpush1.xpose.msra.mxu0 0.0
    %648 = vmatprep.subr.mxu0 0.0
    %649 = vmatpush1.xpose.msra.mxu0 0.0
    %650 = vmatprep.subr.mxu0 0.0
    %651 = vmatpush1.xpose.msra.mxu0 0.0
    %652 = vmatprep.subr.mxu0 0.0
    %653 = vmatpush1.xpose.msra.mxu0 0.0
    %654 = vmatprep.subr.mxu0 0.0
    %655 = vmatpush1.xpose.msra.mxu0 0.0
    %656 = vmatprep.subr.mxu0 0.0
    %657 = vmatpush1.xpose.msra.mxu0 0.0
    %658 = vmatprep.subr.mxu0 0.0
    %659 = vmatpush1.xpose.msra.mxu0 0.0
    %660 = vmatprep.subr.mxu0 0.0
    %661 = vmatpush1.xpose.msra.mxu0 0.0
    %662 = vmatprep.subr.mxu0 0.0
    %663 = vmatpush1.xpose.msra.mxu0 0.0
    %664 = vmatprep.subr.mxu0 0.0
    %665 = vmatpush1.xpose.msra.mxu0 0.0
    %666 = vmatprep.subr.mxu0 0.0
    %667 = vmatpush1.xpose.msra.mxu0 0.0
    %668 = vmatprep.subr.mxu0 0.0
    %669 = vmatpush1.xpose.msra.mxu0 0.0
    %670 = vmatprep.subr.mxu0 0.0
    %671 = vmatpush1.xpose.msra.mxu0 0.0
    %672 = vmatprep.subr.mxu0 0.0
    %673 = vmatpush1.xpose.msra.mxu0 0.0
    %674 = vmatprep.subr.mxu0 0.0
    %675 = vmatpush1.xpose.msra.mxu0 0.0
    %676 = vmatprep.subr.mxu0 0.0
    %677 = vmatpush1.xpose.msra.mxu0 0.0
    %678 = vmatprep.subr.mxu0 0.0
    %679 = vmatpush1.xpose.msra.mxu0 0.0
    %680 = vmatprep.subr.mxu0 0.0
    %681 = vmatpush1.xpose.msra.mxu0 0.0
    %682 = vmatprep.subr.mxu0 0.0
    %683 = vmatpush1.xpose.msra.mxu0 0.0
    %684 = vmatprep.subr.mxu0 0.0
    %685 = vmatpush1.xpose.msra.mxu0 0.0
    %686 = vmatprep.subr.mxu0 0.0
    %687 = vmatpush1.xpose.msra.mxu0 0.0
    %688 = vmatprep.subr.mxu0 0.0
    %689 = vmatpush1.xpose.msra.mxu0 0.0
    %690 = vmatprep.subr.mxu0 0.0
    %691 = vmatpush1.xpose.msra.mxu0 0.0
    %692 = vmatprep.subr.mxu0 0.0
    %693 = vmatpush1.xpose.msra.mxu0 0.0
    %694 = vmatprep.subr.mxu0 0.0
    %695 = vmatpush1.xpose.msra.mxu0 0.0
    %696 = vmatprep.mubr.f32.mxu0 0.0
    %697 = vmatmul.mubr.f32.gmra.mrb[0].mxu0 %v624
    %v698 = vpop.f32.mrb[0].mxu0
    %v699 = vadd.f32 0.0, %v698
    %v700 = vpop.f32.mrb[0].mxu0
    %701 = vdwg.mxu0
    %v702 = vsel %vm248, %v699, -1e+30
    %v703 = vsel %vm333, %v702, -inf
    %704 = vmax.xlane.f32.xlu0 %v703
    %v705 = vpop.xlane.xlu0 %704
    %v706 = vsub.f32 %v702, %v705
    %v707 = vmul.f32 %v706, 1.442695
    %v708 = vpow.pop %v707
    %v709 = vsel %vm333, %v708, 0.0
    %710 = vadd.xlane.f32.xlu0 %v709
    %v711 = vpop.xlane.xlu0 %710
    %v712 = vrcp.pop %v711
    %v713 = vmul.f32 %v708, %v712
    %714 = vrot.lane.b32.xlu0 %v145, 32
    %v715 = vpop.permute.xlu0 %714
    %716 = vrot.lane.b32.xlu0 %v148, 32
    %v717 = vpop.permute.xlu0 %716
    %718 = vrot.lane.b32.xlu0 %v153, 32
    %v719 = vpop.permute.xlu0 %718
    %v724 = vsel %vm354, %v713, 0
    %726 = vmatprep.subr.mxu0 0.0
    %727 = vmatpush1.msra.mxu0 %v715
    %728 = vmatprep.subr.mxu0 0.0
    %729 = vmatpush1.msra.mxu0 %v717
    %730 = vmatprep.subr.mxu0 0.0
    %731 = vmatpush1.msra.mxu0 %v719
    %732 = vmatprep.subr.mxu0 0.0
    %733 = vmatpush1.msra.mxu0 0.0
    %734 = vmatprep.subr.mxu0 0.0
    %735 = vmatpush1.msra.mxu0 0.0
    %736 = vmatprep.subr.mxu0 0.0
    %737 = vmatpush1.msra.mxu0 0.0
    %738 = vmatprep.subr.mxu0 0.0
    %739 = vmatpush1.msra.mxu0 0.0
    %740 = vmatprep.subr.mxu0 0.0
    %741 = vmatpush1.msra.mxu0 0.0
    %742 = vmatprep.subr.mxu0 0.0
    %743 = vmatpush1.msra.mxu0 0.0
    %744 = vmatprep.subr.mxu0 0.0
    %745 = vmatpush1.msra.mxu0 0.0
    %746 = vmatprep.subr.mxu0 0.0
    %747 = vmatpush1.msra.mxu0 0.0
    %748 = vmatprep.subr.mxu0 0.0
    %749 = vmatpush1.msra.mxu0 0.0
    %750 = vmatprep.subr.mxu0 0.0
    %751 = vmatpush1.msra.mxu0 0.0
    %752 = vmatprep.subr.mxu0 0.0
    %753 = vmatpush1.msra.mxu0 0.0
    %754 = vmatprep.subr.mxu0 0.0
    %755 = vmatpush1.msra.mxu0 0.0
    %756 = vmatprep.subr.mxu0 0.0
    %757 = vmatpush1.msra.mxu0 0.0
    %758 = vmatprep.subr.mxu0 0.0
    %759 = vmatpush1.msra.mxu0 0.0
    %760 = vmatprep.subr.mxu0 0.0
    %761 = vmatpush1.msra.mxu0 0.0
    %762 = vmatprep.subr.mxu0 0.0
    %763 = vmatpush1.msra.mxu0 0.0
    %764 = vmatprep.subr.mxu0 0.0
    %765 = vmatpush1.msra.mxu0 0.0
    %766 = vmatprep.subr.mxu0 0.0
    %767 = vmatpush1.msra.mxu0 0.0
    %768 = vmatprep.subr.mxu0 0.0
    %769 = vmatpush1.msra.mxu0 0.0
    %770 = vmatprep.subr.mxu0 0.0
    %771 = vmatpush1.msra.mxu0 0.0
    %772 = vmatprep.subr.mxu0 0.0
    %773 = vmatpush1.msra.mxu0 0.0
    %774 = vmatprep.subr.mxu0 0.0
    %775 = vmatpush1.msra.mxu0 0.0
    %776 = vmatprep.subr.mxu0 0.0
    %777 = vmatpush1.msra.mxu0 0.0
    %778 = vmatprep.subr.mxu0 0.0
    %779 = vmatpush1.msra.mxu0 0.0
    %780 = vmatprep.subr.mxu0 0.0
    %781 = vmatpush1.msra.mxu0 0.0
    %782 = vmatprep.subr.mxu0 0.0
    %783 = vmatpush1.msra.mxu0 0.0
    %784 = vmatprep.subr.mxu0 0.0
    %785 = vmatpush1.msra.mxu0 0.0
    %786 = vmatprep.subr.mxu0 0.0
    %787 = vmatpush1.msra.mxu0 0.0
    %788 = vmatprep.subr.mxu0 0.0
    %789 = vmatpush1.msra.mxu0 0.0
    %790 = vmatprep.mubr.f32.mxu0 0.0
    %791 = vmatmul.mubr.f32.gmra.mrb[0].mxu0 %v724
    %v792 = vpop.f32.mrb[0].mxu0
    %v793 = vadd.f32 0.0, %v792
    %v794 = vpop.f32.mrb[0].mxu0
    %795 = vdwg.mxu0
    %797 = vrot.lane.b32.xlu0 %v793, 32
    %v798 = vpop.permute.xlu0 %797
    %vm800 = vcmask 385280
    %801 = vst.msk [vmem:[#allocation2] sm:$0x1] %vm800, %v798
    %802 = vrot.lane.b32.xlu0 %v245, 80
    %v803 = vpop.permute.xlu0 %802
    %804 = vrot.lane.b32.xlu0 %v145, 80
    %v805 = vpop.permute.xlu0 %804
    %806 = vrot.lane.b32.xlu0 %v148, 80
    %v807 = vpop.permute.xlu0 %806
    %808 = vrot.lane.b32.xlu0 %v153, 80
    %v809 = vpop.permute.xlu0 %808
    %v810 = vsel %vm249, %v803, 0
    %v812 = vsel %vm249, %v805, 0
    %v814 = vsel %vm249, %v807, 0
    %v816 = vsel %vm249, %v809, 0
    %818 = vmatprep.subr.mxu0 0.0
    %819 = vmatpush1.xpose.msra.mxu0 %v812
    %820 = vmatprep.subr.mxu0 0.0
    %821 = vmatpush1.xpose.msra.mxu0 %v814
    %822 = vmatprep.subr.mxu0 0.0
    %823 = vmatpush1.xpose.msra.mxu0 %v816
    %824 = vmatprep.subr.mxu0 0.0
    %825 = vmatpush1.xpose.msra.mxu0 0.0
    %826 = vmatprep.subr.mxu0 0.0
    %827 = vmatpush1.xpose.msra.mxu0 0.0
    %828 = vmatprep.subr.mxu0 0.0
    %829 = vmatpush1.xpose.msra.mxu0 0.0
    %830 = vmatprep.subr.mxu0 0.0
    %831 = vmatpush1.xpose.msra.mxu0 0.0
    %832 = vmatprep.subr.mxu0 0.0
    %833 = vmatpush1.xpose.msra.mxu0 0.0
    %834 = vmatprep.subr.mxu0 0.0
    %835 = vmatpush1.xpose.msra.mxu0 0.0
    %836 = vmatprep.subr.mxu0 0.0
    %837 = vmatpush1.xpose.msra.mxu0 0.0
    %838 = vmatprep.subr.mxu0 0.0
    %839 = vmatpush1.xpose.msra.mxu0 0.0
    %840 = vmatprep.subr.mxu0 0.0
    %841 = vmatpush1.xpose.msra.mxu0 0.0
    %842 = vmatprep.subr.mxu0 0.0
    %843 = vmatpush1.xpose.msra.mxu0 0.0
    %844 = vmatprep.subr.mxu0 0.0
    %845 = vmatpush1.xpose.msra.mxu0 0.0
    %846 = vmatprep.subr.mxu0 0.0
    %847 = vmatpush1.xpose.msra.mxu0 0.0
    %848 = vmatprep.subr.mxu0 0.0
    %849 = vmatpush1.xpose.msra.mxu0 0.0
    %850 = vmatprep.subr.mxu0 0.0
    %851 = vmatpush1.xpose.msra.mxu0 0.0
    %852 = vmatprep.subr.mxu0 0.0
    %853 = vmatpush1.xpose.msra.mxu0 0.0
    %854 = vmatprep.subr.mxu0 0.0
    %855 = vmatpush1.xpose.msra.mxu0 0.0
    %856 = vmatprep.subr.mxu0 0.0
    %857 = vmatpush1.xpose.msra.mxu0 0.0
    %858 = vmatprep.subr.mxu0 0.0
    %859 = vmatpush1.xpose.msra.mxu0 0.0
    %860 = vmatprep.subr.mxu0 0.0
    %861 = vmatpush1.xpose.msra.mxu0 0.0
    %862 = vmatprep.subr.mxu0 0.0
    %863 = vmatpush1.xpose.msra.mxu0 0.0
    %864 = vmatprep.subr.mxu0 0.0
    %865 = vmatpush1.xpose.msra.mxu0 0.0
    %866 = vmatprep.subr.mxu0 0.0
    %867 = vmatpush1.xpose.msra.mxu0 0.0
    %868 = vmatprep.subr.mxu0 0.0
    %869 = vmatpush1.xpose.msra.mxu0 0.0
    %870 = vmatprep.subr.mxu0 0.0
    %871 = vmatpush1.xpose.msra.mxu0 0.0
    %872 = vmatprep.subr.mxu0 0.0
    %873 = vmatpush1.xpose.msra.mxu0 0.0
    %874 = vmatprep.subr.mxu0 0.0
    %875 = vmatpush1.xpose.msra.mxu0 0.0
    %876 = vmatprep.subr.mxu0 0.0
    %877 = vmatpush1.xpose.msra.mxu0 0.0
    %878 = vmatprep.subr.mxu0 0.0
    %879 = vmatpush1.xpose.msra.mxu0 0.0
    %880 = vmatprep.subr.mxu0 0.0
    %881 = vmatpush1.xpose.msra.mxu0 0.0
    %882 = vmatprep.mubr.f32.mxu0 0.0
    %883 = vmatmul.mubr.f32.gmra.mrb[0].mxu0 %v810
    %v884 = vpop.f32.mrb[0].mxu0
    %v885 = vadd.f32 0.0, %v884
    %v886 = vpop.f32.mrb[0].mxu0
    %887 = vdwg.mxu0
    %v888 = vsel %vm248, %v885, -1e+30
    %v889 = vsel %vm333, %v888, -inf
    %890 = vmax.xlane.f32.xlu0 %v889
    %v891 = vpop.xlane.xlu0 %890
    %v892 = vsub.f32 %v888, %v891
    %v893 = vmul.f32 %v892, 1.442695
    %v894 = vpow.pop %v893
    %v895 = vsel %vm333, %v894, 0.0
    %896 = vadd.xlane.f32.xlu0 %v895
    %v897 = vpop.xlane.xlu0 %896
    %v898 = vrcp.pop %v897
    %v899 = vmul.f32 %v894, %v898
    %900 = vrot.lane.b32.xlu0 %v145, 16
    %v901 = vpop.permute.xlu0 %900
    %902 = vrot.lane.b32.xlu0 %v148, 16
    %v903 = vpop.permute.xlu0 %902
    %904 = vrot.lane.b32.xlu0 %v153, 16
    %v905 = vpop.permute.xlu0 %904
    %v910 = vsel %vm354, %v899, 0
    %912 = vmatprep.subr.mxu0 0.0
    %913 = vmatpush1.msra.mxu0 %v901
    %914 = vmatprep.subr.mxu0 0.0
    %915 = vmatpush1.msra.mxu0 %v903
    %916 = vmatprep.subr.mxu0 0.0
    %917 = vmatpush1.msra.mxu0 %v905
    %918 = vmatprep.subr.mxu0 0.0
    %919 = vmatpush1.msra.mxu0 0.0
    %920 = vmatprep.subr.mxu0 0.0
    %921 = vmatpush1.msra.mxu0 0.0
    %922 = vmatprep.subr.mxu0 0.0
    %923 = vmatpush1.msra.mxu0 0.0
    %924 = vmatprep.subr.mxu0 0.0
    %925 = vmatpush1.msra.mxu0 0.0
    %926 = vmatprep.subr.mxu0 0.0
    %927 = vmatpush1.msra.mxu0 0.0
    %928 = vmatprep.subr.mxu0 0.0
    %929 = vmatpush1.msra.mxu0 0.0
    %930 = vmatprep.subr.mxu0 0.0
    %931 = vmatpush1.msra.mxu0 0.0
    %932 = vmatprep.subr.mxu0 0.0
    %933 = vmatpush1.msra.mxu0 0.0
    %934 = vmatprep.subr.mxu0 0.0
    %935 = vmatpush1.msra.mxu0 0.0
    %936 = vmatprep.subr.mxu0 0.0
    %937 = vmatpush1.msra.mxu0 0.0
    %938 = vmatprep.subr.mxu0 0.0
    %939 = vmatpush1.msra.mxu0 0.0
    %940 = vmatprep.subr.mxu0 0.0
    %941 = vmatpush1.msra.mxu0 0.0
    %942 = vmatprep.subr.mxu0 0.0
    %943 = vmatpush1.msra.mxu0 0.0
    %944 = vmatprep.subr.mxu0 0.0
    %945 = vmatpush1.msra.mxu0 0.0
    %946 = vmatprep.subr.mxu0 0.0
    %947 = vmatpush1.msra.mxu0 0.0
    %948 = vmatprep.subr.mxu0 0.0
    %949 = vmatpush1.msra.mxu0 0.0
    %950 = vmatprep.subr.mxu0 0.0
    %951 = vmatpush1.msra.mxu0 0.0
    %952 = vmatprep.subr.mxu0 0.0
    %953 = vmatpush1.msra.mxu0 0.0
    %954 = vmatprep.subr.mxu0 0.0
    %955 = vmatpush1.msra.mxu0 0.0
    %956 = vmatprep.subr.mxu0 0.0
    %957 = vmatpush1.msra.mxu0 0.0
    %958 = vmatprep.subr.mxu0 0.0
    %959 = vmatpush1.msra.mxu0 0.0
    %960 = vmatprep.subr.mxu0 0.0
    %961 = vmatpush1.msra.mxu0 0.0
    %962 = vmatprep.subr.mxu0 0.0
    %963 = vmatpush1.msra.mxu0 0.0
    %964 = vmatprep.subr.mxu0 0.0
    %965 = vmatpush1.msra.mxu0 0.0
    %966 = vmatprep.subr.mxu0 0.0
    %967 = vmatpush1.msra.mxu0 0.0
    %968 = vmatprep.subr.mxu0 0.0
    %969 = vmatpush1.msra.mxu0 0.0
    %970 = vmatprep.subr.mxu0 0.0
    %971 = vmatpush1.msra.mxu0 0.0
    %972 = vmatprep.subr.mxu0 0.0
    %973 = vmatpush1.msra.mxu0 0.0
    %974 = vmatprep.subr.mxu0 0.0
    %975 = vmatpush1.msra.mxu0 0.0
    %976 = vmatprep.mubr.f32.mxu0 0.0
    %977 = vmatmul.mubr.f32.gmra.mrb[0].mxu0 %v910
    %v978 = vpop.f32.mrb[0].mxu0
    %v979 = vadd.f32 0.0, %v978
    %v980 = vpop.f32.mrb[0].mxu0
    %981 = vdwg.mxu0
    %983 = vrot.lane.b32.xlu0 %v979, 48
    %v984 = vpop.permute.xlu0 %983
    %vm986 = vcmask 516480
    %987 = vst.msk [vmem:[#allocation2] sm:$0x1] %vm986, %v984
    %v989 = vsel %vm249, %v156, 0
    %v992 = vsel %vm249, %v161, 0
    %v995 = vsel %vm249, %v164, 0
    %997 = vmatprep.subr.mxu0 0.0
    %998 = vmatpush1.xpose.msra.mxu0 %v989
    %999 = vmatprep.subr.mxu0 0.0
    %1000 = vmatpush1.xpose.msra.mxu0 %v992
    %1001 = vmatprep.subr.mxu0 0.0
    %1002 = vmatpush1.xpose.msra.mxu0 %v995
    %1003 = vmatprep.subr.mxu0 0.0
    %1004 = vmatpush1.xpose.msra.mxu0 0.0
    %1005 = vmatprep.subr.mxu0 0.0
    %1006 = vmatpush1.xpose.msra.mxu0 0.0
    %1007 = vmatprep.subr.mxu0 0.0
    %1008 = vmatpush1.xpose.msra.mxu0 0.0
    %1009 = vmatprep.subr.mxu0 0.0
    %1010 = vmatpush1.xpose.msra.mxu0 0.0
    %1011 = vmatprep.subr.mxu0 0.0
    %1012 = vmatpush1.xpose.msra.mxu0 0.0
    %1013 = vmatprep.subr.mxu0 0.0
    %1014 = vmatpush1.xpose.msra.mxu0 0.0
    %1015 = vmatprep.subr.mxu0 0.0
    %1016 = vmatpush1.xpose.msra.mxu0 0.0
    %1017 = vmatprep.subr.mxu0 0.0
    %1018 = vmatpush1.xpose.msra.mxu0 0.0
    %1019 = vmatprep.subr.mxu0 0.0
    %1020 = vmatpush1.xpose.msra.mxu0 0.0
    %1021 = vmatprep.subr.mxu0 0.0
    %1022 = vmatpush1.xpose.msra.mxu0 0.0
    %1023 = vmatprep.subr.mxu0 0.0
    %1024 = vmatpush1.xpose.msra.mxu0 0.0
    %1025 = vmatprep.subr.mxu0 0.0
    %1026 = vmatpush1.xpose.msra.mxu0 0.0
    %1027 = vmatprep.subr.mxu0 0.0
    %1028 = vmatpush1.xpose.msra.mxu0 0.0
    %1029 = vmatprep.subr.mxu0 0.0
    %1030 = vmatpush1.xpose.msra.mxu0 0.0
    %1031 = vmatprep.subr.mxu0 0.0
    %1032 = vmatpush1.xpose.msra.mxu0 0.0
    %1033 = vmatprep.subr.mxu0 0.0
    %1034 = vmatpush1.xpose.msra.mxu0 0.0
    %1035 = vmatprep.subr.mxu0 0.0
    %1036 = vmatpush1.xpose.msra.mxu0 0.0
    %1037 = vmatprep.subr.mxu0 0.0
    %1038 = vmatpush1.xpose.msra.mxu0 0.0
    %1039 = vmatprep.subr.mxu0 0.0
    %1040 = vmatpush1.xpose.msra.mxu0 0.0
    %1041 = vmatprep.subr.mxu0 0.0
    %1042 = vmatpush1.xpose.msra.mxu0 0.0
    %1043 = vmatprep.subr.mxu0 0.0
    %1044 = vmatpush1.xpose.msra.mxu0 0.0
    %1045 = vmatprep.subr.mxu0 0.0
    %1046 = vmatpush1.xpose.msra.mxu0 0.0
    %1047 = vmatprep.subr.mxu0 0.0
    %1048 = vmatpush1.xpose.msra.mxu0 0.0
    %1049 = vmatprep.subr.mxu0 0.0
    %1050 = vmatpush1.xpose.msra.mxu0 0.0
    %1051 = vmatprep.subr.mxu0 0.0
    %1052 = vmatpush1.xpose.msra.mxu0 0.0
    %1053 = vmatprep.subr.mxu0 0.0
    %1054 = vmatpush1.xpose.msra.mxu0 0.0
    %1055 = vmatprep.subr.mxu0 0.0
    %1056 = vmatpush1.xpose.msra.mxu0 0.0
    %1057 = vmatprep.subr.mxu0 0.0
    %1058 = vmatpush1.xpose.msra.mxu0 0.0
    %1059 = vmatprep.subr.mxu0 0.0
    %1060 = vmatpush1.xpose.msra.mxu0 0.0
    %1061 = vmatprep.mubr.f32.mxu0 0.0
    %1062 = vmatmul.mubr.f32.gmra.mrb[0].mxu0 %v251
    %v1063 = vpop.f32.mrb[0].mxu0
    %v1064 = vadd.f32 0.0, %v1063
    %v1065 = vpop.f32.mrb[0].mxu0
    %1066 = vdwg.mxu0
    %v1067 = vsel %vm248, %v1064, -1e+30
    %v1068 = vsel %vm333, %v1067, -inf
    %1069 = vmax.xlane.f32.xlu0 %v1068
    %v1070 = vpop.xlane.xlu0 %1069
    %v1071 = vsub.f32 %v1067, %v1070
    %v1072 = vmul.f32 %v1071, 1.442695
    %v1073 = vpow.pop %v1072
    %v1074 = vsel %vm333, %v1073, 0.0
    %1075 = vadd.xlane.f32.xlu0 %v1074
    %v1076 = vpop.xlane.xlu0 %1075
    %v1077 = vrcp.pop %v1076
    %v1078 = vmul.f32 %v1073, %v1077
    %1079 = vrot.lane.b32.xlu0 %v156, 64
    %v1080 = vpop.permute.xlu0 %1079
    %1081 = vrot.lane.b32.xlu0 %v161, 64
    %v1082 = vpop.permute.xlu0 %1081
    %1083 = vrot.lane.b32.xlu0 %v164, 64
    %v1084 = vpop.permute.xlu0 %1083
    %v1089 = vsel %vm354, %v1078, 0
    %1091 = vmatprep.subr.mxu0 0.0
    %1092 = vmatpush1.msra.mxu0 %v1080
    %1093 = vmatprep.subr.mxu0 0.0
    %1094 = vmatpush1.msra.mxu0 %v1082
    %1095 = vmatprep.subr.mxu0 0.0
    %1096 = vmatpush1.msra.mxu0 %v1084
    %1097 = vmatprep.subr.mxu0 0.0
    %1098 = vmatpush1.msra.mxu0 0.0
    %1099 = vmatprep.subr.mxu0 0.0
    %1100 = vmatpush1.msra.mxu0 0.0
    %1101 = vmatprep.subr.mxu0 0.0
    %1102 = vmatpush1.msra.mxu0 0.0
    %1103 = vmatprep.subr.mxu0 0.0
    %1104 = vmatpush1.msra.mxu0 0.0
    %1105 = vmatprep.subr.mxu0 0.0
    %1106 = vmatpush1.msra.mxu0 0.0
    %1107 = vmatprep.subr.mxu0 0.0
    %1108 = vmatpush1.msra.mxu0 0.0
    %1109 = vmatprep.subr.mxu0 0.0
    %1110 = vmatpush1.msra.mxu0 0.0
    %1111 = vmatprep.subr.mxu0 0.0
    %1112 = vmatpush1.msra.mxu0 0.0
    %1113 = vmatprep.subr.mxu0 0.0
    %1114 = vmatpush1.msra.mxu0 0.0
    %1115 = vmatprep.subr.mxu0 0.0
    %1116 = vmatpush1.msra.mxu0 0.0
    %1117 = vmatprep.subr.mxu0 0.0
    %1118 = vmatpush1.msra.mxu0 0.0
    %1119 = vmatprep.subr.mxu0 0.0
    %1120 = vmatpush1.msra.mxu0 0.0
    %1121 = vmatprep.subr.mxu0 0.0
    %1122 = vmatpush1.msra.mxu0 0.0
    %1123 = vmatprep.subr.mxu0 0.0
    %1124 = vmatpush1.msra.mxu0 0.0
    %1125 = vmatprep.subr.mxu0 0.0
    %1126 = vmatpush1.msra.mxu0 0.0
    %1127 = vmatprep.subr.mxu0 0.0
    %1128 = vmatpush1.msra.mxu0 0.0
    %1129 = vmatprep.subr.mxu0 0.0
    %1130 = vmatpush1.msra.mxu0 0.0
    %1131 = vmatprep.subr.mxu0 0.0
    %1132 = vmatpush1.msra.mxu0 0.0
    %1133 = vmatprep.subr.mxu0 0.0
    %1134 = vmatpush1.msra.mxu0 0.0
    %1135 = vmatprep.subr.mxu0 0.0
    %1136 = vmatpush1.msra.mxu0 0.0
    %1137 = vmatprep.subr.mxu0 0.0
    %1138 = vmatpush1.msra.mxu0 0.0
    %1139 = vmatprep.subr.mxu0 0.0
    %1140 = vmatpush1.msra.mxu0 0.0
    %1141 = vmatprep.subr.mxu0 0.0
    %1142 = vmatpush1.msra.mxu0 0.0
    %1143 = vmatprep.subr.mxu0 0.0
    %1144 = vmatpush1.msra.mxu0 0.0
    %1145 = vmatprep.subr.mxu0 0.0
    %1146 = vmatpush1.msra.mxu0 0.0
    %1147 = vmatprep.subr.mxu0 0.0
    %1148 = vmatpush1.msra.mxu0 0.0
    %1149 = vmatprep.subr.mxu0 0.0
    %1150 = vmatpush1.msra.mxu0 0.0
    %1151 = vmatprep.subr.mxu0 0.0
    %1152 = vmatpush1.msra.mxu0 0.0
    %1153 = vmatprep.subr.mxu0 0.0
    %1154 = vmatpush1.msra.mxu0 0.0
    %1155 = vmatprep.mubr.f32.mxu0 0.0
    %1156 = vmatmul.mubr.f32.gmra.mrb[0].mxu0 %v1089
    %v1157 = vpop.f32.mrb[0].mxu0
    %v1158 = vadd.f32 0.0, %v1157
    %v1159 = vpop.f32.mrb[0].mxu0
    %1160 = vdwg.mxu0
    %1161 = vst.msk [vmem:[#allocation2 + $0x1] sm:$0x1] %vm428, %v1158
    %1162 = vrot.lane.b32.xlu0 %v156, 112
    %v1163 = vpop.permute.xlu0 %1162
    %1164 = vrot.lane.b32.xlu0 %v161, 112
    %v1165 = vpop.permute.xlu0 %1164
    %1166 = vrot.lane.b32.xlu0 %v164, 112
    %v1167 = vpop.permute.xlu0 %1166
    %v1168 = vsel %vm249, %v1163, 0
    %v1170 = vsel %vm249, %v1165, 0
    %v1172 = vsel %vm249, %v1167, 0
    %1174 = vmatprep.subr.mxu0 0.0
    %1175 = vmatpush1.xpose.msra.mxu0 %v1168
    %1176 = vmatprep.subr.mxu0 0.0
    %1177 = vmatpush1.xpose.msra.mxu0 %v1170
    %1178 = vmatprep.subr.mxu0 0.0
    %1179 = vmatpush1.xpose.msra.mxu0 %v1172
    %1180 = vmatprep.subr.mxu0 0.0
    %1181 = vmatpush1.xpose.msra.mxu0 0.0
    %1182 = vmatprep.subr.mxu0 0.0
    %1183 = vmatpush1.xpose.msra.mxu0 0.0
    %1184 = vmatprep.subr.mxu0 0.0
    %1185 = vmatpush1.xpose.msra.mxu0 0.0
    %1186 = vmatprep.subr.mxu0 0.0
    %1187 = vmatpush1.xpose.msra.mxu0 0.0
    %1188 = vmatprep.subr.mxu0 0.0
    %1189 = vmatpush1.xpose.msra.mxu0 0.0
    %1190 = vmatprep.subr.mxu0 0.0
    %1191 = vmatpush1.xpose.msra.mxu0 0.0
    %1192 = vmatprep.subr.mxu0 0.0
    %1193 = vmatpush1.xpose.msra.mxu0 0.0
    %1194 = vmatprep.subr.mxu0 0.0
    %1195 = vmatpush1.xpose.msra.mxu0 0.0
    %1196 = vmatprep.subr.mxu0 0.0
    %1197 = vmatpush1.xpose.msra.mxu0 0.0
    %1198 = vmatprep.subr.mxu0 0.0
    %1199 = vmatpush1.xpose.msra.mxu0 0.0
    %1200 = vmatprep.subr.mxu0 0.0
    %1201 = vmatpush1.xpose.msra.mxu0 0.0
    %1202 = vmatprep.subr.mxu0 0.0
    %1203 = vmatpush1.xpose.msra.mxu0 0.0
    %1204 = vmatprep.subr.mxu0 0.0
    %1205 = vmatpush1.xpose.msra.mxu0 0.0
    %1206 = vmatprep.subr.mxu0 0.0
    %1207 = vmatpush1.xpose.msra.mxu0 0.0
    %1208 = vmatprep.subr.mxu0 0.0
    %1209 = vmatpush1.xpose.msra.mxu0 0.0
    %1210 = vmatprep.subr.mxu0 0.0
    %1211 = vmatpush1.xpose.msra.mxu0 0.0
    %1212 = vmatprep.subr.mxu0 0.0
    %1213 = vmatpush1.xpose.msra.mxu0 0.0
    %1214 = vmatprep.subr.mxu0 0.0
    %1215 = vmatpush1.xpose.msra.mxu0 0.0
    %1216 = vmatprep.subr.mxu0 0.0
    %1217 = vmatpush1.xpose.msra.mxu0 0.0
    %1218 = vmatprep.subr.mxu0 0.0
    %1219 = vmatpush1.xpose.msra.mxu0 0.0
    %1220 = vmatprep.subr.mxu0 0.0
    %1221 = vmatpush1.xpose.msra.mxu0 0.0
    %1222 = vmatprep.subr.mxu0 0.0
    %1223 = vmatpush1.xpose.msra.mxu0 0.0
    %1224 = vmatprep.subr.mxu0 0.0
    %1225 = vmatpush1.xpose.msra.mxu0 0.0
    %1226 = vmatprep.subr.mxu0 0.0
    %1227 = vmatpush1.xpose.msra.mxu0 0.0
    %1228 = vmatprep.subr.mxu0 0.0
    %1229 = vmatpush1.xpose.msra.mxu0 0.0
    %1230 = vmatprep.subr.mxu0 0.0
    %1231 = vmatpush1.xpose.msra.mxu0 0.0
    %1232 = vmatprep.subr.mxu0 0.0
    %1233 = vmatpush1.xpose.msra.mxu0 0.0
    %1234 = vmatprep.subr.mxu0 0.0
    %1235 = vmatpush1.xpose.msra.mxu0 0.0
    %1236 = vmatprep.subr.mxu0 0.0
    %1237 = vmatpush1.xpose.msra.mxu0 0.0
    %1238 = vmatprep.mubr.f32.mxu0 0.0
    %1239 = vmatmul.mubr.f32.gmra.mrb[0].mxu0 %v438
    %v1240 = vpop.f32.mrb[0].mxu0
    %v1241 = vadd.f32 0.0, %v1240
    %v1242 = vpop.f32.mrb[0].mxu0
    %1243 = vdwg.mxu0
    %v1244 = vsel %vm248, %v1241, -1e+30
    %v1245 = vsel %vm333, %v1244, -inf
    %1246 = vmax.xlane.f32.xlu0 %v1245
    %v1247 = vpop.xlane.xlu0 %1246
    %v1248 = vsub.f32 %v1244, %v1247
    %v1249 = vmul.f32 %v1248, 1.442695
    %v1250 = vpow.pop %v1249
    %v1251 = vsel %vm333, %v1250, 0.0
    %1252 = vadd.xlane.f32.xlu0 %v1251
    %v1253 = vpop.xlane.xlu0 %1252
    %v1254 = vrcp.pop %v1253
    %v1255 = vmul.f32 %v1250, %v1254
    %1256 = vrot.lane.b32.xlu0 %v156, 48
    %v1257 = vpop.permute.xlu0 %1256
    %1258 = vrot.lane.b32.xlu0 %v161, 48
    %v1259 = vpop.permute.xlu0 %1258
    %1260 = vrot.lane.b32.xlu0 %v164, 48
    %v1261 = vpop.permute.xlu0 %1260
    %v1266 = vsel %vm354, %v1255, 0
    %1268 = vmatprep.subr.mxu0 0.0
    %1269 = vmatpush1.msra.mxu0 %v1257
    %1270 = vmatprep.subr.mxu0 0.0
    %1271 = vmatpush1.msra.mxu0 %v1259
    %1272 = vmatprep.subr.mxu0 0.0
    %1273 = vmatpush1.msra.mxu0 %v1261
    %1274 = vmatprep.subr.mxu0 0.0
    %1275 = vmatpush1.msra.mxu0 0.0
    %1276 = vmatprep.subr.mxu0 0.0
    %1277 = vmatpush1.msra.mxu0 0.0
    %1278 = vmatprep.subr.mxu0 0.0
    %1279 = vmatpush1.msra.mxu0 0.0
    %1280 = vmatprep.subr.mxu0 0.0
    %1281 = vmatpush1.msra.mxu0 0.0
    %1282 = vmatprep.subr.mxu0 0.0
    %1283 = vmatpush1.msra.mxu0 0.0
    %1284 = vmatprep.subr.mxu0 0.0
    %1285 = vmatpush1.msra.mxu0 0.0
    %1286 = vmatprep.subr.mxu0 0.0
    %1287 = vmatpush1.msra.mxu0 0.0
    %1288 = vmatprep.subr.mxu0 0.0
    %1289 = vmatpush1.msra.mxu0 0.0
    %1290 = vmatprep.subr.mxu0 0.0
    %1291 = vmatpush1.msra.mxu0 0.0
    %1292 = vmatprep.subr.mxu0 0.0
    %1293 = vmatpush1.msra.mxu0 0.0
    %1294 = vmatprep.subr.mxu0 0.0
    %1295 = vmatpush1.msra.mxu0 0.0
    %1296 = vmatprep.subr.mxu0 0.0
    %1297 = vmatpush1.msra.mxu0 0.0
    %1298 = vmatprep.subr.mxu0 0.0
    %1299 = vmatpush1.msra.mxu0 0.0
    %1300 = vmatprep.subr.mxu0 0.0
    %1301 = vmatpush1.msra.mxu0 0.0
    %1302 = vmatprep.subr.mxu0 0.0
    %1303 = vmatpush1.msra.mxu0 0.0
    %1304 = vmatprep.subr.mxu0 0.0
    %1305 = vmatpush1.msra.mxu0 0.0
    %1306 = vmatprep.subr.mxu0 0.0
    %1307 = vmatpush1.msra.mxu0 0.0
    %1308 = vmatprep.subr.mxu0 0.0
    %1309 = vmatpush1.msra.mxu0 0.0
    %1310 = vmatprep.subr.mxu0 0.0
    %1311 = vmatpush1.msra.mxu0 0.0
    %1312 = vmatprep.subr.mxu0 0.0
    %1313 = vmatpush1.msra.mxu0 0.0
    %1314 = vmatprep.subr.mxu0 0.0
    %1315 = vmatpush1.msra.mxu0 0.0
    %1316 = vmatprep.subr.mxu0 0.0
    %1317 = vmatpush1.msra.mxu0 0.0
    %1318 = vmatprep.subr.mxu0 0.0
    %1319 = vmatpush1.msra.mxu0 0.0
    %1320 = vmatprep.subr.mxu0 0.0
    %1321 = vmatpush1.msra.mxu0 0.0
    %1322 = vmatprep.subr.mxu0 0.0
    %1323 = vmatpush1.msra.mxu0 0.0
    %1324 = vmatprep.subr.mxu0 0.0
    %1325 = vmatpush1.msra.mxu0 0.0
    %1326 = vmatprep.subr.mxu0 0.0
    %1327 = vmatpush1.msra.mxu0 0.0
    %1328 = vmatprep.subr.mxu0 0.0
    %1329 = vmatpush1.msra.mxu0 0.0
    %1330 = vmatprep.subr.mxu0 0.0
    %1331 = vmatpush1.msra.mxu0 0.0
    %1332 = vmatprep.mubr.f32.mxu0 0.0
    %1333 = vmatmul.mubr.f32.gmra.mrb[0].mxu0 %v1266
    %v1334 = vpop.f32.mrb[0].mxu0
    %v1335 = vadd.f32 0.0, %v1334
    %v1336 = vpop.f32.mrb[0].mxu0
    %1337 = vdwg.mxu0
    %1339 = vrot.lane.b32.xlu0 %v1335, 16
    %v1340 = vpop.permute.xlu0 %1339
    %1342 = vst.msk [vmem:[#allocation2 + $0x1] sm:$0x1] %vm614, %v1340
    %1343 = vrot.lane.b32.xlu0 %v156, 96
    %v1344 = vpop.permute.xlu0 %1343
    %1345 = vrot.lane.b32.xlu0 %v161, 96
    %v1346 = vpop.permute.xlu0 %1345
    %1347 = vrot.lane.b32.xlu0 %v164, 96
    %v1348 = vpop.permute.xlu0 %1347
    %v1349 = vsel %vm249, %v1344, 0
    %v1351 = vsel %vm249, %v1346, 0
    %v1353 = vsel %vm249, %v1348, 0
    %1355 = vmatprep.subr.mxu0 0.0
    %1356 = vmatpush1.xpose.msra.mxu0 %v1349
    %1357 = vmatprep.subr.mxu0 0.0
    %1358 = vmatpush1.xpose.msra.mxu0 %v1351
    %1359 = vmatprep.subr.mxu0 0.0
    %1360 = vmatpush1.xpose.msra.mxu0 %v1353
    %1361 = vmatprep.subr.mxu0 0.0
    %1362 = vmatpush1.xpose.msra.mxu0 0.0
    %1363 = vmatprep.subr.mxu0 0.0
    %1364 = vmatpush1.xpose.msra.mxu0 0.0
    %1365 = vmatprep.subr.mxu0 0.0
    %1366 = vmatpush1.xpose.msra.mxu0 0.0
    %1367 = vmatprep.subr.mxu0 0.0
    %1368 = vmatpush1.xpose.msra.mxu0 0.0
    %1369 = vmatprep.subr.mxu0 0.0
    %1370 = vmatpush1.xpose.msra.mxu0 0.0
    %1371 = vmatprep.subr.mxu0 0.0
    %1372 = vmatpush1.xpose.msra.mxu0 0.0
    %1373 = vmatprep.subr.mxu0 0.0
    %1374 = vmatpush1.xpose.msra.mxu0 0.0
    %1375 = vmatprep.subr.mxu0 0.0
    %1376 = vmatpush1.xpose.msra.mxu0 0.0
    %1377 = vmatprep.subr.mxu0 0.0
    %1378 = vmatpush1.xpose.msra.mxu0 0.0
    %1379 = vmatprep.subr.mxu0 0.0
    %1380 = vmatpush1.xpose.msra.mxu0 0.0
    %1381 = vmatprep.subr.mxu0 0.0
    %1382 = vmatpush1.xpose.msra.mxu0 0.0
    %1383 = vmatprep.subr.mxu0 0.0
    %1384 = vmatpush1.xpose.msra.mxu0 0.0
    %1385 = vmatprep.subr.mxu0 0.0
    %1386 = vmatpush1.xpose.msra.mxu0 0.0
    %1387 = vmatprep.subr.mxu0 0.0
    %1388 = vmatpush1.xpose.msra.mxu0 0.0
    %1389 = vmatprep.subr.mxu0 0.0
    %1390 = vmatpush1.xpose.msra.mxu0 0.0
    %1391 = vmatprep.subr.mxu0 0.0
    %1392 = vmatpush1.xpose.msra.mxu0 0.0
    %1393 = vmatprep.subr.mxu0 0.0
    %1394 = vmatpush1.xpose.msra.mxu0 0.0
    %1395 = vmatprep.subr.mxu0 0.0
    %1396 = vmatpush1.xpose.msra.mxu0 0.0
    %1397 = vmatprep.subr.mxu0 0.0
    %1398 = vmatpush1.xpose.msra.mxu0 0.0
    %1399 = vmatprep.subr.mxu0 0.0
    %1400 = vmatpush1.xpose.msra.mxu0 0.0
    %1401 = vmatprep.subr.mxu0 0.0
    %1402 = vmatpush1.xpose.msra.mxu0 0.0
    %1403 = vmatprep.subr.mxu0 0.0
    %1404 = vmatpush1.xpose.msra.mxu0 0.0
    %1405 = vmatprep.subr.mxu0 0.0
    %1406 = vmatpush1.xpose.msra.mxu0 0.0
    %1407 = vmatprep.subr.mxu0 0.0
    %1408 = vmatpush1.xpose.msra.mxu0 0.0
    %1409 = vmatprep.subr.mxu0 0.0
    %1410 = vmatpush1.xpose.msra.mxu0 0.0
    %1411 = vmatprep.subr.mxu0 0.0
    %1412 = vmatpush1.xpose.msra.mxu0 0.0
    %1413 = vmatprep.subr.mxu0 0.0
    %1414 = vmatpush1.xpose.msra.mxu0 0.0
    %1415 = vmatprep.subr.mxu0 0.0
    %1416 = vmatpush1.xpose.msra.mxu0 0.0
    %1417 = vmatprep.subr.mxu0 0.0
    %1418 = vmatpush1.xpose.msra.mxu0 0.0
    %1419 = vmatprep.mubr.f32.mxu0 0.0
    %1420 = vmatmul.mubr.f32.gmra.mrb[0].mxu0 %v624
    %v1421 = vpop.f32.mrb[0].mxu0
    %v1422 = vadd.f32 0.0, %v1421
    %v1423 = vpop.f32.mrb[0].mxu0
    %1424 = vdwg.mxu0
    %v1425 = vsel %vm248, %v1422, -1e+30
    %v1426 = vsel %vm333, %v1425, -inf
    %1427 = vmax.xlane.f32.xlu0 %v1426
    %v1428 = vpop.xlane.xlu0 %1427
    %v1429 = vsub.f32 %v1425, %v1428
    %v1430 = vmul.f32 %v1429, 1.442695
    %v1431 = vpow.pop %v1430
    %v1432 = vsel %vm333, %v1431, 0.0
    %1433 = vadd.xlane.f32.xlu0 %v1432
    %v1434 = vpop.xlane.xlu0 %1433
    %v1435 = vrcp.pop %v1434
    %v1436 = vmul.f32 %v1431, %v1435
    %1437 = vrot.lane.b32.xlu0 %v156, 32
    %v1438 = vpop.permute.xlu0 %1437
    %1439 = vrot.lane.b32.xlu0 %v161, 32
    %v1440 = vpop.permute.xlu0 %1439
    %1441 = vrot.lane.b32.xlu0 %v164, 32
    %v1442 = vpop.permute.xlu0 %1441
    %v1447 = vsel %vm354, %v1436, 0
    %1449 = vmatprep.subr.mxu0 0.0
    %1450 = vmatpush1.msra.mxu0 %v1438
    %1451 = vmatprep.subr.mxu0 0.0
    %1452 = vmatpush1.msra.mxu0 %v1440
    %1453 = vmatprep.subr.mxu0 0.0
    %1454 = vmatpush1.msra.mxu0 %v1442
    %1455 = vmatprep.subr.mxu0 0.0
    %1456 = vmatpush1.msra.mxu0 0.0
    %1457 = vmatprep.subr.mxu0 0.0
    %1458 = vmatpush1.msra.mxu0 0.0
    %1459 = vmatprep.subr.mxu0 0.0
    %1460 = vmatpush1.msra.mxu0 0.0
    %1461 = vmatprep.subr.mxu0 0.0
    %1462 = vmatpush1.msra.mxu0 0.0
    %1463 = vmatprep.subr.mxu0 0.0
    %1464 = vmatpush1.msra.mxu0 0.0
    %1465 = vmatprep.subr.mxu0 0.0
    %1466 = vmatpush1.msra.mxu0 0.0
    %1467 = vmatprep.subr.mxu0 0.0
    %1468 = vmatpush1.msra.mxu0 0.0
    %1469 = vmatprep.subr.mxu0 0.0
    %1470 = vmatpush1.msra.mxu0 0.0
    %1471 = vmatprep.subr.mxu0 0.0
    %1472 = vmatpush1.msra.mxu0 0.0
    %1473 = vmatprep.subr.mxu0 0.0
    %1474 = vmatpush1.msra.mxu0 0.0
    %1475 = vmatprep.subr.mxu0 0.0
    %1476 = vmatpush1.msra.mxu0 0.0
    %1477 = vmatprep.subr.mxu0 0.0
    %1478 = vmatpush1.msra.mxu0 0.0
    %1479 = vmatprep.subr.mxu0 0.0
    %1480 = vmatpush1.msra.mxu0 0.0
    %1481 = vmatprep.subr.mxu0 0.0
    %1482 = vmatpush1.msra.mxu0 0.0
    %1483 = vmatprep.subr.mxu0 0.0
    %1484 = vmatpush1.msra.mxu0 0.0
    %1485 = vmatprep.subr.mxu0 0.0
    %1486 = vmatpush1.msra.mxu0 0.0
    %1487 = vmatprep.subr.mxu0 0.0
    %1488 = vmatpush1.msra.mxu0 0.0
    %1489 = vmatprep.subr.mxu0 0.0
    %1490 = vmatpush1.msra.mxu0 0.0
    %1491 = vmatprep.subr.mxu0 0.0
    %1492 = vmatpush1.msra.mxu0 0.0
    %1493 = vmatprep.subr.mxu0 0.0
    %1494 = vmatpush1.msra.mxu0 0.0
    %1495 = vmatprep.subr.mxu0 0.0
    %1496 = vmatpush1.msra.mxu0 0.0
    %1497 = vmatprep.subr.mxu0 0.0
    %1498 = vmatpush1.msra.mxu0 0.0
    %1499 = vmatprep.subr.mxu0 0.0
    %1500 = vmatpush1.msra.mxu0 0.0
    %1501 = vmatprep.subr.mxu0 0.0
    %1502 = vmatpush1.msra.mxu0 0.0
    %1503 = vmatprep.subr.mxu0 0.0
    %1504 = vmatpush1.msra.mxu0 0.0
    %1505 = vmatprep.subr.mxu0 0.0
    %1506 = vmatpush1.msra.mxu0 0.0
    %1507 = vmatprep.subr.mxu0 0.0
    %1508 = vmatpush1.msra.mxu0 0.0
    %1509 = vmatprep.subr.mxu0 0.0
    %1510 = vmatpush1.msra.mxu0 0.0
    %1511 = vmatprep.subr.mxu0 0.0
    %1512 = vmatpush1.msra.mxu0 0.0
    %1513 = vmatprep.mubr.f32.mxu0 0.0
    %1514 = vmatmul.mubr.f32.gmra.mrb[0].mxu0 %v1447
    %v1515 = vpop.f32.mrb[0].mxu0
    %v1516 = vadd.f32 0.0, %v1515
    %v1517 = vpop.f32.mrb[0].mxu0
    %1518 = vdwg.mxu0
    %1520 = vrot.lane.b32.xlu0 %v1516, 32
    %v1521 = vpop.permute.xlu0 %1520
    %1523 = vst.msk [vmem:[#allocation2 + $0x1] sm:$0x1] %vm800, %v1521
    %1524 = vrot.lane.b32.xlu0 %v156, 80
    %v1525 = vpop.permute.xlu0 %1524
    %1526 = vrot.lane.b32.xlu0 %v161, 80
    %v1527 = vpop.permute.xlu0 %1526
    %1528 = vrot.lane.b32.xlu0 %v164, 80
    %v1529 = vpop.permute.xlu0 %1528
    %v1530 = vsel %vm249, %v1525, 0
    %v1532 = vsel %vm249, %v1527, 0
    %v1534 = vsel %vm249, %v1529, 0
    %1536 = vmatprep.subr.mxu0 0.0
    %1537 = vmatpush1.xpose.msra.mxu0 %v1530
    %1538 = vmatprep.subr.mxu0 0.0
    %1539 = vmatpush1.xpose.msra.mxu0 %v1532
    %1540 = vmatprep.subr.mxu0 0.0
    %1541 = vmatpush1.xpose.msra.mxu0 %v1534
    %1542 = vmatprep.subr.mxu0 0.0
    %1543 = vmatpush1.xpose.msra.mxu0 0.0
    %1544 = vmatprep.subr.mxu0 0.0
    %1545 = vmatpush1.xpose.msra.mxu0 0.0
    %1546 = vmatprep.subr.mxu0 0.0
    %1547 = vmatpush1.xpose.msra.mxu0 0.0
    %1548 = vmatprep.subr.mxu0 0.0
    %1549 = vmatpush1.xpose.msra.mxu0 0.0
    %1550 = vmatprep.subr.mxu0 0.0
    %1551 = vmatpush1.xpose.msra.mxu0 0.0
    %1552 = vmatprep.subr.mxu0 0.0
    %1553 = vmatpush1.xpose.msra.mxu0 0.0
    %1554 = vmatprep.subr.mxu0 0.0
    %1555 = vmatpush1.xpose.msra.mxu0 0.0
    %1556 = vmatprep.subr.mxu0 0.0
    %1557 = vmatpush1.xpose.msra.mxu0 0.0
    %1558 = vmatprep.subr.mxu0 0.0
    %1559 = vmatpush1.xpose.msra.mxu0 0.0
    %1560 = vmatprep.subr.mxu0 0.0
    %1561 = vmatpush1.xpose.msra.mxu0 0.0
    %1562 = vmatprep.subr.mxu0 0.0
    %1563 = vmatpush1.xpose.msra.mxu0 0.0
    %1564 = vmatprep.subr.mxu0 0.0
    %1565 = vmatpush1.xpose.msra.mxu0 0.0
    %1566 = vmatprep.subr.mxu0 0.0
    %1567 = vmatpush1.xpose.msra.mxu0 0.0
    %1568 = vmatprep.subr.mxu0 0.0
    %1569 = vmatpush1.xpose.msra.mxu0 0.0
    %1570 = vmatprep.subr.mxu0 0.0
    %1571 = vmatpush1.xpose.msra.mxu0 0.0
    %1572 = vmatprep.subr.mxu0 0.0
    %1573 = vmatpush1.xpose.msra.mxu0 0.0
    %1574 = vmatprep.subr.mxu0 0.0
    %1575 = vmatpush1.xpose.msra.mxu0 0.0
    %1576 = vmatprep.subr.mxu0 0.0
    %1577 = vmatpush1.xpose.msra.mxu0 0.0
    %1578 = vmatprep.subr.mxu0 0.0
    %1579 = vmatpush1.xpose.msra.mxu0 0.0
    %1580 = vmatprep.subr.mxu0 0.0
    %1581 = vmatpush1.xpose.msra.mxu0 0.0
    %1582 = vmatprep.subr.mxu0 0.0
    %1583 = vmatpush1.xpose.msra.mxu0 0.0
    %1584 = vmatprep.subr.mxu0 0.0
    %1585 = vmatpush1.xpose.msra.mxu0 0.0
    %1586 = vmatprep.subr.mxu0 0.0
    %1587 = vmatpush1.xpose.msra.mxu0 0.0
    %1588 = vmatprep.subr.mxu0 0.0
    %1589 = vmatpush1.xpose.msra.mxu0 0.0
    %1590 = vmatprep.subr.mxu0 0.0
    %1591 = vmatpush1.xpose.msra.mxu0 0.0
    %1592 = vmatprep.subr.mxu0 0.0
    %1593 = vmatpush1.xpose.msra.mxu0 0.0
    %1594 = vmatprep.subr.mxu0 0.0
    %1595 = vmatpush1.xpose.msra.mxu0 0.0
    %1596 = vmatprep.subr.mxu0 0.0
    %1597 = vmatpush1.xpose.msra.mxu0 0.0
    %1598 = vmatprep.subr.mxu0 0.0
    %1599 = vmatpush1.xpose.msra.mxu0 0.0
    %1600 = vmatprep.mubr.f32.mxu0 0.0
    %1601 = vmatmul.mubr.f32.gmra.mrb[0].mxu0 %v810
    %v1602 = vpop.f32.mrb[0].mxu0
    %v1603 = vadd.f32 0.0, %v1602
    %v1604 = vpop.f32.mrb[0].mxu0
    %1605 = vdwg.mxu0
    %v1606 = vsel %vm248, %v1603, -1e+30
    %v1607 = vsel %vm333, %v1606, -inf
    %1608 = vmax.xlane.f32.xlu0 %v1607
    %v1609 = vpop.xlane.xlu0 %1608
    %v1610 = vsub.f32 %v1606, %v1609
    %v1611 = vmul.f32 %v1610, 1.442695
    %v1612 = vpow.pop %v1611
    %v1613 = vsel %vm333, %v1612, 0.0
    %1614 = vadd.xlane.f32.xlu0 %v1613
    %v1615 = vpop.xlane.xlu0 %1614
    %v1616 = vrcp.pop %v1615
    %v1617 = vmul.f32 %v1612, %v1616
    %1618 = vrot.lane.b32.xlu0 %v156, 16
    %v1619 = vpop.permute.xlu0 %1618
    %1620 = vrot.lane.b32.xlu0 %v161, 16
    %v1621 = vpop.permute.xlu0 %1620
    %1622 = vrot.lane.b32.xlu0 %v164, 16
    %v1623 = vpop.permute.xlu0 %1622
    %v1628 = vsel %vm354, %v1617, 0
    %1630 = vmatprep.subr.mxu0 0.0
    %1631 = vmatpush1.msra.mxu0 %v1619
    %1632 = vmatprep.subr.mxu0 0.0
    %1633 = vmatpush1.msra.mxu0 %v1621
    %1634 = vmatprep.subr.mxu0 0.0
    %1635 = vmatpush1.msra.mxu0 %v1623
    %1636 = vmatprep.subr.mxu0 0.0
    %1637 = vmatpush1.msra.mxu0 0.0
    %1638 = vmatprep.subr.mxu0 0.0
    %1639 = vmatpush1.msra.mxu0 0.0
    %1640 = vmatprep.subr.mxu0 0.0
    %1641 = vmatpush1.msra.mxu0 0.0
    %1642 = vmatprep.subr.mxu0 0.0
    %1643 = vmatpush1.msra.mxu0 0.0
    %1644 = vmatprep.subr.mxu0 0.0
    %1645 = vmatpush1.msra.mxu0 0.0
    %1646 = vmatprep.subr.mxu0 0.0
    %1647 = vmatpush1.msra.mxu0 0.0
    %1648 = vmatprep.subr.mxu0 0.0
    %1649 = vmatpush1.msra.mxu0 0.0
    %1650 = vmatprep.subr.mxu0 0.0
    %1651 = vmatpush1.msra.mxu0 0.0
    %1652 = vmatprep.subr.mxu0 0.0
    %1653 = vmatpush1.msra.mxu0 0.0
    %1654 = vmatprep.subr.mxu0 0.0
    %1655 = vmatpush1.msra.mxu0 0.0
    %1656 = vmatprep.subr.mxu0 0.0
    %1657 = vmatpush1.msra.mxu0 0.0
    %1658 = vmatprep.subr.mxu0 0.0
    %1659 = vmatpush1.msra.mxu0 0.0
    %1660 = vmatprep.subr.mxu0 0.0
    %1661 = vmatpush1.msra.mxu0 0.0
    %1662 = vmatprep.subr.mxu0 0.0
    %1663 = vmatpush1.msra.mxu0 0.0
    %1664 = vmatprep.subr.mxu0 0.0
    %1665 = vmatpush1.msra.mxu0 0.0
    %1666 = vmatprep.subr.mxu0 0.0
    %1667 = vmatpush1.msra.mxu0 0.0
    %1668 = vmatprep.subr.mxu0 0.0
    %1669 = vmatpush1.msra.mxu0 0.0
    %1670 = vmatprep.subr.mxu0 0.0
    %1671 = vmatpush1.msra.mxu0 0.0
    %1672 = vmatprep.subr.mxu0 0.0
    %1673 = vmatpush1.msra.mxu0 0.0
    %1674 = vmatprep.subr.mxu0 0.0
    %1675 = vmatpush1.msra.mxu0 0.0
    %1676 = vmatprep.subr.mxu0 0.0
    %1677 = vmatpush1.msra.mxu0 0.0
    %1678 = vmatprep.subr.mxu0 0.0
    %1679 = vmatpush1.msra.mxu0 0.0
    %1680 = vmatprep.subr.mxu0 0.0
    %1681 = vmatpush1.msra.mxu0 0.0
    %1682 = vmatprep.subr.mxu0 0.0
    %1683 = vmatpush1.msra.mxu0 0.0
    %1684 = vmatprep.subr.mxu0 0.0
    %1685 = vmatpush1.msra.mxu0 0.0
    %1686 = vmatprep.subr.mxu0 0.0
    %1687 = vmatpush1.msra.mxu0 0.0
    %1688 = vmatprep.subr.mxu0 0.0
    %1689 = vmatpush1.msra.mxu0 0.0
    %1690 = vmatprep.subr.mxu0 0.0
    %1691 = vmatpush1.msra.mxu0 0.0
    %1692 = vmatprep.subr.mxu0 0.0
    %1693 = vmatpush1.msra.mxu0 0.0
    %1694 = vmatprep.mubr.f32.mxu0 0.0
    %1695 = vmatmul.mubr.f32.gmra.mrb[0].mxu0 %v1628
    %v1696 = vpop.f32.mrb[0].mxu0
    %v1697 = vadd.f32 0.0, %v1696
    %v1698 = vpop.f32.mrb[0].mxu0
    %1699 = vdwg.mxu0
    %1701 = vrot.lane.b32.xlu0 %v1697, 48
    %v1702 = vpop.permute.xlu0 %1701
    %1704 = vst.msk [vmem:[#allocation2 + $0x1] sm:$0x1] %vm986, %v1702
    %v1705 = vld [vmem:[#allocation2] sm:$0x3]
    %v1706 = vpack.c.bf16 %v1705, %v1705
    %v1707 = vld [vmem:[%s6] sm:$0xf]
    %v1708 = vld [vmem:[%s6 + $0x4] sm:$0xf]
    %v1709 = vld [vmem:[%s6 + $0x8] sm:$0xf]
    %v1710 = vld [vmem:[%s6 + $0xc] sm:$0xf]
    %v1711 = vld [vmem:[%s6 + $0x10] sm:$0xf]
    %v1712 = vld [vmem:[%s6 + $0x14] sm:$0xf]
    %v1713 = vld [vmem:[%s6 + $0x18] sm:$0xf]
    %v1714 = vld [vmem:[%s6 + $0x1c] sm:$0xf]
    %v1715 = vld [vmem:[%s7] sm:$0x1]
    %v1717 = vlaneseq
    %v1718 = vshrl.u32 %v1717, 7
    %v1719 = vsub.s32 0, %v1718
    %v1720 = vrot.slane %v1715, %v1719
    %v1730 = vunpack.c.l.b16 %v1707
    %v1731 = vunpack.c.l.b16 %v1708
    %v1732 = vunpack.c.l.b16 %v1709
    %v1733 = vunpack.c.l.b16 %v1710
    %v1734 = vunpack.c.l.b16 %v1711
    %v1735 = vunpack.c.l.b16 %v1712
    %v1736 = vunpack.c.l.b16 %v1713
    %v1737 = vunpack.c.l.b16 %v1714
    %v1738 = vpack.c.b16 %v1731, %v1730
    %v1739 = vpack.c.b16 %v1733, %v1732
    %v1740 = vpack.c.b16 %v1735, %v1734
    %v1741 = vpack.c.b16 %v1737, %v1736
    %v1747 = vsel %vm100, %v1706, 0
    %1749 = vmatprep.subr.bf16.mxu0 0
    %1750 = vmatpush1.bf16.msra.mxu0 %v1738
    %1751 = vmatprep.subr.bf16.mxu0 0
    %1752 = vmatpush1.bf16.msra.mxu0 %v1739
    %1753 = vmatprep.subr.bf16.mxu0 0
    %1754 = vmatpush1.bf16.msra.mxu0 %v1740
    %1755 = vmatprep.subr.bf16.mxu0 0
    %1756 = vmatpush1.bf16.msra.mxu0 %v1741
    %1757 = vmatprep.subr.bf16.mxu0 0
    %1758 = vmatpush1.bf16.msra.mxu0 0
    %1759 = vmatprep.subr.bf16.mxu0 0
    %1760 = vmatpush1.bf16.msra.mxu0 0
    %1761 = vmatprep.subr.bf16.mxu0 0
    %1762 = vmatpush1.bf16.msra.mxu0 0
    %1763 = vmatprep.subr.bf16.mxu0 0
    %1764 = vmatpush1.bf16.msra.mxu0 0
    %1765 = vmatprep.subr.bf16.mxu0 0
    %1766 = vmatpush1.bf16.msra.mxu0 0
    %1767 = vmatprep.subr.bf16.mxu0 0
    %1768 = vmatpush1.bf16.msra.mxu0 0
    %1769 = vmatprep.subr.bf16.mxu0 0
    %1770 = vmatpush1.bf16.msra.mxu0 0
    %1771 = vmatprep.subr.bf16.mxu0 0
    %1772 = vmatpush1.bf16.msra.mxu0 0
    %1773 = vmatprep.subr.bf16.mxu0 0
    %1774 = vmatpush1.bf16.msra.mxu0 0
    %1775 = vmatprep.subr.bf16.mxu0 0
    %1776 = vmatpush1.bf16.msra.mxu0 0
    %1777 = vmatprep.subr.bf16.mxu0 0
    %1778 = vmatpush1.bf16.msra.mxu0 0
    %1779 = vmatprep.subr.bf16.mxu0 0
    %1780 = vmatpush1.bf16.msra.mxu0 0
    %1781 = vmatprep.mubr.bf16.mxu0 0
    %1782 = vmatmul.mubr.bf16.gmra.mrb[0].mxu0 %v1747
    %v1783 = vpop.f32.mrb[0].mxu0
    %v1784 = vadd.f32 %v1720, %v1783
    %v1785 = vpop.f32.mrb[0].mxu0
    %v1786 = vpop.f32.mrb[0].mxu0
    %v1787 = vpop.f32.mrb[0].mxu0
    %1788 = vdwg.mxu0
    %v1789 = vld [vmem:[%s8] sm:$0x1]
    %v1790 = vld [vmem:[%s9] sm:$0x1]
    %vm1791 = vcmask 517120
    %v1792 = vsel %vm1791, %v1784, 0.0
    %1793 = vadd.xlane.f32.xlu0 %v1792
    %v1794 = vpop.xlane.xlu0 %1793
    %v1795 = vrcp.pop 64.0
    %v1796 = vmul.f32 %v1794, %v1795
    %v1797 = vsub.f32 %v1784, %v1796
    %v1798 = vmul.f32 %v1797, %v1797
    %v1799 = vsel %vm1791, %v1798, 0.0
    %1800 = vadd.xlane.f32.xlu0 %v1799
    %v1801 = vpop.xlane.xlu0 %1800
    %v1802 = vmul.f32 %v1801, %v1795
    %v1803 = vadd.f32 %v1802, 1e-05
    %v1804 = vrsqrt.pop %v1803
    %v1805 = vmul.f32 %v1797, %v1804
    %v1807 = vlaneseq
    %v1808 = vshrl.u32 %v1807, 7
    %v1809 = vsub.s32 0, %v1808
    %v1810 = vrot.slane %v1789, %v1809
    %v1812 = vmul.f32 %v1805, %v1810
    %v1814 = vlaneseq
    %v1815 = vshrl.u32 %v1814, 7
    %v1816 = vsub.s32 0, %v1815
    %v1817 = vrot.slane %v1790, %v1816
    %v1819 = vadd.f32 %v1812, %v1817
    %v1820 = vpack.c.bf16 %v1819, %v1819
    %v1821 = vld [vmem:[%s10] sm:$0xff]
    %v1822 = vld [vmem:[%s10 + $0x8] sm:$0xff]
    %v1823 = vld [vmem:[%s10 + $0x10] sm:$0xff]
    %v1824 = vld [vmem:[%s10 + $0x18] sm:$0xff]
    %v1825 = vld [vmem:[%s10 + $0x20] sm:$0xff]
    %v1826 = vld [vmem:[%s10 + $0x28] sm:$0xff]
    %v1827 = vld [vmem:[%s10 + $0x30] sm:$0xff]
    %v1828 = vld [vmem:[%s10 + $0x38] sm:$0xff]
    %v1829 = vld [vmem:[%s10 + $0x40] sm:$0xff]
    %v1830 = vld [vmem:[%s10 + $0x48] sm:$0xff]
    %v1831 = vld [vmem:[%s10 + $0x50] sm:$0xff]
    %v1832 = vld [vmem:[%s10 + $0x58] sm:$0xff]
    %v1833 = vld [vmem:[%s10 + $0x60] sm:$0xff]
    %v1834 = vld [vmem:[%s10 + $0x68] sm:$0xff]
    %v1835 = vld [vmem:[%s10 + $0x70] sm:$0xff]
    %v1836 = vld [vmem:[%s10 + $0x78] sm:$0xff]
    %v1837 = vld [vmem:[%s11] sm:$0xf]
    %v1839 = vlaneseq
    %v1840 = vshrl.u32 %v1839, 7
    %v1841 = vsub.s32 0, %v1840
    %v1842 = vrot.slane %v1837, %v1841
    %v1843 = vlaneseq
    %v1844 = vshrl.u32 %v1843, 7
    %v1845 = vsub.s32 1, %v1844
    %v1846 = vrot.slane %v1837, %v1845
    %v1847 = vlaneseq
    %v1848 = vshrl.u32 %v1847, 7
    %v1849 = vsub.s32 2, %v1848
    %v1850 = vrot.slane %v1837, %v1849
    %v1851 = vlaneseq
    %v1852 = vshrl.u32 %v1851, 7
    %v1853 = vsub.s32 3, %v1852
    %v1854 = vrot.slane %v1837, %v1853
    %v1875 = vunpack.c.l.b16 %v1821
    %v1876 = vunpack.c.h.b16 %v1821
    %v1877 = vunpack.c.l.b16 %v1822
    %v1878 = vunpack.c.h.b16 %v1822
    %v1879 = vunpack.c.l.b16 %v1823
    %v1880 = vunpack.c.h.b16 %v1823
    %v1881 = vunpack.c.l.b16 %v1824
    %v1882 = vunpack.c.h.b16 %v1824
    %v1883 = vunpack.c.l.b16 %v1825
    %v1884 = vunpack.c.h.b16 %v1825
    %v1885 = vunpack.c.l.b16 %v1826
    %v1886 = vunpack.c.h.b16 %v1826
    %v1887 = vunpack.c.l.b16 %v1827
    %v1888 = vunpack.c.h.b16 %v1827
    %v1889 = vunpack.c.l.b16 %v1828
    %v1890 = vunpack.c.h.b16 %v1828
    %v1891 = vunpack.c.l.b16 %v1829
    %v1892 = vunpack.c.h.b16 %v1829
    %v1893 = vunpack.c.l.b16 %v1830
    %v1894 = vunpack.c.h.b16 %v1830
    %v1895 = vunpack.c.l.b16 %v1831
    %v1896 = vunpack.c.h.b16 %v1831
    %v1897 = vunpack.c.l.b16 %v1832
    %v1898 = vunpack.c.h.b16 %v1832
    %v1899 = vunpack.c.l.b16 %v1833
    %v1900 = vunpack.c.h.b16 %v1833
    %v1901 = vunpack.c.l.b16 %v1834
    %v1902 = vunpack.c.h.b16 %v1834
    %v1903 = vunpack.c.l.b16 %v1835
    %v1904 = vunpack.c.h.b16 %v1835
    %v1905 = vunpack.c.l.b16 %v1836
    %v1906 = vunpack.c.h.b16 %v1836
    %v1907 = vpack.c.b16 %v1879, %v1875
    %v1908 = vpack.c.b16 %v1880, %v1876
    %v1909 = vpack.c.b16 %v1881, %v1877
    %v1910 = vpack.c.b16 %v1882, %v1878
    %v1911 = vpack.c.b16 %v1887, %v1883
    %v1912 = vpack.c.b16 %v1888, %v1884
    %v1913 = vpack.c.b16 %v1889, %v1885
    %v1914 = vpack.c.b16 %v1890, %v1886
    %v1915 = vpack.c.b16 %v1895, %v1891
    %v1916 = vpack.c.b16 %v1896, %v1892
    %v1917 = vpack.c.b16 %v1897, %v1893
    %v1918 = vpack.c.b16 %v1898, %v1894
    %v1919 = vpack.c.b16 %v1903, %v1899
    %v1920 = vpack.c.b16 %v1904, %v1900
    %v1921 = vpack.c.b16 %v1905, %v1901
    %v1922 = vpack.c.b16 %v1906, %v1902
    %v1940 = vsel %vm100, %v1820, 0
    %1942 = vmatprep.subr.bf16.mxu0 %v1908
    %1943 = vmatpush1.bf16.msra.mxu0 %v1907
    %1944 = vmatprep.subr.bf16.mxu0 %v1912
    %1945 = vmatpush1.bf16.msra.mxu0 %v1911
    %1946 = vmatprep.subr.bf16.mxu0 %v1916
    %1947 = vmatpush1.bf16.msra.mxu0 %v1915
    %1948 = vmatprep.subr.bf16.mxu0 %v1920
    %1949 = vmatpush1.bf16.msra.mxu0 %v1919
    %1950 = vmatprep.subr.bf16.mxu0 0
    %1951 = vmatpush1.bf16.msra.mxu0 0
    %1952 = vmatprep.subr.bf16.mxu0 0
    %1953 = vmatpush1.bf16.msra.mxu0 0
    %1954 = vmatprep.subr.bf16.mxu0 0
    %1955 = vmatpush1.bf16.msra.mxu0 0
    %1956 = vmatprep.subr.bf16.mxu0 0
    %1957 = vmatpush1.bf16.msra.mxu0 0
    %1958 = vmatprep.subr.bf16.mxu0 0
    %1959 = vmatpush1.bf16.msra.mxu0 0
    %1960 = vmatprep.subr.bf16.mxu0 0
    %1961 = vmatpush1.bf16.msra.mxu0 0
    %1962 = vmatprep.subr.bf16.mxu0 0
    %1963 = vmatpush1.bf16.msra.mxu0 0
    %1964 = vmatprep.subr.bf16.mxu0 0
    %1965 = vmatpush1.bf16.msra.mxu0 0
    %1966 = vmatprep.subr.bf16.mxu0 0
    %1967 = vmatpush1.bf16.msra.mxu0 0
    %1968 = vmatprep.subr.bf16.mxu0 0
    %1969 = vmatpush1.bf16.msra.mxu0 0
    %1970 = vmatprep.subr.bf16.mxu0 0
    %1971 = vmatpush1.bf16.msra.mxu0 0
    %1972 = vmatprep.subr.bf16.mxu0 0
    %1973 = vmatpush1.bf16.msra.mxu0 0
    %1974 = vmatprep.mubr.bf16.mxu0 0
    %1975 = vmatmul.mubr.bf16.gmra.mrb[0].mxu0 %v1940
    %v1976 = vpop.f32.mrb[0].mxu0
    %v1977 = vadd.f32 %v1842, %v1976
    %v1978 = vpop.f32.mrb[0].mxu0
    %v1979 = vadd.f32 %v1846, %v1978
    %v1980 = vpop.f32.mrb[0].mxu0
    %v1981 = vpop.f32.mrb[0].mxu0
    %1982 = vdwg.mxu0
    %1983 = vmatprep.subr.bf16.mxu0 %v1910
    %1984 = vmatpush1.bf16.msra.mxu0 %v1909
    %1985 = vmatprep.subr.bf16.mxu0 %v1914
    %1986 = vmatpush1.bf16.msra.mxu0 %v1913
    %1987 = vmatprep.subr.bf16.mxu0 %v1918
    %1988 = vmatpush1.bf16.msra.mxu0 %v1917
    %1989 = vmatprep.subr.bf16.mxu0 %v1922
    %1990 = vmatpush1.bf16.msra.mxu0 %v1921
    %1991 = vmatprep.subr.bf16.mxu0 0
    %1992 = vmatpush1.bf16.msra.mxu0 0
    %1993 = vmatprep.subr.bf16.mxu0 0
    %1994 = vmatpush1.bf16.msra.mxu0 0
    %1995 = vmatprep.subr.bf16.mxu0 0
    %1996 = vmatpush1.bf16.msra.mxu0 0
    %1997 = vmatprep.subr.bf16.mxu0 0
    %1998 = vmatpush1.bf16.msra.mxu0 0
    %1999 = vmatprep.subr.bf16.mxu0 0
    %2000 = vmatpush1.bf16.msra.mxu0 0
    %2001 = vmatprep.subr.bf16.mxu0 0
    %2002 = vmatpush1.bf16.msra.mxu0 0
    %2003 = vmatprep.subr.bf16.mxu0 0
    %2004 = vmatpush1.bf16.msra.mxu0 0
    %2005 = vmatprep.subr.bf16.mxu0 0
    %2006 = vmatpush1.bf16.msra.mxu0 0
    %2007 = vmatprep.subr.bf16.mxu0 0
    %2008 = vmatpush1.bf16.msra.mxu0 0
    %2009 = vmatprep.subr.bf16.mxu0 0
    %2010 = vmatpush1.bf16.msra.mxu0 0
    %2011 = vmatprep.subr.bf16.mxu0 0
    %2012 = vmatpush1.bf16.msra.mxu0 0
    %2013 = vmatprep.subr.bf16.mxu0 0
    %2014 = vmatpush1.bf16.msra.mxu0 0
    %2015 = vmatprep.mubr.bf16.mxu0 0
    %2016 = vmatmul.mubr.bf16.gmra.mrb[0].mxu0 %v1940
    %v2017 = vpop.f32.mrb[0].mxu0
    %v2018 = vadd.f32 %v1850, %v2017
    %v2019 = vpop.f32.mrb[0].mxu0
    %v2020 = vadd.f32 %v1854, %v2019
    %v2021 = vpop.f32.mrb[0].mxu0
    %v2022 = vpop.f32.mrb[0].mxu0
    %2023 = vdwg.mxu0
    %v2024 = vpack.c.bf16 %v1977, %v1977
    %v2025 = vpack.c.bf16 %v1979, %v1979
    %v2026 = vpack.c.bf16 %v2018, %v2018
    %v2027 = vpack.c.bf16 %v2020, %v2020
    %v2028 = vld [vmem:[%s12] sm:$0xf]
    %v2029 = vld [vmem:[%s12 + $0x4] sm:$0xf]
    %v2030 = vld [vmem:[%s12 + $0x8] sm:$0xf]
    %v2031 = vld [vmem:[%s12 + $0xc] sm:$0xf]
    %v2032 = vld [vmem:[%s12 + $0x10] sm:$0xf]
    %v2033 = vld [vmem:[%s12 + $0x14] sm:$0xf]
    %v2034 = vld [vmem:[%s12 + $0x18] sm:$0xf]
    %v2035 = vld [vmem:[%s12 + $0x1c] sm:$0xf]
    %v2036 = vld [vmem:[%s12 + $0x20] sm:$0xf]
    %v2037 = vld [vmem:[%s12 + $0x24] sm:$0xf]
    %v2038 = vld [vmem:[%s12 + $0x28] sm:$0xf]
    %v2039 = vld [vmem:[%s12 + $0x2c] sm:$0xf]
    %v2040 = vld [vmem:[%s12 + $0x30] sm:$0xf]
    %v2041 = vld [vmem:[%s12 + $0x34] sm:$0xf]
    %v2042 = vld [vmem:[%s12 + $0x38] sm:$0xf]
    %v2043 = vld [vmem:[%s12 + $0x3c] sm:$0xf]
    %v2044 = vld [vmem:[%s12 + $0x40] sm:$0xf]
    %v2045 = vld [vmem:[%s12 + $0x44] sm:$0xf]
    %v2046 = vld [vmem:[%s12 + $0x48] sm:$0xf]
    %v2047 = vld [vmem:[%s12 + $0x4c] sm:$0xf]
    %v2048 = vld [vmem:[%s12 + $0x50] sm:$0xf]
    %v2049 = vld [vmem:[%s12 + $0x54] sm:$0xf]
    %v2050 = vld [vmem:[%s12 + $0x58] sm:$0xf]
    %v2051 = vld [vmem:[%s12 + $0x5c] sm:$0xf]
    %v2052 = vld [vmem:[%s12 + $0x60] sm:$0xf]
    %v2053 = vld [vmem:[%s12 + $0x64] sm:$0xf]
    %v2054 = vld [vmem:[%s12 + $0x68] sm:$0xf]
    %v2055 = vld [vmem:[%s12 + $0x6c] sm:$0xf]
    %v2056 = vld [vmem:[%s12 + $0x70] sm:$0xf]
    %v2057 = vld [vmem:[%s12 + $0x74] sm:$0xf]
    %v2058 = vld [vmem:[%s12 + $0x78] sm:$0xf]
    %v2059 = vld [vmem:[%s12 + $0x7c] sm:$0xf]
    %v2060 = vld [vmem:[%s12 + $0x80] sm:$0xf]
    %v2061 = vld [vmem:[%s12 + $0x84] sm:$0xf]
    %v2062 = vld [vmem:[%s12 + $0x88] sm:$0xf]
    %v2063 = vld [vmem:[%s12 + $0x8c] sm:$0xf]
    %v2064 = vld [vmem:[%s12 + $0x90] sm:$0xf]
    %v2065 = vld [vmem:[%s12 + $0x94] sm:$0xf]
    %v2066 = vld [vmem:[%s12 + $0x98] sm:$0xf]
    %v2067 = vld [vmem:[%s12 + $0x9c] sm:$0xf]
    %v2068 = vld [vmem:[%s12 + $0xa0] sm:$0xf]
    %v2069 = vld [vmem:[%s12 + $0xa4] sm:$0xf]
    %v2070 = vld [vmem:[%s12 + $0xa8] sm:$0xf]
    %v2071 = vld [vmem:[%s12 + $0xac] sm:$0xf]
    %v2072 = vld [vmem:[%s12 + $0xb0] sm:$0xf]
    %v2073 = vld [vmem:[%s12 + $0xb4] sm:$0xf]
    %v2074 = vld [vmem:[%s12 + $0xb8] sm:$0xf]
    %v2075 = vld [vmem:[%s12 + $0xbc] sm:$0xf]
    %v2076 = vld [vmem:[%s12 + $0xc0] sm:$0xf]
    %v2077 = vld [vmem:[%s12 + $0xc4] sm:$0xf]
    %v2078 = vld [vmem:[%s12 + $0xc8] sm:$0xf]
    %v2079 = vld [vmem:[%s12 + $0xcc] sm:$0xf]
    %v2080 = vld [vmem:[%s12 + $0xd0] sm:$0xf]
    %v2081 = vld [vmem:[%s12 + $0xd4] sm:$0xf]
    %v2082 = vld [vmem:[%s12 + $0xd8] sm:$0xf]
    %v2083 = vld [vmem:[%s12 + $0xdc] sm:$0xf]
    %v2084 = vld [vmem:[%s12 + $0xe0] sm:$0xf]
    %v2085 = vld [vmem:[%s12 + $0xe4] sm:$0xf]
    %v2086 = vld [vmem:[%s12 + $0xe8] sm:$0xf]
    %v2087 = vld [vmem:[%s12 + $0xec] sm:$0xf]
    %v2088 = vld [vmem:[%s12 + $0xf0] sm:$0xf]
    %v2089 = vld [vmem:[%s12 + $0xf4] sm:$0xf]
    %v2090 = vld [vmem:[%s12 + $0xf8] sm:$0xf]
    %v2091 = vld [vmem:[%s12 + $0xfc] sm:$0xf]
    %v2092 = vld [vmem:[%s13] sm:$0x1]
    %v2094 = vlaneseq
    %v2095 = vshrl.u32 %v2094, 7
    %v2096 = vsub.s32 0, %v2095
    %v2097 = vrot.slane %v2092, %v2096
    %v2163 = vunpack.c.l.b16 %v2028
    %v2164 = vunpack.c.l.b16 %v2029
    %v2165 = vunpack.c.l.b16 %v2030
    %v2166 = vunpack.c.l.b16 %v2031
    %v2167 = vunpack.c.l.b16 %v2032
    %v2168 = vunpack.c.l.b16 %v2033
    %v2169 = vunpack.c.l.b16 %v2034
    %v2170 = vunpack.c.l.b16 %v2035
    %v2171 = vunpack.c.l.b16 %v2036
    %v2172 = vunpack.c.l.b16 %v2037
    %v2173 = vunpack.c.l.b16 %v2038
    %v2174 = vunpack.c.l.b16 %v2039
    %v2175 = vunpack.c.l.b16 %v2040
    %v2176 = vunpack.c.l.b16 %v2041
    %v2177 = vunpack.c.l.b16 %v2042
    %v2178 = vunpack.c.l.b16 %v2043
    %v2179 = vunpack.c.l.b16 %v2044
    %v2180 = vunpack.c.l.b16 %v2045
    %v2181 = vunpack.c.l.b16 %v2046
    %v2182 = vunpack.c.l.b16 %v2047
    %v2183 = vunpack.c.l.b16 %v2048
    %v2184 = vunpack.c.l.b16 %v2049
    %v2185 = vunpack.c.l.b16 %v2050
    %v2186 = vunpack.c.l.b16 %v2051
    %v2187 = vunpack.c.l.b16 %v2052
    %v2188 = vunpack.c.l.b16 %v2053
    %v2189 = vunpack.c.l.b16 %v2054
    %v2190 = vunpack.c.l.b16 %v2055
    %v2191 = vunpack.c.l.b16 %v2056
    %v2192 = vunpack.c.l.b16 %v2057
    %v2193 = vunpack.c.l.b16 %v2058
    %v2194 = vunpack.c.l.b16 %v2059
    %v2195 = vunpack.c.l.b16 %v2060
    %v2196 = vunpack.c.l.b16 %v2061
    %v2197 = vunpack.c.l.b16 %v2062
    %v2198 = vunpack.c.l.b16 %v2063
    %v2199 = vunpack.c.l.b16 %v2064
    %v2200 = vunpack.c.l.b16 %v2065
    %v2201 = vunpack.c.l.b16 %v2066
    %v2202 = vunpack.c.l.b16 %v2067
    %v2203 = vunpack.c.l.b16 %v2068
    %v2204 = vunpack.c.l.b16 %v2069
    %v2205 = vunpack.c.l.b16 %v2070
    %v2206 = vunpack.c.l.b16 %v2071
    %v2207 = vunpack.c.l.b16 %v2072
    %v2208 = vunpack.c.l.b16 %v2073
    %v2209 = vunpack.c.l.b16 %v2074
    %v2210 = vunpack.c.l.b16 %v2075
    %v2211 = vunpack.c.l.b16 %v2076
    %v2212 = vunpack.c.l.b16 %v2077
    %v2213 = vunpack.c.l.b16 %v2078
    %v2214 = vunpack.c.l.b16 %v2079
    %v2215 = vunpack.c.l.b16 %v2080
    %v2216 = vunpack.c.l.b16 %v2081
    %v2217 = vunpack.c.l.b16 %v2082
    %v2218 = vunpack.c.l.b16 %v2083
    %v2219 = vunpack.c.l.b16 %v2084
    %v2220 = vunpack.c.l.b16 %v2085
    %v2221 = vunpack.c.l.b16 %v2086
    %v2222 = vunpack.c.l.b16 %v2087
    %v2223 = vunpack.c.l.b16 %v2088
    %v2224 = vunpack.c.l.b16 %v2089
    %v2225 = vunpack.c.l.b16 %v2090
    %v2226 = vunpack.c.l.b16 %v2091
    %v2227 = vpack.c.b16 %v2164, %v2163
    %v2228 = vpack.c.b16 %v2166, %v2165
    %v2229 = vpack.c.b16 %v2168, %v2167
    %v2230 = vpack.c.b16 %v2170, %v2169
    %v2231 = vpack.c.b16 %v2172, %v2171
    %v2232 = vpack.c.b16 %v2174, %v2173
    %v2233 = vpack.c.b16 %v2176, %v2175
    %v2234 = vpack.c.b16 %v2178, %v2177
    %v2235 = vpack.c.b16 %v2180, %v2179
    %v2236 = vpack.c.b16 %v2182, %v2181
    %v2237 = vpack.c.b16 %v2184, %v2183
    %v2238 = vpack.c.b16 %v2186, %v2185
    %v2239 = vpack.c.b16 %v2188, %v2187
    %v2240 = vpack.c.b16 %v2190, %v2189
    %v2241 = vpack.c.b16 %v2192, %v2191
    %v2242 = vpack.c.b16 %v2194, %v2193
    %v2243 = vpack.c.b16 %v2196, %v2195
    %v2244 = vpack.c.b16 %v2198, %v2197
    %v2245 = vpack.c.b16 %v2200, %v2199
    %v2246 = vpack.c.b16 %v2202, %v2201
    %v2247 = vpack.c.b16 %v2204, %v2203
    %v2248 = vpack.c.b16 %v2206, %v2205
    %v2249 = vpack.c.b16 %v2208, %v2207
    %v2250 = vpack.c.b16 %v2210, %v2209
    %v2251 = vpack.c.b16 %v2212, %v2211
    %v2252 = vpack.c.b16 %v2214, %v2213
    %v2253 = vpack.c.b16 %v2216, %v2215
    %v2254 = vpack.c.b16 %v2218, %v2217
    %v2255 = vpack.c.b16 %v2220, %v2219
    %v2256 = vpack.c.b16 %v2222, %v2221
    %v2257 = vpack.c.b16 %v2224, %v2223
    %v2258 = vpack.c.b16 %v2226, %v2225
    %2291 = vmatprep.subr.bf16.mxu0 0
    %2292 = vmatpush1.bf16.msra.mxu0 %v2227
    %2293 = vmatprep.subr.bf16.mxu0 0
    %2294 = vmatpush1.bf16.msra.mxu0 %v2228
    %2295 = vmatprep.subr.bf16.mxu0 0
    %2296 = vmatpush1.bf16.msra.mxu0 %v2229
    %2297 = vmatprep.subr.bf16.mxu0 0
    %2298 = vmatpush1.bf16.msra.mxu0 %v2230
    %2299 = vmatprep.subr.bf16.mxu0 0
    %2300 = vmatpush1.bf16.msra.mxu0 %v2231
    %2301 = vmatprep.subr.bf16.mxu0 0
    %2302 = vmatpush1.bf16.msra.mxu0 %v2232
    %2303 = vmatprep.subr.bf16.mxu0 0
    %2304 = vmatpush1.bf16.msra.mxu0 %v2233
    %2305 = vmatprep.subr.bf16.mxu0 0
    %2306 = vmatpush1.bf16.msra.mxu0 %v2234
    %2307 = vmatprep.subr.bf16.mxu0 0
    %2308 = vmatpush1.bf16.msra.mxu0 %v2235
    %2309 = vmatprep.subr.bf16.mxu0 0
    %2310 = vmatpush1.bf16.msra.mxu0 %v2236
    %2311 = vmatprep.subr.bf16.mxu0 0
    %2312 = vmatpush1.bf16.msra.mxu0 %v2237
    %2313 = vmatprep.subr.bf16.mxu0 0
    %2314 = vmatpush1.bf16.msra.mxu0 %v2238
    %2315 = vmatprep.subr.bf16.mxu0 0
    %2316 = vmatpush1.bf16.msra.mxu0 %v2239
    %2317 = vmatprep.subr.bf16.mxu0 0
    %2318 = vmatpush1.bf16.msra.mxu0 %v2240
    %2319 = vmatprep.subr.bf16.mxu0 0
    %2320 = vmatpush1.bf16.msra.mxu0 %v2241
    %2321 = vmatprep.subr.bf16.mxu0 0
    %2322 = vmatpush1.bf16.msra.mxu0 %v2242
    %2323 = vmatprep.mubr.bf16.mxu0 %v2025
    %2324 = vmatmul.mubr.bf16.gmra.mrb[0].mxu0 %v2024
    %v2325 = vpop.f32.mrb[0].mxu0
    %v2326 = vadd.f32 %v2097, %v2325
    %v2327 = vpop.f32.mrb[0].mxu0
    %v2328 = vpop.f32.mrb[0].mxu0
    %v2329 = vpop.f32.mrb[0].mxu0
    %2330 = vdwg.mxu0
    %2331 = vmatprep.subr.bf16.mxu0 0
    %2332 = vmatpush1.bf16.msra.mxu0 %v2243
    %2333 = vmatprep.subr.bf16.mxu0 0
    %2334 = vmatpush1.bf16.msra.mxu0 %v2244
    %2335 = vmatprep.subr.bf16.mxu0 0
    %2336 = vmatpush1.bf16.msra.mxu0 %v2245
    %2337 = vmatprep.subr.bf16.mxu0 0
    %2338 = vmatpush1.bf16.msra.mxu0 %v2246
    %2339 = vmatprep.subr.bf16.mxu0 0
    %2340 = vmatpush1.bf16.msra.mxu0 %v2247
    %2341 = vmatprep.subr.bf16.mxu0 0
    %2342 = vmatpush1.bf16.msra.mxu0 %v2248
    %2343 = vmatprep.subr.bf16.mxu0 0
    %2344 = vmatpush1.bf16.msra.mxu0 %v2249
    %2345 = vmatprep.subr.bf16.mxu0 0
    %2346 = vmatpush1.bf16.msra.mxu0 %v2250
    %2347 = vmatprep.subr.bf16.mxu0 0
    %2348 = vmatpush1.bf16.msra.mxu0 %v2251
    %2349 = vmatprep.subr.bf16.mxu0 0
    %2350 = vmatpush1.bf16.msra.mxu0 %v2252
    %2351 = vmatprep.subr.bf16.mxu0 0
    %2352 = vmatpush1.bf16.msra.mxu0 %v2253
    %2353 = vmatprep.subr.bf16.mxu0 0
    %2354 = vmatpush1.bf16.msra.mxu0 %v2254
    %2355 = vmatprep.subr.bf16.mxu0 0
    %2356 = vmatpush1.bf16.msra.mxu0 %v2255
    %2357 = vmatprep.subr.bf16.mxu0 0
    %2358 = vmatpush1.bf16.msra.mxu0 %v2256
    %2359 = vmatprep.subr.bf16.mxu0 0
    %2360 = vmatpush1.bf16.msra.mxu0 %v2257
    %2361 = vmatprep.subr.bf16.mxu0 0
    %2362 = vmatpush1.bf16.msra.mxu0 %v2258
    %2363 = vmatprep.mubr.bf16.mxu0 %v2027
    %2364 = vmatmul.mubr.bf16.gmra.mrb[0].mxu0 %v2026
    %v2365 = vpop.f32.mrb[0].mxu0
    %v2366 = vadd.f32 %v2326, %v2365
    %v2367 = vpop.f32.mrb[0].mxu0
    %v2368 = vpop.f32.mrb[0].mxu0
    %v2369 = vpop.f32.mrb[0].mxu0
    %2370 = vdwg.mxu0
    %v2375 = vcombine.low %v1977, %v1979
    %v2376 = vcombine.low %v2018, %v2020
    %v2378 = vunpack.c.l.s4 1983009808
    %v2379 = vunpack.c.0.s8 %v2378
    %v2380 = vlaneseq
    %v2381 = vshrl.u32 %v2380, 7
    %v2382 = vsub.s32 %v2379, %v2381
    %v2383 = vrot.slane %v2375, %v2382
    %v2385 = vunpack.c.l.s4 1983009808
    %v2386 = vunpack.c.0.s8 %v2385
    %v2387 = vlaneseq
    %v2388 = vshrl.u32 %v2387, 7
    %v2389 = vsub.s32 %v2386, %v2388
    %v2390 = vrot.slane %v2376, %v2389
    %v2391 = vcombine.low %v2383, %v2390
    %2393 = vst [vmem:[#allocation3] sm:$0xff] %v2391
    %2394 = vst [vmem:[#allocation5] sm:$0x3] %v2366
    // Predicated region
    $region58: #{coca_vision_only_forward.5} parent=1 // pred_check
      _
    $region59: #{coca_vision_only_forward.5} parent=1 // pred_check_branch
      %2396 = sbr.rel (0) target = $region61
    $region60: #{coca_vision_only_forward.5} parent=1 // pred_region
      %s2398 = ssub.s32 128, 128
      %2399 = vsyncadd [#allocation4], %s2398
      %s2401 = sshll.u32 [#allocation3], 4
      %s2402 = int_to_ptr.vmem [resolvable:$true] %s2401
      %2404 = dma.vmem_to_hbm [thread:$0]  %s2402, 128, %s14, [#allocation4]
    $region61: #{coca_vision_only_forward.5} parent=1 // pred_fallthru
      _
    // Predicated region
    $region62: #{coca_vision_only_forward.5} parent=1 // pred_check
      _
    $region63: #{coca_vision_only_forward.5} parent=1 // pred_check_branch
      %2406 = sbr.rel (0) target = $region65
    $region64: #{coca_vision_only_forward.5} parent=1 // pred_region
      %s2408 = ssub.s32 32, 32
      %2409 = vsyncadd [#allocation6], %s2408
      %s2411 = sshll.u32 [#allocation5], 4
      %s2412 = int_to_ptr.vmem [resolvable:$true] %s2411
      %2414 = dma.vmem_to_hbm [thread:$0]  %s2412, 32, %s15, [#allocation6]
    $region65: #{coca_vision_only_forward.5} parent=1 // pred_fallthru
      _
    // Predicated region
    $region66: #{coca_vision_only_forward.5} parent=1 // pred_check
      _
    $region67: #{coca_vision_only_forward.5} parent=1 // pred_check_branch
      %2416 = sbr.rel (0) target = $region69
    $region68: #{coca_vision_only_forward.5} parent=1 // pred_region
      %2417 = dma.done [#allocation4], 128
    $region69: #{coca_vision_only_forward.5} parent=1 // pred_fallthru
      _
    // Predicated region
    $region70: #{coca_vision_only_forward.5} parent=1 // pred_check
      _
    $region71: #{coca_vision_only_forward.5} parent=1 // pred_check_branch
      %2419 = sbr.rel (0) target = $region73
    $region72: #{coca_vision_only_forward.5} parent=1 // pred_region
      %2420 = dma.done [#allocation6], 32
    $region73: #{coca_vision_only_forward.5} parent=1 // pred_fallthru
      _
    %2421 = vsyncpa [#allocation4], 1
    %2422 = vsyncpa [#allocation6], 1

</llo_original>
